<compile_context>
chip_gen: v7x
topology: tpu7x:2x2x1
jax: 0.10.0
libtpu: 0.0.40
codegen_flags: <defaults>
</compile_context>

<pallas_src>
import jax
import jax.numpy as jnp
from jax.experimental import pallas as pl
from jax.experimental.pallas import tpu as pltpu

SEQ_LEN = 128            # sequence_length
NUM_CH = 12              # num_channels
C1, C2 = 32, 64          # conv channel counts
K = 3                    # conv kernel size
L1 = SEQ_LEN - (K - 1)   # 126  (after conv1)
P1 = L1 // 2             # 63   (after pool1)
L2 = P1 - (K - 1)        # 61   (after conv2)
P2 = L2 // 2             # 30   (after pool2)
FLAT = C2 * P2           # 1920 (multiple of 128 -> lane-dense fc1 input)
HID = 100
HIDP = 128               # HID zero-padded to a full lane tile
OUT = 1
EPS = 1e-5               # BatchNorm1d default eps
KC1 = K * NUM_CH         # 36: conv1 contraction depth (im2col in the wrapper)
S1 = SEQ_LEN // 2        # 64: per-sample row stride after pool1 (63 valid + 1 junk)


# ----------------------------- fused Pallas kernel ---------------------------

def _make_fused_kernel(bt):
    """conv1+bn1+relu+pool -> conv2+bn2+relu+pool -> fc1+relu -> fc2,
    vectorized across `bt` batch elements per grid step."""
    N1 = bt * SEQ_LEN    # conv1 output rows in the batch tile (row = b*128 + t)
    N2 = bt * S1         # pool1 / conv2 rows in the batch tile (row = b*64 + t)

    def kernel(x1_ref, w1_ref, b1_ref, w2_ref, b2_ref,
               wf1_ref, bf1_ref, wf2_ref, bf2_ref,
               o_ref, h1_s, p1_s, h2_s, flat_s):
        # ---- conv1 + folded BN + ReLU: ONE batched matmul, taps folded into a
        #      36-wide contraction (im2col done in the wrapper; rows t=126,127
        #      per sample are zero-padded there, so every output row is finite).
        h1 = jnp.dot(x1_ref[...], w1_ref[...],
                     preferred_element_type=jnp.float32)           # (N1, 32)
        h1_s[...] = jnp.maximum(h1 + b1_ref[...], 0.0)

        # ---- MaxPool1d(2): even/odd stride-2 sublane reads.  Sample stride
        #      128 -> 64, so pooled row index stays b*64 + t (t=63 is junk but
        #      finite and never consumed by the valid conv2/pool2 range).
        p1_s[pl.ds(0, N2), :] = jnp.maximum(h1_s[pl.ds(0, N2, 2), :],
                                            h1_s[pl.ds(1, N2, 2), :])
        # Zero the 8 pad rows the shifted conv2 reads touch for the last sample.
        p1_s[pl.ds(N2, 8), :] = jnp.zeros((8, C1), jnp.float32)

        # ---- conv2 + folded BN + ReLU: 3 batched shifted matmuls (M = bt*64).
        acc2 = jnp.zeros((N2, C2), jnp.float32)
        for k in range(K):
            acc2 = acc2 + jnp.dot(
                p1_s[pl.ds(k, N2), :].astype(jnp.bfloat16),
                w2_ref[k], preferred_element_type=jnp.float32)
        h2_s[...] = jnp.maximum(acc2 + b2_ref[...], 0.0)

        # ---- MaxPool1d(2) (odd length 61 -> 30, drops last, as torch) fused
        #      with the (t, c)-major flatten: per pooled time step, gather one
        #      row per sample (stride S1) and do ONE (bt, 64) block store into
        #      the lane-dense fc1 input scratch.
        for t in range(P2):
            e = h2_s[pl.ds(2 * t, bt, S1), :]          # rows b*64 + 2t
            o = h2_s[pl.ds(2 * t + 1, bt, S1), :]      # rows b*64 + 2t + 1
            flat_s[:, t * C2:(t + 1) * C2] = jnp.maximum(e, o).astype(jnp.bfloat16)

        # ---- fc1 -> ReLU -> (dropout = identity in eval) -> fc2 ----
        # TODO(synk): nn.Dropout train-mode random masking not implemented.
        h = jnp.dot(flat_s[...], wf1_ref[...],
                    preferred_element_type=jnp.float32)             # (bt, 128)
        h = jnp.maximum(h + bf1_ref[...], 0.0)                      # lane-dense
        # fc2 (HID->1) as VPU multiply + lane reduce (padded lanes contribute 0).
        o_ref[...] = (jnp.sum(h * wf2_ref[...], axis=-1, keepdims=True)
                      + bf2_ref[...])

    return kernel


# ------------------------------ wrapper / glue -------------------------------

def _pick_bt(B, block_b):
    """Batch tile: <= block_b, divides B, multiple of 8 when there are several
    grid steps, and keeps >= 2 grid steps (v7x has 2 TensorCores) when cheap."""
    if B <= block_b:
        bt = B // 2 if (B % 16 == 0) else B
    else:
        bt = block_b
    if B % bt != 0:
        raise ValueError(f"batch {B} must be divisible by the batch tile {bt}")
    if B // bt > 1 and bt % 8 != 0:
        bt = B                      # fall back to a single grid step
    return bt


def baseline_gait_phase_cnn(x, folded, *, block_b=32):
    """x: (B, SEQ_LEN, NUM_CH) float32  ->  (B, 1) float32."""
    (w1f, b1v, w2f, b2v, wf1, bf1, wf2, bf2) = folded
    B = x.shape[0]
    bt = _pick_bt(B, block_b)
    nb = B // bt

    # conv1 im2col in HBM (plain XLA): x1[b, t, k*12 + c] = x[b, t+k, c];
    # rows t=126,127 zero-padded; cast to bf16 once (halves x DMA + VMEM).
    xb = x.astype(jnp.bfloat16)
    x1 = jnp.concatenate([xb[:, k:k + L1, :] for k in range(K)], axis=-1)
    x1 = jnp.pad(x1, ((0, 0), (0, SEQ_LEN - L1), (0, 0)))       # (B, 128, 36)
    x1 = x1.reshape(B * SEQ_LEN, KC1)

    flops = B * (2 * SEQ_LEN * KC1 * C1 + 2 * S1 * K * C1 * C2
                 + 2 * FLAT * HIDP + 2 * HIDP)
    bytes_accessed = (x1.size * 2 + B * OUT * 4
                      + (w1f.size + w2f.size + wf1.size) * 2
                      + (b1v.size + b2v.size + bf1.size + wf2.size + bf2.size) * 4)

    kernel = _make_fused_kernel(bt)
    return pl.pallas_call(
        kernel,
        out_shape=jax.ShapeDtypeStruct((B, OUT), jnp.float32),
        grid_spec=pltpu.PrefetchScalarGridSpec(
            num_scalar_prefetch=0,
            grid=(nb,),
            in_specs=[
                pl.BlockSpec((bt * SEQ_LEN, KC1), lambda i: (i, 0)),  # im2col'd x
                pl.BlockSpec((KC1, C1), lambda i: (0, 0)),            # conv1 w (folded)
                pl.BlockSpec((1, C1), lambda i: (0, 0)),
                pl.BlockSpec((K, C1, C2), lambda i: (0, 0, 0)),       # conv2 w (folded)
                pl.BlockSpec((1, C2), lambda i: (0, 0)),
                pl.BlockSpec((FLAT, HIDP), lambda i: (0, 0)),         # fc1 w (permuted)
                pl.BlockSpec((1, HIDP), lambda i: (0, 0)),
                pl.BlockSpec((1, HIDP), lambda i: (0, 0)),            # fc2 w
                pl.BlockSpec((1, OUT), lambda i: (0, 0)),
            ],
            out_specs=pl.BlockSpec((bt, OUT), lambda i: (i, 0)),
            scratch_shapes=[
                pltpu.VMEM((bt * SEQ_LEN, C1), jnp.float32),   # conv1+relu
                pltpu.VMEM((bt * S1 + 8, C1), jnp.float32),    # pool1 (+pad rows)
                pltpu.VMEM((bt * S1, C2), jnp.float32),        # conv2+relu
                pltpu.VMEM((bt, FLAT), jnp.bfloat16),          # lane-dense fc1 input
            ],
        ),
        compiler_params=pltpu.CompilerParams(
            dimension_semantics=("parallel",)),
        cost_estimate=pl.CostEstimate(
            flops=flops, transcendentals=0, bytes_accessed=bytes_accessed),
    )(x1, w1f, b1v, w2f, b2v, wf1, bf1, wf2, bf2)


# -------------------------- parameters (synthetic) ----------------------------

def init_params(key):
    ks = jax.random.split(key, 16)
    p = {
        "conv1_w": jax.random.normal(ks[0], (C1, NUM_CH, K), jnp.float32) * 0.1,
        "conv1_b": jax.random.normal(ks[1], (C1,), jnp.float32) * 0.1,
        "g1": 1.0 + 0.1 * jax.random.normal(ks[2], (C1,), jnp.float32),
        "be1": 0.1 * jax.random.normal(ks[3], (C1,), jnp.float32),
        "m1": 0.1 * jax.random.normal(ks[4], (C1,), jnp.float32),
        "v1": jax.random.uniform(ks[5], (C1,), jnp.float32, minval=0.5, maxval=1.5),
        "conv2_w": jax.random.normal(ks[6], (C2, C1, K), jnp.float32) * 0.1,
        "conv2_b": jax.random.normal(ks[7], (C2,), jnp.float32) * 0.1,
        "g2": 1.0 + 0.1 * jax.random.normal(ks[8], (C2,), jnp.float32),
        "be2": 0.1 * jax.random.normal(ks[9], (C2,), jnp.float32),
        "m2": 0.1 * jax.random.normal(ks[10], (C2,), jnp.float32),
        "v2": jax.random.uniform(ks[11], (C2,), jnp.float32, minval=0.5, maxval=1.5),
        "fc1_w": jax.random.normal(ks[12], (HID, FLAT), jnp.float32) * 0.02,
        "fc1_b": jax.random.normal(ks[13], (HID,), jnp.float32) * 0.1,
        "fc2_w": jax.random.normal(ks[14], (OUT, HID), jnp.float32) * 0.1,
        "fc2_b": jax.random.normal(ks[15], (OUT,), jnp.float32) * 0.1,
    }
    return p


def fold_params(p):
    """Eval-mode BN folded into conv weights/bias; conv1 taps folded into a
    (36, 32) weight matching the wrapper im2col lane order; fc1 rows permuted
    to the kernel's (t, c) flatten order; HID zero-padded to 128; bf16 weights."""
    s1 = p["g1"] / jnp.sqrt(p["v1"] + EPS)
    w1 = jnp.transpose(p["conv1_w"], (2, 1, 0)) * s1[None, None, :]  # (K, Cin, C1)
    w1f = w1.reshape(KC1, C1).astype(jnp.bfloat16)                   # row = k*12 + c
    b1v = ((p["conv1_b"] - p["m1"]) * s1 + p["be1"]).reshape(1, C1)

    s2 = p["g2"] / jnp.sqrt(p["v2"] + EPS)
    w2f = (jnp.transpose(p["conv2_w"], (2, 1, 0)) * s2[None, None, :]
           ).astype(jnp.bfloat16)                                    # (K, C1, C2)
    b2v = ((p["conv2_b"] - p["m2"]) * s2 + p["be2"]).reshape(1, C2)

    # fc1: torch flattens (B, C2, P2) channel-major (index = c*P2 + t); permute
    # rows to (t, c) order (index = t*C2 + c) to match the kernel's flatten.
    wt = p["fc1_w"].reshape(HID, C2, P2)                             # (h, c, t)
    wt = jnp.transpose(wt, (2, 1, 0)).reshape(FLAT, HID)             # rows (t, c)
    wf1 = jnp.zeros((FLAT, HIDP), jnp.float32).at[:, :HID].set(wt).astype(jnp.bfloat16)
    bf1 = jnp.zeros((1, HIDP), jnp.float32).at[:, :HID].set(p["fc1_b"])
    assert OUT == 1
    wf2 = jnp.zeros((1, HIDP), jnp.float32).at[:, :HID].set(p["fc2_w"][0])
    bf2 = p["fc2_b"].reshape(1, OUT)
    return (w1f, b1v, w2f, b2v, wf1, bf1, wf2, bf2)


# ------------------------- pure-JAX reference (check) -------------------------

def ref_forward(x, p):
    B = x.shape[0]
    xt = jnp.transpose(x, (0, 2, 1))                                 # (B, 12, 128)
    h = jnp.zeros((B, C1, L1), jnp.float32)
    for k in range(K):
        h = h + jnp.einsum("bcl,oc->bol", xt[:, :, k:k + L1], p["conv1_w"][:, :, k])
    h = h + p["conv1_b"][None, :, None]
    h = (h - p["m1"][None, :, None]) / jnp.sqrt(p["v1"] + EPS)[None, :, None] \
        * p["g1"][None, :, None] + p["be1"][None, :, None]
    h = jnp.maximum(h, 0.0)
    h = jnp.max(h[:, :, :2 * P1].reshape(B, C1, P1, 2), axis=-1)
    h2 = jnp.zeros((B, C2, L2), jnp.float32)
    for k in range(K):
        h2 = h2 + jnp.einsum("bcl,oc->bol", h[:, :, k:k + L2], p["conv2_w"][:, :, k])
    h2 = h2 + p["conv2_b"][None, :, None]
    h2 = (h2 - p["m2"][None, :, None]) / jnp.sqrt(p["v2"] + EPS)[None, :, None] \
        * p["g2"][None, :, None] + p["be2"][None, :, None]
    h2 = jnp.maximum(h2, 0.0)
    h2 = jnp.max(h2[:, :, :2 * P2].reshape(B, C2, P2, 2), axis=-1)   # (B, 64, 30)
    flat = h2.reshape(B, -1)
    f1 = jnp.maximum(flat @ p["fc1_w"].T + p["fc1_b"], 0.0)
    return f1 @ p["fc2_w"].T + p["fc2_b"]


# ----------------------------------- main -------------------------------------

if __name__ == "__main__":
    key = jax.random.PRNGKey(0)
    kx, kp = jax.random.split(key)
    B = 16                      # -> batch tile 8, two "parallel" grid steps
    x = jax.random.normal(kx, (B, SEQ_LEN, NUM_CH), jnp.float32)

    raw = init_params(kp)
    folded = fold_params(raw)

    out = jax.block_until_ready(baseline_gait_phase_cnn(x, folded))
    assert out.shape == (B, OUT), out.shape

    ref = jax.block_until_ready(ref_forward(x, raw))
    # bf16 matmul operands (f32 accumulation) -> slightly looser tolerance than
    # a pure-f32 kernel; a structural/ordering bug would still blow past this.
    if not bool(jnp.allclose(out, ref, atol=5e-2, rtol=5e-2)):
        raise AssertionError(
            f"Pallas output mismatch vs reference: max abs err "
            f"{float(jnp.max(jnp.abs(out - ref)))}")
    print("KERNEL_OK")
</pallas_src>

<mosaic_0001>
module attributes {stable_mosaic.version = 11 : i64} {
  func.func @kernel(%arg0: i32, %arg1: memref<1024x36xbf16, #tpu.memory_space<vmem>>, %arg2: memref<36x32xbf16, #tpu.memory_space<vmem>>, %arg3: memref<1x32xf32, #tpu.memory_space<vmem>>, %arg4: memref<3x32x64xbf16, #tpu.memory_space<vmem>>, %arg5: memref<1x64xf32, #tpu.memory_space<vmem>>, %arg6: memref<1920x128xbf16, #tpu.memory_space<vmem>>, %arg7: memref<1x128xf32, #tpu.memory_space<vmem>>, %arg8: memref<1x128xf32, #tpu.memory_space<vmem>>, %arg9: memref<1x1xf32, #tpu.memory_space<vmem>>, %arg10: memref<8x1xf32, #tpu.memory_space<vmem>>, %arg11: memref<1024x32xf32, #tpu.memory_space<vmem>>, %arg12: memref<520x32xf32, #tpu.memory_space<vmem>>, %arg13: memref<512x64xf32, #tpu.memory_space<vmem>>, %arg14: memref<8x1920xbf16, #tpu.memory_space<vmem>>) attributes {dimension_semantics = [#tpu.dimension_semantics<parallel>], iteration_bounds = array<i64: 2>, scalar_prefetch = 0 : i64, scratch_operands = 4 : i64, tpu.core_type = #tpu.core_type<tc>, window_params = [{transform_indices = @transform_0, window_bounds = array<i64: 1024, 36>}, {pipeline_mode = #tpu.pipeline_mode<synchronous>, transform_indices = @transform_1, window_bounds = array<i64: 36, 32>}, {pipeline_mode = #tpu.pipeline_mode<synchronous>, transform_indices = @transform_2, window_bounds = array<i64: 1, 32>}, {pipeline_mode = #tpu.pipeline_mode<synchronous>, transform_indices = @transform_3, window_bounds = array<i64: 3, 32, 64>}, {pipeline_mode = #tpu.pipeline_mode<synchronous>, transform_indices = @transform_4, window_bounds = array<i64: 1, 64>}, {pipeline_mode = #tpu.pipeline_mode<synchronous>, transform_indices = @transform_5, window_bounds = array<i64: 1920, 128>}, {pipeline_mode = #tpu.pipeline_mode<synchronous>, transform_indices = @transform_6, window_bounds = array<i64: 1, 128>}, {pipeline_mode = #tpu.pipeline_mode<synchronous>, transform_indices = @transform_7, window_bounds = array<i64: 1, 128>}, {pipeline_mode = #tpu.pipeline_mode<synchronous>, transform_indices = @transform_8, window_bounds = array<i64: 1, 1>}, {transform_indices = @transform_9, window_bounds = array<i64: 8, 1>}]} {
    %c0 = arith.constant 0 : index
    %c0_0 = arith.constant 0 : index
    %0 = vector.load %arg1[%c0, %c0_0] : memref<1024x36xbf16, #tpu.memory_space<vmem>>, vector<1024x36xbf16>
    %c0_1 = arith.constant 0 : index
    %c0_2 = arith.constant 0 : index
    %1 = vector.load %arg2[%c0_1, %c0_2] : memref<36x32xbf16, #tpu.memory_space<vmem>>, vector<36x32xbf16>
    %cst = arith.constant dense<0.000000e+00> : vector<1024x32xf32>
    %2 = tpu.matmul %0, %1, %cst {dimension_numbers = #tpu.dot_dimension_numbers<[1], [0], [0], [1], [0, 0, 1, 1], [], []>} : vector<1024x36xbf16>, vector<36x32xbf16>, vector<1024x32xf32> -> vector<1024x32xf32>
    %c0_3 = arith.constant 0 : index
    %c0_4 = arith.constant 0 : index
    %3 = vector.load %arg3[%c0_3, %c0_4] : memref<1x32xf32, #tpu.memory_space<vmem>>, vector<1x32xf32>
    %4 = vector.broadcast %3 : vector<1x32xf32> to vector<1024x32xf32>
    %5 = arith.addf %2, %4 : vector<1024x32xf32>
    %cst_5 = arith.constant 0.000000e+00 : f32
    %6 = vector.broadcast %cst_5 : f32 to vector<1024x32xf32>
    %7 = arith.maximumf %5, %6 : vector<1024x32xf32>
    %c0_6 = arith.constant 0 : index
    %c0_7 = arith.constant 0 : index
    %8 = vector.load %arg11[%c0_6, %c0_7] : memref<1024x32xf32, #tpu.memory_space<vmem>>, vector<1024x32xf32>
    tpu.vector_store %arg11[%c0_6, %c0_7], %7 {strides = array<i32>} : memref<1024x32xf32, #tpu.memory_space<vmem>>, vector<1024x32xf32>,
    %c0_8 = arith.constant 0 : index
    %c0_9 = arith.constant 0 : index
    %9 = tpu.strided_load %arg11[%c0_8, %c0_9] {strides = array<i32: 2, 1>} : memref<1024x32xf32, #tpu.memory_space<vmem>>, vector<512x32xf32>
    %c1 = arith.constant 1 : index
    %c0_10 = arith.constant 0 : index
    %10 = tpu.strided_load %arg11[%c1, %c0_10] {strides = array<i32: 2, 1>} : memref<1024x32xf32, #tpu.memory_space<vmem>>, vector<512x32xf32>
    %11 = arith.maximumf %9, %10 : vector<512x32xf32>
    %c0_11 = arith.constant 0 : index
    %c0_12 = arith.constant 0 : index
    %12 = vector.load %arg12[%c0_11, %c0_12] : memref<520x32xf32, #tpu.memory_space<vmem>>, vector<512x32xf32>
    tpu.vector_store %arg12[%c0_11, %c0_12], %11 {strides = array<i32>} : memref<520x32xf32, #tpu.memory_space<vmem>>, vector<512x32xf32>,
    %cst_13 = arith.constant 0.000000e+00 : f32
    %13 = vector.broadcast %cst_13 : f32 to vector<8x32xf32>
    %c512 = arith.constant 512 : index
    %c0_14 = arith.constant 0 : index
    %14 = vector.load %arg12[%c512, %c0_14] : memref<520x32xf32, #tpu.memory_space<vmem>>, vector<8x32xf32>
    tpu.vector_store %arg12[%c512, %c0_14], %13 {strides = array<i32>} : memref<520x32xf32, #tpu.memory_space<vmem>>, vector<8x32xf32>,
    %cst_15 = arith.constant 0.000000e+00 : f32
    %15 = vector.broadcast %cst_15 : f32 to vector<512x64xf32>
    %c0_16 = arith.constant 0 : index
    %c0_17 = arith.constant 0 : index
    %16 = vector.load %arg12[%c0_16, %c0_17] : memref<520x32xf32, #tpu.memory_space<vmem>>, vector<512x32xf32>
    %17 = arith.truncf %16 : vector<512x32xf32> to vector<512x32xbf16>
    %c0_18 = arith.constant 0 : index
    %c0_19 = arith.constant 0 : index
    %c0_20 = arith.constant 0 : index
    %18 = vector.load %arg4[%c0_18, %c0_19, %c0_20] : memref<3x32x64xbf16, #tpu.memory_space<vmem>>, vector<1x32x64xbf16>
    %19 = vector.shape_cast %18 : vector<1x32x64xbf16> to vector<32x64xbf16>
    %cst_21 = arith.constant dense<0.000000e+00> : vector<512x64xf32>
    %20 = tpu.matmul %17, %19, %cst_21 {dimension_numbers = #tpu.dot_dimension_numbers<[1], [0], [0], [1], [0, 0, 1, 1], [], []>} : vector<512x32xbf16>, vector<32x64xbf16>, vector<512x64xf32> -> vector<512x64xf32>
    %21 = arith.addf %15, %20 : vector<512x64xf32>
    %c1_22 = arith.constant 1 : index
    %c0_23 = arith.constant 0 : index
    %22 = vector.load %arg12[%c1_22, %c0_23] : memref<520x32xf32, #tpu.memory_space<vmem>>, vector<512x32xf32>
    %23 = arith.truncf %22 : vector<512x32xf32> to vector<512x32xbf16>
    %c1_24 = arith.constant 1 : index
    %c0_25 = arith.constant 0 : index
    %c0_26 = arith.constant 0 : index
    %24 = vector.load %arg4[%c1_24, %c0_25, %c0_26] : memref<3x32x64xbf16, #tpu.memory_space<vmem>>, vector<1x32x64xbf16>
    %25 = vector.shape_cast %24 : vector<1x32x64xbf16> to vector<32x64xbf16>
    %cst_27 = arith.constant dense<0.000000e+00> : vector<512x64xf32>
    %26 = tpu.matmul %23, %25, %cst_27 {dimension_numbers = #tpu.dot_dimension_numbers<[1], [0], [0], [1], [0, 0, 1, 1], [], []>} : vector<512x32xbf16>, vector<32x64xbf16>, vector<512x64xf32> -> vector<512x64xf32>
    %27 = arith.addf %21, %26 : vector<512x64xf32>
    %c2 = arith.constant 2 : index
    %c0_28 = arith.constant 0 : index
    %28 = vector.load %arg12[%c2, %c0_28] : memref<520x32xf32, #tpu.memory_space<vmem>>, vector<512x32xf32>
    %29 = arith.truncf %28 : vector<512x32xf32> to vector<512x32xbf16>
    %c2_29 = arith.constant 2 : index
    %c0_30 = arith.constant 0 : index
    %c0_31 = arith.constant 0 : index
    %30 = vector.load %arg4[%c2_29, %c0_30, %c0_31] : memref<3x32x64xbf16, #tpu.memory_space<vmem>>, vector<1x32x64xbf16>
    %31 = vector.shape_cast %30 : vector<1x32x64xbf16> to vector<32x64xbf16>
    %cst_32 = arith.constant dense<0.000000e+00> : vector<512x64xf32>
    %32 = tpu.matmul %29, %31, %cst_32 {dimension_numbers = #tpu.dot_dimension_numbers<[1], [0], [0], [1], [0, 0, 1, 1], [], []>} : vector<512x32xbf16>, vector<32x64xbf16>, vector<512x64xf32> -> vector<512x64xf32>
    %33 = arith.addf %27, %32 : vector<512x64xf32>
    %c0_33 = arith.constant 0 : index
    %c0_34 = arith.constant 0 : index
    %34 = vector.load %arg5[%c0_33, %c0_34] : memref<1x64xf32, #tpu.memory_space<vmem>>, vector<1x64xf32>
    %35 = vector.broadcast %34 : vector<1x64xf32> to vector<512x64xf32>
    %36 = arith.addf %33, %35 : vector<512x64xf32>
    %cst_35 = arith.constant 0.000000e+00 : f32
    %37 = vector.broadcast %cst_35 : f32 to vector<512x64xf32>
    %38 = arith.maximumf %36, %37 : vector<512x64xf32>
    %c0_36 = arith.constant 0 : index
    %c0_37 = arith.constant 0 : index
    %39 = vector.load %arg13[%c0_36, %c0_37] : memref<512x64xf32, #tpu.memory_space<vmem>>, vector<512x64xf32>
    tpu.vector_store %arg13[%c0_36, %c0_37], %38 {strides = array<i32>} : memref<512x64xf32, #tpu.memory_space<vmem>>, vector<512x64xf32>,
    %c0_38 = arith.constant 0 : index
    %c0_39 = arith.constant 0 : index
    %40 = tpu.strided_load %arg13[%c0_38, %c0_39] {strides = array<i32: 64, 1>} : memref<512x64xf32, #tpu.memory_space<vmem>>, vector<8x64xf32>
    %c1_40 = arith.constant 1 : index
    %c0_41 = arith.constant 0 : index
    %41 = tpu.strided_load %arg13[%c1_40, %c0_41] {strides = array<i32: 64, 1>} : memref<512x64xf32, #tpu.memory_space<vmem>>, vector<8x64xf32>
    %42 = arith.maximumf %40, %41 : vector<8x64xf32>
    %43 = arith.truncf %42 : vector<8x64xf32> to vector<8x64xbf16>
    %c0_42 = arith.constant 0 : index
    %c0_43 = arith.constant 0 : index
    %44 = vector.load %arg14[%c0_42, %c0_43] : memref<8x1920xbf16, #tpu.memory_space<vmem>>, vector<8x64xbf16>
    tpu.vector_store %arg14[%c0_42, %c0_43], %43 {strides = array<i32>} : memref<8x1920xbf16, #tpu.memory_space<vmem>>, vector<8x64xbf16>,
    %c2_44 = arith.constant 2 : index
    %c0_45 = arith.constant 0 : index
    %45 = tpu.strided_load %arg13[%c2_44, %c0_45] {strides = array<i32: 64, 1>} : memref<512x64xf32, #tpu.memory_space<vmem>>, vector<8x64xf32>
    %c3 = arith.constant 3 : index
    %c0_46 = arith.constant 0 : index
    %46 = tpu.strided_load %arg13[%c3, %c0_46] {strides = array<i32: 64, 1>} : memref<512x64xf32, #tpu.memory_space<vmem>>, vector<8x64xf32>
    %47 = arith.maximumf %45, %46 : vector<8x64xf32>
    %48 = arith.truncf %47 : vector<8x64xf32> to vector<8x64xbf16>
    %c0_47 = arith.constant 0 : index
    %c64 = arith.constant 64 : index
    %49 = vector.load %arg14[%c0_47, %c64] : memref<8x1920xbf16, #tpu.memory_space<vmem>>, vector<8x64xbf16>
    tpu.vector_store %arg14[%c0_47, %c64], %48 {strides = array<i32>} : memref<8x1920xbf16, #tpu.memory_space<vmem>>, vector<8x64xbf16>,
    %c4 = arith.constant 4 : index
    %c0_48 = arith.constant 0 : index
    %50 = tpu.strided_load %arg13[%c4, %c0_48] {strides = array<i32: 64, 1>} : memref<512x64xf32, #tpu.memory_space<vmem>>, vector<8x64xf32>
    %c5 = arith.constant 5 : index
    %c0_49 = arith.constant 0 : index
    %51 = tpu.strided_load %arg13[%c5, %c0_49] {strides = array<i32: 64, 1>} : memref<512x64xf32, #tpu.memory_space<vmem>>, vector<8x64xf32>
    %52 = arith.maximumf %50, %51 : vector<8x64xf32>
    %53 = arith.truncf %52 : vector<8x64xf32> to vector<8x64xbf16>
    %c0_50 = arith.constant 0 : index
    %c128 = arith.constant 128 : index
    %54 = vector.load %arg14[%c0_50, %c128] : memref<8x1920xbf16, #tpu.memory_space<vmem>>, vector<8x64xbf16>
    tpu.vector_store %arg14[%c0_50, %c128], %53 {strides = array<i32>} : memref<8x1920xbf16, #tpu.memory_space<vmem>>, vector<8x64xbf16>,
    %c6 = arith.constant 6 : index
    %c0_51 = arith.constant 0 : index
    %55 = tpu.strided_load %arg13[%c6, %c0_51] {strides = array<i32: 64, 1>} : memref<512x64xf32, #tpu.memory_space<vmem>>, vector<8x64xf32>
    %c7 = arith.constant 7 : index
    %c0_52 = arith.constant 0 : index
    %56 = tpu.strided_load %arg13[%c7, %c0_52] {strides = array<i32: 64, 1>} : memref<512x64xf32, #tpu.memory_space<vmem>>, vector<8x64xf32>
    %57 = arith.maximumf %55, %56 : vector<8x64xf32>
    %58 = arith.truncf %57 : vector<8x64xf32> to vector<8x64xbf16>
    %c0_53 = arith.constant 0 : index
    %c192 = arith.constant 192 : index
    %59 = vector.load %arg14[%c0_53, %c192] : memref<8x1920xbf16, #tpu.memory_space<vmem>>, vector<8x64xbf16>
    tpu.vector_store %arg14[%c0_53, %c192], %58 {strides = array<i32>} : memref<8x1920xbf16, #tpu.memory_space<vmem>>, vector<8x64xbf16>,
    %c8 = arith.constant 8 : index
    %c0_54 = arith.constant 0 : index
    %60 = tpu.strided_load %arg13[%c8, %c0_54] {strides = array<i32: 64, 1>} : memref<512x64xf32, #tpu.memory_space<vmem>>, vector<8x64xf32>
    %c9 = arith.constant 9 : index
    %c0_55 = arith.constant 0 : index
    %61 = tpu.strided_load %arg13[%c9, %c0_55] {strides = array<i32: 64, 1>} : memref<512x64xf32, #tpu.memory_space<vmem>>, vector<8x64xf32>
    %62 = arith.maximumf %60, %61 : vector<8x64xf32>
    %63 = arith.truncf %62 : vector<8x64xf32> to vector<8x64xbf16>
    %c0_56 = arith.constant 0 : index
    %c256 = arith.constant 256 : index
    %64 = vector.load %arg14[%c0_56, %c256] : memref<8x1920xbf16, #tpu.memory_space<vmem>>, vector<8x64xbf16>
    tpu.vector_store %arg14[%c0_56, %c256], %63 {strides = array<i32>} : memref<8x1920xbf16, #tpu.memory_space<vmem>>, vector<8x64xbf16>,
    %c10 = arith.constant 10 : index
    %c0_57 = arith.constant 0 : index
    %65 = tpu.strided_load %arg13[%c10, %c0_57] {strides = array<i32: 64, 1>} : memref<512x64xf32, #tpu.memory_space<vmem>>, vector<8x64xf32>
    %c11 = arith.constant 11 : index
    %c0_58 = arith.constant 0 : index
    %66 = tpu.strided_load %arg13[%c11, %c0_58] {strides = array<i32: 64, 1>} : memref<512x64xf32, #tpu.memory_space<vmem>>, vector<8x64xf32>
    %67 = arith.maximumf %65, %66 : vector<8x64xf32>
    %68 = arith.truncf %67 : vector<8x64xf32> to vector<8x64xbf16>
    %c0_59 = arith.constant 0 : index
    %c320 = arith.constant 320 : index
    %69 = vector.load %arg14[%c0_59, %c320] : memref<8x1920xbf16, #tpu.memory_space<vmem>>, vector<8x64xbf16>
    tpu.vector_store %arg14[%c0_59, %c320], %68 {strides = array<i32>} : memref<8x1920xbf16, #tpu.memory_space<vmem>>, vector<8x64xbf16>,
    %c12 = arith.constant 12 : index
    %c0_60 = arith.constant 0 : index
    %70 = tpu.strided_load %arg13[%c12, %c0_60] {strides = array<i32: 64, 1>} : memref<512x64xf32, #tpu.memory_space<vmem>>, vector<8x64xf32>
    %c13 = arith.constant 13 : index
    %c0_61 = arith.constant 0 : index
    %71 = tpu.strided_load %arg13[%c13, %c0_61] {strides = array<i32: 64, 1>} : memref<512x64xf32, #tpu.memory_space<vmem>>, vector<8x64xf32>
    %72 = arith.maximumf %70, %71 : vector<8x64xf32>
    %73 = arith.truncf %72 : vector<8x64xf32> to vector<8x64xbf16>
    %c0_62 = arith.constant 0 : index
    %c384 = arith.constant 384 : index
    %74 = vector.load %arg14[%c0_62, %c384] : memref<8x1920xbf16, #tpu.memory_space<vmem>>, vector<8x64xbf16>
    tpu.vector_store %arg14[%c0_62, %c384], %73 {strides = array<i32>} : memref<8x1920xbf16, #tpu.memory_space<vmem>>, vector<8x64xbf16>,
    %c14 = arith.constant 14 : index
    %c0_63 = arith.constant 0 : index
    %75 = tpu.strided_load %arg13[%c14, %c0_63] {strides = array<i32: 64, 1>} : memref<512x64xf32, #tpu.memory_space<vmem>>, vector<8x64xf32>
    %c15 = arith.constant 15 : index
    %c0_64 = arith.constant 0 : index
    %76 = tpu.strided_load %arg13[%c15, %c0_64] {strides = array<i32: 64, 1>} : memref<512x64xf32, #tpu.memory_space<vmem>>, vector<8x64xf32>
    %77 = arith.maximumf %75, %76 : vector<8x64xf32>
    %78 = arith.truncf %77 : vector<8x64xf32> to vector<8x64xbf16>
    %c0_65 = arith.constant 0 : index
    %c448 = arith.constant 448 : index
    %79 = vector.load %arg14[%c0_65, %c448] : memref<8x1920xbf16, #tpu.memory_space<vmem>>, vector<8x64xbf16>
    tpu.vector_store %arg14[%c0_65, %c448], %78 {strides = array<i32>} : memref<8x1920xbf16, #tpu.memory_space<vmem>>, vector<8x64xbf16>,
    %c16 = arith.constant 16 : index
    %c0_66 = arith.constant 0 : index
    %80 = tpu.strided_load %arg13[%c16, %c0_66] {strides = array<i32: 64, 1>} : memref<512x64xf32, #tpu.memory_space<vmem>>, vector<8x64xf32>
    %c17 = arith.constant 17 : index
    %c0_67 = arith.constant 0 : index
    %81 = tpu.strided_load %arg13[%c17, %c0_67] {strides = array<i32: 64, 1>} : memref<512x64xf32, #tpu.memory_space<vmem>>, vector<8x64xf32>
    %82 = arith.maximumf %80, %81 : vector<8x64xf32>
    %83 = arith.truncf %82 : vector<8x64xf32> to vector<8x64xbf16>
    %c0_68 = arith.constant 0 : index
    %c512_69 = arith.constant 512 : index
    %84 = vector.load %arg14[%c0_68, %c512_69] : memref<8x1920xbf16, #tpu.memory_space<vmem>>, vector<8x64xbf16>
    tpu.vector_store %arg14[%c0_68, %c512_69], %83 {strides = array<i32>} : memref<8x1920xbf16, #tpu.memory_space<vmem>>, vector<8x64xbf16>,
    %c18 = arith.constant 18 : index
    %c0_70 = arith.constant 0 : index
    %85 = tpu.strided_load %arg13[%c18, %c0_70] {strides = array<i32: 64, 1>} : memref<512x64xf32, #tpu.memory_space<vmem>>, vector<8x64xf32>
    %c19 = arith.constant 19 : index
    %c0_71 = arith.constant 0 : index
    %86 = tpu.strided_load %arg13[%c19, %c0_71] {strides = array<i32: 64, 1>} : memref<512x64xf32, #tpu.memory_space<vmem>>, vector<8x64xf32>
    %87 = arith.maximumf %85, %86 : vector<8x64xf32>
    %88 = arith.truncf %87 : vector<8x64xf32> to vector<8x64xbf16>
    %c0_72 = arith.constant 0 : index
    %c576 = arith.constant 576 : index
    %89 = vector.load %arg14[%c0_72, %c576] : memref<8x1920xbf16, #tpu.memory_space<vmem>>, vector<8x64xbf16>
    tpu.vector_store %arg14[%c0_72, %c576], %88 {strides = array<i32>} : memref<8x1920xbf16, #tpu.memory_space<vmem>>, vector<8x64xbf16>,
    %c20 = arith.constant 20 : index
    %c0_73 = arith.constant 0 : index
    %90 = tpu.strided_load %arg13[%c20, %c0_73] {strides = array<i32: 64, 1>} : memref<512x64xf32, #tpu.memory_space<vmem>>, vector<8x64xf32>
    %c21 = arith.constant 21 : index
    %c0_74 = arith.constant 0 : index
    %91 = tpu.strided_load %arg13[%c21, %c0_74] {strides = array<i32: 64, 1>} : memref<512x64xf32, #tpu.memory_space<vmem>>, vector<8x64xf32>
    %92 = arith.maximumf %90, %91 : vector<8x64xf32>
    %93 = arith.truncf %92 : vector<8x64xf32> to vector<8x64xbf16>
    %c0_75 = arith.constant 0 : index
    %c640 = arith.constant 640 : index
    %94 = vector.load %arg14[%c0_75, %c640] : memref<8x1920xbf16, #tpu.memory_space<vmem>>, vector<8x64xbf16>
    tpu.vector_store %arg14[%c0_75, %c640], %93 {strides = array<i32>} : memref<8x1920xbf16, #tpu.memory_space<vmem>>, vector<8x64xbf16>,
    %c22 = arith.constant 22 : index
    %c0_76 = arith.constant 0 : index
    %95 = tpu.strided_load %arg13[%c22, %c0_76] {strides = array<i32: 64, 1>} : memref<512x64xf32, #tpu.memory_space<vmem>>, vector<8x64xf32>
    %c23 = arith.constant 23 : index
    %c0_77 = arith.constant 0 : index
    %96 = tpu.strided_load %arg13[%c23, %c0_77] {strides = array<i32: 64, 1>} : memref<512x64xf32, #tpu.memory_space<vmem>>, vector<8x64xf32>
    %97 = arith.maximumf %95, %96 : vector<8x64xf32>
    %98 = arith.truncf %97 : vector<8x64xf32> to vector<8x64xbf16>
    %c0_78 = arith.constant 0 : index
    %c704 = arith.constant 704 : index
    %99 = vector.load %arg14[%c0_78, %c704] : memref<8x1920xbf16, #tpu.memory_space<vmem>>, vector<8x64xbf16>
    tpu.vector_store %arg14[%c0_78, %c704], %98 {strides = array<i32>} : memref<8x1920xbf16, #tpu.memory_space<vmem>>, vector<8x64xbf16>,
    %c24 = arith.constant 24 : index
    %c0_79 = arith.constant 0 : index
    %100 = tpu.strided_load %arg13[%c24, %c0_79] {strides = array<i32: 64, 1>} : memref<512x64xf32, #tpu.memory_space<vmem>>, vector<8x64xf32>
    %c25 = arith.constant 25 : index
    %c0_80 = arith.constant 0 : index
    %101 = tpu.strided_load %arg13[%c25, %c0_80] {strides = array<i32: 64, 1>} : memref<512x64xf32, #tpu.memory_space<vmem>>, vector<8x64xf32>
    %102 = arith.maximumf %100, %101 : vector<8x64xf32>
    %103 = arith.truncf %102 : vector<8x64xf32> to vector<8x64xbf16>
    %c0_81 = arith.constant 0 : index
    %c768 = arith.constant 768 : index
    %104 = vector.load %arg14[%c0_81, %c768] : memref<8x1920xbf16, #tpu.memory_space<vmem>>, vector<8x64xbf16>
    tpu.vector_store %arg14[%c0_81, %c768], %103 {strides = array<i32>} : memref<8x1920xbf16, #tpu.memory_space<vmem>>, vector<8x64xbf16>,
    %c26 = arith.constant 26 : index
    %c0_82 = arith.constant 0 : index
    %105 = tpu.strided_load %arg13[%c26, %c0_82] {strides = array<i32: 64, 1>} : memref<512x64xf32, #tpu.memory_space<vmem>>, vector<8x64xf32>
    %c27 = arith.constant 27 : index
    %c0_83 = arith.constant 0 : index
    %106 = tpu.strided_load %arg13[%c27, %c0_83] {strides = array<i32: 64, 1>} : memref<512x64xf32, #tpu.memory_space<vmem>>, vector<8x64xf32>
    %107 = arith.maximumf %105, %106 : vector<8x64xf32>
    %108 = arith.truncf %107 : vector<8x64xf32> to vector<8x64xbf16>
    %c0_84 = arith.constant 0 : index
    %c832 = arith.constant 832 : index
    %109 = vector.load %arg14[%c0_84, %c832] : memref<8x1920xbf16, #tpu.memory_space<vmem>>, vector<8x64xbf16>
    tpu.vector_store %arg14[%c0_84, %c832], %108 {strides = array<i32>} : memref<8x1920xbf16, #tpu.memory_space<vmem>>, vector<8x64xbf16>,
    %c28 = arith.constant 28 : index
    %c0_85 = arith.constant 0 : index
    %110 = tpu.strided_load %arg13[%c28, %c0_85] {strides = array<i32: 64, 1>} : memref<512x64xf32, #tpu.memory_space<vmem>>, vector<8x64xf32>
    %c29 = arith.constant 29 : index
    %c0_86 = arith.constant 0 : index
    %111 = tpu.strided_load %arg13[%c29, %c0_86] {strides = array<i32: 64, 1>} : memref<512x64xf32, #tpu.memory_space<vmem>>, vector<8x64xf32>
    %112 = arith.maximumf %110, %111 : vector<8x64xf32>
    %113 = arith.truncf %112 : vector<8x64xf32> to vector<8x64xbf16>
    %c0_87 = arith.constant 0 : index
    %c896 = arith.constant 896 : index
    %114 = vector.load %arg14[%c0_87, %c896] : memref<8x1920xbf16, #tpu.memory_space<vmem>>, vector<8x64xbf16>
    tpu.vector_store %arg14[%c0_87, %c896], %113 {strides = array<i32>} : memref<8x1920xbf16, #tpu.memory_space<vmem>>, vector<8x64xbf16>,
    %c30 = arith.constant 30 : index
    %c0_88 = arith.constant 0 : index
    %115 = tpu.strided_load %arg13[%c30, %c0_88] {strides = array<i32: 64, 1>} : memref<512x64xf32, #tpu.memory_space<vmem>>, vector<8x64xf32>
    %c31 = arith.constant 31 : index
    %c0_89 = arith.constant 0 : index
    %116 = tpu.strided_load %arg13[%c31, %c0_89] {strides = array<i32: 64, 1>} : memref<512x64xf32, #tpu.memory_space<vmem>>, vector<8x64xf32>
    %117 = arith.maximumf %115, %116 : vector<8x64xf32>
    %118 = arith.truncf %117 : vector<8x64xf32> to vector<8x64xbf16>
    %c0_90 = arith.constant 0 : index
    %c960 = arith.constant 960 : index
    %119 = vector.load %arg14[%c0_90, %c960] : memref<8x1920xbf16, #tpu.memory_space<vmem>>, vector<8x64xbf16>
    tpu.vector_store %arg14[%c0_90, %c960], %118 {strides = array<i32>} : memref<8x1920xbf16, #tpu.memory_space<vmem>>, vector<8x64xbf16>,
    %c32 = arith.constant 32 : index
    %c0_91 = arith.constant 0 : index
    %120 = tpu.strided_load %arg13[%c32, %c0_91] {strides = array<i32: 64, 1>} : memref<512x64xf32, #tpu.memory_space<vmem>>, vector<8x64xf32>
    %c33 = arith.constant 33 : index
    %c0_92 = arith.constant 0 : index
    %121 = tpu.strided_load %arg13[%c33, %c0_92] {strides = array<i32: 64, 1>} : memref<512x64xf32, #tpu.memory_space<vmem>>, vector<8x64xf32>
    %122 = arith.maximumf %120, %121 : vector<8x64xf32>
    %123 = arith.truncf %122 : vector<8x64xf32> to vector<8x64xbf16>
    %c0_93 = arith.constant 0 : index
    %c1024 = arith.constant 1024 : index
    %124 = vector.load %arg14[%c0_93, %c1024] : memref<8x1920xbf16, #tpu.memory_space<vmem>>, vector<8x64xbf16>
    tpu.vector_store %arg14[%c0_93, %c1024], %123 {strides = array<i32>} : memref<8x1920xbf16, #tpu.memory_space<vmem>>, vector<8x64xbf16>,
    %c34 = arith.constant 34 : index
    %c0_94 = arith.constant 0 : index
    %125 = tpu.strided_load %arg13[%c34, %c0_94] {strides = array<i32: 64, 1>} : memref<512x64xf32, #tpu.memory_space<vmem>>, vector<8x64xf32>
    %c35 = arith.constant 35 : index
    %c0_95 = arith.constant 0 : index
    %126 = tpu.strided_load %arg13[%c35, %c0_95] {strides = array<i32: 64, 1>} : memref<512x64xf32, #tpu.memory_space<vmem>>, vector<8x64xf32>
    %127 = arith.maximumf %125, %126 : vector<8x64xf32>
    %128 = arith.truncf %127 : vector<8x64xf32> to vector<8x64xbf16>
    %c0_96 = arith.constant 0 : index
    %c1088 = arith.constant 1088 : index
    %129 = vector.load %arg14[%c0_96, %c1088] : memref<8x1920xbf16, #tpu.memory_space<vmem>>, vector<8x64xbf16>
    tpu.vector_store %arg14[%c0_96, %c1088], %128 {strides = array<i32>} : memref<8x1920xbf16, #tpu.memory_space<vmem>>, vector<8x64xbf16>,
    %c36 = arith.constant 36 : index
    %c0_97 = arith.constant 0 : index
    %130 = tpu.strided_load %arg13[%c36, %c0_97] {strides = array<i32: 64, 1>} : memref<512x64xf32, #tpu.memory_space<vmem>>, vector<8x64xf32>
    %c37 = arith.constant 37 : index
    %c0_98 = arith.constant 0 : index
    %131 = tpu.strided_load %arg13[%c37, %c0_98] {strides = array<i32: 64, 1>} : memref<512x64xf32, #tpu.memory_space<vmem>>, vector<8x64xf32>
    %132 = arith.maximumf %130, %131 : vector<8x64xf32>
    %133 = arith.truncf %132 : vector<8x64xf32> to vector<8x64xbf16>
    %c0_99 = arith.constant 0 : index
    %c1152 = arith.constant 1152 : index
    %134 = vector.load %arg14[%c0_99, %c1152] : memref<8x1920xbf16, #tpu.memory_space<vmem>>, vector<8x64xbf16>
    tpu.vector_store %arg14[%c0_99, %c1152], %133 {strides = array<i32>} : memref<8x1920xbf16, #tpu.memory_space<vmem>>, vector<8x64xbf16>,
    %c38 = arith.constant 38 : index
    %c0_100 = arith.constant 0 : index
    %135 = tpu.strided_load %arg13[%c38, %c0_100] {strides = array<i32: 64, 1>} : memref<512x64xf32, #tpu.memory_space<vmem>>, vector<8x64xf32>
    %c39 = arith.constant 39 : index
    %c0_101 = arith.constant 0 : index
    %136 = tpu.strided_load %arg13[%c39, %c0_101] {strides = array<i32: 64, 1>} : memref<512x64xf32, #tpu.memory_space<vmem>>, vector<8x64xf32>
    %137 = arith.maximumf %135, %136 : vector<8x64xf32>
    %138 = arith.truncf %137 : vector<8x64xf32> to vector<8x64xbf16>
    %c0_102 = arith.constant 0 : index
    %c1216 = arith.constant 1216 : index
    %139 = vector.load %arg14[%c0_102, %c1216] : memref<8x1920xbf16, #tpu.memory_space<vmem>>, vector<8x64xbf16>
    tpu.vector_store %arg14[%c0_102, %c1216], %138 {strides = array<i32>} : memref<8x1920xbf16, #tpu.memory_space<vmem>>, vector<8x64xbf16>,
    %c40 = arith.constant 40 : index
    %c0_103 = arith.constant 0 : index
    %140 = tpu.strided_load %arg13[%c40, %c0_103] {strides = array<i32: 64, 1>} : memref<512x64xf32, #tpu.memory_space<vmem>>, vector<8x64xf32>
    %c41 = arith.constant 41 : index
    %c0_104 = arith.constant 0 : index
    %141 = tpu.strided_load %arg13[%c41, %c0_104] {strides = array<i32: 64, 1>} : memref<512x64xf32, #tpu.memory_space<vmem>>, vector<8x64xf32>
    %142 = arith.maximumf %140, %141 : vector<8x64xf32>
    %143 = arith.truncf %142 : vector<8x64xf32> to vector<8x64xbf16>
    %c0_105 = arith.constant 0 : index
    %c1280 = arith.constant 1280 : index
    %144 = vector.load %arg14[%c0_105, %c1280] : memref<8x1920xbf16, #tpu.memory_space<vmem>>, vector<8x64xbf16>
    tpu.vector_store %arg14[%c0_105, %c1280], %143 {strides = array<i32>} : memref<8x1920xbf16, #tpu.memory_space<vmem>>, vector<8x64xbf16>,
    %c42 = arith.constant 42 : index
    %c0_106 = arith.constant 0 : index
    %145 = tpu.strided_load %arg13[%c42, %c0_106] {strides = array<i32: 64, 1>} : memref<512x64xf32, #tpu.memory_space<vmem>>, vector<8x64xf32>
    %c43 = arith.constant 43 : index
    %c0_107 = arith.constant 0 : index
    %146 = tpu.strided_load %arg13[%c43, %c0_107] {strides = array<i32: 64, 1>} : memref<512x64xf32, #tpu.memory_space<vmem>>, vector<8x64xf32>
    %147 = arith.maximumf %145, %146 : vector<8x64xf32>
    %148 = arith.truncf %147 : vector<8x64xf32> to vector<8x64xbf16>
    %c0_108 = arith.constant 0 : index
    %c1344 = arith.constant 1344 : index
    %149 = vector.load %arg14[%c0_108, %c1344] : memref<8x1920xbf16, #tpu.memory_space<vmem>>, vector<8x64xbf16>
    tpu.vector_store %arg14[%c0_108, %c1344], %148 {strides = array<i32>} : memref<8x1920xbf16, #tpu.memory_space<vmem>>, vector<8x64xbf16>,
    %c44 = arith.constant 44 : index
    %c0_109 = arith.constant 0 : index
    %150 = tpu.strided_load %arg13[%c44, %c0_109] {strides = array<i32: 64, 1>} : memref<512x64xf32, #tpu.memory_space<vmem>>, vector<8x64xf32>
    %c45 = arith.constant 45 : index
    %c0_110 = arith.constant 0 : index
    %151 = tpu.strided_load %arg13[%c45, %c0_110] {strides = array<i32: 64, 1>} : memref<512x64xf32, #tpu.memory_space<vmem>>, vector<8x64xf32>
    %152 = arith.maximumf %150, %151 : vector<8x64xf32>
    %153 = arith.truncf %152 : vector<8x64xf32> to vector<8x64xbf16>
    %c0_111 = arith.constant 0 : index
    %c1408 = arith.constant 1408 : index
    %154 = vector.load %arg14[%c0_111, %c1408] : memref<8x1920xbf16, #tpu.memory_space<vmem>>, vector<8x64xbf16>
    tpu.vector_store %arg14[%c0_111, %c1408], %153 {strides = array<i32>} : memref<8x1920xbf16, #tpu.memory_space<vmem>>, vector<8x64xbf16>,
    %c46 = arith.constant 46 : index
    %c0_112 = arith.constant 0 : index
    %155 = tpu.strided_load %arg13[%c46, %c0_112] {strides = array<i32: 64, 1>} : memref<512x64xf32, #tpu.memory_space<vmem>>, vector<8x64xf32>
    %c47 = arith.constant 47 : index
    %c0_113 = arith.constant 0 : index
    %156 = tpu.strided_load %arg13[%c47, %c0_113] {strides = array<i32: 64, 1>} : memref<512x64xf32, #tpu.memory_space<vmem>>, vector<8x64xf32>
    %157 = arith.maximumf %155, %156 : vector<8x64xf32>
    %158 = arith.truncf %157 : vector<8x64xf32> to vector<8x64xbf16>
    %c0_114 = arith.constant 0 : index
    %c1472 = arith.constant 1472 : index
    %159 = vector.load %arg14[%c0_114, %c1472] : memref<8x1920xbf16, #tpu.memory_space<vmem>>, vector<8x64xbf16>
    tpu.vector_store %arg14[%c0_114, %c1472], %158 {strides = array<i32>} : memref<8x1920xbf16, #tpu.memory_space<vmem>>, vector<8x64xbf16>,
    %c48 = arith.constant 48 : index
    %c0_115 = arith.constant 0 : index
    %160 = tpu.strided_load %arg13[%c48, %c0_115] {strides = array<i32: 64, 1>} : memref<512x64xf32, #tpu.memory_space<vmem>>, vector<8x64xf32>
    %c49 = arith.constant 49 : index
    %c0_116 = arith.constant 0 : index
    %161 = tpu.strided_load %arg13[%c49, %c0_116] {strides = array<i32: 64, 1>} : memref<512x64xf32, #tpu.memory_space<vmem>>, vector<8x64xf32>
    %162 = arith.maximumf %160, %161 : vector<8x64xf32>
    %163 = arith.truncf %162 : vector<8x64xf32> to vector<8x64xbf16>
    %c0_117 = arith.constant 0 : index
    %c1536 = arith.constant 1536 : index
    %164 = vector.load %arg14[%c0_117, %c1536] : memref<8x1920xbf16, #tpu.memory_space<vmem>>, vector<8x64xbf16>
    tpu.vector_store %arg14[%c0_117, %c1536], %163 {strides = array<i32>} : memref<8x1920xbf16, #tpu.memory_space<vmem>>, vector<8x64xbf16>,
    %c50 = arith.constant 50 : index
    %c0_118 = arith.constant 0 : index
    %165 = tpu.strided_load %arg13[%c50, %c0_118] {strides = array<i32: 64, 1>} : memref<512x64xf32, #tpu.memory_space<vmem>>, vector<8x64xf32>
    %c51 = arith.constant 51 : index
    %c0_119 = arith.constant 0 : index
    %166 = tpu.strided_load %arg13[%c51, %c0_119] {strides = array<i32: 64, 1>} : memref<512x64xf32, #tpu.memory_space<vmem>>, vector<8x64xf32>
    %167 = arith.maximumf %165, %166 : vector<8x64xf32>
    %168 = arith.truncf %167 : vector<8x64xf32> to vector<8x64xbf16>
    %c0_120 = arith.constant 0 : index
    %c1600 = arith.constant 1600 : index
    %169 = vector.load %arg14[%c0_120, %c1600] : memref<8x1920xbf16, #tpu.memory_space<vmem>>, vector<8x64xbf16>
    tpu.vector_store %arg14[%c0_120, %c1600], %168 {strides = array<i32>} : memref<8x1920xbf16, #tpu.memory_space<vmem>>, vector<8x64xbf16>,
    %c52 = arith.constant 52 : index
    %c0_121 = arith.constant 0 : index
    %170 = tpu.strided_load %arg13[%c52, %c0_121] {strides = array<i32: 64, 1>} : memref<512x64xf32, #tpu.memory_space<vmem>>, vector<8x64xf32>
    %c53 = arith.constant 53 : index
    %c0_122 = arith.constant 0 : index
    %171 = tpu.strided_load %arg13[%c53, %c0_122] {strides = array<i32: 64, 1>} : memref<512x64xf32, #tpu.memory_space<vmem>>, vector<8x64xf32>
    %172 = arith.maximumf %170, %171 : vector<8x64xf32>
    %173 = arith.truncf %172 : vector<8x64xf32> to vector<8x64xbf16>
    %c0_123 = arith.constant 0 : index
    %c1664 = arith.constant 1664 : index
    %174 = vector.load %arg14[%c0_123, %c1664] : memref<8x1920xbf16, #tpu.memory_space<vmem>>, vector<8x64xbf16>
    tpu.vector_store %arg14[%c0_123, %c1664], %173 {strides = array<i32>} : memref<8x1920xbf16, #tpu.memory_space<vmem>>, vector<8x64xbf16>,
    %c54 = arith.constant 54 : index
    %c0_124 = arith.constant 0 : index
    %175 = tpu.strided_load %arg13[%c54, %c0_124] {strides = array<i32: 64, 1>} : memref<512x64xf32, #tpu.memory_space<vmem>>, vector<8x64xf32>
    %c55 = arith.constant 55 : index
    %c0_125 = arith.constant 0 : index
    %176 = tpu.strided_load %arg13[%c55, %c0_125] {strides = array<i32: 64, 1>} : memref<512x64xf32, #tpu.memory_space<vmem>>, vector<8x64xf32>
    %177 = arith.maximumf %175, %176 : vector<8x64xf32>
    %178 = arith.truncf %177 : vector<8x64xf32> to vector<8x64xbf16>
    %c0_126 = arith.constant 0 : index
    %c1728 = arith.constant 1728 : index
    %179 = vector.load %arg14[%c0_126, %c1728] : memref<8x1920xbf16, #tpu.memory_space<vmem>>, vector<8x64xbf16>
    tpu.vector_store %arg14[%c0_126, %c1728], %178 {strides = array<i32>} : memref<8x1920xbf16, #tpu.memory_space<vmem>>, vector<8x64xbf16>,
    %c56 = arith.constant 56 : index
    %c0_127 = arith.constant 0 : index
    %180 = tpu.strided_load %arg13[%c56, %c0_127] {strides = array<i32: 64, 1>} : memref<512x64xf32, #tpu.memory_space<vmem>>, vector<8x64xf32>
    %c57 = arith.constant 57 : index
    %c0_128 = arith.constant 0 : index
    %181 = tpu.strided_load %arg13[%c57, %c0_128] {strides = array<i32: 64, 1>} : memref<512x64xf32, #tpu.memory_space<vmem>>, vector<8x64xf32>
    %182 = arith.maximumf %180, %181 : vector<8x64xf32>
    %183 = arith.truncf %182 : vector<8x64xf32> to vector<8x64xbf16>
    %c0_129 = arith.constant 0 : index
    %c1792 = arith.constant 1792 : index
    %184 = vector.load %arg14[%c0_129, %c1792] : memref<8x1920xbf16, #tpu.memory_space<vmem>>, vector<8x64xbf16>
    tpu.vector_store %arg14[%c0_129, %c1792], %183 {strides = array<i32>} : memref<8x1920xbf16, #tpu.memory_space<vmem>>, vector<8x64xbf16>,
    %c58 = arith.constant 58 : index
    %c0_130 = arith.constant 0 : index
    %185 = tpu.strided_load %arg13[%c58, %c0_130] {strides = array<i32: 64, 1>} : memref<512x64xf32, #tpu.memory_space<vmem>>, vector<8x64xf32>
    %c59 = arith.constant 59 : index
    %c0_131 = arith.constant 0 : index
    %186 = tpu.strided_load %arg13[%c59, %c0_131] {strides = array<i32: 64, 1>} : memref<512x64xf32, #tpu.memory_space<vmem>>, vector<8x64xf32>
    %187 = arith.maximumf %185, %186 : vector<8x64xf32>
    %188 = arith.truncf %187 : vector<8x64xf32> to vector<8x64xbf16>
    %c0_132 = arith.constant 0 : index
    %c1856 = arith.constant 1856 : index
    %189 = vector.load %arg14[%c0_132, %c1856] : memref<8x1920xbf16, #tpu.memory_space<vmem>>, vector<8x64xbf16>
    tpu.vector_store %arg14[%c0_132, %c1856], %188 {strides = array<i32>} : memref<8x1920xbf16, #tpu.memory_space<vmem>>, vector<8x64xbf16>,
    %c0_133 = arith.constant 0 : index
    %c0_134 = arith.constant 0 : index
    %190 = vector.load %arg14[%c0_133, %c0_134] : memref<8x1920xbf16, #tpu.memory_space<vmem>>, vector<8x1920xbf16>
    %c0_135 = arith.constant 0 : index
    %c0_136 = arith.constant 0 : index
    %191 = vector.load %arg6[%c0_135, %c0_136] : memref<1920x128xbf16, #tpu.memory_space<vmem>>, vector<1920x128xbf16>
    %cst_137 = arith.constant dense<0.000000e+00> : vector<8x128xf32>
    %192 = tpu.matmul %190, %191, %cst_137 {dimension_numbers = #tpu.dot_dimension_numbers<[1], [0], [0], [1], [0, 0, 1, 1], [], []>} : vector<8x1920xbf16>, vector<1920x128xbf16>, vector<8x128xf32> -> vector<8x128xf32>
    %c0_138 = arith.constant 0 : index
    %c0_139 = arith.constant 0 : index
    %193 = vector.load %arg7[%c0_138, %c0_139] : memref<1x128xf32, #tpu.memory_space<vmem>>, vector<1x128xf32>
    %194 = vector.broadcast %193 : vector<1x128xf32> to vector<8x128xf32>
    %195 = arith.addf %192, %194 : vector<8x128xf32>
    %cst_140 = arith.constant 0.000000e+00 : f32
    %196 = vector.broadcast %cst_140 : f32 to vector<8x128xf32>
    %197 = arith.maximumf %195, %196 : vector<8x128xf32>
    %c0_141 = arith.constant 0 : index
    %c0_142 = arith.constant 0 : index
    %198 = vector.load %arg8[%c0_141, %c0_142] : memref<1x128xf32, #tpu.memory_space<vmem>>, vector<1x128xf32>
    %199 = vector.broadcast %198 : vector<1x128xf32> to vector<8x128xf32>
    %200 = arith.mulf %197, %199 : vector<8x128xf32>
    %cst_143 = arith.constant dense<0.000000e+00> : vector<8xf32>
    %201 = vector.multi_reduction <add>, %200, %cst_143 [1] : vector<8x128xf32> to vector<8xf32>
    %202 = vector.shape_cast %201 : vector<8xf32> to vector<8x1xf32>
    %c0_144 = arith.constant 0 : index
    %c0_145 = arith.constant 0 : index
    %203 = vector.load %arg9[%c0_144, %c0_145] : memref<1x1xf32, #tpu.memory_space<vmem>>, vector<1x1xf32>
    %204 = vector.broadcast %203 : vector<1x1xf32> to vector<8x1xf32>
    %205 = arith.addf %202, %204 : vector<8x1xf32>
    %c0_146 = arith.constant 0 : index
    %c0_147 = arith.constant 0 : index
    %206 = vector.load %arg10[%c0_146, %c0_147] : memref<8x1xf32, #tpu.memory_space<vmem>>, vector<8x1xf32>
    tpu.vector_store %arg10[%c0_146, %c0_147], %205 {strides = array<i32>} : memref<8x1xf32, #tpu.memory_space<vmem>>, vector<8x1xf32>,
    return
  }
  func.func @transform_0(%arg0: i32) -> (i32, i32) {
    %c0_i32 = arith.constant 0 : i32
    %c0_i32_0 = arith.constant 0 : i32
    return %arg0, %c0_i32 : i32, i32
  }
  func.func @transform_1(%arg0: i32) -> (i32, i32) {
    %c0_i32 = arith.constant 0 : i32
    %c0_i32_0 = arith.constant 0 : i32
    %c0_i32_1 = arith.constant 0 : i32
    return %c0_i32, %c0_i32_0 : i32, i32
  }
  func.func @transform_2(%arg0: i32) -> (i32, i32) {
    %c0_i32 = arith.constant 0 : i32
    %c0_i32_0 = arith.constant 0 : i32
    %c0_i32_1 = arith.constant 0 : i32
    return %c0_i32, %c0_i32_0 : i32, i32
  }
  func.func @transform_3(%arg0: i32) -> (i32, i32, i32) {
    %c0_i32 = arith.constant 0 : i32
    %c0_i32_0 = arith.constant 0 : i32
    %c0_i32_1 = arith.constant 0 : i32
    %c0_i32_2 = arith.constant 0 : i32
    return %c0_i32, %c0_i32_0, %c0_i32_1 : i32, i32, i32
  }
  func.func @transform_4(%arg0: i32) -> (i32, i32) {
    %c0_i32 = arith.constant 0 : i32
    %c0_i32_0 = arith.constant 0 : i32
    %c0_i32_1 = arith.constant 0 : i32
    return %c0_i32, %c0_i32_0 : i32, i32
  }
  func.func @transform_5(%arg0: i32) -> (i32, i32) {
    %c0_i32 = arith.constant 0 : i32
    %c0_i32_0 = arith.constant 0 : i32
    %c0_i32_1 = arith.constant 0 : i32
    return %c0_i32, %c0_i32_0 : i32, i32
  }
  func.func @transform_6(%arg0: i32) -> (i32, i32) {
    %c0_i32 = arith.constant 0 : i32
    %c0_i32_0 = arith.constant 0 : i32
    %c0_i32_1 = arith.constant 0 : i32
    return %c0_i32, %c0_i32_0 : i32, i32
  }
  func.func @transform_7(%arg0: i32) -> (i32, i32) {
    %c0_i32 = arith.constant 0 : i32
    %c0_i32_0 = arith.constant 0 : i32
    %c0_i32_1 = arith.constant 0 : i32
    return %c0_i32, %c0_i32_0 : i32, i32
  }
  func.func @transform_8(%arg0: i32) -> (i32, i32) {
    %c0_i32 = arith.constant 0 : i32
    %c0_i32_0 = arith.constant 0 : i32
    %c0_i32_1 = arith.constant 0 : i32
    return %c0_i32, %c0_i32_0 : i32, i32
  }
  func.func @transform_9(%arg0: i32) -> (i32, i32) {
    %c0_i32 = arith.constant 0 : i32
    %c0_i32_0 = arith.constant 0 : i32
    return %arg0, %c0_i32 : i32, i32
  }
}

</mosaic_0001>

<llo_original>
// kernel: tpu_custom_call.1
$region0: #{tpu_custom_call.1}
  #allocation0 [shape = 'u32[]', space=smem, size = 0x4, offset = 0x4, fixed_abs, tag = 'smem constant byte address 0x4 - core index']
  #allocation1 [shape = 'u32[144,128]{1,0:T(1,128)}', space=vmem, size = 0x12000, scoped, tag = 'internal scratch']
  #allocation2 [shape = 'f32[1024,32]{1,0:T(8,128)}', space=vmem, size = 0x80000, scoped, tag = 'scratch operand']
  #allocation3 [shape = 'f32[520,32]{1,0:T(8,128)}', space=vmem, size = 0x41000, scoped, tag = 'scratch operand']
  #allocation4 [shape = 'f32[512,64]{1,0:T(8,128)}', space=vmem, size = 0x40000, scoped, tag = 'scratch operand']
  #allocation5 [shape = 'bf16[8,1920]{1,0:T(8,128)(2,1)}', space=vmem, size = 0x7800, scoped, tag = 'scratch operand']
  #allocation6 [shape = 'f32[1,1]{1,0:T(1,128)S(1)}', space=vmem, size = 0x200, scoped, tag = 'scoped memory for tpu_custom_call.1']
  %s0 = inlined_call_operand.vmem [shape: bf16[2048,36], index: 0, kind: input, shape index: {}]
  %s1 = inlined_call_operand.vmem [shape: bf16[36,32], index: 1, kind: input, shape index: {}]
  %s2 = inlined_call_operand.vmem [shape: f32[1,32], index: 2, kind: input, shape index: {}]
  %s3 = inlined_call_operand.vmem [shape: bf16[3,32,64], index: 3, kind: input, shape index: {}]
  %s4 = inlined_call_operand.vmem [shape: f32[1,64], index: 4, kind: input, shape index: {}]
  %s5 = inlined_call_operand.vmem [shape: bf16[1920,128], index: 5, kind: input, shape index: {}]
  %s6 = inlined_call_operand.vmem [shape: f32[1,128], index: 6, kind: input, shape index: {}]
  %s7 = inlined_call_operand.vmem [shape: f32[1,128], index: 7, kind: input, shape index: {}]
  %s8 = inlined_call_operand.<no memory space> [shape: f32[1,1], index: 8, kind: input, shape index: {}]
  %s9 = inlined_call_operand.vmem [shape: f32[16,1], index: 9, kind: output, shape index: {}]
  %s10 = sld [smem:[#allocation0]]
  $region69: #{tpu_custom_call.1} parent=0
    _
  %s12 = ssub.s32 1, %s10
  %s13 = scalar_select 0, %s12, %s10
  %v14 = vstv %s8
  %15 = vst [vmem:[#allocation6] sm:$0x1] %v14
  loop: start=0, step=1, limit=4
  $region2: #{tpu_custom_call.1} parent=0 // loop_pre_header
    _
  $region3: #{tpu_custom_call.1} parent=0 // loop_header
    %s17 = sphi 0, %s21
    %p18 = scmp.ge.s32.totalorder %s17, 4
    %s27 = sphi 0, %s29
    %s30 = sphi 0, %s27
    %s31 = sphi 0, %s30
    %s47 = sphi 0, %s31
    %s51 = sphi 0, %s51
    %s53 = sphi 0, %s51
    %s54 = sphi 0, %s53
    %s68 = sphi 0, %s54
    %s72 = sphi 0, %s72
    %s74 = sphi 0, %s72
    %s75 = sphi 0, %s74
    %s89 = sphi 0, %s75
    %s93 = sphi 0, %s93
    %s95 = sphi 0, %s93
    %s96 = sphi 0, %s95
    %s110 = sphi 0, %s96
    %s114 = sphi 0, %s114
    %s116 = sphi 0, %s114
    %s117 = sphi 0, %s116
    %s131 = sphi 0, %s117
    %s135 = sphi 0, %s135
    %s137 = sphi 0, %s135
    %s138 = sphi 0, %s137
    %s152 = sphi 0, %s138
    %s156 = sphi 0, %s156
    %s158 = sphi 0, %s156
    %s159 = sphi 0, %s158
    %s173 = sphi 0, %s159
    %s177 = sphi 0, %s177
    %s179 = sphi 0, %s177
    %s180 = sphi 0, %s179
    %s194 = sphi 0, %s180
    %s198 = sphi 0, %s198
    %s200 = sphi 0, %s198
    %s201 = sphi 0, %s200
    %s215 = sphi 0, %s201
    %s221 = sphi 0, %s223
    %s224 = sphi 0, %s221
    %s225 = sphi 0, %s224
    %s241 = sphi 0, %s225
  $region4: #{tpu_custom_call.1} parent=0 // loop_header_branch
    %20 = sbr.rel (%p18) target = $region8
  $region5: #{tpu_custom_call.1} parent=0 // loop_body
    %s22 = ssub.s32 %s17, 1
    %s23 = ssub.s32 %s17, 2
    %s24 = sadd.s32 %s17, 1
    %s25 = ssub.s32 %s17, %s24
    %p26 = scmp.eq.s32.totalorder %s25, 0
    %s28 = sadd.s32 %s27, 1
    %s29 = scalar_select %p26, %s27, %s28
    %p32 = pneg %p26
    %p33 = scmp.eq.s32.totalorder %s17, 1
    %p34 = por %p32, %p33
    %p35 = scmp.ne.s32.totalorder %s27, %s30
    %p36 = scmp.eq.s32.totalorder %s17, 0
    %p37 = por %p35, %p36
    %p38 = scmp.ne.s32.totalorder %s27, %s30
    %p39 = scmp.eq.s32.totalorder %s22, 1
    %p40 = por %p38, %p39
    %p41 = scmp.ne.s32.totalorder %s30, %s31
    %p42 = scmp.eq.s32.totalorder %s22, 0
    %p43 = por %p41, %p42
    %p44 = scmp.ne.s32.totalorder %s30, %s31
    %p45 = scmp.eq.s32.totalorder %s23, 1
    %p46 = por %p44, %p45
    %p48 = scmp.ne.s32.totalorder %s31, %s47
    %p49 = scmp.eq.s32.totalorder %s23, 0
    %p50 = por %p48, %p49
    %s52 = sadd.s32 %s51, 1
    %p55 = scmp.eq.s32.totalorder %s17, 1
    %p56 = scmp.ne.s32.totalorder %s51, %s53
    %p57 = scmp.eq.s32.totalorder %s17, 0
    %p58 = por %p56, %p57
    %p59 = scmp.ne.s32.totalorder %s51, %s53
    %p60 = scmp.eq.s32.totalorder %s22, 1
    %p61 = por %p59, %p60
    %p62 = scmp.ne.s32.totalorder %s53, %s54
    %p63 = scmp.eq.s32.totalorder %s22, 0
    %p64 = por %p62, %p63
    %p65 = scmp.ne.s32.totalorder %s53, %s54
    %p66 = scmp.eq.s32.totalorder %s23, 1
    %p67 = por %p65, %p66
    %p69 = scmp.ne.s32.totalorder %s54, %s68
    %p70 = scmp.eq.s32.totalorder %s23, 0
    %p71 = por %p69, %p70
    %s73 = sadd.s32 %s72, 1
    %p76 = scmp.eq.s32.totalorder %s17, 1
    %p77 = scmp.ne.s32.totalorder %s72, %s74
    %p78 = scmp.eq.s32.totalorder %s17, 0
    %p79 = por %p77, %p78
    %p80 = scmp.ne.s32.totalorder %s72, %s74
    %p81 = scmp.eq.s32.totalorder %s22, 1
    %p82 = por %p80, %p81
    %p83 = scmp.ne.s32.totalorder %s74, %s75
    %p84 = scmp.eq.s32.totalorder %s22, 0
    %p85 = por %p83, %p84
    %p86 = scmp.ne.s32.totalorder %s74, %s75
    %p87 = scmp.eq.s32.totalorder %s23, 1
    %p88 = por %p86, %p87
    %p90 = scmp.ne.s32.totalorder %s75, %s89
    %p91 = scmp.eq.s32.totalorder %s23, 0
    %p92 = por %p90, %p91
    %s94 = sadd.s32 %s93, 1
    %p97 = scmp.eq.s32.totalorder %s17, 1
    %p98 = scmp.ne.s32.totalorder %s93, %s95
    %p99 = scmp.eq.s32.totalorder %s17, 0
    %p100 = por %p98, %p99
    %p101 = scmp.ne.s32.totalorder %s93, %s95
    %p102 = scmp.eq.s32.totalorder %s22, 1
    %p103 = por %p101, %p102
    %p104 = scmp.ne.s32.totalorder %s95, %s96
    %p105 = scmp.eq.s32.totalorder %s22, 0
    %p106 = por %p104, %p105
    %p107 = scmp.ne.s32.totalorder %s95, %s96
    %p108 = scmp.eq.s32.totalorder %s23, 1
    %p109 = por %p107, %p108
    %p111 = scmp.ne.s32.totalorder %s96, %s110
    %p112 = scmp.eq.s32.totalorder %s23, 0
    %p113 = por %p111, %p112
    %s115 = sadd.s32 %s114, 1
    %p118 = scmp.eq.s32.totalorder %s17, 1
    %p119 = scmp.ne.s32.totalorder %s114, %s116
    %p120 = scmp.eq.s32.totalorder %s17, 0
    %p121 = por %p119, %p120
    %p122 = scmp.ne.s32.totalorder %s114, %s116
    %p123 = scmp.eq.s32.totalorder %s22, 1
    %p124 = por %p122, %p123
    %p125 = scmp.ne.s32.totalorder %s116, %s117
    %p126 = scmp.eq.s32.totalorder %s22, 0
    %p127 = por %p125, %p126
    %p128 = scmp.ne.s32.totalorder %s116, %s117
    %p129 = scmp.eq.s32.totalorder %s23, 1
    %p130 = por %p128, %p129
    %p132 = scmp.ne.s32.totalorder %s117, %s131
    %p133 = scmp.eq.s32.totalorder %s23, 0
    %p134 = por %p132, %p133
    %s136 = sadd.s32 %s135, 1
    %p139 = scmp.eq.s32.totalorder %s17, 1
    %p140 = scmp.ne.s32.totalorder %s135, %s137
    %p141 = scmp.eq.s32.totalorder %s17, 0
    %p142 = por %p140, %p141
    %p143 = scmp.ne.s32.totalorder %s135, %s137
    %p144 = scmp.eq.s32.totalorder %s22, 1
    %p145 = por %p143, %p144
    %p146 = scmp.ne.s32.totalorder %s137, %s138
    %p147 = scmp.eq.s32.totalorder %s22, 0
    %p148 = por %p146, %p147
    %p149 = scmp.ne.s32.totalorder %s137, %s138
    %p150 = scmp.eq.s32.totalorder %s23, 1
    %p151 = por %p149, %p150
    %p153 = scmp.ne.s32.totalorder %s138, %s152
    %p154 = scmp.eq.s32.totalorder %s23, 0
    %p155 = por %p153, %p154
    %s157 = sadd.s32 %s156, 1
    %p160 = scmp.eq.s32.totalorder %s17, 1
    %p161 = scmp.ne.s32.totalorder %s156, %s158
    %p162 = scmp.eq.s32.totalorder %s17, 0
    %p163 = por %p161, %p162
    %p164 = scmp.ne.s32.totalorder %s156, %s158
    %p165 = scmp.eq.s32.totalorder %s22, 1
    %p166 = por %p164, %p165
    %p167 = scmp.ne.s32.totalorder %s158, %s159
    %p168 = scmp.eq.s32.totalorder %s22, 0
    %p169 = por %p167, %p168
    %p170 = scmp.ne.s32.totalorder %s158, %s159
    %p171 = scmp.eq.s32.totalorder %s23, 1
    %p172 = por %p170, %p171
    %p174 = scmp.ne.s32.totalorder %s159, %s173
    %p175 = scmp.eq.s32.totalorder %s23, 0
    %p176 = por %p174, %p175
    %s178 = sadd.s32 %s177, 1
    %p181 = scmp.eq.s32.totalorder %s17, 1
    %p182 = scmp.ne.s32.totalorder %s177, %s179
    %p183 = scmp.eq.s32.totalorder %s17, 0
    %p184 = por %p182, %p183
    %p185 = scmp.ne.s32.totalorder %s177, %s179
    %p186 = scmp.eq.s32.totalorder %s22, 1
    %p187 = por %p185, %p186
    %p188 = scmp.ne.s32.totalorder %s179, %s180
    %p189 = scmp.eq.s32.totalorder %s22, 0
    %p190 = por %p188, %p189
    %p191 = scmp.ne.s32.totalorder %s179, %s180
    %p192 = scmp.eq.s32.totalorder %s23, 1
    %p193 = por %p191, %p192
    %p195 = scmp.ne.s32.totalorder %s180, %s194
    %p196 = scmp.eq.s32.totalorder %s23, 0
    %p197 = por %p195, %p196
    %s199 = sadd.s32 %s198, 1
    %p202 = scmp.eq.s32.totalorder %s17, 1
    %p203 = scmp.ne.s32.totalorder %s198, %s200
    %p204 = scmp.eq.s32.totalorder %s17, 0
    %p205 = por %p203, %p204
    %p206 = scmp.ne.s32.totalorder %s198, %s200
    %p207 = scmp.eq.s32.totalorder %s22, 1
    %p208 = por %p206, %p207
    %p209 = scmp.ne.s32.totalorder %s200, %s201
    %p210 = scmp.eq.s32.totalorder %s22, 0
    %p211 = por %p209, %p210
    %p212 = scmp.ne.s32.totalorder %s200, %s201
    %p213 = scmp.eq.s32.totalorder %s23, 1
    %p214 = por %p212, %p213
    %p216 = scmp.ne.s32.totalorder %s201, %s215
    %p217 = scmp.eq.s32.totalorder %s23, 0
    %p218 = por %p216, %p217
    %s219 = ssub.s32 %s17, %s24
    %p220 = scmp.eq.s32.totalorder %s219, 0
    %s222 = sadd.s32 %s221, 1
    %s223 = scalar_select %p220, %s221, %s222
    %p226 = pneg %p220
    %p227 = scmp.eq.s32.totalorder %s17, 1
    %p228 = por %p226, %p227
    %p229 = scmp.ne.s32.totalorder %s221, %s224
    %p230 = scmp.eq.s32.totalorder %s17, 0
    %p231 = por %p229, %p230
    %p232 = scmp.ne.s32.totalorder %s221, %s224
    %p233 = scmp.eq.s32.totalorder %s22, 1
    %p234 = por %p232, %p233
    %p235 = scmp.ne.s32.totalorder %s224, %s225
    %p236 = scmp.eq.s32.totalorder %s22, 0
    %p237 = por %p235, %p236
    %p238 = scmp.ne.s32.totalorder %s224, %s225
    %p239 = scmp.eq.s32.totalorder %s23, 1
    %p240 = por %p238, %p239
    %p242 = scmp.ne.s32.totalorder %s225, %s241
    %p243 = scmp.eq.s32.totalorder %s23, 0
    %p244 = por %p242, %p243
    %p245 = scmp.le.s32.totalorder 1, %s17
    %p246 = scmp.lt.s32.totalorder %s17, 3
    %p247 = pnand %p245, %p246
    %p248 = pneg %p247
    // Predicated region
    $region9: #{tpu_custom_call.1} parent=5 // pred_check
      _
    $region10: #{tpu_custom_call.1} parent=5 // pred_check_branch
      %250 = sbr.rel (%p247) target = $region12
    $region11: #{tpu_custom_call.1} parent=5 // pred_region
      %s251 = ssub.s32 %s17, 1
      // Predicated region
      $region13: #{tpu_custom_call.1} parent=11 // pred_check
        %p252 = pneg %p64
      $region14: #{tpu_custom_call.1} parent=11 // pred_check_branch
        %254 = sbr.rel (%p252) target = $region16
      $region15: #{tpu_custom_call.1} parent=11 // pred_region
        _
      $region16: #{tpu_custom_call.1} parent=11 // pred_fallthru
        _
      // Predicated region
      $region17: #{tpu_custom_call.1} parent=11 // pred_check
        %p255 = pneg %p85
      $region18: #{tpu_custom_call.1} parent=11 // pred_check_branch
        %257 = sbr.rel (%p255) target = $region20
      $region19: #{tpu_custom_call.1} parent=11 // pred_region
        _
      $region20: #{tpu_custom_call.1} parent=11 // pred_fallthru
        _
      // Predicated region
      $region21: #{tpu_custom_call.1} parent=11 // pred_check
        %p258 = pneg %p106
      $region22: #{tpu_custom_call.1} parent=11 // pred_check_branch
        %260 = sbr.rel (%p258) target = $region24
      $region23: #{tpu_custom_call.1} parent=11 // pred_region
        _
      $region24: #{tpu_custom_call.1} parent=11 // pred_fallthru
        _
      // Predicated region
      $region25: #{tpu_custom_call.1} parent=11 // pred_check
        %p261 = pneg %p127
      $region26: #{tpu_custom_call.1} parent=11 // pred_check_branch
        %263 = sbr.rel (%p261) target = $region28
      $region27: #{tpu_custom_call.1} parent=11 // pred_region
        _
      $region28: #{tpu_custom_call.1} parent=11 // pred_fallthru
        _
      // Predicated region
      $region29: #{tpu_custom_call.1} parent=11 // pred_check
        %p264 = pneg %p148
      $region30: #{tpu_custom_call.1} parent=11 // pred_check_branch
        %266 = sbr.rel (%p264) target = $region32
      $region31: #{tpu_custom_call.1} parent=11 // pred_region
        _
      $region32: #{tpu_custom_call.1} parent=11 // pred_fallthru
        _
      // Predicated region
      $region33: #{tpu_custom_call.1} parent=11 // pred_check
        %p267 = pneg %p169
      $region34: #{tpu_custom_call.1} parent=11 // pred_check_branch
        %269 = sbr.rel (%p267) target = $region36
      $region35: #{tpu_custom_call.1} parent=11 // pred_region
        _
      $region36: #{tpu_custom_call.1} parent=11 // pred_fallthru
        _
      // Predicated region
      $region37: #{tpu_custom_call.1} parent=11 // pred_check
        %p270 = pneg %p190
      $region38: #{tpu_custom_call.1} parent=11 // pred_check_branch
        %272 = sbr.rel (%p270) target = $region40
      $region39: #{tpu_custom_call.1} parent=11 // pred_region
        _
      $region40: #{tpu_custom_call.1} parent=11 // pred_fallthru
        _
      // Predicated region
      $region41: #{tpu_custom_call.1} parent=11 // pred_check
        %p273 = pneg %p211
      $region42: #{tpu_custom_call.1} parent=11 // pred_check_branch
        %275 = sbr.rel (%p273) target = $region44
      $region43: #{tpu_custom_call.1} parent=11 // pred_region
        _
      $region44: #{tpu_custom_call.1} parent=11 // pred_fallthru
        _
    $region12: #{tpu_custom_call.1} parent=5 // pred_fallthru
      _
    %p276 = scmp.lt.s32.totalorder %s17, 2
    // Predicated region
    $region45: #{tpu_custom_call.1} parent=5 // pred_check
      %p277 = pneg %p276
    $region46: #{tpu_custom_call.1} parent=5 // pred_check_branch
      %279 = sbr.rel (%p277) target = $region48
    $region47: #{tpu_custom_call.1} parent=5 // pred_region
      // Predicated region
      $region49: #{tpu_custom_call.1} parent=47 // pred_check
        %p280 = pneg %p37
      $region50: #{tpu_custom_call.1} parent=47 // pred_check_branch
        %282 = sbr.rel (%p280) target = $region52
      $region51: #{tpu_custom_call.1} parent=47 // pred_region
        %s283 = smul.u32 128, %s17
        %p284 = scmp.lt.s32.totalorder %s283, 255
        %s285 = scalar_select %p284, %s283, 255
        %s286 = smul.addr %s285, 4
        %s287 = scalar_lea.vmem %s0, %s286
        %s288 = smul.u32 128, %s17
      $region52: #{tpu_custom_call.1} parent=47 // pred_fallthru
        _
    $region48: #{tpu_custom_call.1} parent=5 // pred_fallthru
      _
    %p289 = scmp.le.s32.totalorder 1, %s17
    %p290 = scmp.lt.s32.totalorder %s17, 3
    %p291 = pnand %p289, %p290
    %p292 = pneg %p291
    // Predicated region
    $region53: #{tpu_custom_call.1} parent=5 // pred_check
      _
    $region54: #{tpu_custom_call.1} parent=5 // pred_check_branch
      %294 = sbr.rel (%p291) target = $region56
    $region55: #{tpu_custom_call.1} parent=5 // pred_region
      %s295 = ssub.s32 %s17, 1
      %s296 = smul.u32 128, %s22
      %p297 = scmp.lt.s32.totalorder %s296, 255
      %s298 = scalar_select %p297, %s296, 255
      %s299 = smul.addr %s298, 4
      %s300 = scalar_lea.vmem %s0, %s299
      %p301 = pneg %p43
      %p302 = pneg %p40
      %p303 = pneg %p64
      %p304 = pneg %p61
      %p305 = pneg %p85
      %p306 = pneg %p82
      %p307 = pneg %p106
      %p308 = pneg %p103
      %p309 = pneg %p127
      %p310 = pneg %p124
      %p311 = pneg %p148
      %p312 = pneg %p145
      %p313 = pneg %p169
      %p314 = pneg %p166
      %p315 = pneg %p190
      %p316 = pneg %p187
      %p317 = pneg %p211
      %p318 = pneg %p208
      %p319 = pneg %p237
      %p320 = pneg %p234
      %p321 = scmp.lt.s32.totalorder %s22, 1
      %s322 = scalar_select %p321, %s22, 1
      %s323 = smul.addr %s322, 8
      %s324 = scalar_lea.vmem %s9, %s323
      %s325 = smul.u32 128, %s22
      %p326 = scmp.lt.s32.totalorder %s325, 255
      %s327 = scalar_select %p326, %s325, 255
      %s328 = smul.addr %s327, 4
      %s329 = scalar_lea.vmem %s0, %s328
      %s330 = smul.u32 128, %s22
      %p331 = scmp.lt.s32.totalorder %s22, 1
      %s332 = scalar_select %p331, %s22, 1
      %s333 = smul.addr %s332, 8
      %s334 = scalar_lea.vmem %s9, %s333
      %v336 = vld [vmem:[%s329] sm:$0xf]
      %v337 = vld [vmem:[%s329 + $0x4] sm:$0xf]
      %v338 = vld [vmem:[%s329 + $0x8] sm:$0xf]
      %v339 = vld [vmem:[%s329 + $0xc] sm:$0xf]
      %v340 = vld [vmem:[%s329 + $0x10] sm:$0xf]
      %v341 = vld [vmem:[%s329 + $0x14] sm:$0xf]
      %v342 = vld [vmem:[%s329 + $0x18] sm:$0xf]
      %v343 = vld [vmem:[%s329 + $0x1c] sm:$0xf]
      %v344 = vld [vmem:[%s329 + $0x20] sm:$0xf]
      %v345 = vld [vmem:[%s329 + $0x24] sm:$0xf]
      %v346 = vld [vmem:[%s329 + $0x28] sm:$0xf]
      %v347 = vld [vmem:[%s329 + $0x2c] sm:$0xf]
      %v348 = vld [vmem:[%s329 + $0x30] sm:$0xf]
      %v349 = vld [vmem:[%s329 + $0x34] sm:$0xf]
      %v350 = vld [vmem:[%s329 + $0x38] sm:$0xf]
      %v351 = vld [vmem:[%s329 + $0x3c] sm:$0xf]
      %v352 = vld [vmem:[%s329 + $0x40] sm:$0xf]
      %v353 = vld [vmem:[%s329 + $0x44] sm:$0xf]
      %v354 = vld [vmem:[%s329 + $0x48] sm:$0xf]
      %v355 = vld [vmem:[%s329 + $0x4c] sm:$0xf]
      %v356 = vld [vmem:[%s329 + $0x50] sm:$0xf]
      %v357 = vld [vmem:[%s329 + $0x54] sm:$0xf]
      %v358 = vld [vmem:[%s329 + $0x58] sm:$0xf]
      %v359 = vld [vmem:[%s329 + $0x5c] sm:$0xf]
      %v360 = vld [vmem:[%s329 + $0x60] sm:$0xf]
      %v361 = vld [vmem:[%s329 + $0x64] sm:$0xf]
      %v362 = vld [vmem:[%s329 + $0x68] sm:$0xf]
      %v363 = vld [vmem:[%s329 + $0x6c] sm:$0xf]
      %v364 = vld [vmem:[%s329 + $0x70] sm:$0xf]
      %v365 = vld [vmem:[%s329 + $0x74] sm:$0xf]
      %v366 = vld [vmem:[%s329 + $0x78] sm:$0xf]
      %v367 = vld [vmem:[%s329 + $0x7c] sm:$0xf]
      %v368 = vld [vmem:[%s329 + $0x80] sm:$0xf]
      %v369 = vld [vmem:[%s329 + $0x84] sm:$0xf]
      %v370 = vld [vmem:[%s329 + $0x88] sm:$0xf]
      %v371 = vld [vmem:[%s329 + $0x8c] sm:$0xf]
      %v372 = vld [vmem:[%s329 + $0x90] sm:$0xf]
      %v373 = vld [vmem:[%s329 + $0x94] sm:$0xf]
      %v374 = vld [vmem:[%s329 + $0x98] sm:$0xf]
      %v375 = vld [vmem:[%s329 + $0x9c] sm:$0xf]
      %v376 = vld [vmem:[%s329 + $0xa0] sm:$0xf]
      %v377 = vld [vmem:[%s329 + $0xa4] sm:$0xf]
      %v378 = vld [vmem:[%s329 + $0xa8] sm:$0xf]
      %v379 = vld [vmem:[%s329 + $0xac] sm:$0xf]
      %v380 = vld [vmem:[%s329 + $0xb0] sm:$0xf]
      %v381 = vld [vmem:[%s329 + $0xb4] sm:$0xf]
      %v382 = vld [vmem:[%s329 + $0xb8] sm:$0xf]
      %v383 = vld [vmem:[%s329 + $0xbc] sm:$0xf]
      %v384 = vld [vmem:[%s329 + $0xc0] sm:$0xf]
      %v385 = vld [vmem:[%s329 + $0xc4] sm:$0xf]
      %v386 = vld [vmem:[%s329 + $0xc8] sm:$0xf]
      %v387 = vld [vmem:[%s329 + $0xcc] sm:$0xf]
      %v388 = vld [vmem:[%s329 + $0xd0] sm:$0xf]
      %v389 = vld [vmem:[%s329 + $0xd4] sm:$0xf]
      %v390 = vld [vmem:[%s329 + $0xd8] sm:$0xf]
      %v391 = vld [vmem:[%s329 + $0xdc] sm:$0xf]
      %v392 = vld [vmem:[%s329 + $0xe0] sm:$0xf]
      %v393 = vld [vmem:[%s329 + $0xe4] sm:$0xf]
      %v394 = vld [vmem:[%s329 + $0xe8] sm:$0xf]
      %v395 = vld [vmem:[%s329 + $0xec] sm:$0xf]
      %v396 = vld [vmem:[%s329 + $0xf0] sm:$0xf]
      %v397 = vld [vmem:[%s329 + $0xf4] sm:$0xf]
      %v398 = vld [vmem:[%s329 + $0xf8] sm:$0xf]
      %v399 = vld [vmem:[%s329 + $0xfc] sm:$0xf]
      %v400 = vld [vmem:[%s329 + $0x100] sm:$0xf]
      %v401 = vld [vmem:[%s329 + $0x104] sm:$0xf]
      %v402 = vld [vmem:[%s329 + $0x108] sm:$0xf]
      %v403 = vld [vmem:[%s329 + $0x10c] sm:$0xf]
      %v404 = vld [vmem:[%s329 + $0x110] sm:$0xf]
      %v405 = vld [vmem:[%s329 + $0x114] sm:$0xf]
      %v406 = vld [vmem:[%s329 + $0x118] sm:$0xf]
      %v407 = vld [vmem:[%s329 + $0x11c] sm:$0xf]
      %v408 = vld [vmem:[%s329 + $0x120] sm:$0xf]
      %v409 = vld [vmem:[%s329 + $0x124] sm:$0xf]
      %v410 = vld [vmem:[%s329 + $0x128] sm:$0xf]
      %v411 = vld [vmem:[%s329 + $0x12c] sm:$0xf]
      %v412 = vld [vmem:[%s329 + $0x130] sm:$0xf]
      %v413 = vld [vmem:[%s329 + $0x134] sm:$0xf]
      %v414 = vld [vmem:[%s329 + $0x138] sm:$0xf]
      %v415 = vld [vmem:[%s329 + $0x13c] sm:$0xf]
      %v416 = vld [vmem:[%s329 + $0x140] sm:$0xf]
      %v417 = vld [vmem:[%s329 + $0x144] sm:$0xf]
      %v418 = vld [vmem:[%s329 + $0x148] sm:$0xf]
      %v419 = vld [vmem:[%s329 + $0x14c] sm:$0xf]
      %v420 = vld [vmem:[%s329 + $0x150] sm:$0xf]
      %v421 = vld [vmem:[%s329 + $0x154] sm:$0xf]
      %v422 = vld [vmem:[%s329 + $0x158] sm:$0xf]
      %v423 = vld [vmem:[%s329 + $0x15c] sm:$0xf]
      %v424 = vld [vmem:[%s329 + $0x160] sm:$0xf]
      %v425 = vld [vmem:[%s329 + $0x164] sm:$0xf]
      %v426 = vld [vmem:[%s329 + $0x168] sm:$0xf]
      %v427 = vld [vmem:[%s329 + $0x16c] sm:$0xf]
      %v428 = vld [vmem:[%s329 + $0x170] sm:$0xf]
      %v429 = vld [vmem:[%s329 + $0x174] sm:$0xf]
      %v430 = vld [vmem:[%s329 + $0x178] sm:$0xf]
      %v431 = vld [vmem:[%s329 + $0x17c] sm:$0xf]
      %v432 = vld [vmem:[%s329 + $0x180] sm:$0xf]
      %v433 = vld [vmem:[%s329 + $0x184] sm:$0xf]
      %v434 = vld [vmem:[%s329 + $0x188] sm:$0xf]
      %v435 = vld [vmem:[%s329 + $0x18c] sm:$0xf]
      %v436 = vld [vmem:[%s329 + $0x190] sm:$0xf]
      %v437 = vld [vmem:[%s329 + $0x194] sm:$0xf]
      %v438 = vld [vmem:[%s329 + $0x198] sm:$0xf]
      %v439 = vld [vmem:[%s329 + $0x19c] sm:$0xf]
      %v440 = vld [vmem:[%s329 + $0x1a0] sm:$0xf]
      %v441 = vld [vmem:[%s329 + $0x1a4] sm:$0xf]
      %v442 = vld [vmem:[%s329 + $0x1a8] sm:$0xf]
      %v443 = vld [vmem:[%s329 + $0x1ac] sm:$0xf]
      %v444 = vld [vmem:[%s329 + $0x1b0] sm:$0xf]
      %v445 = vld [vmem:[%s329 + $0x1b4] sm:$0xf]
      %v446 = vld [vmem:[%s329 + $0x1b8] sm:$0xf]
      %v447 = vld [vmem:[%s329 + $0x1bc] sm:$0xf]
      %v448 = vld [vmem:[%s329 + $0x1c0] sm:$0xf]
      %v449 = vld [vmem:[%s329 + $0x1c4] sm:$0xf]
      %v450 = vld [vmem:[%s329 + $0x1c8] sm:$0xf]
      %v451 = vld [vmem:[%s329 + $0x1cc] sm:$0xf]
      %v452 = vld [vmem:[%s329 + $0x1d0] sm:$0xf]
      %v453 = vld [vmem:[%s329 + $0x1d4] sm:$0xf]
      %v454 = vld [vmem:[%s329 + $0x1d8] sm:$0xf]
      %v455 = vld [vmem:[%s329 + $0x1dc] sm:$0xf]
      %v456 = vld [vmem:[%s329 + $0x1e0] sm:$0xf]
      %v457 = vld [vmem:[%s329 + $0x1e4] sm:$0xf]
      %v458 = vld [vmem:[%s329 + $0x1e8] sm:$0xf]
      %v459 = vld [vmem:[%s329 + $0x1ec] sm:$0xf]
      %v460 = vld [vmem:[%s329 + $0x1f0] sm:$0xf]
      %v461 = vld [vmem:[%s329 + $0x1f4] sm:$0xf]
      %v462 = vld [vmem:[%s329 + $0x1f8] sm:$0xf]
      %v463 = vld [vmem:[%s329 + $0x1fc] sm:$0xf]
      %v464 = vld [vmem:[%s1] sm:$0xf]
      %v465 = vld [vmem:[%s1 + $0x4] sm:$0xf]
      %v466 = vld [vmem:[%s1 + $0x8] sm:$0xf]
      %v467 = vld [vmem:[%s1 + $0xc] sm:$0xf]
      %v468 = vld [vmem:[%s1 + $0x10] sm:$0x3]
      %v469 = vld [vmem:[%s2] sm:$0x1]
      %v471 = vlaneseq
      %v472 = vshrl.u32 %v471, 7
      %v473 = vsub.s32 0, %v472
      %v474 = vrot.slane %v469, %v473
      %v604 = vunpack.c.l.b16 %v336
      %v605 = vunpack.c.l.b16 %v337
      %v606 = vunpack.c.l.b16 %v338
      %v607 = vunpack.c.l.b16 %v339
      %v608 = vunpack.c.l.b16 %v340
      %v609 = vunpack.c.l.b16 %v341
      %v610 = vunpack.c.l.b16 %v342
      %v611 = vunpack.c.l.b16 %v343
      %v612 = vunpack.c.l.b16 %v344
      %v613 = vunpack.c.l.b16 %v345
      %v614 = vunpack.c.l.b16 %v346
      %v615 = vunpack.c.l.b16 %v347
      %v616 = vunpack.c.l.b16 %v348
      %v617 = vunpack.c.l.b16 %v349
      %v618 = vunpack.c.l.b16 %v350
      %v619 = vunpack.c.l.b16 %v351
      %v620 = vunpack.c.l.b16 %v352
      %v621 = vunpack.c.l.b16 %v353
      %v622 = vunpack.c.l.b16 %v354
      %v623 = vunpack.c.l.b16 %v355
      %v624 = vunpack.c.l.b16 %v356
      %v625 = vunpack.c.l.b16 %v357
      %v626 = vunpack.c.l.b16 %v358
      %v627 = vunpack.c.l.b16 %v359
      %v628 = vunpack.c.l.b16 %v360
      %v629 = vunpack.c.l.b16 %v361
      %v630 = vunpack.c.l.b16 %v362
      %v631 = vunpack.c.l.b16 %v363
      %v632 = vunpack.c.l.b16 %v364
      %v633 = vunpack.c.l.b16 %v365
      %v634 = vunpack.c.l.b16 %v366
      %v635 = vunpack.c.l.b16 %v367
      %v636 = vunpack.c.l.b16 %v368
      %v637 = vunpack.c.l.b16 %v369
      %v638 = vunpack.c.l.b16 %v370
      %v639 = vunpack.c.l.b16 %v371
      %v640 = vunpack.c.l.b16 %v372
      %v641 = vunpack.c.l.b16 %v373
      %v642 = vunpack.c.l.b16 %v374
      %v643 = vunpack.c.l.b16 %v375
      %v644 = vunpack.c.l.b16 %v376
      %v645 = vunpack.c.l.b16 %v377
      %v646 = vunpack.c.l.b16 %v378
      %v647 = vunpack.c.l.b16 %v379
      %v648 = vunpack.c.l.b16 %v380
      %v649 = vunpack.c.l.b16 %v381
      %v650 = vunpack.c.l.b16 %v382
      %v651 = vunpack.c.l.b16 %v383
      %v652 = vunpack.c.l.b16 %v384
      %v653 = vunpack.c.l.b16 %v385
      %v654 = vunpack.c.l.b16 %v386
      %v655 = vunpack.c.l.b16 %v387
      %v656 = vunpack.c.l.b16 %v388
      %v657 = vunpack.c.l.b16 %v389
      %v658 = vunpack.c.l.b16 %v390
      %v659 = vunpack.c.l.b16 %v391
      %v660 = vunpack.c.l.b16 %v392
      %v661 = vunpack.c.l.b16 %v393
      %v662 = vunpack.c.l.b16 %v394
      %v663 = vunpack.c.l.b16 %v395
      %v664 = vunpack.c.l.b16 %v396
      %v665 = vunpack.c.l.b16 %v397
      %v666 = vunpack.c.l.b16 %v398
      %v667 = vunpack.c.l.b16 %v399
      %v668 = vunpack.c.l.b16 %v400
      %v669 = vunpack.c.l.b16 %v401
      %v670 = vunpack.c.l.b16 %v402
      %v671 = vunpack.c.l.b16 %v403
      %v672 = vunpack.c.l.b16 %v404
      %v673 = vunpack.c.l.b16 %v405
      %v674 = vunpack.c.l.b16 %v406
      %v675 = vunpack.c.l.b16 %v407
      %v676 = vunpack.c.l.b16 %v408
      %v677 = vunpack.c.l.b16 %v409
      %v678 = vunpack.c.l.b16 %v410
      %v679 = vunpack.c.l.b16 %v411
      %v680 = vunpack.c.l.b16 %v412
      %v681 = vunpack.c.l.b16 %v413
      %v682 = vunpack.c.l.b16 %v414
      %v683 = vunpack.c.l.b16 %v415
      %v684 = vunpack.c.l.b16 %v416
      %v685 = vunpack.c.l.b16 %v417
      %v686 = vunpack.c.l.b16 %v418
      %v687 = vunpack.c.l.b16 %v419
      %v688 = vunpack.c.l.b16 %v420
      %v689 = vunpack.c.l.b16 %v421
      %v690 = vunpack.c.l.b16 %v422
      %v691 = vunpack.c.l.b16 %v423
      %v692 = vunpack.c.l.b16 %v424
      %v693 = vunpack.c.l.b16 %v425
      %v694 = vunpack.c.l.b16 %v426
      %v695 = vunpack.c.l.b16 %v427
      %v696 = vunpack.c.l.b16 %v428
      %v697 = vunpack.c.l.b16 %v429
      %v698 = vunpack.c.l.b16 %v430
      %v699 = vunpack.c.l.b16 %v431
      %v700 = vunpack.c.l.b16 %v432
      %v701 = vunpack.c.l.b16 %v433
      %v702 = vunpack.c.l.b16 %v434
      %v703 = vunpack.c.l.b16 %v435
      %v704 = vunpack.c.l.b16 %v436
      %v705 = vunpack.c.l.b16 %v437
      %v706 = vunpack.c.l.b16 %v438
      %v707 = vunpack.c.l.b16 %v439
      %v708 = vunpack.c.l.b16 %v440
      %v709 = vunpack.c.l.b16 %v441
      %v710 = vunpack.c.l.b16 %v442
      %v711 = vunpack.c.l.b16 %v443
      %v712 = vunpack.c.l.b16 %v444
      %v713 = vunpack.c.l.b16 %v445
      %v714 = vunpack.c.l.b16 %v446
      %v715 = vunpack.c.l.b16 %v447
      %v716 = vunpack.c.l.b16 %v448
      %v717 = vunpack.c.l.b16 %v449
      %v718 = vunpack.c.l.b16 %v450
      %v719 = vunpack.c.l.b16 %v451
      %v720 = vunpack.c.l.b16 %v452
      %v721 = vunpack.c.l.b16 %v453
      %v722 = vunpack.c.l.b16 %v454
      %v723 = vunpack.c.l.b16 %v455
      %v724 = vunpack.c.l.b16 %v456
      %v725 = vunpack.c.l.b16 %v457
      %v726 = vunpack.c.l.b16 %v458
      %v727 = vunpack.c.l.b16 %v459
      %v728 = vunpack.c.l.b16 %v460
      %v729 = vunpack.c.l.b16 %v461
      %v730 = vunpack.c.l.b16 %v462
      %v731 = vunpack.c.l.b16 %v463
      %v732 = vpack.c.b16 %v605, %v604
      %v733 = vpack.c.b16 %v607, %v606
      %v734 = vpack.c.b16 %v609, %v608
      %v735 = vpack.c.b16 %v611, %v610
      %v736 = vpack.c.b16 %v613, %v612
      %v737 = vpack.c.b16 %v615, %v614
      %v738 = vpack.c.b16 %v617, %v616
      %v739 = vpack.c.b16 %v619, %v618
      %v740 = vpack.c.b16 %v621, %v620
      %v741 = vpack.c.b16 %v623, %v622
      %v742 = vpack.c.b16 %v625, %v624
      %v743 = vpack.c.b16 %v627, %v626
      %v744 = vpack.c.b16 %v629, %v628
      %v745 = vpack.c.b16 %v631, %v630
      %v746 = vpack.c.b16 %v633, %v632
      %v747 = vpack.c.b16 %v635, %v634
      %v748 = vpack.c.b16 %v637, %v636
      %v749 = vpack.c.b16 %v639, %v638
      %v750 = vpack.c.b16 %v641, %v640
      %v751 = vpack.c.b16 %v643, %v642
      %v752 = vpack.c.b16 %v645, %v644
      %v753 = vpack.c.b16 %v647, %v646
      %v754 = vpack.c.b16 %v649, %v648
      %v755 = vpack.c.b16 %v651, %v650
      %v756 = vpack.c.b16 %v653, %v652
      %v757 = vpack.c.b16 %v655, %v654
      %v758 = vpack.c.b16 %v657, %v656
      %v759 = vpack.c.b16 %v659, %v658
      %v760 = vpack.c.b16 %v661, %v660
      %v761 = vpack.c.b16 %v663, %v662
      %v762 = vpack.c.b16 %v665, %v664
      %v763 = vpack.c.b16 %v667, %v666
      %v764 = vpack.c.b16 %v669, %v668
      %v765 = vpack.c.b16 %v671, %v670
      %v766 = vpack.c.b16 %v673, %v672
      %v767 = vpack.c.b16 %v675, %v674
      %v768 = vpack.c.b16 %v677, %v676
      %v769 = vpack.c.b16 %v679, %v678
      %v770 = vpack.c.b16 %v681, %v680
      %v771 = vpack.c.b16 %v683, %v682
      %v772 = vpack.c.b16 %v685, %v684
      %v773 = vpack.c.b16 %v687, %v686
      %v774 = vpack.c.b16 %v689, %v688
      %v775 = vpack.c.b16 %v691, %v690
      %v776 = vpack.c.b16 %v693, %v692
      %v777 = vpack.c.b16 %v695, %v694
      %v778 = vpack.c.b16 %v697, %v696
      %v779 = vpack.c.b16 %v699, %v698
      %v780 = vpack.c.b16 %v701, %v700
      %v781 = vpack.c.b16 %v703, %v702
      %v782 = vpack.c.b16 %v705, %v704
      %v783 = vpack.c.b16 %v707, %v706
      %v784 = vpack.c.b16 %v709, %v708
      %v785 = vpack.c.b16 %v711, %v710
      %v786 = vpack.c.b16 %v713, %v712
      %v787 = vpack.c.b16 %v715, %v714
      %v788 = vpack.c.b16 %v717, %v716
      %v789 = vpack.c.b16 %v719, %v718
      %v790 = vpack.c.b16 %v721, %v720
      %v791 = vpack.c.b16 %v723, %v722
      %v792 = vpack.c.b16 %v725, %v724
      %v793 = vpack.c.b16 %v727, %v726
      %v794 = vpack.c.b16 %v729, %v728
      %v795 = vpack.c.b16 %v731, %v730
      %v801 = vunpack.c.l.b16 %v464
      %v802 = vunpack.c.l.b16 %v465
      %v803 = vunpack.c.l.b16 %v466
      %v804 = vunpack.c.l.b16 %v467
      %v805 = vunpack.c.l.b16 %v468
      %v806 = vpack.c.b16 %v802, %v801
      %v807 = vpack.c.b16 %v804, %v803
      %v808 = vpack.c.b16 %v805, %v805
      %vm811 = vcmask 293888
      %v813 = vsel %vm811, %v732, 0
      %v816 = vsel %vm811, %v733, 0
      %v819 = vsel %vm811, %v734, 0
      %v822 = vsel %vm811, %v735, 0
      %v825 = vsel %vm811, %v736, 0
      %v828 = vsel %vm811, %v737, 0
      %v831 = vsel %vm811, %v738, 0
      %v834 = vsel %vm811, %v739, 0
      %v837 = vsel %vm811, %v740, 0
      %v840 = vsel %vm811, %v741, 0
      %v843 = vsel %vm811, %v742, 0
      %v846 = vsel %vm811, %v743, 0
      %v849 = vsel %vm811, %v744, 0
      %v852 = vsel %vm811, %v745, 0
      %v855 = vsel %vm811, %v746, 0
      %v858 = vsel %vm811, %v747, 0
      %v861 = vsel %vm811, %v748, 0
      %v864 = vsel %vm811, %v749, 0
      %v867 = vsel %vm811, %v750, 0
      %v870 = vsel %vm811, %v751, 0
      %v873 = vsel %vm811, %v752, 0
      %v876 = vsel %vm811, %v753, 0
      %v879 = vsel %vm811, %v754, 0
      %v882 = vsel %vm811, %v755, 0
      %v885 = vsel %vm811, %v756, 0
      %v888 = vsel %vm811, %v757, 0
      %v891 = vsel %vm811, %v758, 0
      %v894 = vsel %vm811, %v759, 0
      %v897 = vsel %vm811, %v760, 0
      %v900 = vsel %vm811, %v761, 0
      %v903 = vsel %vm811, %v762, 0
      %v906 = vsel %vm811, %v763, 0
      %v909 = vsel %vm811, %v764, 0
      %v912 = vsel %vm811, %v765, 0
      %v915 = vsel %vm811, %v766, 0
      %v918 = vsel %vm811, %v767, 0
      %v921 = vsel %vm811, %v768, 0
      %v924 = vsel %vm811, %v769, 0
      %v927 = vsel %vm811, %v770, 0
      %v930 = vsel %vm811, %v771, 0
      %v933 = vsel %vm811, %v772, 0
      %v936 = vsel %vm811, %v773, 0
      %v939 = vsel %vm811, %v774, 0
      %v942 = vsel %vm811, %v775, 0
      %v945 = vsel %vm811, %v776, 0
      %v948 = vsel %vm811, %v777, 0
      %v951 = vsel %vm811, %v778, 0
      %v954 = vsel %vm811, %v779, 0
      %v957 = vsel %vm811, %v780, 0
      %v960 = vsel %vm811, %v781, 0
      %v963 = vsel %vm811, %v782, 0
      %v966 = vsel %vm811, %v783, 0
      %v969 = vsel %vm811, %v784, 0
      %v972 = vsel %vm811, %v785, 0
      %v975 = vsel %vm811, %v786, 0
      %v978 = vsel %vm811, %v787, 0
      %v981 = vsel %vm811, %v788, 0
      %v984 = vsel %vm811, %v789, 0
      %v987 = vsel %vm811, %v790, 0
      %v990 = vsel %vm811, %v791, 0
      %v993 = vsel %vm811, %v792, 0
      %v996 = vsel %vm811, %v793, 0
      %v999 = vsel %vm811, %v794, 0
      %v1002 = vsel %vm811, %v795, 0
      %vm1004 = vcmask 1041408
      %v1006 = vsel %vm1004, %v808, 0
      %1008 = vmatprep.subr.bf16.mxu0 0
      %1009 = vmatpush1.bf16.msra.mxu0 %v806
      %1010 = vmatprep.subr.bf16.mxu0 0
      %1011 = vmatpush1.bf16.msra.mxu0 %v807
      %1012 = vmatprep.subr.bf16.mxu0 0
      %1013 = vmatpush1.bf16.msra.mxu0 %v1006
      %1014 = vmatprep.subr.bf16.mxu0 0
      %1015 = vmatpush1.bf16.msra.mxu0 0
      %1016 = vmatprep.subr.bf16.mxu0 0
      %1017 = vmatpush1.bf16.msra.mxu0 0
      %1018 = vmatprep.subr.bf16.mxu0 0
      %1019 = vmatpush1.bf16.msra.mxu0 0
      %1020 = vmatprep.subr.bf16.mxu0 0
      %1021 = vmatpush1.bf16.msra.mxu0 0
      %1022 = vmatprep.subr.bf16.mxu0 0
      %1023 = vmatpush1.bf16.msra.mxu0 0
      %1024 = vmatprep.subr.bf16.mxu0 0
      %1025 = vmatpush1.bf16.msra.mxu0 0
      %1026 = vmatprep.subr.bf16.mxu0 0
      %1027 = vmatpush1.bf16.msra.mxu0 0
      %1028 = vmatprep.subr.bf16.mxu0 0
      %1029 = vmatpush1.bf16.msra.mxu0 0
      %1030 = vmatprep.subr.bf16.mxu0 0
      %1031 = vmatpush1.bf16.msra.mxu0 0
      %1032 = vmatprep.subr.bf16.mxu0 0
      %1033 = vmatpush1.bf16.msra.mxu0 0
      %1034 = vmatprep.subr.bf16.mxu0 0
      %1035 = vmatpush1.bf16.msra.mxu0 0
      %1036 = vmatprep.subr.bf16.mxu0 0
      %1037 = vmatpush1.bf16.msra.mxu0 0
      %1038 = vmatprep.subr.bf16.mxu0 0
      %1039 = vmatpush1.bf16.msra.mxu0 0
      %1040 = vmatprep.mubr.bf16.mxu0 0
      %1041 = vmatmul.mubr.bf16.gmra.mrb[0].mxu0 %v813
      %v1042 = vpop.f32.mrb[0].mxu0
      %v1043 = vadd.f32 %v474, %v1042
      %v1044 = vpop.f32.mrb[0].mxu0
      %v1045 = vpop.f32.mrb[0].mxu0
      %v1046 = vadd.f32 %v474, %v1045
      %v1047 = vpop.f32.mrb[0].mxu0
      %1048 = vmatprep.mubr.bf16.mxu0 0
      %1049 = vmatmul.mubr.bf16.gmra.mrb[0].mxu0 %v816
      %v1050 = vpop.f32.mrb[0].mxu0
      %v1051 = vadd.f32 %v474, %v1050
      %v1052 = vpop.f32.mrb[0].mxu0
      %v1053 = vpop.f32.mrb[0].mxu0
      %v1054 = vadd.f32 %v474, %v1053
      %v1055 = vpop.f32.mrb[0].mxu0
      %1056 = vmatprep.mubr.bf16.mxu0 0
      %1057 = vmatmul.mubr.bf16.gmra.mrb[0].mxu0 %v819
      %v1058 = vpop.f32.mrb[0].mxu0
      %v1059 = vadd.f32 %v474, %v1058
      %v1060 = vpop.f32.mrb[0].mxu0
      %v1061 = vpop.f32.mrb[0].mxu0
      %v1062 = vadd.f32 %v474, %v1061
      %v1063 = vpop.f32.mrb[0].mxu0
      %1064 = vmatprep.mubr.bf16.mxu0 0
      %1065 = vmatmul.mubr.bf16.gmra.mrb[0].mxu0 %v822
      %v1066 = vpop.f32.mrb[0].mxu0
      %v1067 = vadd.f32 %v474, %v1066
      %v1068 = vpop.f32.mrb[0].mxu0
      %v1069 = vpop.f32.mrb[0].mxu0
      %v1070 = vadd.f32 %v474, %v1069
      %v1071 = vpop.f32.mrb[0].mxu0
      %1072 = vmatprep.mubr.bf16.mxu0 0
      %1073 = vmatmul.mubr.bf16.gmra.mrb[0].mxu0 %v825
      %v1074 = vpop.f32.mrb[0].mxu0
      %v1075 = vadd.f32 %v474, %v1074
      %v1076 = vpop.f32.mrb[0].mxu0
      %v1077 = vpop.f32.mrb[0].mxu0
      %v1078 = vadd.f32 %v474, %v1077
      %v1079 = vpop.f32.mrb[0].mxu0
      %1080 = vmatprep.mubr.bf16.mxu0 0
      %1081 = vmatmul.mubr.bf16.gmra.mrb[0].mxu0 %v828
      %v1082 = vpop.f32.mrb[0].mxu0
      %v1083 = vadd.f32 %v474, %v1082
      %v1084 = vpop.f32.mrb[0].mxu0
      %v1085 = vpop.f32.mrb[0].mxu0
      %v1086 = vadd.f32 %v474, %v1085
      %v1087 = vpop.f32.mrb[0].mxu0
      %1088 = vmatprep.mubr.bf16.mxu0 0
      %1089 = vmatmul.mubr.bf16.gmra.mrb[0].mxu0 %v831
      %v1090 = vpop.f32.mrb[0].mxu0
      %v1091 = vadd.f32 %v474, %v1090
      %v1092 = vpop.f32.mrb[0].mxu0
      %v1093 = vpop.f32.mrb[0].mxu0
      %v1094 = vadd.f32 %v474, %v1093
      %v1095 = vpop.f32.mrb[0].mxu0
      %1096 = vmatprep.mubr.bf16.mxu0 0
      %1097 = vmatmul.mubr.bf16.gmra.mrb[0].mxu0 %v834
      %v1098 = vpop.f32.mrb[0].mxu0
      %v1099 = vadd.f32 %v474, %v1098
      %v1100 = vpop.f32.mrb[0].mxu0
      %v1101 = vpop.f32.mrb[0].mxu0
      %v1102 = vadd.f32 %v474, %v1101
      %v1103 = vpop.f32.mrb[0].mxu0
      %1104 = vmatprep.mubr.bf16.mxu0 0
      %1105 = vmatmul.mubr.bf16.gmra.mrb[0].mxu0 %v837
      %v1106 = vpop.f32.mrb[0].mxu0
      %v1107 = vadd.f32 %v474, %v1106
      %v1108 = vpop.f32.mrb[0].mxu0
      %v1109 = vpop.f32.mrb[0].mxu0
      %v1110 = vadd.f32 %v474, %v1109
      %v1111 = vpop.f32.mrb[0].mxu0
      %1112 = vmatprep.mubr.bf16.mxu0 0
      %1113 = vmatmul.mubr.bf16.gmra.mrb[0].mxu0 %v840
      %v1114 = vpop.f32.mrb[0].mxu0
      %v1115 = vadd.f32 %v474, %v1114
      %v1116 = vpop.f32.mrb[0].mxu0
      %v1117 = vpop.f32.mrb[0].mxu0
      %v1118 = vadd.f32 %v474, %v1117
      %v1119 = vpop.f32.mrb[0].mxu0
      %1120 = vmatprep.mubr.bf16.mxu0 0
      %1121 = vmatmul.mubr.bf16.gmra.mrb[0].mxu0 %v843
      %v1122 = vpop.f32.mrb[0].mxu0
      %v1123 = vadd.f32 %v474, %v1122
      %v1124 = vpop.f32.mrb[0].mxu0
      %v1125 = vpop.f32.mrb[0].mxu0
      %v1126 = vadd.f32 %v474, %v1125
      %v1127 = vpop.f32.mrb[0].mxu0
      %1128 = vmatprep.mubr.bf16.mxu0 0
      %1129 = vmatmul.mubr.bf16.gmra.mrb[0].mxu0 %v846
      %v1130 = vpop.f32.mrb[0].mxu0
      %v1131 = vadd.f32 %v474, %v1130
      %v1132 = vpop.f32.mrb[0].mxu0
      %v1133 = vpop.f32.mrb[0].mxu0
      %v1134 = vadd.f32 %v474, %v1133
      %v1135 = vpop.f32.mrb[0].mxu0
      %1136 = vmatprep.mubr.bf16.mxu0 0
      %1137 = vmatmul.mubr.bf16.gmra.mrb[0].mxu0 %v849
      %v1138 = vpop.f32.mrb[0].mxu0
      %v1139 = vadd.f32 %v474, %v1138
      %v1140 = vpop.f32.mrb[0].mxu0
      %v1141 = vpop.f32.mrb[0].mxu0
      %v1142 = vadd.f32 %v474, %v1141
      %v1143 = vpop.f32.mrb[0].mxu0
      %1144 = vmatprep.mubr.bf16.mxu0 0
      %1145 = vmatmul.mubr.bf16.gmra.mrb[0].mxu0 %v852
      %v1146 = vpop.f32.mrb[0].mxu0
      %v1147 = vadd.f32 %v474, %v1146
      %v1148 = vpop.f32.mrb[0].mxu0
      %v1149 = vpop.f32.mrb[0].mxu0
      %v1150 = vadd.f32 %v474, %v1149
      %v1151 = vpop.f32.mrb[0].mxu0
      %1152 = vmatprep.mubr.bf16.mxu0 0
      %1153 = vmatmul.mubr.bf16.gmra.mrb[0].mxu0 %v855
      %v1154 = vpop.f32.mrb[0].mxu0
      %v1155 = vadd.f32 %v474, %v1154
      %v1156 = vpop.f32.mrb[0].mxu0
      %v1157 = vpop.f32.mrb[0].mxu0
      %v1158 = vadd.f32 %v474, %v1157
      %v1159 = vpop.f32.mrb[0].mxu0
      %1160 = vmatprep.mubr.bf16.mxu0 0
      %1161 = vmatmul.mubr.bf16.gmra.mrb[0].mxu0 %v858
      %v1162 = vpop.f32.mrb[0].mxu0
      %v1163 = vadd.f32 %v474, %v1162
      %v1164 = vpop.f32.mrb[0].mxu0
      %v1165 = vpop.f32.mrb[0].mxu0
      %v1166 = vadd.f32 %v474, %v1165
      %v1167 = vpop.f32.mrb[0].mxu0
      %1168 = vmatprep.mubr.bf16.mxu0 0
      %1169 = vmatmul.mubr.bf16.gmra.mrb[0].mxu0 %v861
      %v1170 = vpop.f32.mrb[0].mxu0
      %v1171 = vadd.f32 %v474, %v1170
      %v1172 = vpop.f32.mrb[0].mxu0
      %v1173 = vpop.f32.mrb[0].mxu0
      %v1174 = vadd.f32 %v474, %v1173
      %v1175 = vpop.f32.mrb[0].mxu0
      %1176 = vmatprep.mubr.bf16.mxu0 0
      %1177 = vmatmul.mubr.bf16.gmra.mrb[0].mxu0 %v864
      %v1178 = vpop.f32.mrb[0].mxu0
      %v1179 = vadd.f32 %v474, %v1178
      %v1180 = vpop.f32.mrb[0].mxu0
      %v1181 = vpop.f32.mrb[0].mxu0
      %v1182 = vadd.f32 %v474, %v1181
      %v1183 = vpop.f32.mrb[0].mxu0
      %1184 = vmatprep.mubr.bf16.mxu0 0
      %1185 = vmatmul.mubr.bf16.gmra.mrb[0].mxu0 %v867
      %v1186 = vpop.f32.mrb[0].mxu0
      %v1187 = vadd.f32 %v474, %v1186
      %v1188 = vpop.f32.mrb[0].mxu0
      %v1189 = vpop.f32.mrb[0].mxu0
      %v1190 = vadd.f32 %v474, %v1189
      %v1191 = vpop.f32.mrb[0].mxu0
      %1192 = vmatprep.mubr.bf16.mxu0 0
      %1193 = vmatmul.mubr.bf16.gmra.mrb[0].mxu0 %v870
      %v1194 = vpop.f32.mrb[0].mxu0
      %v1195 = vadd.f32 %v474, %v1194
      %v1196 = vpop.f32.mrb[0].mxu0
      %v1197 = vpop.f32.mrb[0].mxu0
      %v1198 = vadd.f32 %v474, %v1197
      %v1199 = vpop.f32.mrb[0].mxu0
      %1200 = vmatprep.mubr.bf16.mxu0 0
      %1201 = vmatmul.mubr.bf16.gmra.mrb[0].mxu0 %v873
      %v1202 = vpop.f32.mrb[0].mxu0
      %v1203 = vadd.f32 %v474, %v1202
      %v1204 = vpop.f32.mrb[0].mxu0
      %v1205 = vpop.f32.mrb[0].mxu0
      %v1206 = vadd.f32 %v474, %v1205
      %v1207 = vpop.f32.mrb[0].mxu0
      %1208 = vmatprep.mubr.bf16.mxu0 0
      %1209 = vmatmul.mubr.bf16.gmra.mrb[0].mxu0 %v876
      %v1210 = vpop.f32.mrb[0].mxu0
      %v1211 = vadd.f32 %v474, %v1210
      %v1212 = vpop.f32.mrb[0].mxu0
      %v1213 = vpop.f32.mrb[0].mxu0
      %v1214 = vadd.f32 %v474, %v1213
      %v1215 = vpop.f32.mrb[0].mxu0
      %1216 = vmatprep.mubr.bf16.mxu0 0
      %1217 = vmatmul.mubr.bf16.gmra.mrb[0].mxu0 %v879
      %v1218 = vpop.f32.mrb[0].mxu0
      %v1219 = vadd.f32 %v474, %v1218
      %v1220 = vpop.f32.mrb[0].mxu0
      %v1221 = vpop.f32.mrb[0].mxu0
      %v1222 = vadd.f32 %v474, %v1221
      %v1223 = vpop.f32.mrb[0].mxu0
      %1224 = vmatprep.mubr.bf16.mxu0 0
      %1225 = vmatmul.mubr.bf16.gmra.mrb[0].mxu0 %v882
      %v1226 = vpop.f32.mrb[0].mxu0
      %v1227 = vadd.f32 %v474, %v1226
      %v1228 = vpop.f32.mrb[0].mxu0
      %v1229 = vpop.f32.mrb[0].mxu0
      %v1230 = vadd.f32 %v474, %v1229
      %v1231 = vpop.f32.mrb[0].mxu0
      %1232 = vmatprep.mubr.bf16.mxu0 0
      %1233 = vmatmul.mubr.bf16.gmra.mrb[0].mxu0 %v885
      %v1234 = vpop.f32.mrb[0].mxu0
      %v1235 = vadd.f32 %v474, %v1234
      %v1236 = vpop.f32.mrb[0].mxu0
      %v1237 = vpop.f32.mrb[0].mxu0
      %v1238 = vadd.f32 %v474, %v1237
      %v1239 = vpop.f32.mrb[0].mxu0
      %1240 = vmatprep.mubr.bf16.mxu0 0
      %1241 = vmatmul.mubr.bf16.gmra.mrb[0].mxu0 %v888
      %v1242 = vpop.f32.mrb[0].mxu0
      %v1243 = vadd.f32 %v474, %v1242
      %v1244 = vpop.f32.mrb[0].mxu0
      %v1245 = vpop.f32.mrb[0].mxu0
      %v1246 = vadd.f32 %v474, %v1245
      %v1247 = vpop.f32.mrb[0].mxu0
      %1248 = vmatprep.mubr.bf16.mxu0 0
      %1249 = vmatmul.mubr.bf16.gmra.mrb[0].mxu0 %v891
      %v1250 = vpop.f32.mrb[0].mxu0
      %v1251 = vadd.f32 %v474, %v1250
      %v1252 = vpop.f32.mrb[0].mxu0
      %v1253 = vpop.f32.mrb[0].mxu0
      %v1254 = vadd.f32 %v474, %v1253
      %v1255 = vpop.f32.mrb[0].mxu0
      %1256 = vmatprep.mubr.bf16.mxu0 0
      %1257 = vmatmul.mubr.bf16.gmra.mrb[0].mxu0 %v894
      %v1258 = vpop.f32.mrb[0].mxu0
      %v1259 = vadd.f32 %v474, %v1258
      %v1260 = vpop.f32.mrb[0].mxu0
      %v1261 = vpop.f32.mrb[0].mxu0
      %v1262 = vadd.f32 %v474, %v1261
      %v1263 = vpop.f32.mrb[0].mxu0
      %1264 = vmatprep.mubr.bf16.mxu0 0
      %1265 = vmatmul.mubr.bf16.gmra.mrb[0].mxu0 %v897
      %v1266 = vpop.f32.mrb[0].mxu0
      %v1267 = vadd.f32 %v474, %v1266
      %v1268 = vpop.f32.mrb[0].mxu0
      %v1269 = vpop.f32.mrb[0].mxu0
      %v1270 = vadd.f32 %v474, %v1269
      %v1271 = vpop.f32.mrb[0].mxu0
      %1272 = vmatprep.mubr.bf16.mxu0 0
      %1273 = vmatmul.mubr.bf16.gmra.mrb[0].mxu0 %v900
      %v1274 = vpop.f32.mrb[0].mxu0
      %v1275 = vadd.f32 %v474, %v1274
      %v1276 = vpop.f32.mrb[0].mxu0
      %v1277 = vpop.f32.mrb[0].mxu0
      %v1278 = vadd.f32 %v474, %v1277
      %v1279 = vpop.f32.mrb[0].mxu0
      %1280 = vmatprep.mubr.bf16.mxu0 0
      %1281 = vmatmul.mubr.bf16.gmra.mrb[0].mxu0 %v903
      %v1282 = vpop.f32.mrb[0].mxu0
      %v1283 = vadd.f32 %v474, %v1282
      %v1284 = vpop.f32.mrb[0].mxu0
      %v1285 = vpop.f32.mrb[0].mxu0
      %v1286 = vadd.f32 %v474, %v1285
      %v1287 = vpop.f32.mrb[0].mxu0
      %1288 = vmatprep.mubr.bf16.mxu0 0
      %1289 = vmatmul.mubr.bf16.gmra.mrb[0].mxu0 %v906
      %v1290 = vpop.f32.mrb[0].mxu0
      %v1291 = vadd.f32 %v474, %v1290
      %v1292 = vpop.f32.mrb[0].mxu0
      %v1293 = vpop.f32.mrb[0].mxu0
      %v1294 = vadd.f32 %v474, %v1293
      %v1295 = vpop.f32.mrb[0].mxu0
      %1296 = vmatprep.mubr.bf16.mxu0 0
      %1297 = vmatmul.mubr.bf16.gmra.mrb[0].mxu0 %v909
      %v1298 = vpop.f32.mrb[0].mxu0
      %v1299 = vadd.f32 %v474, %v1298
      %v1300 = vpop.f32.mrb[0].mxu0
      %v1301 = vpop.f32.mrb[0].mxu0
      %v1302 = vadd.f32 %v474, %v1301
      %v1303 = vpop.f32.mrb[0].mxu0
      %1304 = vmatprep.mubr.bf16.mxu0 0
      %1305 = vmatmul.mubr.bf16.gmra.mrb[0].mxu0 %v912
      %v1306 = vpop.f32.mrb[0].mxu0
      %v1307 = vadd.f32 %v474, %v1306
      %v1308 = vpop.f32.mrb[0].mxu0
      %v1309 = vpop.f32.mrb[0].mxu0
      %v1310 = vadd.f32 %v474, %v1309
      %v1311 = vpop.f32.mrb[0].mxu0
      %1312 = vmatprep.mubr.bf16.mxu0 0
      %1313 = vmatmul.mubr.bf16.gmra.mrb[0].mxu0 %v915
      %v1314 = vpop.f32.mrb[0].mxu0
      %v1315 = vadd.f32 %v474, %v1314
      %v1316 = vpop.f32.mrb[0].mxu0
      %v1317 = vpop.f32.mrb[0].mxu0
      %v1318 = vadd.f32 %v474, %v1317
      %v1319 = vpop.f32.mrb[0].mxu0
      %1320 = vmatprep.mubr.bf16.mxu0 0
      %1321 = vmatmul.mubr.bf16.gmra.mrb[0].mxu0 %v918
      %v1322 = vpop.f32.mrb[0].mxu0
      %v1323 = vadd.f32 %v474, %v1322
      %v1324 = vpop.f32.mrb[0].mxu0
      %v1325 = vpop.f32.mrb[0].mxu0
      %v1326 = vadd.f32 %v474, %v1325
      %v1327 = vpop.f32.mrb[0].mxu0
      %1328 = vmatprep.mubr.bf16.mxu0 0
      %1329 = vmatmul.mubr.bf16.gmra.mrb[0].mxu0 %v921
      %v1330 = vpop.f32.mrb[0].mxu0
      %v1331 = vadd.f32 %v474, %v1330
      %v1332 = vpop.f32.mrb[0].mxu0
      %v1333 = vpop.f32.mrb[0].mxu0
      %v1334 = vadd.f32 %v474, %v1333
      %v1335 = vpop.f32.mrb[0].mxu0
      %1336 = vmatprep.mubr.bf16.mxu0 0
      %1337 = vmatmul.mubr.bf16.gmra.mrb[0].mxu0 %v924
      %v1338 = vpop.f32.mrb[0].mxu0
      %v1339 = vadd.f32 %v474, %v1338
      %v1340 = vpop.f32.mrb[0].mxu0
      %v1341 = vpop.f32.mrb[0].mxu0
      %v1342 = vadd.f32 %v474, %v1341
      %v1343 = vpop.f32.mrb[0].mxu0
      %1344 = vmatprep.mubr.bf16.mxu0 0
      %1345 = vmatmul.mubr.bf16.gmra.mrb[0].mxu0 %v927
      %v1346 = vpop.f32.mrb[0].mxu0
      %v1347 = vadd.f32 %v474, %v1346
      %v1348 = vpop.f32.mrb[0].mxu0
      %v1349 = vpop.f32.mrb[0].mxu0
      %v1350 = vadd.f32 %v474, %v1349
      %v1351 = vpop.f32.mrb[0].mxu0
      %1352 = vmatprep.mubr.bf16.mxu0 0
      %1353 = vmatmul.mubr.bf16.gmra.mrb[0].mxu0 %v930
      %v1354 = vpop.f32.mrb[0].mxu0
      %v1355 = vadd.f32 %v474, %v1354
      %v1356 = vpop.f32.mrb[0].mxu0
      %v1357 = vpop.f32.mrb[0].mxu0
      %v1358 = vadd.f32 %v474, %v1357
      %v1359 = vpop.f32.mrb[0].mxu0
      %1360 = vmatprep.mubr.bf16.mxu0 0
      %1361 = vmatmul.mubr.bf16.gmra.mrb[0].mxu0 %v933
      %v1362 = vpop.f32.mrb[0].mxu0
      %v1363 = vadd.f32 %v474, %v1362
      %v1364 = vpop.f32.mrb[0].mxu0
      %v1365 = vpop.f32.mrb[0].mxu0
      %v1366 = vadd.f32 %v474, %v1365
      %v1367 = vpop.f32.mrb[0].mxu0
      %1368 = vmatprep.mubr.bf16.mxu0 0
      %1369 = vmatmul.mubr.bf16.gmra.mrb[0].mxu0 %v936
      %v1370 = vpop.f32.mrb[0].mxu0
      %v1371 = vadd.f32 %v474, %v1370
      %v1372 = vpop.f32.mrb[0].mxu0
      %v1373 = vpop.f32.mrb[0].mxu0
      %v1374 = vadd.f32 %v474, %v1373
      %v1375 = vpop.f32.mrb[0].mxu0
      %1376 = vmatprep.mubr.bf16.mxu0 0
      %1377 = vmatmul.mubr.bf16.gmra.mrb[0].mxu0 %v939
      %v1378 = vpop.f32.mrb[0].mxu0
      %v1379 = vadd.f32 %v474, %v1378
      %v1380 = vpop.f32.mrb[0].mxu0
      %v1381 = vpop.f32.mrb[0].mxu0
      %v1382 = vadd.f32 %v474, %v1381
      %v1383 = vpop.f32.mrb[0].mxu0
      %1384 = vmatprep.mubr.bf16.mxu0 0
      %1385 = vmatmul.mubr.bf16.gmra.mrb[0].mxu0 %v942
      %v1386 = vpop.f32.mrb[0].mxu0
      %v1387 = vadd.f32 %v474, %v1386
      %v1388 = vpop.f32.mrb[0].mxu0
      %v1389 = vpop.f32.mrb[0].mxu0
      %v1390 = vadd.f32 %v474, %v1389
      %v1391 = vpop.f32.mrb[0].mxu0
      %1392 = vmatprep.mubr.bf16.mxu0 0
      %1393 = vmatmul.mubr.bf16.gmra.mrb[0].mxu0 %v945
      %v1394 = vpop.f32.mrb[0].mxu0
      %v1395 = vadd.f32 %v474, %v1394
      %v1396 = vpop.f32.mrb[0].mxu0
      %v1397 = vpop.f32.mrb[0].mxu0
      %v1398 = vadd.f32 %v474, %v1397
      %v1399 = vpop.f32.mrb[0].mxu0
      %1400 = vmatprep.mubr.bf16.mxu0 0
      %1401 = vmatmul.mubr.bf16.gmra.mrb[0].mxu0 %v948
      %v1402 = vpop.f32.mrb[0].mxu0
      %v1403 = vadd.f32 %v474, %v1402
      %v1404 = vpop.f32.mrb[0].mxu0
      %v1405 = vpop.f32.mrb[0].mxu0
      %v1406 = vadd.f32 %v474, %v1405
      %v1407 = vpop.f32.mrb[0].mxu0
      %1408 = vmatprep.mubr.bf16.mxu0 0
      %1409 = vmatmul.mubr.bf16.gmra.mrb[0].mxu0 %v951
      %v1410 = vpop.f32.mrb[0].mxu0
      %v1411 = vadd.f32 %v474, %v1410
      %v1412 = vpop.f32.mrb[0].mxu0
      %v1413 = vpop.f32.mrb[0].mxu0
      %v1414 = vadd.f32 %v474, %v1413
      %v1415 = vpop.f32.mrb[0].mxu0
      %1416 = vmatprep.mubr.bf16.mxu0 0
      %1417 = vmatmul.mubr.bf16.gmra.mrb[0].mxu0 %v954
      %v1418 = vpop.f32.mrb[0].mxu0
      %v1419 = vadd.f32 %v474, %v1418
      %v1420 = vpop.f32.mrb[0].mxu0
      %v1421 = vpop.f32.mrb[0].mxu0
      %v1422 = vadd.f32 %v474, %v1421
      %v1423 = vpop.f32.mrb[0].mxu0
      %1424 = vmatprep.mubr.bf16.mxu0 0
      %1425 = vmatmul.mubr.bf16.gmra.mrb[0].mxu0 %v957
      %v1426 = vpop.f32.mrb[0].mxu0
      %v1427 = vadd.f32 %v474, %v1426
      %v1428 = vpop.f32.mrb[0].mxu0
      %v1429 = vpop.f32.mrb[0].mxu0
      %v1430 = vadd.f32 %v474, %v1429
      %v1431 = vpop.f32.mrb[0].mxu0
      %1432 = vmatprep.mubr.bf16.mxu0 0
      %1433 = vmatmul.mubr.bf16.gmra.mrb[0].mxu0 %v960
      %v1434 = vpop.f32.mrb[0].mxu0
      %v1435 = vadd.f32 %v474, %v1434
      %v1436 = vpop.f32.mrb[0].mxu0
      %v1437 = vpop.f32.mrb[0].mxu0
      %v1438 = vadd.f32 %v474, %v1437
      %v1439 = vpop.f32.mrb[0].mxu0
      %1440 = vmatprep.mubr.bf16.mxu0 0
      %1441 = vmatmul.mubr.bf16.gmra.mrb[0].mxu0 %v963
      %v1442 = vpop.f32.mrb[0].mxu0
      %v1443 = vadd.f32 %v474, %v1442
      %v1444 = vpop.f32.mrb[0].mxu0
      %v1445 = vpop.f32.mrb[0].mxu0
      %v1446 = vadd.f32 %v474, %v1445
      %v1447 = vpop.f32.mrb[0].mxu0
      %1448 = vmatprep.mubr.bf16.mxu0 0
      %1449 = vmatmul.mubr.bf16.gmra.mrb[0].mxu0 %v966
      %v1450 = vpop.f32.mrb[0].mxu0
      %v1451 = vadd.f32 %v474, %v1450
      %v1452 = vpop.f32.mrb[0].mxu0
      %v1453 = vpop.f32.mrb[0].mxu0
      %v1454 = vadd.f32 %v474, %v1453
      %v1455 = vpop.f32.mrb[0].mxu0
      %1456 = vmatprep.mubr.bf16.mxu0 0
      %1457 = vmatmul.mubr.bf16.gmra.mrb[0].mxu0 %v969
      %v1458 = vpop.f32.mrb[0].mxu0
      %v1459 = vadd.f32 %v474, %v1458
      %v1460 = vpop.f32.mrb[0].mxu0
      %v1461 = vpop.f32.mrb[0].mxu0
      %v1462 = vadd.f32 %v474, %v1461
      %v1463 = vpop.f32.mrb[0].mxu0
      %1464 = vmatprep.mubr.bf16.mxu0 0
      %1465 = vmatmul.mubr.bf16.gmra.mrb[0].mxu0 %v972
      %v1466 = vpop.f32.mrb[0].mxu0
      %v1467 = vadd.f32 %v474, %v1466
      %v1468 = vpop.f32.mrb[0].mxu0
      %v1469 = vpop.f32.mrb[0].mxu0
      %v1470 = vadd.f32 %v474, %v1469
      %v1471 = vpop.f32.mrb[0].mxu0
      %1472 = vmatprep.mubr.bf16.mxu0 0
      %1473 = vmatmul.mubr.bf16.gmra.mrb[0].mxu0 %v975
      %v1474 = vpop.f32.mrb[0].mxu0
      %v1475 = vadd.f32 %v474, %v1474
      %v1476 = vpop.f32.mrb[0].mxu0
      %v1477 = vpop.f32.mrb[0].mxu0
      %v1478 = vadd.f32 %v474, %v1477
      %v1479 = vpop.f32.mrb[0].mxu0
      %1480 = vmatprep.mubr.bf16.mxu0 0
      %1481 = vmatmul.mubr.bf16.gmra.mrb[0].mxu0 %v978
      %v1482 = vpop.f32.mrb[0].mxu0
      %v1483 = vadd.f32 %v474, %v1482
      %v1484 = vpop.f32.mrb[0].mxu0
      %v1485 = vpop.f32.mrb[0].mxu0
      %v1486 = vadd.f32 %v474, %v1485
      %v1487 = vpop.f32.mrb[0].mxu0
      %1488 = vmatprep.mubr.bf16.mxu0 0
      %1489 = vmatmul.mubr.bf16.gmra.mrb[0].mxu0 %v981
      %v1490 = vpop.f32.mrb[0].mxu0
      %v1491 = vadd.f32 %v474, %v1490
      %v1492 = vpop.f32.mrb[0].mxu0
      %v1493 = vpop.f32.mrb[0].mxu0
      %v1494 = vadd.f32 %v474, %v1493
      %v1495 = vpop.f32.mrb[0].mxu0
      %1496 = vmatprep.mubr.bf16.mxu0 0
      %1497 = vmatmul.mubr.bf16.gmra.mrb[0].mxu0 %v984
      %v1498 = vpop.f32.mrb[0].mxu0
      %v1499 = vadd.f32 %v474, %v1498
      %v1500 = vpop.f32.mrb[0].mxu0
      %v1501 = vpop.f32.mrb[0].mxu0
      %v1502 = vadd.f32 %v474, %v1501
      %v1503 = vpop.f32.mrb[0].mxu0
      %1504 = vmatprep.mubr.bf16.mxu0 0
      %1505 = vmatmul.mubr.bf16.gmra.mrb[0].mxu0 %v987
      %v1506 = vpop.f32.mrb[0].mxu0
      %v1507 = vadd.f32 %v474, %v1506
      %v1508 = vpop.f32.mrb[0].mxu0
      %v1509 = vpop.f32.mrb[0].mxu0
      %v1510 = vadd.f32 %v474, %v1509
      %v1511 = vpop.f32.mrb[0].mxu0
      %1512 = vmatprep.mubr.bf16.mxu0 0
      %1513 = vmatmul.mubr.bf16.gmra.mrb[0].mxu0 %v990
      %v1514 = vpop.f32.mrb[0].mxu0
      %v1515 = vadd.f32 %v474, %v1514
      %v1516 = vpop.f32.mrb[0].mxu0
      %v1517 = vpop.f32.mrb[0].mxu0
      %v1518 = vadd.f32 %v474, %v1517
      %v1519 = vpop.f32.mrb[0].mxu0
      %1520 = vmatprep.mubr.bf16.mxu0 0
      %1521 = vmatmul.mubr.bf16.gmra.mrb[0].mxu0 %v993
      %v1522 = vpop.f32.mrb[0].mxu0
      %v1523 = vadd.f32 %v474, %v1522
      %v1524 = vpop.f32.mrb[0].mxu0
      %v1525 = vpop.f32.mrb[0].mxu0
      %v1526 = vadd.f32 %v474, %v1525
      %v1527 = vpop.f32.mrb[0].mxu0
      %1528 = vmatprep.mubr.bf16.mxu0 0
      %1529 = vmatmul.mubr.bf16.gmra.mrb[0].mxu0 %v996
      %v1530 = vpop.f32.mrb[0].mxu0
      %v1531 = vadd.f32 %v474, %v1530
      %v1532 = vpop.f32.mrb[0].mxu0
      %v1533 = vpop.f32.mrb[0].mxu0
      %v1534 = vadd.f32 %v474, %v1533
      %v1535 = vpop.f32.mrb[0].mxu0
      %1536 = vmatprep.mubr.bf16.mxu0 0
      %1537 = vmatmul.mubr.bf16.gmra.mrb[0].mxu0 %v999
      %v1538 = vpop.f32.mrb[0].mxu0
      %v1539 = vadd.f32 %v474, %v1538
      %v1540 = vpop.f32.mrb[0].mxu0
      %v1541 = vpop.f32.mrb[0].mxu0
      %v1542 = vadd.f32 %v474, %v1541
      %v1543 = vpop.f32.mrb[0].mxu0
      %1544 = vmatprep.mubr.bf16.mxu0 0
      %1545 = vmatmul.mubr.bf16.gmra.mrb[0].mxu0 %v1002
      %v1546 = vpop.f32.mrb[0].mxu0
      %v1547 = vadd.f32 %v474, %v1546
      %v1548 = vpop.f32.mrb[0].mxu0
      %v1549 = vpop.f32.mrb[0].mxu0
      %v1550 = vadd.f32 %v474, %v1549
      %v1551 = vpop.f32.mrb[0].mxu0
      %1552 = vdwg.mxu0
      %v1553 = vmax.f32 %v1043, 0.0
      %v1554 = vmax.f32 %v1046, 0.0
      %v1555 = vmax.f32 %v1051, 0.0
      %v1556 = vmax.f32 %v1054, 0.0
      %v1557 = vmax.f32 %v1059, 0.0
      %v1558 = vmax.f32 %v1062, 0.0
      %v1559 = vmax.f32 %v1067, 0.0
      %v1560 = vmax.f32 %v1070, 0.0
      %v1561 = vmax.f32 %v1075, 0.0
      %v1562 = vmax.f32 %v1078, 0.0
      %v1563 = vmax.f32 %v1083, 0.0
      %v1564 = vmax.f32 %v1086, 0.0
      %v1565 = vmax.f32 %v1091, 0.0
      %v1566 = vmax.f32 %v1094, 0.0
      %v1567 = vmax.f32 %v1099, 0.0
      %v1568 = vmax.f32 %v1102, 0.0
      %v1569 = vmax.f32 %v1107, 0.0
      %v1570 = vmax.f32 %v1110, 0.0
      %v1571 = vmax.f32 %v1115, 0.0
      %v1572 = vmax.f32 %v1118, 0.0
      %v1573 = vmax.f32 %v1123, 0.0
      %v1574 = vmax.f32 %v1126, 0.0
      %v1575 = vmax.f32 %v1131, 0.0
      %v1576 = vmax.f32 %v1134, 0.0
      %v1577 = vmax.f32 %v1139, 0.0
      %v1578 = vmax.f32 %v1142, 0.0
      %v1579 = vmax.f32 %v1147, 0.0
      %v1580 = vmax.f32 %v1150, 0.0
      %v1581 = vmax.f32 %v1155, 0.0
      %v1582 = vmax.f32 %v1158, 0.0
      %v1583 = vmax.f32 %v1163, 0.0
      %v1584 = vmax.f32 %v1166, 0.0
      %v1585 = vmax.f32 %v1171, 0.0
      %v1586 = vmax.f32 %v1174, 0.0
      %v1587 = vmax.f32 %v1179, 0.0
      %v1588 = vmax.f32 %v1182, 0.0
      %v1589 = vmax.f32 %v1187, 0.0
      %v1590 = vmax.f32 %v1190, 0.0
      %v1591 = vmax.f32 %v1195, 0.0
      %v1592 = vmax.f32 %v1198, 0.0
      %v1593 = vmax.f32 %v1203, 0.0
      %v1594 = vmax.f32 %v1206, 0.0
      %v1595 = vmax.f32 %v1211, 0.0
      %v1596 = vmax.f32 %v1214, 0.0
      %v1597 = vmax.f32 %v1219, 0.0
      %v1598 = vmax.f32 %v1222, 0.0
      %v1599 = vmax.f32 %v1227, 0.0
      %v1600 = vmax.f32 %v1230, 0.0
      %v1601 = vmax.f32 %v1235, 0.0
      %v1602 = vmax.f32 %v1238, 0.0
      %v1603 = vmax.f32 %v1243, 0.0
      %v1604 = vmax.f32 %v1246, 0.0
      %v1605 = vmax.f32 %v1251, 0.0
      %v1606 = vmax.f32 %v1254, 0.0
      %v1607 = vmax.f32 %v1259, 0.0
      %v1608 = vmax.f32 %v1262, 0.0
      %v1609 = vmax.f32 %v1267, 0.0
      %v1610 = vmax.f32 %v1270, 0.0
      %v1611 = vmax.f32 %v1275, 0.0
      %v1612 = vmax.f32 %v1278, 0.0
      %v1613 = vmax.f32 %v1283, 0.0
      %v1614 = vmax.f32 %v1286, 0.0
      %v1615 = vmax.f32 %v1291, 0.0
      %v1616 = vmax.f32 %v1294, 0.0
      %v1617 = vmax.f32 %v1299, 0.0
      %v1618 = vmax.f32 %v1302, 0.0
      %v1619 = vmax.f32 %v1307, 0.0
      %v1620 = vmax.f32 %v1310, 0.0
      %v1621 = vmax.f32 %v1315, 0.0
      %v1622 = vmax.f32 %v1318, 0.0
      %v1623 = vmax.f32 %v1323, 0.0
      %v1624 = vmax.f32 %v1326, 0.0
      %v1625 = vmax.f32 %v1331, 0.0
      %v1626 = vmax.f32 %v1334, 0.0
      %v1627 = vmax.f32 %v1339, 0.0
      %v1628 = vmax.f32 %v1342, 0.0
      %v1629 = vmax.f32 %v1347, 0.0
      %v1630 = vmax.f32 %v1350, 0.0
      %v1631 = vmax.f32 %v1355, 0.0
      %v1632 = vmax.f32 %v1358, 0.0
      %v1633 = vmax.f32 %v1363, 0.0
      %v1634 = vmax.f32 %v1366, 0.0
      %v1635 = vmax.f32 %v1371, 0.0
      %v1636 = vmax.f32 %v1374, 0.0
      %v1637 = vmax.f32 %v1379, 0.0
      %v1638 = vmax.f32 %v1382, 0.0
      %v1639 = vmax.f32 %v1387, 0.0
      %v1640 = vmax.f32 %v1390, 0.0
      %v1641 = vmax.f32 %v1395, 0.0
      %v1642 = vmax.f32 %v1398, 0.0
      %v1643 = vmax.f32 %v1403, 0.0
      %v1644 = vmax.f32 %v1406, 0.0
      %v1645 = vmax.f32 %v1411, 0.0
      %v1646 = vmax.f32 %v1414, 0.0
      %v1647 = vmax.f32 %v1419, 0.0
      %v1648 = vmax.f32 %v1422, 0.0
      %v1649 = vmax.f32 %v1427, 0.0
      %v1650 = vmax.f32 %v1430, 0.0
      %v1651 = vmax.f32 %v1435, 0.0
      %v1652 = vmax.f32 %v1438, 0.0
      %v1653 = vmax.f32 %v1443, 0.0
      %v1654 = vmax.f32 %v1446, 0.0
      %v1655 = vmax.f32 %v1451, 0.0
      %v1656 = vmax.f32 %v1454, 0.0
      %v1657 = vmax.f32 %v1459, 0.0
      %v1658 = vmax.f32 %v1462, 0.0
      %v1659 = vmax.f32 %v1467, 0.0
      %v1660 = vmax.f32 %v1470, 0.0
      %v1661 = vmax.f32 %v1475, 0.0
      %v1662 = vmax.f32 %v1478, 0.0
      %v1663 = vmax.f32 %v1483, 0.0
      %v1664 = vmax.f32 %v1486, 0.0
      %v1665 = vmax.f32 %v1491, 0.0
      %v1666 = vmax.f32 %v1494, 0.0
      %v1667 = vmax.f32 %v1499, 0.0
      %v1668 = vmax.f32 %v1502, 0.0
      %v1669 = vmax.f32 %v1507, 0.0
      %v1670 = vmax.f32 %v1510, 0.0
      %v1671 = vmax.f32 %v1515, 0.0
      %v1672 = vmax.f32 %v1518, 0.0
      %v1673 = vmax.f32 %v1523, 0.0
      %v1674 = vmax.f32 %v1526, 0.0
      %v1675 = vmax.f32 %v1531, 0.0
      %v1676 = vmax.f32 %v1534, 0.0
      %v1677 = vmax.f32 %v1539, 0.0
      %v1678 = vmax.f32 %v1542, 0.0
      %v1679 = vmax.f32 %v1547, 0.0
      %v1680 = vmax.f32 %v1550, 0.0
      %vm1681 = vcmask 261120
      %1682 = vst.msk [vmem:[#allocation2] sm:$0xff] %vm1681, %v1553
      %1683 = vst.msk [vmem:[#allocation2 + $0x8] sm:$0xff] %vm1681, %v1554
      %1684 = vst.msk [vmem:[#allocation2 + $0x10] sm:$0xff] %vm1681, %v1555
      %1685 = vst.msk [vmem:[#allocation2 + $0x18] sm:$0xff] %vm1681, %v1556
      %1686 = vst.msk [vmem:[#allocation2 + $0x20] sm:$0xff] %vm1681, %v1557
      %1687 = vst.msk [vmem:[#allocation2 + $0x28] sm:$0xff] %vm1681, %v1558
      %1688 = vst.msk [vmem:[#allocation2 + $0x30] sm:$0xff] %vm1681, %v1559
      %1689 = vst.msk [vmem:[#allocation2 + $0x38] sm:$0xff] %vm1681, %v1560
      %1690 = vst.msk [vmem:[#allocation2 + $0x40] sm:$0xff] %vm1681, %v1561
      %1691 = vst.msk [vmem:[#allocation2 + $0x48] sm:$0xff] %vm1681, %v1562
      %1692 = vst.msk [vmem:[#allocation2 + $0x50] sm:$0xff] %vm1681, %v1563
      %1693 = vst.msk [vmem:[#allocation2 + $0x58] sm:$0xff] %vm1681, %v1564
      %1694 = vst.msk [vmem:[#allocation2 + $0x60] sm:$0xff] %vm1681, %v1565
      %1695 = vst.msk [vmem:[#allocation2 + $0x68] sm:$0xff] %vm1681, %v1566
      %1696 = vst.msk [vmem:[#allocation2 + $0x70] sm:$0xff] %vm1681, %v1567
      %1697 = vst.msk [vmem:[#allocation2 + $0x78] sm:$0xff] %vm1681, %v1568
      %1698 = vst.msk [vmem:[#allocation2 + $0x80] sm:$0xff] %vm1681, %v1569
      %1699 = vst.msk [vmem:[#allocation2 + $0x88] sm:$0xff] %vm1681, %v1570
      %1700 = vst.msk [vmem:[#allocation2 + $0x90] sm:$0xff] %vm1681, %v1571
      %1701 = vst.msk [vmem:[#allocation2 + $0x98] sm:$0xff] %vm1681, %v1572
      %1702 = vst.msk [vmem:[#allocation2 + $0xa0] sm:$0xff] %vm1681, %v1573
      %1703 = vst.msk [vmem:[#allocation2 + $0xa8] sm:$0xff] %vm1681, %v1574
      %1704 = vst.msk [vmem:[#allocation2 + $0xb0] sm:$0xff] %vm1681, %v1575
      %1705 = vst.msk [vmem:[#allocation2 + $0xb8] sm:$0xff] %vm1681, %v1576
      %1706 = vst.msk [vmem:[#allocation2 + $0xc0] sm:$0xff] %vm1681, %v1577
      %1707 = vst.msk [vmem:[#allocation2 + $0xc8] sm:$0xff] %vm1681, %v1578
      %1708 = vst.msk [vmem:[#allocation2 + $0xd0] sm:$0xff] %vm1681, %v1579
      %1709 = vst.msk [vmem:[#allocation2 + $0xd8] sm:$0xff] %vm1681, %v1580
      %1710 = vst.msk [vmem:[#allocation2 + $0xe0] sm:$0xff] %vm1681, %v1581
      %1711 = vst.msk [vmem:[#allocation2 + $0xe8] sm:$0xff] %vm1681, %v1582
      %1712 = vst.msk [vmem:[#allocation2 + $0xf0] sm:$0xff] %vm1681, %v1583
      %1713 = vst.msk [vmem:[#allocation2 + $0xf8] sm:$0xff] %vm1681, %v1584
      %1714 = vst.msk [vmem:[#allocation2 + $0x100] sm:$0xff] %vm1681, %v1585
      %1715 = vst.msk [vmem:[#allocation2 + $0x108] sm:$0xff] %vm1681, %v1586
      %1716 = vst.msk [vmem:[#allocation2 + $0x110] sm:$0xff] %vm1681, %v1587
      %1717 = vst.msk [vmem:[#allocation2 + $0x118] sm:$0xff] %vm1681, %v1588
      %1718 = vst.msk [vmem:[#allocation2 + $0x120] sm:$0xff] %vm1681, %v1589
      %1719 = vst.msk [vmem:[#allocation2 + $0x128] sm:$0xff] %vm1681, %v1590
      %1720 = vst.msk [vmem:[#allocation2 + $0x130] sm:$0xff] %vm1681, %v1591
      %1721 = vst.msk [vmem:[#allocation2 + $0x138] sm:$0xff] %vm1681, %v1592
      %1722 = vst.msk [vmem:[#allocation2 + $0x140] sm:$0xff] %vm1681, %v1593
      %1723 = vst.msk [vmem:[#allocation2 + $0x148] sm:$0xff] %vm1681, %v1594
      %1724 = vst.msk [vmem:[#allocation2 + $0x150] sm:$0xff] %vm1681, %v1595
      %1725 = vst.msk [vmem:[#allocation2 + $0x158] sm:$0xff] %vm1681, %v1596
      %1726 = vst.msk [vmem:[#allocation2 + $0x160] sm:$0xff] %vm1681, %v1597
      %1727 = vst.msk [vmem:[#allocation2 + $0x168] sm:$0xff] %vm1681, %v1598
      %1728 = vst.msk [vmem:[#allocation2 + $0x170] sm:$0xff] %vm1681, %v1599
      %1729 = vst.msk [vmem:[#allocation2 + $0x178] sm:$0xff] %vm1681, %v1600
      %1730 = vst.msk [vmem:[#allocation2 + $0x180] sm:$0xff] %vm1681, %v1601
      %1731 = vst.msk [vmem:[#allocation2 + $0x188] sm:$0xff] %vm1681, %v1602
      %1732 = vst.msk [vmem:[#allocation2 + $0x190] sm:$0xff] %vm1681, %v1603
      %1733 = vst.msk [vmem:[#allocation2 + $0x198] sm:$0xff] %vm1681, %v1604
      %1734 = vst.msk [vmem:[#allocation2 + $0x1a0] sm:$0xff] %vm1681, %v1605
      %1735 = vst.msk [vmem:[#allocation2 + $0x1a8] sm:$0xff] %vm1681, %v1606
      %1736 = vst.msk [vmem:[#allocation2 + $0x1b0] sm:$0xff] %vm1681, %v1607
      %1737 = vst.msk [vmem:[#allocation2 + $0x1b8] sm:$0xff] %vm1681, %v1608
      %1738 = vst.msk [vmem:[#allocation2 + $0x1c0] sm:$0xff] %vm1681, %v1609
      %1739 = vst.msk [vmem:[#allocation2 + $0x1c8] sm:$0xff] %vm1681, %v1610
      %1740 = vst.msk [vmem:[#allocation2 + $0x1d0] sm:$0xff] %vm1681, %v1611
      %1741 = vst.msk [vmem:[#allocation2 + $0x1d8] sm:$0xff] %vm1681, %v1612
      %1742 = vst.msk [vmem:[#allocation2 + $0x1e0] sm:$0xff] %vm1681, %v1613
      %1743 = vst.msk [vmem:[#allocation2 + $0x1e8] sm:$0xff] %vm1681, %v1614
      %1744 = vst.msk [vmem:[#allocation2 + $0x1f0] sm:$0xff] %vm1681, %v1615
      %1745 = vst.msk [vmem:[#allocation2 + $0x1f8] sm:$0xff] %vm1681, %v1616
      %1746 = vst.msk [vmem:[#allocation2 + $0x200] sm:$0xff] %vm1681, %v1617
      %1747 = vst.msk [vmem:[#allocation2 + $0x208] sm:$0xff] %vm1681, %v1618
      %1748 = vst.msk [vmem:[#allocation2 + $0x210] sm:$0xff] %vm1681, %v1619
      %1749 = vst.msk [vmem:[#allocation2 + $0x218] sm:$0xff] %vm1681, %v1620
      %1750 = vst.msk [vmem:[#allocation2 + $0x220] sm:$0xff] %vm1681, %v1621
      %1751 = vst.msk [vmem:[#allocation2 + $0x228] sm:$0xff] %vm1681, %v1622
      %1752 = vst.msk [vmem:[#allocation2 + $0x230] sm:$0xff] %vm1681, %v1623
      %1753 = vst.msk [vmem:[#allocation2 + $0x238] sm:$0xff] %vm1681, %v1624
      %1754 = vst.msk [vmem:[#allocation2 + $0x240] sm:$0xff] %vm1681, %v1625
      %1755 = vst.msk [vmem:[#allocation2 + $0x248] sm:$0xff] %vm1681, %v1626
      %1756 = vst.msk [vmem:[#allocation2 + $0x250] sm:$0xff] %vm1681, %v1627
      %1757 = vst.msk [vmem:[#allocation2 + $0x258] sm:$0xff] %vm1681, %v1628
      %1758 = vst.msk [vmem:[#allocation2 + $0x260] sm:$0xff] %vm1681, %v1629
      %1759 = vst.msk [vmem:[#allocation2 + $0x268] sm:$0xff] %vm1681, %v1630
      %1760 = vst.msk [vmem:[#allocation2 + $0x270] sm:$0xff] %vm1681, %v1631
      %1761 = vst.msk [vmem:[#allocation2 + $0x278] sm:$0xff] %vm1681, %v1632
      %1762 = vst.msk [vmem:[#allocation2 + $0x280] sm:$0xff] %vm1681, %v1633
      %1763 = vst.msk [vmem:[#allocation2 + $0x288] sm:$0xff] %vm1681, %v1634
      %1764 = vst.msk [vmem:[#allocation2 + $0x290] sm:$0xff] %vm1681, %v1635
      %1765 = vst.msk [vmem:[#allocation2 + $0x298] sm:$0xff] %vm1681, %v1636
      %1766 = vst.msk [vmem:[#allocation2 + $0x2a0] sm:$0xff] %vm1681, %v1637
      %1767 = vst.msk [vmem:[#allocation2 + $0x2a8] sm:$0xff] %vm1681, %v1638
      %1768 = vst.msk [vmem:[#allocation2 + $0x2b0] sm:$0xff] %vm1681, %v1639
      %1769 = vst.msk [vmem:[#allocation2 + $0x2b8] sm:$0xff] %vm1681, %v1640
      %1770 = vst.msk [vmem:[#allocation2 + $0x2c0] sm:$0xff] %vm1681, %v1641
      %1771 = vst.msk [vmem:[#allocation2 + $0x2c8] sm:$0xff] %vm1681, %v1642
      %1772 = vst.msk [vmem:[#allocation2 + $0x2d0] sm:$0xff] %vm1681, %v1643
      %1773 = vst.msk [vmem:[#allocation2 + $0x2d8] sm:$0xff] %vm1681, %v1644
      %1774 = vst.msk [vmem:[#allocation2 + $0x2e0] sm:$0xff] %vm1681, %v1645
      %1775 = vst.msk [vmem:[#allocation2 + $0x2e8] sm:$0xff] %vm1681, %v1646
      %1776 = vst.msk [vmem:[#allocation2 + $0x2f0] sm:$0xff] %vm1681, %v1647
      %1777 = vst.msk [vmem:[#allocation2 + $0x2f8] sm:$0xff] %vm1681, %v1648
      %1778 = vst.msk [vmem:[#allocation2 + $0x300] sm:$0xff] %vm1681, %v1649
      %1779 = vst.msk [vmem:[#allocation2 + $0x308] sm:$0xff] %vm1681, %v1650
      %1780 = vst.msk [vmem:[#allocation2 + $0x310] sm:$0xff] %vm1681, %v1651
      %1781 = vst.msk [vmem:[#allocation2 + $0x318] sm:$0xff] %vm1681, %v1652
      %1782 = vst.msk [vmem:[#allocation2 + $0x320] sm:$0xff] %vm1681, %v1653
      %1783 = vst.msk [vmem:[#allocation2 + $0x328] sm:$0xff] %vm1681, %v1654
      %1784 = vst.msk [vmem:[#allocation2 + $0x330] sm:$0xff] %vm1681, %v1655
      %1785 = vst.msk [vmem:[#allocation2 + $0x338] sm:$0xff] %vm1681, %v1656
      %1786 = vst.msk [vmem:[#allocation2 + $0x340] sm:$0xff] %vm1681, %v1657
      %1787 = vst.msk [vmem:[#allocation2 + $0x348] sm:$0xff] %vm1681, %v1658
      %1788 = vst.msk [vmem:[#allocation2 + $0x350] sm:$0xff] %vm1681, %v1659
      %1789 = vst.msk [vmem:[#allocation2 + $0x358] sm:$0xff] %vm1681, %v1660
      %1790 = vst.msk [vmem:[#allocation2 + $0x360] sm:$0xff] %vm1681, %v1661
      %1791 = vst.msk [vmem:[#allocation2 + $0x368] sm:$0xff] %vm1681, %v1662
      %1792 = vst.msk [vmem:[#allocation2 + $0x370] sm:$0xff] %vm1681, %v1663
      %1793 = vst.msk [vmem:[#allocation2 + $0x378] sm:$0xff] %vm1681, %v1664
      %1794 = vst.msk [vmem:[#allocation2 + $0x380] sm:$0xff] %vm1681, %v1665
      %1795 = vst.msk [vmem:[#allocation2 + $0x388] sm:$0xff] %vm1681, %v1666
      %1796 = vst.msk [vmem:[#allocation2 + $0x390] sm:$0xff] %vm1681, %v1667
      %1797 = vst.msk [vmem:[#allocation2 + $0x398] sm:$0xff] %vm1681, %v1668
      %1798 = vst.msk [vmem:[#allocation2 + $0x3a0] sm:$0xff] %vm1681, %v1669
      %1799 = vst.msk [vmem:[#allocation2 + $0x3a8] sm:$0xff] %vm1681, %v1670
      %1800 = vst.msk [vmem:[#allocation2 + $0x3b0] sm:$0xff] %vm1681, %v1671
      %1801 = vst.msk [vmem:[#allocation2 + $0x3b8] sm:$0xff] %vm1681, %v1672
      %1802 = vst.msk [vmem:[#allocation2 + $0x3c0] sm:$0xff] %vm1681, %v1673
      %1803 = vst.msk [vmem:[#allocation2 + $0x3c8] sm:$0xff] %vm1681, %v1674
      %1804 = vst.msk [vmem:[#allocation2 + $0x3d0] sm:$0xff] %vm1681, %v1675
      %1805 = vst.msk [vmem:[#allocation2 + $0x3d8] sm:$0xff] %vm1681, %v1676
      %1806 = vst.msk [vmem:[#allocation2 + $0x3e0] sm:$0xff] %vm1681, %v1677
      %1807 = vst.msk [vmem:[#allocation2 + $0x3e8] sm:$0xff] %vm1681, %v1678
      %1808 = vst.msk [vmem:[#allocation2 + $0x3f0] sm:$0xff] %vm1681, %v1679
      %1809 = vst.msk [vmem:[#allocation2 + $0x3f8] sm:$0xff] %vm1681, %v1680
      %v1810 = vld [vmem:[#allocation2] ss:$2 sm:$0xff]
      %s1811 = scalar_lea.vmem [#allocation2], 16
      %v1812 = vld [vmem:[%s1811] ss:$2 sm:$0xff]
      %s1813 = scalar_lea.vmem [#allocation2], 32
      %v1814 = vld [vmem:[%s1813] ss:$2 sm:$0xff]
      %s1815 = scalar_lea.vmem [#allocation2], 48
      %v1816 = vld [vmem:[%s1815] ss:$2 sm:$0xff]
      %s1817 = scalar_lea.vmem [#allocation2], 64
      %v1818 = vld [vmem:[%s1817] ss:$2 sm:$0xff]
      %s1819 = scalar_lea.vmem [#allocation2], 80
      %v1820 = vld [vmem:[%s1819] ss:$2 sm:$0xff]
      %s1821 = scalar_lea.vmem [#allocation2], 96
      %v1822 = vld [vmem:[%s1821] ss:$2 sm:$0xff]
      %s1823 = scalar_lea.vmem [#allocation2], 112
      %v1824 = vld [vmem:[%s1823] ss:$2 sm:$0xff]
      %s1825 = scalar_lea.vmem [#allocation2], 128
      %v1826 = vld [vmem:[%s1825] ss:$2 sm:$0xff]
      %s1827 = scalar_lea.vmem [#allocation2], 144
      %v1828 = vld [vmem:[%s1827] ss:$2 sm:$0xff]
      %s1829 = scalar_lea.vmem [#allocation2], 160
      %v1830 = vld [vmem:[%s1829] ss:$2 sm:$0xff]
      %s1831 = scalar_lea.vmem [#allocation2], 176
      %v1832 = vld [vmem:[%s1831] ss:$2 sm:$0xff]
      %s1833 = scalar_lea.vmem [#allocation2], 192
      %v1834 = vld [vmem:[%s1833] ss:$2 sm:$0xff]
      %s1835 = scalar_lea.vmem [#allocation2], 208
      %v1836 = vld [vmem:[%s1835] ss:$2 sm:$0xff]
      %s1837 = scalar_lea.vmem [#allocation2], 224
      %v1838 = vld [vmem:[%s1837] ss:$2 sm:$0xff]
      %s1839 = scalar_lea.vmem [#allocation2], 240
      %v1840 = vld [vmem:[%s1839] ss:$2 sm:$0xff]
      %s1841 = scalar_lea.vmem [#allocation2], 256
      %v1842 = vld [vmem:[%s1841] ss:$2 sm:$0xff]
      %s1843 = scalar_lea.vmem [#allocation2], 272
      %v1844 = vld [vmem:[%s1843] ss:$2 sm:$0xff]
      %s1845 = scalar_lea.vmem [#allocation2], 288
      %v1846 = vld [vmem:[%s1845] ss:$2 sm:$0xff]
      %s1847 = scalar_lea.vmem [#allocation2], 304
      %v1848 = vld [vmem:[%s1847] ss:$2 sm:$0xff]
      %s1849 = scalar_lea.vmem [#allocation2], 320
      %v1850 = vld [vmem:[%s1849] ss:$2 sm:$0xff]
      %s1851 = scalar_lea.vmem [#allocation2], 336
      %v1852 = vld [vmem:[%s1851] ss:$2 sm:$0xff]
      %s1853 = scalar_lea.vmem [#allocation2], 352
      %v1854 = vld [vmem:[%s1853] ss:$2 sm:$0xff]
      %s1855 = scalar_lea.vmem [#allocation2], 368
      %v1856 = vld [vmem:[%s1855] ss:$2 sm:$0xff]
      %s1857 = scalar_lea.vmem [#allocation2], 384
      %v1858 = vld [vmem:[%s1857] ss:$2 sm:$0xff]
      %s1859 = scalar_lea.vmem [#allocation2], 400
      %v1860 = vld [vmem:[%s1859] ss:$2 sm:$0xff]
      %s1861 = scalar_lea.vmem [#allocation2], 416
      %v1862 = vld [vmem:[%s1861] ss:$2 sm:$0xff]
      %s1863 = scalar_lea.vmem [#allocation2], 432
      %v1864 = vld [vmem:[%s1863] ss:$2 sm:$0xff]
      %s1865 = scalar_lea.vmem [#allocation2], 448
      %v1866 = vld [vmem:[%s1865] ss:$2 sm:$0xff]
      %s1867 = scalar_lea.vmem [#allocation2], 464
      %v1868 = vld [vmem:[%s1867] ss:$2 sm:$0xff]
      %s1869 = scalar_lea.vmem [#allocation2], 480
      %v1870 = vld [vmem:[%s1869] ss:$2 sm:$0xff]
      %s1871 = scalar_lea.vmem [#allocation2], 496
      %v1872 = vld [vmem:[%s1871] ss:$2 sm:$0xff]
      %s1873 = scalar_lea.vmem [#allocation2], 512
      %v1874 = vld [vmem:[%s1873] ss:$2 sm:$0xff]
      %s1875 = scalar_lea.vmem [#allocation2], 528
      %v1876 = vld [vmem:[%s1875] ss:$2 sm:$0xff]
      %s1877 = scalar_lea.vmem [#allocation2], 544
      %v1878 = vld [vmem:[%s1877] ss:$2 sm:$0xff]
      %s1879 = scalar_lea.vmem [#allocation2], 560
      %v1880 = vld [vmem:[%s1879] ss:$2 sm:$0xff]
      %s1881 = scalar_lea.vmem [#allocation2], 576
      %v1882 = vld [vmem:[%s1881] ss:$2 sm:$0xff]
      %s1883 = scalar_lea.vmem [#allocation2], 592
      %v1884 = vld [vmem:[%s1883] ss:$2 sm:$0xff]
      %s1885 = scalar_lea.vmem [#allocation2], 608
      %v1886 = vld [vmem:[%s1885] ss:$2 sm:$0xff]
      %s1887 = scalar_lea.vmem [#allocation2], 624
      %v1888 = vld [vmem:[%s1887] ss:$2 sm:$0xff]
      %s1889 = scalar_lea.vmem [#allocation2], 640
      %v1890 = vld [vmem:[%s1889] ss:$2 sm:$0xff]
      %s1891 = scalar_lea.vmem [#allocation2], 656
      %v1892 = vld [vmem:[%s1891] ss:$2 sm:$0xff]
      %s1893 = scalar_lea.vmem [#allocation2], 672
      %v1894 = vld [vmem:[%s1893] ss:$2 sm:$0xff]
      %s1895 = scalar_lea.vmem [#allocation2], 688
      %v1896 = vld [vmem:[%s1895] ss:$2 sm:$0xff]
      %s1897 = scalar_lea.vmem [#allocation2], 704
      %v1898 = vld [vmem:[%s1897] ss:$2 sm:$0xff]
      %s1899 = scalar_lea.vmem [#allocation2], 720
      %v1900 = vld [vmem:[%s1899] ss:$2 sm:$0xff]
      %s1901 = scalar_lea.vmem [#allocation2], 736
      %v1902 = vld [vmem:[%s1901] ss:$2 sm:$0xff]
      %s1903 = scalar_lea.vmem [#allocation2], 752
      %v1904 = vld [vmem:[%s1903] ss:$2 sm:$0xff]
      %s1905 = scalar_lea.vmem [#allocation2], 768
      %v1906 = vld [vmem:[%s1905] ss:$2 sm:$0xff]
      %s1907 = scalar_lea.vmem [#allocation2], 784
      %v1908 = vld [vmem:[%s1907] ss:$2 sm:$0xff]
      %s1909 = scalar_lea.vmem [#allocation2], 800
      %v1910 = vld [vmem:[%s1909] ss:$2 sm:$0xff]
      %s1911 = scalar_lea.vmem [#allocation2], 816
      %v1912 = vld [vmem:[%s1911] ss:$2 sm:$0xff]
      %s1913 = scalar_lea.vmem [#allocation2], 832
      %v1914 = vld [vmem:[%s1913] ss:$2 sm:$0xff]
      %s1915 = scalar_lea.vmem [#allocation2], 848
      %v1916 = vld [vmem:[%s1915] ss:$2 sm:$0xff]
      %s1917 = scalar_lea.vmem [#allocation2], 864
      %v1918 = vld [vmem:[%s1917] ss:$2 sm:$0xff]
      %s1919 = scalar_lea.vmem [#allocation2], 880
      %v1920 = vld [vmem:[%s1919] ss:$2 sm:$0xff]
      %s1921 = scalar_lea.vmem [#allocation2], 896
      %v1922 = vld [vmem:[%s1921] ss:$2 sm:$0xff]
      %s1923 = scalar_lea.vmem [#allocation2], 912
      %v1924 = vld [vmem:[%s1923] ss:$2 sm:$0xff]
      %s1925 = scalar_lea.vmem [#allocation2], 928
      %v1926 = vld [vmem:[%s1925] ss:$2 sm:$0xff]
      %s1927 = scalar_lea.vmem [#allocation2], 944
      %v1928 = vld [vmem:[%s1927] ss:$2 sm:$0xff]
      %s1929 = scalar_lea.vmem [#allocation2], 960
      %v1930 = vld [vmem:[%s1929] ss:$2 sm:$0xff]
      %s1931 = scalar_lea.vmem [#allocation2], 976
      %v1932 = vld [vmem:[%s1931] ss:$2 sm:$0xff]
      %s1933 = scalar_lea.vmem [#allocation2], 992
      %v1934 = vld [vmem:[%s1933] ss:$2 sm:$0xff]
      %s1935 = scalar_lea.vmem [#allocation2], 1008
      %v1936 = vld [vmem:[%s1935] ss:$2 sm:$0xff]
      %s1937 = scalar_lea.vmem [#allocation2], 1
      %v1938 = vld [vmem:[%s1937] ss:$2 sm:$0xff]
      %s1939 = scalar_lea.vmem [#allocation2], 17
      %v1940 = vld [vmem:[%s1939] ss:$2 sm:$0xff]
      %s1941 = scalar_lea.vmem [#allocation2], 33
      %v1942 = vld [vmem:[%s1941] ss:$2 sm:$0xff]
      %s1943 = scalar_lea.vmem [#allocation2], 49
      %v1944 = vld [vmem:[%s1943] ss:$2 sm:$0xff]
      %s1945 = scalar_lea.vmem [#allocation2], 65
      %v1946 = vld [vmem:[%s1945] ss:$2 sm:$0xff]
      %s1947 = scalar_lea.vmem [#allocation2], 81
      %v1948 = vld [vmem:[%s1947] ss:$2 sm:$0xff]
      %s1949 = scalar_lea.vmem [#allocation2], 97
      %v1950 = vld [vmem:[%s1949] ss:$2 sm:$0xff]
      %s1951 = scalar_lea.vmem [#allocation2], 113
      %v1952 = vld [vmem:[%s1951] ss:$2 sm:$0xff]
      %s1953 = scalar_lea.vmem [#allocation2], 129
      %v1954 = vld [vmem:[%s1953] ss:$2 sm:$0xff]
      %s1955 = scalar_lea.vmem [#allocation2], 145
      %v1956 = vld [vmem:[%s1955] ss:$2 sm:$0xff]
      %s1957 = scalar_lea.vmem [#allocation2], 161
      %v1958 = vld [vmem:[%s1957] ss:$2 sm:$0xff]
      %s1959 = scalar_lea.vmem [#allocation2], 177
      %v1960 = vld [vmem:[%s1959] ss:$2 sm:$0xff]
      %s1961 = scalar_lea.vmem [#allocation2], 193
      %v1962 = vld [vmem:[%s1961] ss:$2 sm:$0xff]
      %s1963 = scalar_lea.vmem [#allocation2], 209
      %v1964 = vld [vmem:[%s1963] ss:$2 sm:$0xff]
      %s1965 = scalar_lea.vmem [#allocation2], 225
      %v1966 = vld [vmem:[%s1965] ss:$2 sm:$0xff]
      %s1967 = scalar_lea.vmem [#allocation2], 241
      %v1968 = vld [vmem:[%s1967] ss:$2 sm:$0xff]
      %s1969 = scalar_lea.vmem [#allocation2], 257
      %v1970 = vld [vmem:[%s1969] ss:$2 sm:$0xff]
      %s1971 = scalar_lea.vmem [#allocation2], 273
      %v1972 = vld [vmem:[%s1971] ss:$2 sm:$0xff]
      %s1973 = scalar_lea.vmem [#allocation2], 289
      %v1974 = vld [vmem:[%s1973] ss:$2 sm:$0xff]
      %s1975 = scalar_lea.vmem [#allocation2], 305
      %v1976 = vld [vmem:[%s1975] ss:$2 sm:$0xff]
      %s1977 = scalar_lea.vmem [#allocation2], 321
      %v1978 = vld [vmem:[%s1977] ss:$2 sm:$0xff]
      %s1979 = scalar_lea.vmem [#allocation2], 337
      %v1980 = vld [vmem:[%s1979] ss:$2 sm:$0xff]
      %s1981 = scalar_lea.vmem [#allocation2], 353
      %v1982 = vld [vmem:[%s1981] ss:$2 sm:$0xff]
      %s1983 = scalar_lea.vmem [#allocation2], 369
      %v1984 = vld [vmem:[%s1983] ss:$2 sm:$0xff]
      %s1985 = scalar_lea.vmem [#allocation2], 385
      %v1986 = vld [vmem:[%s1985] ss:$2 sm:$0xff]
      %s1987 = scalar_lea.vmem [#allocation2], 401
      %v1988 = vld [vmem:[%s1987] ss:$2 sm:$0xff]
      %s1989 = scalar_lea.vmem [#allocation2], 417
      %v1990 = vld [vmem:[%s1989] ss:$2 sm:$0xff]
      %s1991 = scalar_lea.vmem [#allocation2], 433
      %v1992 = vld [vmem:[%s1991] ss:$2 sm:$0xff]
      %s1993 = scalar_lea.vmem [#allocation2], 449
      %v1994 = vld [vmem:[%s1993] ss:$2 sm:$0xff]
      %s1995 = scalar_lea.vmem [#allocation2], 465
      %v1996 = vld [vmem:[%s1995] ss:$2 sm:$0xff]
      %s1997 = scalar_lea.vmem [#allocation2], 481
      %v1998 = vld [vmem:[%s1997] ss:$2 sm:$0xff]
      %s1999 = scalar_lea.vmem [#allocation2], 497
      %v2000 = vld [vmem:[%s1999] ss:$2 sm:$0xff]
      %s2001 = scalar_lea.vmem [#allocation2], 513
      %v2002 = vld [vmem:[%s2001] ss:$2 sm:$0xff]
      %s2003 = scalar_lea.vmem [#allocation2], 529
      %v2004 = vld [vmem:[%s2003] ss:$2 sm:$0xff]
      %s2005 = scalar_lea.vmem [#allocation2], 545
      %v2006 = vld [vmem:[%s2005] ss:$2 sm:$0xff]
      %s2007 = scalar_lea.vmem [#allocation2], 561
      %v2008 = vld [vmem:[%s2007] ss:$2 sm:$0xff]
      %s2009 = scalar_lea.vmem [#allocation2], 577
      %v2010 = vld [vmem:[%s2009] ss:$2 sm:$0xff]
      %s2011 = scalar_lea.vmem [#allocation2], 593
      %v2012 = vld [vmem:[%s2011] ss:$2 sm:$0xff]
      %s2013 = scalar_lea.vmem [#allocation2], 609
      %v2014 = vld [vmem:[%s2013] ss:$2 sm:$0xff]
      %s2015 = scalar_lea.vmem [#allocation2], 625
      %v2016 = vld [vmem:[%s2015] ss:$2 sm:$0xff]
      %s2017 = scalar_lea.vmem [#allocation2], 641
      %v2018 = vld [vmem:[%s2017] ss:$2 sm:$0xff]
      %s2019 = scalar_lea.vmem [#allocation2], 657
      %v2020 = vld [vmem:[%s2019] ss:$2 sm:$0xff]
      %s2021 = scalar_lea.vmem [#allocation2], 673
      %v2022 = vld [vmem:[%s2021] ss:$2 sm:$0xff]
      %s2023 = scalar_lea.vmem [#allocation2], 689
      %v2024 = vld [vmem:[%s2023] ss:$2 sm:$0xff]
      %s2025 = scalar_lea.vmem [#allocation2], 705
      %v2026 = vld [vmem:[%s2025] ss:$2 sm:$0xff]
      %s2027 = scalar_lea.vmem [#allocation2], 721
      %v2028 = vld [vmem:[%s2027] ss:$2 sm:$0xff]
      %s2029 = scalar_lea.vmem [#allocation2], 737
      %v2030 = vld [vmem:[%s2029] ss:$2 sm:$0xff]
      %s2031 = scalar_lea.vmem [#allocation2], 753
      %v2032 = vld [vmem:[%s2031] ss:$2 sm:$0xff]
      %s2033 = scalar_lea.vmem [#allocation2], 769
      %v2034 = vld [vmem:[%s2033] ss:$2 sm:$0xff]
      %s2035 = scalar_lea.vmem [#allocation2], 785
      %v2036 = vld [vmem:[%s2035] ss:$2 sm:$0xff]
      %s2037 = scalar_lea.vmem [#allocation2], 801
      %v2038 = vld [vmem:[%s2037] ss:$2 sm:$0xff]
      %s2039 = scalar_lea.vmem [#allocation2], 817
      %v2040 = vld [vmem:[%s2039] ss:$2 sm:$0xff]
      %s2041 = scalar_lea.vmem [#allocation2], 833
      %v2042 = vld [vmem:[%s2041] ss:$2 sm:$0xff]
      %s2043 = scalar_lea.vmem [#allocation2], 849
      %v2044 = vld [vmem:[%s2043] ss:$2 sm:$0xff]
      %s2045 = scalar_lea.vmem [#allocation2], 865
      %v2046 = vld [vmem:[%s2045] ss:$2 sm:$0xff]
      %s2047 = scalar_lea.vmem [#allocation2], 881
      %v2048 = vld [vmem:[%s2047] ss:$2 sm:$0xff]
      %s2049 = scalar_lea.vmem [#allocation2], 897
      %v2050 = vld [vmem:[%s2049] ss:$2 sm:$0xff]
      %s2051 = scalar_lea.vmem [#allocation2], 913
      %v2052 = vld [vmem:[%s2051] ss:$2 sm:$0xff]
      %s2053 = scalar_lea.vmem [#allocation2], 929
      %v2054 = vld [vmem:[%s2053] ss:$2 sm:$0xff]
      %s2055 = scalar_lea.vmem [#allocation2], 945
      %v2056 = vld [vmem:[%s2055] ss:$2 sm:$0xff]
      %s2057 = scalar_lea.vmem [#allocation2], 961
      %v2058 = vld [vmem:[%s2057] ss:$2 sm:$0xff]
      %s2059 = scalar_lea.vmem [#allocation2], 977
      %v2060 = vld [vmem:[%s2059] ss:$2 sm:$0xff]
      %s2061 = scalar_lea.vmem [#allocation2], 993
      %v2062 = vld [vmem:[%s2061] ss:$2 sm:$0xff]
      %s2063 = scalar_lea.vmem [#allocation2], 1009
      %v2064 = vld [vmem:[%s2063] ss:$2 sm:$0xff]
      %v2065 = vmax.f32 %v1810, %v1938
      %v2066 = vmax.f32 %v1812, %v1940
      %v2067 = vmax.f32 %v1814, %v1942
      %v2068 = vmax.f32 %v1816, %v1944
      %v2069 = vmax.f32 %v1818, %v1946
      %v2070 = vmax.f32 %v1820, %v1948
      %v2071 = vmax.f32 %v1822, %v1950
      %v2072 = vmax.f32 %v1824, %v1952
      %v2073 = vmax.f32 %v1826, %v1954
      %v2074 = vmax.f32 %v1828, %v1956
      %v2075 = vmax.f32 %v1830, %v1958
      %v2076 = vmax.f32 %v1832, %v1960
      %v2077 = vmax.f32 %v1834, %v1962
      %v2078 = vmax.f32 %v1836, %v1964
      %v2079 = vmax.f32 %v1838, %v1966
      %v2080 = vmax.f32 %v1840, %v1968
      %v2081 = vmax.f32 %v1842, %v1970
      %v2082 = vmax.f32 %v1844, %v1972
      %v2083 = vmax.f32 %v1846, %v1974
      %v2084 = vmax.f32 %v1848, %v1976
      %v2085 = vmax.f32 %v1850, %v1978
      %v2086 = vmax.f32 %v1852, %v1980
      %v2087 = vmax.f32 %v1854, %v1982
      %v2088 = vmax.f32 %v1856, %v1984
      %v2089 = vmax.f32 %v1858, %v1986
      %v2090 = vmax.f32 %v1860, %v1988
      %v2091 = vmax.f32 %v1862, %v1990
      %v2092 = vmax.f32 %v1864, %v1992
      %v2093 = vmax.f32 %v1866, %v1994
      %v2094 = vmax.f32 %v1868, %v1996
      %v2095 = vmax.f32 %v1870, %v1998
      %v2096 = vmax.f32 %v1872, %v2000
      %v2097 = vmax.f32 %v1874, %v2002
      %v2098 = vmax.f32 %v1876, %v2004
      %v2099 = vmax.f32 %v1878, %v2006
      %v2100 = vmax.f32 %v1880, %v2008
      %v2101 = vmax.f32 %v1882, %v2010
      %v2102 = vmax.f32 %v1884, %v2012
      %v2103 = vmax.f32 %v1886, %v2014
      %v2104 = vmax.f32 %v1888, %v2016
      %v2105 = vmax.f32 %v1890, %v2018
      %v2106 = vmax.f32 %v1892, %v2020
      %v2107 = vmax.f32 %v1894, %v2022
      %v2108 = vmax.f32 %v1896, %v2024
      %v2109 = vmax.f32 %v1898, %v2026
      %v2110 = vmax.f32 %v1900, %v2028
      %v2111 = vmax.f32 %v1902, %v2030
      %v2112 = vmax.f32 %v1904, %v2032
      %v2113 = vmax.f32 %v1906, %v2034
      %v2114 = vmax.f32 %v1908, %v2036
      %v2115 = vmax.f32 %v1910, %v2038
      %v2116 = vmax.f32 %v1912, %v2040
      %v2117 = vmax.f32 %v1914, %v2042
      %v2118 = vmax.f32 %v1916, %v2044
      %v2119 = vmax.f32 %v1918, %v2046
      %v2120 = vmax.f32 %v1920, %v2048
      %v2121 = vmax.f32 %v1922, %v2050
      %v2122 = vmax.f32 %v1924, %v2052
      %v2123 = vmax.f32 %v1926, %v2054
      %v2124 = vmax.f32 %v1928, %v2056
      %v2125 = vmax.f32 %v1930, %v2058
      %v2126 = vmax.f32 %v1932, %v2060
      %v2127 = vmax.f32 %v1934, %v2062
      %v2128 = vmax.f32 %v1936, %v2064
      %2129 = vst.msk [vmem:[#allocation3] sm:$0xff] %vm1681, %v2065
      %2130 = vst.msk [vmem:[#allocation3 + $0x8] sm:$0xff] %vm1681, %v2066
      %2131 = vst.msk [vmem:[#allocation3 + $0x10] sm:$0xff] %vm1681, %v2067
      %2132 = vst.msk [vmem:[#allocation3 + $0x18] sm:$0xff] %vm1681, %v2068
      %2133 = vst.msk [vmem:[#allocation3 + $0x20] sm:$0xff] %vm1681, %v2069
      %2134 = vst.msk [vmem:[#allocation3 + $0x28] sm:$0xff] %vm1681, %v2070
      %2135 = vst.msk [vmem:[#allocation3 + $0x30] sm:$0xff] %vm1681, %v2071
      %2136 = vst.msk [vmem:[#allocation3 + $0x38] sm:$0xff] %vm1681, %v2072
      %2137 = vst.msk [vmem:[#allocation3 + $0x40] sm:$0xff] %vm1681, %v2073
      %2138 = vst.msk [vmem:[#allocation3 + $0x48] sm:$0xff] %vm1681, %v2074
      %2139 = vst.msk [vmem:[#allocation3 + $0x50] sm:$0xff] %vm1681, %v2075
      %2140 = vst.msk [vmem:[#allocation3 + $0x58] sm:$0xff] %vm1681, %v2076
      %2141 = vst.msk [vmem:[#allocation3 + $0x60] sm:$0xff] %vm1681, %v2077
      %2142 = vst.msk [vmem:[#allocation3 + $0x68] sm:$0xff] %vm1681, %v2078
      %2143 = vst.msk [vmem:[#allocation3 + $0x70] sm:$0xff] %vm1681, %v2079
      %2144 = vst.msk [vmem:[#allocation3 + $0x78] sm:$0xff] %vm1681, %v2080
      %2145 = vst.msk [vmem:[#allocation3 + $0x80] sm:$0xff] %vm1681, %v2081
      %2146 = vst.msk [vmem:[#allocation3 + $0x88] sm:$0xff] %vm1681, %v2082
      %2147 = vst.msk [vmem:[#allocation3 + $0x90] sm:$0xff] %vm1681, %v2083
      %2148 = vst.msk [vmem:[#allocation3 + $0x98] sm:$0xff] %vm1681, %v2084
      %2149 = vst.msk [vmem:[#allocation3 + $0xa0] sm:$0xff] %vm1681, %v2085
      %2150 = vst.msk [vmem:[#allocation3 + $0xa8] sm:$0xff] %vm1681, %v2086
      %2151 = vst.msk [vmem:[#allocation3 + $0xb0] sm:$0xff] %vm1681, %v2087
      %2152 = vst.msk [vmem:[#allocation3 + $0xb8] sm:$0xff] %vm1681, %v2088
      %2153 = vst.msk [vmem:[#allocation3 + $0xc0] sm:$0xff] %vm1681, %v2089
      %2154 = vst.msk [vmem:[#allocation3 + $0xc8] sm:$0xff] %vm1681, %v2090
      %2155 = vst.msk [vmem:[#allocation3 + $0xd0] sm:$0xff] %vm1681, %v2091
      %2156 = vst.msk [vmem:[#allocation3 + $0xd8] sm:$0xff] %vm1681, %v2092
      %2157 = vst.msk [vmem:[#allocation3 + $0xe0] sm:$0xff] %vm1681, %v2093
      %2158 = vst.msk [vmem:[#allocation3 + $0xe8] sm:$0xff] %vm1681, %v2094
      %2159 = vst.msk [vmem:[#allocation3 + $0xf0] sm:$0xff] %vm1681, %v2095
      %2160 = vst.msk [vmem:[#allocation3 + $0xf8] sm:$0xff] %vm1681, %v2096
      %2161 = vst.msk [vmem:[#allocation3 + $0x100] sm:$0xff] %vm1681, %v2097
      %2162 = vst.msk [vmem:[#allocation3 + $0x108] sm:$0xff] %vm1681, %v2098
      %2163 = vst.msk [vmem:[#allocation3 + $0x110] sm:$0xff] %vm1681, %v2099
      %2164 = vst.msk [vmem:[#allocation3 + $0x118] sm:$0xff] %vm1681, %v2100
      %2165 = vst.msk [vmem:[#allocation3 + $0x120] sm:$0xff] %vm1681, %v2101
      %2166 = vst.msk [vmem:[#allocation3 + $0x128] sm:$0xff] %vm1681, %v2102
      %2167 = vst.msk [vmem:[#allocation3 + $0x130] sm:$0xff] %vm1681, %v2103
      %2168 = vst.msk [vmem:[#allocation3 + $0x138] sm:$0xff] %vm1681, %v2104
      %2169 = vst.msk [vmem:[#allocation3 + $0x140] sm:$0xff] %vm1681, %v2105
      %2170 = vst.msk [vmem:[#allocation3 + $0x148] sm:$0xff] %vm1681, %v2106
      %2171 = vst.msk [vmem:[#allocation3 + $0x150] sm:$0xff] %vm1681, %v2107
      %2172 = vst.msk [vmem:[#allocation3 + $0x158] sm:$0xff] %vm1681, %v2108
      %2173 = vst.msk [vmem:[#allocation3 + $0x160] sm:$0xff] %vm1681, %v2109
      %2174 = vst.msk [vmem:[#allocation3 + $0x168] sm:$0xff] %vm1681, %v2110
      %2175 = vst.msk [vmem:[#allocation3 + $0x170] sm:$0xff] %vm1681, %v2111
      %2176 = vst.msk [vmem:[#allocation3 + $0x178] sm:$0xff] %vm1681, %v2112
      %2177 = vst.msk [vmem:[#allocation3 + $0x180] sm:$0xff] %vm1681, %v2113
      %2178 = vst.msk [vmem:[#allocation3 + $0x188] sm:$0xff] %vm1681, %v2114
      %2179 = vst.msk [vmem:[#allocation3 + $0x190] sm:$0xff] %vm1681, %v2115
      %2180 = vst.msk [vmem:[#allocation3 + $0x198] sm:$0xff] %vm1681, %v2116
      %2181 = vst.msk [vmem:[#allocation3 + $0x1a0] sm:$0xff] %vm1681, %v2117
      %2182 = vst.msk [vmem:[#allocation3 + $0x1a8] sm:$0xff] %vm1681, %v2118
      %2183 = vst.msk [vmem:[#allocation3 + $0x1b0] sm:$0xff] %vm1681, %v2119
      %2184 = vst.msk [vmem:[#allocation3 + $0x1b8] sm:$0xff] %vm1681, %v2120
      %2185 = vst.msk [vmem:[#allocation3 + $0x1c0] sm:$0xff] %vm1681, %v2121
      %2186 = vst.msk [vmem:[#allocation3 + $0x1c8] sm:$0xff] %vm1681, %v2122
      %2187 = vst.msk [vmem:[#allocation3 + $0x1d0] sm:$0xff] %vm1681, %v2123
      %2188 = vst.msk [vmem:[#allocation3 + $0x1d8] sm:$0xff] %vm1681, %v2124
      %2189 = vst.msk [vmem:[#allocation3 + $0x1e0] sm:$0xff] %vm1681, %v2125
      %2190 = vst.msk [vmem:[#allocation3 + $0x1e8] sm:$0xff] %vm1681, %v2126
      %2191 = vst.msk [vmem:[#allocation3 + $0x1f0] sm:$0xff] %vm1681, %v2127
      %2192 = vst.msk [vmem:[#allocation3 + $0x1f8] sm:$0xff] %vm1681, %v2128
      %2193 = vst.msk [vmem:[#allocation3 + $0x200] sm:$0xff] %vm1681, 0.0
      %v2194 = vld [vmem:[#allocation3] sm:$0xff]
      %v2195 = vld [vmem:[#allocation3 + $0x8] sm:$0xff]
      %v2196 = vld [vmem:[#allocation3 + $0x10] sm:$0xff]
      %v2197 = vld [vmem:[#allocation3 + $0x18] sm:$0xff]
      %v2198 = vld [vmem:[#allocation3 + $0x20] sm:$0xff]
      %v2199 = vld [vmem:[#allocation3 + $0x28] sm:$0xff]
      %v2200 = vld [vmem:[#allocation3 + $0x30] sm:$0xff]
      %v2201 = vld [vmem:[#allocation3 + $0x38] sm:$0xff]
      %v2202 = vld [vmem:[#allocation3 + $0x40] sm:$0xff]
      %v2203 = vld [vmem:[#allocation3 + $0x48] sm:$0xff]
      %v2204 = vld [vmem:[#allocation3 + $0x50] sm:$0xff]
      %v2205 = vld [vmem:[#allocation3 + $0x58] sm:$0xff]
      %v2206 = vld [vmem:[#allocation3 + $0x60] sm:$0xff]
      %v2207 = vld [vmem:[#allocation3 + $0x68] sm:$0xff]
      %v2208 = vld [vmem:[#allocation3 + $0x70] sm:$0xff]
      %v2209 = vld [vmem:[#allocation3 + $0x78] sm:$0xff]
      %v2210 = vld [vmem:[#allocation3 + $0x80] sm:$0xff]
      %v2211 = vld [vmem:[#allocation3 + $0x88] sm:$0xff]
      %v2212 = vld [vmem:[#allocation3 + $0x90] sm:$0xff]
      %v2213 = vld [vmem:[#allocation3 + $0x98] sm:$0xff]
      %v2214 = vld [vmem:[#allocation3 + $0xa0] sm:$0xff]
      %v2215 = vld [vmem:[#allocation3 + $0xa8] sm:$0xff]
      %v2216 = vld [vmem:[#allocation3 + $0xb0] sm:$0xff]
      %v2217 = vld [vmem:[#allocation3 + $0xb8] sm:$0xff]
      %v2218 = vld [vmem:[#allocation3 + $0xc0] sm:$0xff]
      %v2219 = vld [vmem:[#allocation3 + $0xc8] sm:$0xff]
      %v2220 = vld [vmem:[#allocation3 + $0xd0] sm:$0xff]
      %v2221 = vld [vmem:[#allocation3 + $0xd8] sm:$0xff]
      %v2222 = vld [vmem:[#allocation3 + $0xe0] sm:$0xff]
      %v2223 = vld [vmem:[#allocation3 + $0xe8] sm:$0xff]
      %v2224 = vld [vmem:[#allocation3 + $0xf0] sm:$0xff]
      %v2225 = vld [vmem:[#allocation3 + $0xf8] sm:$0xff]
      %v2226 = vld [vmem:[#allocation3 + $0x100] sm:$0xff]
      %v2227 = vld [vmem:[#allocation3 + $0x108] sm:$0xff]
      %v2228 = vld [vmem:[#allocation3 + $0x110] sm:$0xff]
      %v2229 = vld [vmem:[#allocation3 + $0x118] sm:$0xff]
      %v2230 = vld [vmem:[#allocation3 + $0x120] sm:$0xff]
      %v2231 = vld [vmem:[#allocation3 + $0x128] sm:$0xff]
      %v2232 = vld [vmem:[#allocation3 + $0x130] sm:$0xff]
      %v2233 = vld [vmem:[#allocation3 + $0x138] sm:$0xff]
      %v2234 = vld [vmem:[#allocation3 + $0x140] sm:$0xff]
      %v2235 = vld [vmem:[#allocation3 + $0x148] sm:$0xff]
      %v2236 = vld [vmem:[#allocation3 + $0x150] sm:$0xff]
      %v2237 = vld [vmem:[#allocation3 + $0x158] sm:$0xff]
      %v2238 = vld [vmem:[#allocation3 + $0x160] sm:$0xff]
      %v2239 = vld [vmem:[#allocation3 + $0x168] sm:$0xff]
      %v2240 = vld [vmem:[#allocation3 + $0x170] sm:$0xff]
      %v2241 = vld [vmem:[#allocation3 + $0x178] sm:$0xff]
      %v2242 = vld [vmem:[#allocation3 + $0x180] sm:$0xff]
      %v2243 = vld [vmem:[#allocation3 + $0x188] sm:$0xff]
      %v2244 = vld [vmem:[#allocation3 + $0x190] sm:$0xff]
      %v2245 = vld [vmem:[#allocation3 + $0x198] sm:$0xff]
      %v2246 = vld [vmem:[#allocation3 + $0x1a0] sm:$0xff]
      %v2247 = vld [vmem:[#allocation3 + $0x1a8] sm:$0xff]
      %v2248 = vld [vmem:[#allocation3 + $0x1b0] sm:$0xff]
      %v2249 = vld [vmem:[#allocation3 + $0x1b8] sm:$0xff]
      %v2250 = vld [vmem:[#allocation3 + $0x1c0] sm:$0xff]
      %v2251 = vld [vmem:[#allocation3 + $0x1c8] sm:$0xff]
      %v2252 = vld [vmem:[#allocation3 + $0x1d0] sm:$0xff]
      %v2253 = vld [vmem:[#allocation3 + $0x1d8] sm:$0xff]
      %v2254 = vld [vmem:[#allocation3 + $0x1e0] sm:$0xff]
      %v2255 = vld [vmem:[#allocation3 + $0x1e8] sm:$0xff]
      %v2256 = vld [vmem:[#allocation3 + $0x1f0] sm:$0xff]
      %v2257 = vld [vmem:[#allocation3 + $0x1f8] sm:$0xff]
      %v2258 = vpack.c.bf16 %v2195, %v2194
      %v2259 = vpack.c.bf16 %v2197, %v2196
      %v2260 = vpack.c.bf16 %v2199, %v2198
      %v2261 = vpack.c.bf16 %v2201, %v2200
      %v2262 = vpack.c.bf16 %v2203, %v2202
      %v2263 = vpack.c.bf16 %v2205, %v2204
      %v2264 = vpack.c.bf16 %v2207, %v2206
      %v2265 = vpack.c.bf16 %v2209, %v2208
      %v2266 = vpack.c.bf16 %v2211, %v2210
      %v2267 = vpack.c.bf16 %v2213, %v2212
      %v2268 = vpack.c.bf16 %v2215, %v2214
      %v2269 = vpack.c.bf16 %v2217, %v2216
      %v2270 = vpack.c.bf16 %v2219, %v2218
      %v2271 = vpack.c.bf16 %v2221, %v2220
      %v2272 = vpack.c.bf16 %v2223, %v2222
      %v2273 = vpack.c.bf16 %v2225, %v2224
      %v2274 = vpack.c.bf16 %v2227, %v2226
      %v2275 = vpack.c.bf16 %v2229, %v2228
      %v2276 = vpack.c.bf16 %v2231, %v2230
      %v2277 = vpack.c.bf16 %v2233, %v2232
      %v2278 = vpack.c.bf16 %v2235, %v2234
      %v2279 = vpack.c.bf16 %v2237, %v2236
      %v2280 = vpack.c.bf16 %v2239, %v2238
      %v2281 = vpack.c.bf16 %v2241, %v2240
      %v2282 = vpack.c.bf16 %v2243, %v2242
      %v2283 = vpack.c.bf16 %v2245, %v2244
      %v2284 = vpack.c.bf16 %v2247, %v2246
      %v2285 = vpack.c.bf16 %v2249, %v2248
      %v2286 = vpack.c.bf16 %v2251, %v2250
      %v2287 = vpack.c.bf16 %v2253, %v2252
      %v2288 = vpack.c.bf16 %v2255, %v2254
      %v2289 = vpack.c.bf16 %v2257, %v2256
      %v2290 = vld [vmem:[%s3] sm:$0xf]
      %v2291 = vld [vmem:[%s3 + $0x4] sm:$0xf]
      %v2292 = vld [vmem:[%s3 + $0x8] sm:$0xf]
      %v2293 = vld [vmem:[%s3 + $0xc] sm:$0xf]
      %v2294 = vld [vmem:[#allocation3 + $0x1] sm:$0xff]
      %v2295 = vld [vmem:[#allocation3 + $0x9] sm:$0xff]
      %v2296 = vld [vmem:[#allocation3 + $0x11] sm:$0xff]
      %v2297 = vld [vmem:[#allocation3 + $0x19] sm:$0xff]
      %v2298 = vld [vmem:[#allocation3 + $0x21] sm:$0xff]
      %v2299 = vld [vmem:[#allocation3 + $0x29] sm:$0xff]
      %v2300 = vld [vmem:[#allocation3 + $0x31] sm:$0xff]
      %v2301 = vld [vmem:[#allocation3 + $0x39] sm:$0xff]
      %v2302 = vld [vmem:[#allocation3 + $0x41] sm:$0xff]
      %v2303 = vld [vmem:[#allocation3 + $0x49] sm:$0xff]
      %v2304 = vld [vmem:[#allocation3 + $0x51] sm:$0xff]
      %v2305 = vld [vmem:[#allocation3 + $0x59] sm:$0xff]
      %v2306 = vld [vmem:[#allocation3 + $0x61] sm:$0xff]
      %v2307 = vld [vmem:[#allocation3 + $0x69] sm:$0xff]
      %v2308 = vld [vmem:[#allocation3 + $0x71] sm:$0xff]
      %v2309 = vld [vmem:[#allocation3 + $0x79] sm:$0xff]
      %v2310 = vld [vmem:[#allocation3 + $0x81] sm:$0xff]
      %v2311 = vld [vmem:[#allocation3 + $0x89] sm:$0xff]
      %v2312 = vld [vmem:[#allocation3 + $0x91] sm:$0xff]
      %v2313 = vld [vmem:[#allocation3 + $0x99] sm:$0xff]
      %v2314 = vld [vmem:[#allocation3 + $0xa1] sm:$0xff]
      %v2315 = vld [vmem:[#allocation3 + $0xa9] sm:$0xff]
      %v2316 = vld [vmem:[#allocation3 + $0xb1] sm:$0xff]
      %v2317 = vld [vmem:[#allocation3 + $0xb9] sm:$0xff]
      %v2318 = vld [vmem:[#allocation3 + $0xc1] sm:$0xff]
      %v2319 = vld [vmem:[#allocation3 + $0xc9] sm:$0xff]
      %v2320 = vld [vmem:[#allocation3 + $0xd1] sm:$0xff]
      %v2321 = vld [vmem:[#allocation3 + $0xd9] sm:$0xff]
      %v2322 = vld [vmem:[#allocation3 + $0xe1] sm:$0xff]
      %v2323 = vld [vmem:[#allocation3 + $0xe9] sm:$0xff]
      %v2324 = vld [vmem:[#allocation3 + $0xf1] sm:$0xff]
      %v2325 = vld [vmem:[#allocation3 + $0xf9] sm:$0xff]
      %v2326 = vld [vmem:[#allocation3 + $0x101] sm:$0xff]
      %v2327 = vld [vmem:[#allocation3 + $0x109] sm:$0xff]
      %v2328 = vld [vmem:[#allocation3 + $0x111] sm:$0xff]
      %v2329 = vld [vmem:[#allocation3 + $0x119] sm:$0xff]
      %v2330 = vld [vmem:[#allocation3 + $0x121] sm:$0xff]
      %v2331 = vld [vmem:[#allocation3 + $0x129] sm:$0xff]
      %v2332 = vld [vmem:[#allocation3 + $0x131] sm:$0xff]
      %v2333 = vld [vmem:[#allocation3 + $0x139] sm:$0xff]
      %v2334 = vld [vmem:[#allocation3 + $0x141] sm:$0xff]
      %v2335 = vld [vmem:[#allocation3 + $0x149] sm:$0xff]
      %v2336 = vld [vmem:[#allocation3 + $0x151] sm:$0xff]
      %v2337 = vld [vmem:[#allocation3 + $0x159] sm:$0xff]
      %v2338 = vld [vmem:[#allocation3 + $0x161] sm:$0xff]
      %v2339 = vld [vmem:[#allocation3 + $0x169] sm:$0xff]
      %v2340 = vld [vmem:[#allocation3 + $0x171] sm:$0xff]
      %v2341 = vld [vmem:[#allocation3 + $0x179] sm:$0xff]
      %v2342 = vld [vmem:[#allocation3 + $0x181] sm:$0xff]
      %v2343 = vld [vmem:[#allocation3 + $0x189] sm:$0xff]
      %v2344 = vld [vmem:[#allocation3 + $0x191] sm:$0xff]
      %v2345 = vld [vmem:[#allocation3 + $0x199] sm:$0xff]
      %v2346 = vld [vmem:[#allocation3 + $0x1a1] sm:$0xff]
      %v2347 = vld [vmem:[#allocation3 + $0x1a9] sm:$0xff]
      %v2348 = vld [vmem:[#allocation3 + $0x1b1] sm:$0xff]
      %v2349 = vld [vmem:[#allocation3 + $0x1b9] sm:$0xff]
      %v2350 = vld [vmem:[#allocation3 + $0x1c1] sm:$0xff]
      %v2351 = vld [vmem:[#allocation3 + $0x1c9] sm:$0xff]
      %v2352 = vld [vmem:[#allocation3 + $0x1d1] sm:$0xff]
      %v2353 = vld [vmem:[#allocation3 + $0x1d9] sm:$0xff]
      %v2354 = vld [vmem:[#allocation3 + $0x1e1] sm:$0xff]
      %v2355 = vld [vmem:[#allocation3 + $0x1e9] sm:$0xff]
      %v2356 = vld [vmem:[#allocation3 + $0x1f1] sm:$0xff]
      %v2357 = vld [vmem:[#allocation3 + $0x1f9] sm:$0xff]
      %v2358 = vpack.c.bf16 %v2295, %v2294
      %v2359 = vpack.c.bf16 %v2297, %v2296
      %v2360 = vpack.c.bf16 %v2299, %v2298
      %v2361 = vpack.c.bf16 %v2301, %v2300
      %v2362 = vpack.c.bf16 %v2303, %v2302
      %v2363 = vpack.c.bf16 %v2305, %v2304
      %v2364 = vpack.c.bf16 %v2307, %v2306
      %v2365 = vpack.c.bf16 %v2309, %v2308
      %v2366 = vpack.c.bf16 %v2311, %v2310
      %v2367 = vpack.c.bf16 %v2313, %v2312
      %v2368 = vpack.c.bf16 %v2315, %v2314
      %v2369 = vpack.c.bf16 %v2317, %v2316
      %v2370 = vpack.c.bf16 %v2319, %v2318
      %v2371 = vpack.c.bf16 %v2321, %v2320
      %v2372 = vpack.c.bf16 %v2323, %v2322
      %v2373 = vpack.c.bf16 %v2325, %v2324
      %v2374 = vpack.c.bf16 %v2327, %v2326
      %v2375 = vpack.c.bf16 %v2329, %v2328
      %v2376 = vpack.c.bf16 %v2331, %v2330
      %v2377 = vpack.c.bf16 %v2333, %v2332
      %v2378 = vpack.c.bf16 %v2335, %v2334
      %v2379 = vpack.c.bf16 %v2337, %v2336
      %v2380 = vpack.c.bf16 %v2339, %v2338
      %v2381 = vpack.c.bf16 %v2341, %v2340
      %v2382 = vpack.c.bf16 %v2343, %v2342
      %v2383 = vpack.c.bf16 %v2345, %v2344
      %v2384 = vpack.c.bf16 %v2347, %v2346
      %v2385 = vpack.c.bf16 %v2349, %v2348
      %v2386 = vpack.c.bf16 %v2351, %v2350
      %v2387 = vpack.c.bf16 %v2353, %v2352
      %v2388 = vpack.c.bf16 %v2355, %v2354
      %v2389 = vpack.c.bf16 %v2357, %v2356
      %s2390 = scalar_lea.vmem %s3, 16
      %v2391 = vld [vmem:[%s2390] sm:$0xf]
      %v2392 = vld [vmem:[%s2390 + $0x4] sm:$0xf]
      %v2393 = vld [vmem:[%s2390 + $0x8] sm:$0xf]
      %v2394 = vld [vmem:[%s2390 + $0xc] sm:$0xf]
      %v2399 = vunpack.c.l.b16 %v2391
      %v2400 = vunpack.c.l.b16 %v2392
      %v2401 = vunpack.c.l.b16 %v2393
      %v2402 = vunpack.c.l.b16 %v2394
      %v2403 = vpack.c.b16 %v2400, %v2399
      %v2404 = vpack.c.b16 %v2402, %v2401
      %v2408 = vsel %vm1681, %v2358, 0
      %v2411 = vsel %vm1681, %v2359, 0
      %v2414 = vsel %vm1681, %v2360, 0
      %v2417 = vsel %vm1681, %v2361, 0
      %v2420 = vsel %vm1681, %v2362, 0
      %v2423 = vsel %vm1681, %v2363, 0
      %v2426 = vsel %vm1681, %v2364, 0
      %v2429 = vsel %vm1681, %v2365, 0
      %v2432 = vsel %vm1681, %v2366, 0
      %v2435 = vsel %vm1681, %v2367, 0
      %v2438 = vsel %vm1681, %v2368, 0
      %v2441 = vsel %vm1681, %v2369, 0
      %v2444 = vsel %vm1681, %v2370, 0
      %v2447 = vsel %vm1681, %v2371, 0
      %v2450 = vsel %vm1681, %v2372, 0
      %v2453 = vsel %vm1681, %v2373, 0
      %v2456 = vsel %vm1681, %v2374, 0
      %v2459 = vsel %vm1681, %v2375, 0
      %v2462 = vsel %vm1681, %v2376, 0
      %v2465 = vsel %vm1681, %v2377, 0
      %v2468 = vsel %vm1681, %v2378, 0
      %v2471 = vsel %vm1681, %v2379, 0
      %v2474 = vsel %vm1681, %v2380, 0
      %v2477 = vsel %vm1681, %v2381, 0
      %v2480 = vsel %vm1681, %v2382, 0
      %v2483 = vsel %vm1681, %v2383, 0
      %v2486 = vsel %vm1681, %v2384, 0
      %v2489 = vsel %vm1681, %v2385, 0
      %v2492 = vsel %vm1681, %v2386, 0
      %v2495 = vsel %vm1681, %v2387, 0
      %v2498 = vsel %vm1681, %v2388, 0
      %v2501 = vsel %vm1681, %v2389, 0
      %2503 = vmatprep.subr.bf16.mxu0 0
      %2504 = vmatpush1.bf16.msra.mxu0 %v2403
      %2505 = vmatprep.subr.bf16.mxu0 0
      %2506 = vmatpush1.bf16.msra.mxu0 %v2404
      %2507 = vmatprep.subr.bf16.mxu0 0
      %2508 = vmatpush1.bf16.msra.mxu0 0
      %2509 = vmatprep.subr.bf16.mxu0 0
      %2510 = vmatpush1.bf16.msra.mxu0 0
      %2511 = vmatprep.subr.bf16.mxu0 0
      %2512 = vmatpush1.bf16.msra.mxu0 0
      %2513 = vmatprep.subr.bf16.mxu0 0
      %2514 = vmatpush1.bf16.msra.mxu0 0
      %2515 = vmatprep.subr.bf16.mxu0 0
      %2516 = vmatpush1.bf16.msra.mxu0 0
      %2517 = vmatprep.subr.bf16.mxu0 0
      %2518 = vmatpush1.bf16.msra.mxu0 0
      %2519 = vmatprep.subr.bf16.mxu0 0
      %2520 = vmatpush1.bf16.msra.mxu0 0
      %2521 = vmatprep.subr.bf16.mxu0 0
      %2522 = vmatpush1.bf16.msra.mxu0 0
      %2523 = vmatprep.subr.bf16.mxu0 0
      %2524 = vmatpush1.bf16.msra.mxu0 0
      %2525 = vmatprep.subr.bf16.mxu0 0
      %2526 = vmatpush1.bf16.msra.mxu0 0
      %2527 = vmatprep.subr.bf16.mxu0 0
      %2528 = vmatpush1.bf16.msra.mxu0 0
      %2529 = vmatprep.subr.bf16.mxu0 0
      %2530 = vmatpush1.bf16.msra.mxu0 0
      %2531 = vmatprep.subr.bf16.mxu0 0
      %2532 = vmatpush1.bf16.msra.mxu0 0
      %2533 = vmatprep.subr.bf16.mxu0 0
      %2534 = vmatpush1.bf16.msra.mxu0 0
      %2535 = vmatprep.mubr.bf16.mxu0 0
      %2536 = vmatmul.mubr.bf16.gmra.mrb[0].mxu0 %v2408
      %v2537 = vpop.f32.mrb[0].mxu0
      %v2538 = vadd.f32 0.0, %v2537
      %v2539 = vpop.f32.mrb[0].mxu0
      %v2540 = vpop.f32.mrb[0].mxu0
      %v2541 = vadd.f32 0.0, %v2540
      %v2542 = vpop.f32.mrb[0].mxu0
      %2543 = vmatprep.mubr.bf16.mxu0 0
      %2544 = vmatmul.mubr.bf16.gmra.mrb[0].mxu0 %v2411
      %v2545 = vpop.f32.mrb[0].mxu0
      %v2546 = vadd.f32 0.0, %v2545
      %v2547 = vpop.f32.mrb[0].mxu0
      %v2548 = vpop.f32.mrb[0].mxu0
      %v2549 = vadd.f32 0.0, %v2548
      %v2550 = vpop.f32.mrb[0].mxu0
      %2551 = vmatprep.mubr.bf16.mxu0 0
      %2552 = vmatmul.mubr.bf16.gmra.mrb[0].mxu0 %v2414
      %v2553 = vpop.f32.mrb[0].mxu0
      %v2554 = vadd.f32 0.0, %v2553
      %v2555 = vpop.f32.mrb[0].mxu0
      %v2556 = vpop.f32.mrb[0].mxu0
      %v2557 = vadd.f32 0.0, %v2556
      %v2558 = vpop.f32.mrb[0].mxu0
      %2559 = vmatprep.mubr.bf16.mxu0 0
      %2560 = vmatmul.mubr.bf16.gmra.mrb[0].mxu0 %v2417
      %v2561 = vpop.f32.mrb[0].mxu0
      %v2562 = vadd.f32 0.0, %v2561
      %v2563 = vpop.f32.mrb[0].mxu0
      %v2564 = vpop.f32.mrb[0].mxu0
      %v2565 = vadd.f32 0.0, %v2564
      %v2566 = vpop.f32.mrb[0].mxu0
      %2567 = vmatprep.mubr.bf16.mxu0 0
      %2568 = vmatmul.mubr.bf16.gmra.mrb[0].mxu0 %v2420
      %v2569 = vpop.f32.mrb[0].mxu0
      %v2570 = vadd.f32 0.0, %v2569
      %v2571 = vpop.f32.mrb[0].mxu0
      %v2572 = vpop.f32.mrb[0].mxu0
      %v2573 = vadd.f32 0.0, %v2572
      %v2574 = vpop.f32.mrb[0].mxu0
      %2575 = vmatprep.mubr.bf16.mxu0 0
      %2576 = vmatmul.mubr.bf16.gmra.mrb[0].mxu0 %v2423
      %v2577 = vpop.f32.mrb[0].mxu0
      %v2578 = vadd.f32 0.0, %v2577
      %v2579 = vpop.f32.mrb[0].mxu0
      %v2580 = vpop.f32.mrb[0].mxu0
      %v2581 = vadd.f32 0.0, %v2580
      %v2582 = vpop.f32.mrb[0].mxu0
      %2583 = vmatprep.mubr.bf16.mxu0 0
      %2584 = vmatmul.mubr.bf16.gmra.mrb[0].mxu0 %v2426
      %v2585 = vpop.f32.mrb[0].mxu0
      %v2586 = vadd.f32 0.0, %v2585
      %v2587 = vpop.f32.mrb[0].mxu0
      %v2588 = vpop.f32.mrb[0].mxu0
      %v2589 = vadd.f32 0.0, %v2588
      %v2590 = vpop.f32.mrb[0].mxu0
      %2591 = vmatprep.mubr.bf16.mxu0 0
      %2592 = vmatmul.mubr.bf16.gmra.mrb[0].mxu0 %v2429
      %v2593 = vpop.f32.mrb[0].mxu0
      %v2594 = vadd.f32 0.0, %v2593
      %v2595 = vpop.f32.mrb[0].mxu0
      %v2596 = vpop.f32.mrb[0].mxu0
      %v2597 = vadd.f32 0.0, %v2596
      %v2598 = vpop.f32.mrb[0].mxu0
      %2599 = vmatprep.mubr.bf16.mxu0 0
      %2600 = vmatmul.mubr.bf16.gmra.mrb[0].mxu0 %v2432
      %v2601 = vpop.f32.mrb[0].mxu0
      %v2602 = vadd.f32 0.0, %v2601
      %v2603 = vpop.f32.mrb[0].mxu0
      %v2604 = vpop.f32.mrb[0].mxu0
      %v2605 = vadd.f32 0.0, %v2604
      %v2606 = vpop.f32.mrb[0].mxu0
      %2607 = vmatprep.mubr.bf16.mxu0 0
      %2608 = vmatmul.mubr.bf16.gmra.mrb[0].mxu0 %v2435
      %v2609 = vpop.f32.mrb[0].mxu0
      %v2610 = vadd.f32 0.0, %v2609
      %v2611 = vpop.f32.mrb[0].mxu0
      %v2612 = vpop.f32.mrb[0].mxu0
      %v2613 = vadd.f32 0.0, %v2612
      %v2614 = vpop.f32.mrb[0].mxu0
      %2615 = vmatprep.mubr.bf16.mxu0 0
      %2616 = vmatmul.mubr.bf16.gmra.mrb[0].mxu0 %v2438
      %v2617 = vpop.f32.mrb[0].mxu0
      %v2618 = vadd.f32 0.0, %v2617
      %v2619 = vpop.f32.mrb[0].mxu0
      %v2620 = vpop.f32.mrb[0].mxu0
      %v2621 = vadd.f32 0.0, %v2620
      %v2622 = vpop.f32.mrb[0].mxu0
      %2623 = vmatprep.mubr.bf16.mxu0 0
      %2624 = vmatmul.mubr.bf16.gmra.mrb[0].mxu0 %v2441
      %v2625 = vpop.f32.mrb[0].mxu0
      %v2626 = vadd.f32 0.0, %v2625
      %v2627 = vpop.f32.mrb[0].mxu0
      %v2628 = vpop.f32.mrb[0].mxu0
      %v2629 = vadd.f32 0.0, %v2628
      %v2630 = vpop.f32.mrb[0].mxu0
      %2631 = vmatprep.mubr.bf16.mxu0 0
      %2632 = vmatmul.mubr.bf16.gmra.mrb[0].mxu0 %v2444
      %v2633 = vpop.f32.mrb[0].mxu0
      %v2634 = vadd.f32 0.0, %v2633
      %v2635 = vpop.f32.mrb[0].mxu0
      %v2636 = vpop.f32.mrb[0].mxu0
      %v2637 = vadd.f32 0.0, %v2636
      %v2638 = vpop.f32.mrb[0].mxu0
      %2639 = vmatprep.mubr.bf16.mxu0 0
      %2640 = vmatmul.mubr.bf16.gmra.mrb[0].mxu0 %v2447
      %v2641 = vpop.f32.mrb[0].mxu0
      %v2642 = vadd.f32 0.0, %v2641
      %v2643 = vpop.f32.mrb[0].mxu0
      %v2644 = vpop.f32.mrb[0].mxu0
      %v2645 = vadd.f32 0.0, %v2644
      %v2646 = vpop.f32.mrb[0].mxu0
      %2647 = vmatprep.mubr.bf16.mxu0 0
      %2648 = vmatmul.mubr.bf16.gmra.mrb[0].mxu0 %v2450
      %v2649 = vpop.f32.mrb[0].mxu0
      %v2650 = vadd.f32 0.0, %v2649
      %v2651 = vpop.f32.mrb[0].mxu0
      %v2652 = vpop.f32.mrb[0].mxu0
      %v2653 = vadd.f32 0.0, %v2652
      %v2654 = vpop.f32.mrb[0].mxu0
      %2655 = vmatprep.mubr.bf16.mxu0 0
      %2656 = vmatmul.mubr.bf16.gmra.mrb[0].mxu0 %v2453
      %v2657 = vpop.f32.mrb[0].mxu0
      %v2658 = vadd.f32 0.0, %v2657
      %v2659 = vpop.f32.mrb[0].mxu0
      %v2660 = vpop.f32.mrb[0].mxu0
      %v2661 = vadd.f32 0.0, %v2660
      %v2662 = vpop.f32.mrb[0].mxu0
      %2663 = vmatprep.mubr.bf16.mxu0 0
      %2664 = vmatmul.mubr.bf16.gmra.mrb[0].mxu0 %v2456
      %v2665 = vpop.f32.mrb[0].mxu0
      %v2666 = vadd.f32 0.0, %v2665
      %v2667 = vpop.f32.mrb[0].mxu0
      %v2668 = vpop.f32.mrb[0].mxu0
      %v2669 = vadd.f32 0.0, %v2668
      %v2670 = vpop.f32.mrb[0].mxu0
      %2671 = vmatprep.mubr.bf16.mxu0 0
      %2672 = vmatmul.mubr.bf16.gmra.mrb[0].mxu0 %v2459
      %v2673 = vpop.f32.mrb[0].mxu0
      %v2674 = vadd.f32 0.0, %v2673
      %v2675 = vpop.f32.mrb[0].mxu0
      %v2676 = vpop.f32.mrb[0].mxu0
      %v2677 = vadd.f32 0.0, %v2676
      %v2678 = vpop.f32.mrb[0].mxu0
      %2679 = vmatprep.mubr.bf16.mxu0 0
      %2680 = vmatmul.mubr.bf16.gmra.mrb[0].mxu0 %v2462
      %v2681 = vpop.f32.mrb[0].mxu0
      %v2682 = vadd.f32 0.0, %v2681
      %v2683 = vpop.f32.mrb[0].mxu0
      %v2684 = vpop.f32.mrb[0].mxu0
      %v2685 = vadd.f32 0.0, %v2684
      %v2686 = vpop.f32.mrb[0].mxu0
      %2687 = vmatprep.mubr.bf16.mxu0 0
      %2688 = vmatmul.mubr.bf16.gmra.mrb[0].mxu0 %v2465
      %v2689 = vpop.f32.mrb[0].mxu0
      %v2690 = vadd.f32 0.0, %v2689
      %v2691 = vpop.f32.mrb[0].mxu0
      %v2692 = vpop.f32.mrb[0].mxu0
      %v2693 = vadd.f32 0.0, %v2692
      %v2694 = vpop.f32.mrb[0].mxu0
      %2695 = vmatprep.mubr.bf16.mxu0 0
      %2696 = vmatmul.mubr.bf16.gmra.mrb[0].mxu0 %v2468
      %v2697 = vpop.f32.mrb[0].mxu0
      %v2698 = vadd.f32 0.0, %v2697
      %v2699 = vpop.f32.mrb[0].mxu0
      %v2700 = vpop.f32.mrb[0].mxu0
      %v2701 = vadd.f32 0.0, %v2700
      %v2702 = vpop.f32.mrb[0].mxu0
      %2703 = vmatprep.mubr.bf16.mxu0 0
      %2704 = vmatmul.mubr.bf16.gmra.mrb[0].mxu0 %v2471
      %v2705 = vpop.f32.mrb[0].mxu0
      %v2706 = vadd.f32 0.0, %v2705
      %v2707 = vpop.f32.mrb[0].mxu0
      %v2708 = vpop.f32.mrb[0].mxu0
      %v2709 = vadd.f32 0.0, %v2708
      %v2710 = vpop.f32.mrb[0].mxu0
      %2711 = vmatprep.mubr.bf16.mxu0 0
      %2712 = vmatmul.mubr.bf16.gmra.mrb[0].mxu0 %v2474
      %v2713 = vpop.f32.mrb[0].mxu0
      %v2714 = vadd.f32 0.0, %v2713
      %v2715 = vpop.f32.mrb[0].mxu0
      %v2716 = vpop.f32.mrb[0].mxu0
      %v2717 = vadd.f32 0.0, %v2716
      %v2718 = vpop.f32.mrb[0].mxu0
      %2719 = vmatprep.mubr.bf16.mxu0 0
      %2720 = vmatmul.mubr.bf16.gmra.mrb[0].mxu0 %v2477
      %v2721 = vpop.f32.mrb[0].mxu0
      %v2722 = vadd.f32 0.0, %v2721
      %v2723 = vpop.f32.mrb[0].mxu0
      %v2724 = vpop.f32.mrb[0].mxu0
      %v2725 = vadd.f32 0.0, %v2724
      %v2726 = vpop.f32.mrb[0].mxu0
      %2727 = vmatprep.mubr.bf16.mxu0 0
      %2728 = vmatmul.mubr.bf16.gmra.mrb[0].mxu0 %v2480
      %v2729 = vpop.f32.mrb[0].mxu0
      %v2730 = vadd.f32 0.0, %v2729
      %v2731 = vpop.f32.mrb[0].mxu0
      %v2732 = vpop.f32.mrb[0].mxu0
      %v2733 = vadd.f32 0.0, %v2732
      %v2734 = vpop.f32.mrb[0].mxu0
      %2735 = vmatprep.mubr.bf16.mxu0 0
      %2736 = vmatmul.mubr.bf16.gmra.mrb[0].mxu0 %v2483
      %v2737 = vpop.f32.mrb[0].mxu0
      %v2738 = vadd.f32 0.0, %v2737
      %v2739 = vpop.f32.mrb[0].mxu0
      %v2740 = vpop.f32.mrb[0].mxu0
      %v2741 = vadd.f32 0.0, %v2740
      %v2742 = vpop.f32.mrb[0].mxu0
      %2743 = vmatprep.mubr.bf16.mxu0 0
      %2744 = vmatmul.mubr.bf16.gmra.mrb[0].mxu0 %v2486
      %v2745 = vpop.f32.mrb[0].mxu0
      %v2746 = vadd.f32 0.0, %v2745
      %v2747 = vpop.f32.mrb[0].mxu0
      %v2748 = vpop.f32.mrb[0].mxu0
      %v2749 = vadd.f32 0.0, %v2748
      %v2750 = vpop.f32.mrb[0].mxu0
      %2751 = vmatprep.mubr.bf16.mxu0 0
      %2752 = vmatmul.mubr.bf16.gmra.mrb[0].mxu0 %v2489
      %v2753 = vpop.f32.mrb[0].mxu0
      %v2754 = vadd.f32 0.0, %v2753
      %v2755 = vpop.f32.mrb[0].mxu0
      %v2756 = vpop.f32.mrb[0].mxu0
      %v2757 = vadd.f32 0.0, %v2756
      %v2758 = vpop.f32.mrb[0].mxu0
      %2759 = vmatprep.mubr.bf16.mxu0 0
      %2760 = vmatmul.mubr.bf16.gmra.mrb[0].mxu0 %v2492
      %v2761 = vpop.f32.mrb[0].mxu0
      %v2762 = vadd.f32 0.0, %v2761
      %v2763 = vpop.f32.mrb[0].mxu0
      %v2764 = vpop.f32.mrb[0].mxu0
      %v2765 = vadd.f32 0.0, %v2764
      %v2766 = vpop.f32.mrb[0].mxu0
      %2767 = vmatprep.mubr.bf16.mxu0 0
      %2768 = vmatmul.mubr.bf16.gmra.mrb[0].mxu0 %v2495
      %v2769 = vpop.f32.mrb[0].mxu0
      %v2770 = vadd.f32 0.0, %v2769
      %v2771 = vpop.f32.mrb[0].mxu0
      %v2772 = vpop.f32.mrb[0].mxu0
      %v2773 = vadd.f32 0.0, %v2772
      %v2774 = vpop.f32.mrb[0].mxu0
      %2775 = vmatprep.mubr.bf16.mxu0 0
      %2776 = vmatmul.mubr.bf16.gmra.mrb[0].mxu0 %v2498
      %v2777 = vpop.f32.mrb[0].mxu0
      %v2778 = vadd.f32 0.0, %v2777
      %v2779 = vpop.f32.mrb[0].mxu0
      %v2780 = vpop.f32.mrb[0].mxu0
      %v2781 = vadd.f32 0.0, %v2780
      %v2782 = vpop.f32.mrb[0].mxu0
      %2783 = vmatprep.mubr.bf16.mxu0 0
      %2784 = vmatmul.mubr.bf16.gmra.mrb[0].mxu0 %v2501
      %v2785 = vpop.f32.mrb[0].mxu0
      %v2786 = vadd.f32 0.0, %v2785
      %v2787 = vpop.f32.mrb[0].mxu0
      %v2788 = vpop.f32.mrb[0].mxu0
      %v2789 = vadd.f32 0.0, %v2788
      %v2790 = vpop.f32.mrb[0].mxu0
      %2791 = vdwg.mxu0
      %v2796 = vunpack.c.l.b16 %v2290
      %v2797 = vunpack.c.l.b16 %v2291
      %v2798 = vunpack.c.l.b16 %v2292
      %v2799 = vunpack.c.l.b16 %v2293
      %v2800 = vpack.c.b16 %v2797, %v2796
      %v2801 = vpack.c.b16 %v2799, %v2798
      %v2805 = vsel %vm1681, %v2258, 0
      %v2808 = vsel %vm1681, %v2259, 0
      %v2811 = vsel %vm1681, %v2260, 0
      %v2814 = vsel %vm1681, %v2261, 0
      %v2817 = vsel %vm1681, %v2262, 0
      %v2820 = vsel %vm1681, %v2263, 0
      %v2823 = vsel %vm1681, %v2264, 0
      %v2826 = vsel %vm1681, %v2265, 0
      %v2829 = vsel %vm1681, %v2266, 0
      %v2832 = vsel %vm1681, %v2267, 0
      %v2835 = vsel %vm1681, %v2268, 0
      %v2838 = vsel %vm1681, %v2269, 0
      %v2841 = vsel %vm1681, %v2270, 0
      %v2844 = vsel %vm1681, %v2271, 0
      %v2847 = vsel %vm1681, %v2272, 0
      %v2850 = vsel %vm1681, %v2273, 0
      %v2853 = vsel %vm1681, %v2274, 0
      %v2856 = vsel %vm1681, %v2275, 0
      %v2859 = vsel %vm1681, %v2276, 0
      %v2862 = vsel %vm1681, %v2277, 0
      %v2865 = vsel %vm1681, %v2278, 0
      %v2868 = vsel %vm1681, %v2279, 0
      %v2871 = vsel %vm1681, %v2280, 0
      %v2874 = vsel %vm1681, %v2281, 0
      %v2877 = vsel %vm1681, %v2282, 0
      %v2880 = vsel %vm1681, %v2283, 0
      %v2883 = vsel %vm1681, %v2284, 0
      %v2886 = vsel %vm1681, %v2285, 0
      %v2889 = vsel %vm1681, %v2286, 0
      %v2892 = vsel %vm1681, %v2287, 0
      %v2895 = vsel %vm1681, %v2288, 0
      %v2898 = vsel %vm1681, %v2289, 0
      %2900 = vmatprep.subr.bf16.mxu0 0
      %2901 = vmatpush1.bf16.msra.mxu0 %v2800
      %2902 = vmatprep.subr.bf16.mxu0 0
      %2903 = vmatpush1.bf16.msra.mxu0 %v2801
      %2904 = vmatprep.subr.bf16.mxu0 0
      %2905 = vmatpush1.bf16.msra.mxu0 0
      %2906 = vmatprep.subr.bf16.mxu0 0
      %2907 = vmatpush1.bf16.msra.mxu0 0
      %2908 = vmatprep.subr.bf16.mxu0 0
      %2909 = vmatpush1.bf16.msra.mxu0 0
      %2910 = vmatprep.subr.bf16.mxu0 0
      %2911 = vmatpush1.bf16.msra.mxu0 0
      %2912 = vmatprep.subr.bf16.mxu0 0
      %2913 = vmatpush1.bf16.msra.mxu0 0
      %2914 = vmatprep.subr.bf16.mxu0 0
      %2915 = vmatpush1.bf16.msra.mxu0 0
      %2916 = vmatprep.subr.bf16.mxu0 0
      %2917 = vmatpush1.bf16.msra.mxu0 0
      %2918 = vmatprep.subr.bf16.mxu0 0
      %2919 = vmatpush1.bf16.msra.mxu0 0
      %2920 = vmatprep.subr.bf16.mxu0 0
      %2921 = vmatpush1.bf16.msra.mxu0 0
      %2922 = vmatprep.subr.bf16.mxu0 0
      %2923 = vmatpush1.bf16.msra.mxu0 0
      %2924 = vmatprep.subr.bf16.mxu0 0
      %2925 = vmatpush1.bf16.msra.mxu0 0
      %2926 = vmatprep.subr.bf16.mxu0 0
      %2927 = vmatpush1.bf16.msra.mxu0 0
      %2928 = vmatprep.subr.bf16.mxu0 0
      %2929 = vmatpush1.bf16.msra.mxu0 0
      %2930 = vmatprep.subr.bf16.mxu0 0
      %2931 = vmatpush1.bf16.msra.mxu0 0
      %2932 = vmatprep.mubr.bf16.mxu0 0
      %2933 = vmatmul.mubr.bf16.gmra.mrb[0].mxu0 %v2805
      %v2934 = vpop.f32.mrb[0].mxu0
      %v2935 = vadd.f32 %v2538, %v2934
      %v2936 = vpop.f32.mrb[0].mxu0
      %v2937 = vpop.f32.mrb[0].mxu0
      %v2938 = vadd.f32 %v2541, %v2937
      %v2939 = vpop.f32.mrb[0].mxu0
      %2940 = vmatprep.mubr.bf16.mxu0 0
      %2941 = vmatmul.mubr.bf16.gmra.mrb[0].mxu0 %v2808
      %v2942 = vpop.f32.mrb[0].mxu0
      %v2943 = vadd.f32 %v2546, %v2942
      %v2944 = vpop.f32.mrb[0].mxu0
      %v2945 = vpop.f32.mrb[0].mxu0
      %v2946 = vadd.f32 %v2549, %v2945
      %v2947 = vpop.f32.mrb[0].mxu0
      %2948 = vmatprep.mubr.bf16.mxu0 0
      %2949 = vmatmul.mubr.bf16.gmra.mrb[0].mxu0 %v2811
      %v2950 = vpop.f32.mrb[0].mxu0
      %v2951 = vadd.f32 %v2554, %v2950
      %v2952 = vpop.f32.mrb[0].mxu0
      %v2953 = vpop.f32.mrb[0].mxu0
      %v2954 = vadd.f32 %v2557, %v2953
      %v2955 = vpop.f32.mrb[0].mxu0
      %2956 = vmatprep.mubr.bf16.mxu0 0
      %2957 = vmatmul.mubr.bf16.gmra.mrb[0].mxu0 %v2814
      %v2958 = vpop.f32.mrb[0].mxu0
      %v2959 = vadd.f32 %v2562, %v2958
      %v2960 = vpop.f32.mrb[0].mxu0
      %v2961 = vpop.f32.mrb[0].mxu0
      %v2962 = vadd.f32 %v2565, %v2961
      %v2963 = vpop.f32.mrb[0].mxu0
      %2964 = vmatprep.mubr.bf16.mxu0 0
      %2965 = vmatmul.mubr.bf16.gmra.mrb[0].mxu0 %v2817
      %v2966 = vpop.f32.mrb[0].mxu0
      %v2967 = vadd.f32 %v2570, %v2966
      %v2968 = vpop.f32.mrb[0].mxu0
      %v2969 = vpop.f32.mrb[0].mxu0
      %v2970 = vadd.f32 %v2573, %v2969
      %v2971 = vpop.f32.mrb[0].mxu0
      %2972 = vmatprep.mubr.bf16.mxu0 0
      %2973 = vmatmul.mubr.bf16.gmra.mrb[0].mxu0 %v2820
      %v2974 = vpop.f32.mrb[0].mxu0
      %v2975 = vadd.f32 %v2578, %v2974
      %v2976 = vpop.f32.mrb[0].mxu0
      %v2977 = vpop.f32.mrb[0].mxu0
      %v2978 = vadd.f32 %v2581, %v2977
      %v2979 = vpop.f32.mrb[0].mxu0
      %2980 = vmatprep.mubr.bf16.mxu0 0
      %2981 = vmatmul.mubr.bf16.gmra.mrb[0].mxu0 %v2823
      %v2982 = vpop.f32.mrb[0].mxu0
      %v2983 = vadd.f32 %v2586, %v2982
      %v2984 = vpop.f32.mrb[0].mxu0
      %v2985 = vpop.f32.mrb[0].mxu0
      %v2986 = vadd.f32 %v2589, %v2985
      %v2987 = vpop.f32.mrb[0].mxu0
      %2988 = vmatprep.mubr.bf16.mxu0 0
      %2989 = vmatmul.mubr.bf16.gmra.mrb[0].mxu0 %v2826
      %v2990 = vpop.f32.mrb[0].mxu0
      %v2991 = vadd.f32 %v2594, %v2990
      %v2992 = vpop.f32.mrb[0].mxu0
      %v2993 = vpop.f32.mrb[0].mxu0
      %v2994 = vadd.f32 %v2597, %v2993
      %v2995 = vpop.f32.mrb[0].mxu0
      %2996 = vmatprep.mubr.bf16.mxu0 0
      %2997 = vmatmul.mubr.bf16.gmra.mrb[0].mxu0 %v2829
      %v2998 = vpop.f32.mrb[0].mxu0
      %v2999 = vadd.f32 %v2602, %v2998
      %v3000 = vpop.f32.mrb[0].mxu0
      %v3001 = vpop.f32.mrb[0].mxu0
      %v3002 = vadd.f32 %v2605, %v3001
      %v3003 = vpop.f32.mrb[0].mxu0
      %3004 = vmatprep.mubr.bf16.mxu0 0
      %3005 = vmatmul.mubr.bf16.gmra.mrb[0].mxu0 %v2832
      %v3006 = vpop.f32.mrb[0].mxu0
      %v3007 = vadd.f32 %v2610, %v3006
      %v3008 = vpop.f32.mrb[0].mxu0
      %v3009 = vpop.f32.mrb[0].mxu0
      %v3010 = vadd.f32 %v2613, %v3009
      %v3011 = vpop.f32.mrb[0].mxu0
      %3012 = vmatprep.mubr.bf16.mxu0 0
      %3013 = vmatmul.mubr.bf16.gmra.mrb[0].mxu0 %v2835
      %v3014 = vpop.f32.mrb[0].mxu0
      %v3015 = vadd.f32 %v2618, %v3014
      %v3016 = vpop.f32.mrb[0].mxu0
      %v3017 = vpop.f32.mrb[0].mxu0
      %v3018 = vadd.f32 %v2621, %v3017
      %v3019 = vpop.f32.mrb[0].mxu0
      %3020 = vmatprep.mubr.bf16.mxu0 0
      %3021 = vmatmul.mubr.bf16.gmra.mrb[0].mxu0 %v2838
      %v3022 = vpop.f32.mrb[0].mxu0
      %v3023 = vadd.f32 %v2626, %v3022
      %v3024 = vpop.f32.mrb[0].mxu0
      %v3025 = vpop.f32.mrb[0].mxu0
      %v3026 = vadd.f32 %v2629, %v3025
      %v3027 = vpop.f32.mrb[0].mxu0
      %3028 = vmatprep.mubr.bf16.mxu0 0
      %3029 = vmatmul.mubr.bf16.gmra.mrb[0].mxu0 %v2841
      %v3030 = vpop.f32.mrb[0].mxu0
      %v3031 = vadd.f32 %v2634, %v3030
      %v3032 = vpop.f32.mrb[0].mxu0
      %v3033 = vpop.f32.mrb[0].mxu0
      %v3034 = vadd.f32 %v2637, %v3033
      %v3035 = vpop.f32.mrb[0].mxu0
      %3036 = vmatprep.mubr.bf16.mxu0 0
      %3037 = vmatmul.mubr.bf16.gmra.mrb[0].mxu0 %v2844
      %v3038 = vpop.f32.mrb[0].mxu0
      %v3039 = vadd.f32 %v2642, %v3038
      %v3040 = vpop.f32.mrb[0].mxu0
      %v3041 = vpop.f32.mrb[0].mxu0
      %v3042 = vadd.f32 %v2645, %v3041
      %v3043 = vpop.f32.mrb[0].mxu0
      %3044 = vmatprep.mubr.bf16.mxu0 0
      %3045 = vmatmul.mubr.bf16.gmra.mrb[0].mxu0 %v2847
      %v3046 = vpop.f32.mrb[0].mxu0
      %v3047 = vadd.f32 %v2650, %v3046
      %v3048 = vpop.f32.mrb[0].mxu0
      %v3049 = vpop.f32.mrb[0].mxu0
      %v3050 = vadd.f32 %v2653, %v3049
      %v3051 = vpop.f32.mrb[0].mxu0
      %3052 = vmatprep.mubr.bf16.mxu0 0
      %3053 = vmatmul.mubr.bf16.gmra.mrb[0].mxu0 %v2850
      %v3054 = vpop.f32.mrb[0].mxu0
      %v3055 = vadd.f32 %v2658, %v3054
      %v3056 = vpop.f32.mrb[0].mxu0
      %v3057 = vpop.f32.mrb[0].mxu0
      %v3058 = vadd.f32 %v2661, %v3057
      %v3059 = vpop.f32.mrb[0].mxu0
      %3060 = vmatprep.mubr.bf16.mxu0 0
      %3061 = vmatmul.mubr.bf16.gmra.mrb[0].mxu0 %v2853
      %v3062 = vpop.f32.mrb[0].mxu0
      %v3063 = vadd.f32 %v2666, %v3062
      %v3064 = vpop.f32.mrb[0].mxu0
      %v3065 = vpop.f32.mrb[0].mxu0
      %v3066 = vadd.f32 %v2669, %v3065
      %v3067 = vpop.f32.mrb[0].mxu0
      %3068 = vmatprep.mubr.bf16.mxu0 0
      %3069 = vmatmul.mubr.bf16.gmra.mrb[0].mxu0 %v2856
      %v3070 = vpop.f32.mrb[0].mxu0
      %v3071 = vadd.f32 %v2674, %v3070
      %v3072 = vpop.f32.mrb[0].mxu0
      %v3073 = vpop.f32.mrb[0].mxu0
      %v3074 = vadd.f32 %v2677, %v3073
      %v3075 = vpop.f32.mrb[0].mxu0
      %3076 = vmatprep.mubr.bf16.mxu0 0
      %3077 = vmatmul.mubr.bf16.gmra.mrb[0].mxu0 %v2859
      %v3078 = vpop.f32.mrb[0].mxu0
      %v3079 = vadd.f32 %v2682, %v3078
      %v3080 = vpop.f32.mrb[0].mxu0
      %v3081 = vpop.f32.mrb[0].mxu0
      %v3082 = vadd.f32 %v2685, %v3081
      %v3083 = vpop.f32.mrb[0].mxu0
      %3084 = vmatprep.mubr.bf16.mxu0 0
      %3085 = vmatmul.mubr.bf16.gmra.mrb[0].mxu0 %v2862
      %v3086 = vpop.f32.mrb[0].mxu0
      %v3087 = vadd.f32 %v2690, %v3086
      %v3088 = vpop.f32.mrb[0].mxu0
      %v3089 = vpop.f32.mrb[0].mxu0
      %v3090 = vadd.f32 %v2693, %v3089
      %v3091 = vpop.f32.mrb[0].mxu0
      %3092 = vmatprep.mubr.bf16.mxu0 0
      %3093 = vmatmul.mubr.bf16.gmra.mrb[0].mxu0 %v2865
      %v3094 = vpop.f32.mrb[0].mxu0
      %v3095 = vadd.f32 %v2698, %v3094
      %v3096 = vpop.f32.mrb[0].mxu0
      %v3097 = vpop.f32.mrb[0].mxu0
      %v3098 = vadd.f32 %v2701, %v3097
      %v3099 = vpop.f32.mrb[0].mxu0
      %3100 = vmatprep.mubr.bf16.mxu0 0
      %3101 = vmatmul.mubr.bf16.gmra.mrb[0].mxu0 %v2868
      %v3102 = vpop.f32.mrb[0].mxu0
      %v3103 = vadd.f32 %v2706, %v3102
      %v3104 = vpop.f32.mrb[0].mxu0
      %v3105 = vpop.f32.mrb[0].mxu0
      %v3106 = vadd.f32 %v2709, %v3105
      %v3107 = vpop.f32.mrb[0].mxu0
      %3108 = vmatprep.mubr.bf16.mxu0 0
      %3109 = vmatmul.mubr.bf16.gmra.mrb[0].mxu0 %v2871
      %v3110 = vpop.f32.mrb[0].mxu0
      %v3111 = vadd.f32 %v2714, %v3110
      %v3112 = vpop.f32.mrb[0].mxu0
      %v3113 = vpop.f32.mrb[0].mxu0
      %v3114 = vadd.f32 %v2717, %v3113
      %v3115 = vpop.f32.mrb[0].mxu0
      %3116 = vmatprep.mubr.bf16.mxu0 0
      %3117 = vmatmul.mubr.bf16.gmra.mrb[0].mxu0 %v2874
      %v3118 = vpop.f32.mrb[0].mxu0
      %v3119 = vadd.f32 %v2722, %v3118
      %v3120 = vpop.f32.mrb[0].mxu0
      %v3121 = vpop.f32.mrb[0].mxu0
      %v3122 = vadd.f32 %v2725, %v3121
      %v3123 = vpop.f32.mrb[0].mxu0
      %3124 = vmatprep.mubr.bf16.mxu0 0
      %3125 = vmatmul.mubr.bf16.gmra.mrb[0].mxu0 %v2877
      %v3126 = vpop.f32.mrb[0].mxu0
      %v3127 = vadd.f32 %v2730, %v3126
      %v3128 = vpop.f32.mrb[0].mxu0
      %v3129 = vpop.f32.mrb[0].mxu0
      %v3130 = vadd.f32 %v2733, %v3129
      %v3131 = vpop.f32.mrb[0].mxu0
      %3132 = vmatprep.mubr.bf16.mxu0 0
      %3133 = vmatmul.mubr.bf16.gmra.mrb[0].mxu0 %v2880
      %v3134 = vpop.f32.mrb[0].mxu0
      %v3135 = vadd.f32 %v2738, %v3134
      %v3136 = vpop.f32.mrb[0].mxu0
      %v3137 = vpop.f32.mrb[0].mxu0
      %v3138 = vadd.f32 %v2741, %v3137
      %v3139 = vpop.f32.mrb[0].mxu0
      %3140 = vmatprep.mubr.bf16.mxu0 0
      %3141 = vmatmul.mubr.bf16.gmra.mrb[0].mxu0 %v2883
      %v3142 = vpop.f32.mrb[0].mxu0
      %v3143 = vadd.f32 %v2746, %v3142
      %v3144 = vpop.f32.mrb[0].mxu0
      %v3145 = vpop.f32.mrb[0].mxu0
      %v3146 = vadd.f32 %v2749, %v3145
      %v3147 = vpop.f32.mrb[0].mxu0
      %3148 = vmatprep.mubr.bf16.mxu0 0
      %3149 = vmatmul.mubr.bf16.gmra.mrb[0].mxu0 %v2886
      %v3150 = vpop.f32.mrb[0].mxu0
      %v3151 = vadd.f32 %v2754, %v3150
      %v3152 = vpop.f32.mrb[0].mxu0
      %v3153 = vpop.f32.mrb[0].mxu0
      %v3154 = vadd.f32 %v2757, %v3153
      %v3155 = vpop.f32.mrb[0].mxu0
      %3156 = vmatprep.mubr.bf16.mxu0 0
      %3157 = vmatmul.mubr.bf16.gmra.mrb[0].mxu0 %v2889
      %v3158 = vpop.f32.mrb[0].mxu0
      %v3159 = vadd.f32 %v2762, %v3158
      %v3160 = vpop.f32.mrb[0].mxu0
      %v3161 = vpop.f32.mrb[0].mxu0
      %v3162 = vadd.f32 %v2765, %v3161
      %v3163 = vpop.f32.mrb[0].mxu0
      %3164 = vmatprep.mubr.bf16.mxu0 0
      %3165 = vmatmul.mubr.bf16.gmra.mrb[0].mxu0 %v2892
      %v3166 = vpop.f32.mrb[0].mxu0
      %v3167 = vadd.f32 %v2770, %v3166
      %v3168 = vpop.f32.mrb[0].mxu0
      %v3169 = vpop.f32.mrb[0].mxu0
      %v3170 = vadd.f32 %v2773, %v3169
      %v3171 = vpop.f32.mrb[0].mxu0
      %3172 = vmatprep.mubr.bf16.mxu0 0
      %3173 = vmatmul.mubr.bf16.gmra.mrb[0].mxu0 %v2895
      %v3174 = vpop.f32.mrb[0].mxu0
      %v3175 = vadd.f32 %v2778, %v3174
      %v3176 = vpop.f32.mrb[0].mxu0
      %v3177 = vpop.f32.mrb[0].mxu0
      %v3178 = vadd.f32 %v2781, %v3177
      %v3179 = vpop.f32.mrb[0].mxu0
      %3180 = vmatprep.mubr.bf16.mxu0 0
      %3181 = vmatmul.mubr.bf16.gmra.mrb[0].mxu0 %v2898
      %v3182 = vpop.f32.mrb[0].mxu0
      %v3183 = vadd.f32 %v2786, %v3182
      %v3184 = vpop.f32.mrb[0].mxu0
      %v3185 = vpop.f32.mrb[0].mxu0
      %v3186 = vadd.f32 %v2789, %v3185
      %v3187 = vpop.f32.mrb[0].mxu0
      %3188 = vdwg.mxu0
      %v3189 = vld [vmem:[#allocation3 + $0x2] sm:$0xff]
      %v3190 = vld [vmem:[#allocation3 + $0xa] sm:$0xff]
      %v3191 = vld [vmem:[#allocation3 + $0x12] sm:$0xff]
      %v3192 = vld [vmem:[#allocation3 + $0x1a] sm:$0xff]
      %v3193 = vld [vmem:[#allocation3 + $0x22] sm:$0xff]
      %v3194 = vld [vmem:[#allocation3 + $0x2a] sm:$0xff]
      %v3195 = vld [vmem:[#allocation3 + $0x32] sm:$0xff]
      %v3196 = vld [vmem:[#allocation3 + $0x3a] sm:$0xff]
      %v3197 = vld [vmem:[#allocation3 + $0x42] sm:$0xff]
      %v3198 = vld [vmem:[#allocation3 + $0x4a] sm:$0xff]
      %v3199 = vld [vmem:[#allocation3 + $0x52] sm:$0xff]
      %v3200 = vld [vmem:[#allocation3 + $0x5a] sm:$0xff]
      %v3201 = vld [vmem:[#allocation3 + $0x62] sm:$0xff]
      %v3202 = vld [vmem:[#allocation3 + $0x6a] sm:$0xff]
      %v3203 = vld [vmem:[#allocation3 + $0x72] sm:$0xff]
      %v3204 = vld [vmem:[#allocation3 + $0x7a] sm:$0xff]
      %v3205 = vld [vmem:[#allocation3 + $0x82] sm:$0xff]
      %v3206 = vld [vmem:[#allocation3 + $0x8a] sm:$0xff]
      %v3207 = vld [vmem:[#allocation3 + $0x92] sm:$0xff]
      %v3208 = vld [vmem:[#allocation3 + $0x9a] sm:$0xff]
      %v3209 = vld [vmem:[#allocation3 + $0xa2] sm:$0xff]
      %v3210 = vld [vmem:[#allocation3 + $0xaa] sm:$0xff]
      %v3211 = vld [vmem:[#allocation3 + $0xb2] sm:$0xff]
      %v3212 = vld [vmem:[#allocation3 + $0xba] sm:$0xff]
      %v3213 = vld [vmem:[#allocation3 + $0xc2] sm:$0xff]
      %v3214 = vld [vmem:[#allocation3 + $0xca] sm:$0xff]
      %v3215 = vld [vmem:[#allocation3 + $0xd2] sm:$0xff]
      %v3216 = vld [vmem:[#allocation3 + $0xda] sm:$0xff]
      %v3217 = vld [vmem:[#allocation3 + $0xe2] sm:$0xff]
      %v3218 = vld [vmem:[#allocation3 + $0xea] sm:$0xff]
      %v3219 = vld [vmem:[#allocation3 + $0xf2] sm:$0xff]
      %v3220 = vld [vmem:[#allocation3 + $0xfa] sm:$0xff]
      %v3221 = vld [vmem:[#allocation3 + $0x102] sm:$0xff]
      %v3222 = vld [vmem:[#allocation3 + $0x10a] sm:$0xff]
      %v3223 = vld [vmem:[#allocation3 + $0x112] sm:$0xff]
      %v3224 = vld [vmem:[#allocation3 + $0x11a] sm:$0xff]
      %v3225 = vld [vmem:[#allocation3 + $0x122] sm:$0xff]
      %v3226 = vld [vmem:[#allocation3 + $0x12a] sm:$0xff]
      %v3227 = vld [vmem:[#allocation3 + $0x132] sm:$0xff]
      %v3228 = vld [vmem:[#allocation3 + $0x13a] sm:$0xff]
      %v3229 = vld [vmem:[#allocation3 + $0x142] sm:$0xff]
      %v3230 = vld [vmem:[#allocation3 + $0x14a] sm:$0xff]
      %v3231 = vld [vmem:[#allocation3 + $0x152] sm:$0xff]
      %v3232 = vld [vmem:[#allocation3 + $0x15a] sm:$0xff]
      %v3233 = vld [vmem:[#allocation3 + $0x162] sm:$0xff]
      %v3234 = vld [vmem:[#allocation3 + $0x16a] sm:$0xff]
      %v3235 = vld [vmem:[#allocation3 + $0x172] sm:$0xff]
      %v3236 = vld [vmem:[#allocation3 + $0x17a] sm:$0xff]
      %v3237 = vld [vmem:[#allocation3 + $0x182] sm:$0xff]
      %v3238 = vld [vmem:[#allocation3 + $0x18a] sm:$0xff]
      %v3239 = vld [vmem:[#allocation3 + $0x192] sm:$0xff]
      %v3240 = vld [vmem:[#allocation3 + $0x19a] sm:$0xff]
      %v3241 = vld [vmem:[#allocation3 + $0x1a2] sm:$0xff]
      %v3242 = vld [vmem:[#allocation3 + $0x1aa] sm:$0xff]
      %v3243 = vld [vmem:[#allocation3 + $0x1b2] sm:$0xff]
      %v3244 = vld [vmem:[#allocation3 + $0x1ba] sm:$0xff]
      %v3245 = vld [vmem:[#allocation3 + $0x1c2] sm:$0xff]
      %v3246 = vld [vmem:[#allocation3 + $0x1ca] sm:$0xff]
      %v3247 = vld [vmem:[#allocation3 + $0x1d2] sm:$0xff]
      %v3248 = vld [vmem:[#allocation3 + $0x1da] sm:$0xff]
      %v3249 = vld [vmem:[#allocation3 + $0x1e2] sm:$0xff]
      %v3250 = vld [vmem:[#allocation3 + $0x1ea] sm:$0xff]
      %v3251 = vld [vmem:[#allocation3 + $0x1f2] sm:$0xff]
      %v3252 = vld [vmem:[#allocation3 + $0x1fa] sm:$0xff]
      %v3253 = vpack.c.bf16 %v3190, %v3189
      %v3254 = vpack.c.bf16 %v3192, %v3191
      %v3255 = vpack.c.bf16 %v3194, %v3193
      %v3256 = vpack.c.bf16 %v3196, %v3195
      %v3257 = vpack.c.bf16 %v3198, %v3197
      %v3258 = vpack.c.bf16 %v3200, %v3199
      %v3259 = vpack.c.bf16 %v3202, %v3201
      %v3260 = vpack.c.bf16 %v3204, %v3203
      %v3261 = vpack.c.bf16 %v3206, %v3205
      %v3262 = vpack.c.bf16 %v3208, %v3207
      %v3263 = vpack.c.bf16 %v3210, %v3209
      %v3264 = vpack.c.bf16 %v3212, %v3211
      %v3265 = vpack.c.bf16 %v3214, %v3213
      %v3266 = vpack.c.bf16 %v3216, %v3215
      %v3267 = vpack.c.bf16 %v3218, %v3217
      %v3268 = vpack.c.bf16 %v3220, %v3219
      %v3269 = vpack.c.bf16 %v3222, %v3221
      %v3270 = vpack.c.bf16 %v3224, %v3223
      %v3271 = vpack.c.bf16 %v3226, %v3225
      %v3272 = vpack.c.bf16 %v3228, %v3227
      %v3273 = vpack.c.bf16 %v3230, %v3229
      %v3274 = vpack.c.bf16 %v3232, %v3231
      %v3275 = vpack.c.bf16 %v3234, %v3233
      %v3276 = vpack.c.bf16 %v3236, %v3235
      %v3277 = vpack.c.bf16 %v3238, %v3237
      %v3278 = vpack.c.bf16 %v3240, %v3239
      %v3279 = vpack.c.bf16 %v3242, %v3241
      %v3280 = vpack.c.bf16 %v3244, %v3243
      %v3281 = vpack.c.bf16 %v3246, %v3245
      %v3282 = vpack.c.bf16 %v3248, %v3247
      %v3283 = vpack.c.bf16 %v3250, %v3249
      %v3284 = vpack.c.bf16 %v3252, %v3251
      %s3285 = scalar_lea.vmem %s3, 32
      %v3286 = vld [vmem:[%s3285] sm:$0xf]
      %v3287 = vld [vmem:[%s3285 + $0x4] sm:$0xf]
      %v3288 = vld [vmem:[%s3285 + $0x8] sm:$0xf]
      %v3289 = vld [vmem:[%s3285 + $0xc] sm:$0xf]
      %v3294 = vunpack.c.l.b16 %v3286
      %v3295 = vunpack.c.l.b16 %v3287
      %v3296 = vunpack.c.l.b16 %v3288
      %v3297 = vunpack.c.l.b16 %v3289
      %v3298 = vpack.c.b16 %v3295, %v3294
      %v3299 = vpack.c.b16 %v3297, %v3296
      %v3303 = vsel %vm1681, %v3253, 0
      %v3306 = vsel %vm1681, %v3254, 0
      %v3309 = vsel %vm1681, %v3255, 0
      %v3312 = vsel %vm1681, %v3256, 0
      %v3315 = vsel %vm1681, %v3257, 0
      %v3318 = vsel %vm1681, %v3258, 0
      %v3321 = vsel %vm1681, %v3259, 0
      %v3324 = vsel %vm1681, %v3260, 0
      %v3327 = vsel %vm1681, %v3261, 0
      %v3330 = vsel %vm1681, %v3262, 0
      %v3333 = vsel %vm1681, %v3263, 0
      %v3336 = vsel %vm1681, %v3264, 0
      %v3339 = vsel %vm1681, %v3265, 0
      %v3342 = vsel %vm1681, %v3266, 0
      %v3345 = vsel %vm1681, %v3267, 0
      %v3348 = vsel %vm1681, %v3268, 0
      %v3351 = vsel %vm1681, %v3269, 0
      %v3354 = vsel %vm1681, %v3270, 0
      %v3357 = vsel %vm1681, %v3271, 0
      %v3360 = vsel %vm1681, %v3272, 0
      %v3363 = vsel %vm1681, %v3273, 0
      %v3366 = vsel %vm1681, %v3274, 0
      %v3369 = vsel %vm1681, %v3275, 0
      %v3372 = vsel %vm1681, %v3276, 0
      %v3375 = vsel %vm1681, %v3277, 0
      %v3378 = vsel %vm1681, %v3278, 0
      %v3381 = vsel %vm1681, %v3279, 0
      %v3384 = vsel %vm1681, %v3280, 0
      %v3387 = vsel %vm1681, %v3281, 0
      %v3390 = vsel %vm1681, %v3282, 0
      %v3393 = vsel %vm1681, %v3283, 0
      %v3396 = vsel %vm1681, %v3284, 0
      %3398 = vmatprep.subr.bf16.mxu0 0
      %3399 = vmatpush1.bf16.msra.mxu0 %v3298
      %3400 = vmatprep.subr.bf16.mxu0 0
      %3401 = vmatpush1.bf16.msra.mxu0 %v3299
      %3402 = vmatprep.subr.bf16.mxu0 0
      %3403 = vmatpush1.bf16.msra.mxu0 0
      %3404 = vmatprep.subr.bf16.mxu0 0
      %3405 = vmatpush1.bf16.msra.mxu0 0
      %3406 = vmatprep.subr.bf16.mxu0 0
      %3407 = vmatpush1.bf16.msra.mxu0 0
      %3408 = vmatprep.subr.bf16.mxu0 0
      %3409 = vmatpush1.bf16.msra.mxu0 0
      %3410 = vmatprep.subr.bf16.mxu0 0
      %3411 = vmatpush1.bf16.msra.mxu0 0
      %3412 = vmatprep.subr.bf16.mxu0 0
      %3413 = vmatpush1.bf16.msra.mxu0 0
      %3414 = vmatprep.subr.bf16.mxu0 0
      %3415 = vmatpush1.bf16.msra.mxu0 0
      %3416 = vmatprep.subr.bf16.mxu0 0
      %3417 = vmatpush1.bf16.msra.mxu0 0
      %3418 = vmatprep.subr.bf16.mxu0 0
      %3419 = vmatpush1.bf16.msra.mxu0 0
      %3420 = vmatprep.subr.bf16.mxu0 0
      %3421 = vmatpush1.bf16.msra.mxu0 0
      %3422 = vmatprep.subr.bf16.mxu0 0
      %3423 = vmatpush1.bf16.msra.mxu0 0
      %3424 = vmatprep.subr.bf16.mxu0 0
      %3425 = vmatpush1.bf16.msra.mxu0 0
      %3426 = vmatprep.subr.bf16.mxu0 0
      %3427 = vmatpush1.bf16.msra.mxu0 0
      %3428 = vmatprep.subr.bf16.mxu0 0
      %3429 = vmatpush1.bf16.msra.mxu0 0
      %3430 = vmatprep.mubr.bf16.mxu0 0
      %3431 = vmatmul.mubr.bf16.gmra.mrb[0].mxu0 %v3303
      %v3432 = vpop.f32.mrb[0].mxu0
      %v3433 = vadd.f32 0.0, %v3432
      %v3434 = vpop.f32.mrb[0].mxu0
      %v3435 = vpop.f32.mrb[0].mxu0
      %v3436 = vadd.f32 0.0, %v3435
      %v3437 = vpop.f32.mrb[0].mxu0
      %3438 = vmatprep.mubr.bf16.mxu0 0
      %3439 = vmatmul.mubr.bf16.gmra.mrb[0].mxu0 %v3306
      %v3440 = vpop.f32.mrb[0].mxu0
      %v3441 = vadd.f32 0.0, %v3440
      %v3442 = vpop.f32.mrb[0].mxu0
      %v3443 = vpop.f32.mrb[0].mxu0
      %v3444 = vadd.f32 0.0, %v3443
      %v3445 = vpop.f32.mrb[0].mxu0
      %3446 = vmatprep.mubr.bf16.mxu0 0
      %3447 = vmatmul.mubr.bf16.gmra.mrb[0].mxu0 %v3309
      %v3448 = vpop.f32.mrb[0].mxu0
      %v3449 = vadd.f32 0.0, %v3448
      %v3450 = vpop.f32.mrb[0].mxu0
      %v3451 = vpop.f32.mrb[0].mxu0
      %v3452 = vadd.f32 0.0, %v3451
      %v3453 = vpop.f32.mrb[0].mxu0
      %3454 = vmatprep.mubr.bf16.mxu0 0
      %3455 = vmatmul.mubr.bf16.gmra.mrb[0].mxu0 %v3312
      %v3456 = vpop.f32.mrb[0].mxu0
      %v3457 = vadd.f32 0.0, %v3456
      %v3458 = vpop.f32.mrb[0].mxu0
      %v3459 = vpop.f32.mrb[0].mxu0
      %v3460 = vadd.f32 0.0, %v3459
      %v3461 = vpop.f32.mrb[0].mxu0
      %3462 = vmatprep.mubr.bf16.mxu0 0
      %3463 = vmatmul.mubr.bf16.gmra.mrb[0].mxu0 %v3315
      %v3464 = vpop.f32.mrb[0].mxu0
      %v3465 = vadd.f32 0.0, %v3464
      %v3466 = vpop.f32.mrb[0].mxu0
      %v3467 = vpop.f32.mrb[0].mxu0
      %v3468 = vadd.f32 0.0, %v3467
      %v3469 = vpop.f32.mrb[0].mxu0
      %3470 = vmatprep.mubr.bf16.mxu0 0
      %3471 = vmatmul.mubr.bf16.gmra.mrb[0].mxu0 %v3318
      %v3472 = vpop.f32.mrb[0].mxu0
      %v3473 = vadd.f32 0.0, %v3472
      %v3474 = vpop.f32.mrb[0].mxu0
      %v3475 = vpop.f32.mrb[0].mxu0
      %v3476 = vadd.f32 0.0, %v3475
      %v3477 = vpop.f32.mrb[0].mxu0
      %3478 = vmatprep.mubr.bf16.mxu0 0
      %3479 = vmatmul.mubr.bf16.gmra.mrb[0].mxu0 %v3321
      %v3480 = vpop.f32.mrb[0].mxu0
      %v3481 = vadd.f32 0.0, %v3480
      %v3482 = vpop.f32.mrb[0].mxu0
      %v3483 = vpop.f32.mrb[0].mxu0
      %v3484 = vadd.f32 0.0, %v3483
      %v3485 = vpop.f32.mrb[0].mxu0
      %3486 = vmatprep.mubr.bf16.mxu0 0
      %3487 = vmatmul.mubr.bf16.gmra.mrb[0].mxu0 %v3324
      %v3488 = vpop.f32.mrb[0].mxu0
      %v3489 = vadd.f32 0.0, %v3488
      %v3490 = vpop.f32.mrb[0].mxu0
      %v3491 = vpop.f32.mrb[0].mxu0
      %v3492 = vadd.f32 0.0, %v3491
      %v3493 = vpop.f32.mrb[0].mxu0
      %3494 = vmatprep.mubr.bf16.mxu0 0
      %3495 = vmatmul.mubr.bf16.gmra.mrb[0].mxu0 %v3327
      %v3496 = vpop.f32.mrb[0].mxu0
      %v3497 = vadd.f32 0.0, %v3496
      %v3498 = vpop.f32.mrb[0].mxu0
      %v3499 = vpop.f32.mrb[0].mxu0
      %v3500 = vadd.f32 0.0, %v3499
      %v3501 = vpop.f32.mrb[0].mxu0
      %3502 = vmatprep.mubr.bf16.mxu0 0
      %3503 = vmatmul.mubr.bf16.gmra.mrb[0].mxu0 %v3330
      %v3504 = vpop.f32.mrb[0].mxu0
      %v3505 = vadd.f32 0.0, %v3504
      %v3506 = vpop.f32.mrb[0].mxu0
      %v3507 = vpop.f32.mrb[0].mxu0
      %v3508 = vadd.f32 0.0, %v3507
      %v3509 = vpop.f32.mrb[0].mxu0
      %3510 = vmatprep.mubr.bf16.mxu0 0
      %3511 = vmatmul.mubr.bf16.gmra.mrb[0].mxu0 %v3333
      %v3512 = vpop.f32.mrb[0].mxu0
      %v3513 = vadd.f32 0.0, %v3512
      %v3514 = vpop.f32.mrb[0].mxu0
      %v3515 = vpop.f32.mrb[0].mxu0
      %v3516 = vadd.f32 0.0, %v3515
      %v3517 = vpop.f32.mrb[0].mxu0
      %3518 = vmatprep.mubr.bf16.mxu0 0
      %3519 = vmatmul.mubr.bf16.gmra.mrb[0].mxu0 %v3336
      %v3520 = vpop.f32.mrb[0].mxu0
      %v3521 = vadd.f32 0.0, %v3520
      %v3522 = vpop.f32.mrb[0].mxu0
      %v3523 = vpop.f32.mrb[0].mxu0
      %v3524 = vadd.f32 0.0, %v3523
      %v3525 = vpop.f32.mrb[0].mxu0
      %3526 = vmatprep.mubr.bf16.mxu0 0
      %3527 = vmatmul.mubr.bf16.gmra.mrb[0].mxu0 %v3339
      %v3528 = vpop.f32.mrb[0].mxu0
      %v3529 = vadd.f32 0.0, %v3528
      %v3530 = vpop.f32.mrb[0].mxu0
      %v3531 = vpop.f32.mrb[0].mxu0
      %v3532 = vadd.f32 0.0, %v3531
      %v3533 = vpop.f32.mrb[0].mxu0
      %3534 = vmatprep.mubr.bf16.mxu0 0
      %3535 = vmatmul.mubr.bf16.gmra.mrb[0].mxu0 %v3342
      %v3536 = vpop.f32.mrb[0].mxu0
      %v3537 = vadd.f32 0.0, %v3536
      %v3538 = vpop.f32.mrb[0].mxu0
      %v3539 = vpop.f32.mrb[0].mxu0
      %v3540 = vadd.f32 0.0, %v3539
      %v3541 = vpop.f32.mrb[0].mxu0
      %3542 = vmatprep.mubr.bf16.mxu0 0
      %3543 = vmatmul.mubr.bf16.gmra.mrb[0].mxu0 %v3345
      %v3544 = vpop.f32.mrb[0].mxu0
      %v3545 = vadd.f32 0.0, %v3544
      %v3546 = vpop.f32.mrb[0].mxu0
      %v3547 = vpop.f32.mrb[0].mxu0
      %v3548 = vadd.f32 0.0, %v3547
      %v3549 = vpop.f32.mrb[0].mxu0
      %3550 = vmatprep.mubr.bf16.mxu0 0
      %3551 = vmatmul.mubr.bf16.gmra.mrb[0].mxu0 %v3348
      %v3552 = vpop.f32.mrb[0].mxu0
      %v3553 = vadd.f32 0.0, %v3552
      %v3554 = vpop.f32.mrb[0].mxu0
      %v3555 = vpop.f32.mrb[0].mxu0
      %v3556 = vadd.f32 0.0, %v3555
      %v3557 = vpop.f32.mrb[0].mxu0
      %3558 = vmatprep.mubr.bf16.mxu0 0
      %3559 = vmatmul.mubr.bf16.gmra.mrb[0].mxu0 %v3351
      %v3560 = vpop.f32.mrb[0].mxu0
      %v3561 = vadd.f32 0.0, %v3560
      %v3562 = vpop.f32.mrb[0].mxu0
      %v3563 = vpop.f32.mrb[0].mxu0
      %v3564 = vadd.f32 0.0, %v3563
      %v3565 = vpop.f32.mrb[0].mxu0
      %3566 = vmatprep.mubr.bf16.mxu0 0
      %3567 = vmatmul.mubr.bf16.gmra.mrb[0].mxu0 %v3354
      %v3568 = vpop.f32.mrb[0].mxu0
      %v3569 = vadd.f32 0.0, %v3568
      %v3570 = vpop.f32.mrb[0].mxu0
      %v3571 = vpop.f32.mrb[0].mxu0
      %v3572 = vadd.f32 0.0, %v3571
      %v3573 = vpop.f32.mrb[0].mxu0
      %3574 = vmatprep.mubr.bf16.mxu0 0
      %3575 = vmatmul.mubr.bf16.gmra.mrb[0].mxu0 %v3357
      %v3576 = vpop.f32.mrb[0].mxu0
      %v3577 = vadd.f32 0.0, %v3576
      %v3578 = vpop.f32.mrb[0].mxu0
      %v3579 = vpop.f32.mrb[0].mxu0
      %v3580 = vadd.f32 0.0, %v3579
      %v3581 = vpop.f32.mrb[0].mxu0
      %3582 = vmatprep.mubr.bf16.mxu0 0
      %3583 = vmatmul.mubr.bf16.gmra.mrb[0].mxu0 %v3360
      %v3584 = vpop.f32.mrb[0].mxu0
      %v3585 = vadd.f32 0.0, %v3584
      %v3586 = vpop.f32.mrb[0].mxu0
      %v3587 = vpop.f32.mrb[0].mxu0
      %v3588 = vadd.f32 0.0, %v3587
      %v3589 = vpop.f32.mrb[0].mxu0
      %3590 = vmatprep.mubr.bf16.mxu0 0
      %3591 = vmatmul.mubr.bf16.gmra.mrb[0].mxu0 %v3363
      %v3592 = vpop.f32.mrb[0].mxu0
      %v3593 = vadd.f32 0.0, %v3592
      %v3594 = vpop.f32.mrb[0].mxu0
      %v3595 = vpop.f32.mrb[0].mxu0
      %v3596 = vadd.f32 0.0, %v3595
      %v3597 = vpop.f32.mrb[0].mxu0
      %3598 = vmatprep.mubr.bf16.mxu0 0
      %3599 = vmatmul.mubr.bf16.gmra.mrb[0].mxu0 %v3366
      %v3600 = vpop.f32.mrb[0].mxu0
      %v3601 = vadd.f32 0.0, %v3600
      %v3602 = vpop.f32.mrb[0].mxu0
      %v3603 = vpop.f32.mrb[0].mxu0
      %v3604 = vadd.f32 0.0, %v3603
      %v3605 = vpop.f32.mrb[0].mxu0
      %3606 = vmatprep.mubr.bf16.mxu0 0
      %3607 = vmatmul.mubr.bf16.gmra.mrb[0].mxu0 %v3369
      %v3608 = vpop.f32.mrb[0].mxu0
      %v3609 = vadd.f32 0.0, %v3608
      %v3610 = vpop.f32.mrb[0].mxu0
      %v3611 = vpop.f32.mrb[0].mxu0
      %v3612 = vadd.f32 0.0, %v3611
      %v3613 = vpop.f32.mrb[0].mxu0
      %3614 = vmatprep.mubr.bf16.mxu0 0
      %3615 = vmatmul.mubr.bf16.gmra.mrb[0].mxu0 %v3372
      %v3616 = vpop.f32.mrb[0].mxu0
      %v3617 = vadd.f32 0.0, %v3616
      %v3618 = vpop.f32.mrb[0].mxu0
      %v3619 = vpop.f32.mrb[0].mxu0
      %v3620 = vadd.f32 0.0, %v3619
      %v3621 = vpop.f32.mrb[0].mxu0
      %3622 = vmatprep.mubr.bf16.mxu0 0
      %3623 = vmatmul.mubr.bf16.gmra.mrb[0].mxu0 %v3375
      %v3624 = vpop.f32.mrb[0].mxu0
      %v3625 = vadd.f32 0.0, %v3624
      %v3626 = vpop.f32.mrb[0].mxu0
      %v3627 = vpop.f32.mrb[0].mxu0
      %v3628 = vadd.f32 0.0, %v3627
      %v3629 = vpop.f32.mrb[0].mxu0
      %3630 = vmatprep.mubr.bf16.mxu0 0
      %3631 = vmatmul.mubr.bf16.gmra.mrb[0].mxu0 %v3378
      %v3632 = vpop.f32.mrb[0].mxu0
      %v3633 = vadd.f32 0.0, %v3632
      %v3634 = vpop.f32.mrb[0].mxu0
      %v3635 = vpop.f32.mrb[0].mxu0
      %v3636 = vadd.f32 0.0, %v3635
      %v3637 = vpop.f32.mrb[0].mxu0
      %3638 = vmatprep.mubr.bf16.mxu0 0
      %3639 = vmatmul.mubr.bf16.gmra.mrb[0].mxu0 %v3381
      %v3640 = vpop.f32.mrb[0].mxu0
      %v3641 = vadd.f32 0.0, %v3640
      %v3642 = vpop.f32.mrb[0].mxu0
      %v3643 = vpop.f32.mrb[0].mxu0
      %v3644 = vadd.f32 0.0, %v3643
      %v3645 = vpop.f32.mrb[0].mxu0
      %3646 = vmatprep.mubr.bf16.mxu0 0
      %3647 = vmatmul.mubr.bf16.gmra.mrb[0].mxu0 %v3384
      %v3648 = vpop.f32.mrb[0].mxu0
      %v3649 = vadd.f32 0.0, %v3648
      %v3650 = vpop.f32.mrb[0].mxu0
      %v3651 = vpop.f32.mrb[0].mxu0
      %v3652 = vadd.f32 0.0, %v3651
      %v3653 = vpop.f32.mrb[0].mxu0
      %3654 = vmatprep.mubr.bf16.mxu0 0
      %3655 = vmatmul.mubr.bf16.gmra.mrb[0].mxu0 %v3387
      %v3656 = vpop.f32.mrb[0].mxu0
      %v3657 = vadd.f32 0.0, %v3656
      %v3658 = vpop.f32.mrb[0].mxu0
      %v3659 = vpop.f32.mrb[0].mxu0
      %v3660 = vadd.f32 0.0, %v3659
      %v3661 = vpop.f32.mrb[0].mxu0
      %3662 = vmatprep.mubr.bf16.mxu0 0
      %3663 = vmatmul.mubr.bf16.gmra.mrb[0].mxu0 %v3390
      %v3664 = vpop.f32.mrb[0].mxu0
      %v3665 = vadd.f32 0.0, %v3664
      %v3666 = vpop.f32.mrb[0].mxu0
      %v3667 = vpop.f32.mrb[0].mxu0
      %v3668 = vadd.f32 0.0, %v3667
      %v3669 = vpop.f32.mrb[0].mxu0
      %3670 = vmatprep.mubr.bf16.mxu0 0
      %3671 = vmatmul.mubr.bf16.gmra.mrb[0].mxu0 %v3393
      %v3672 = vpop.f32.mrb[0].mxu0
      %v3673 = vadd.f32 0.0, %v3672
      %v3674 = vpop.f32.mrb[0].mxu0
      %v3675 = vpop.f32.mrb[0].mxu0
      %v3676 = vadd.f32 0.0, %v3675
      %v3677 = vpop.f32.mrb[0].mxu0
      %3678 = vmatprep.mubr.bf16.mxu0 0
      %3679 = vmatmul.mubr.bf16.gmra.mrb[0].mxu0 %v3396
      %v3680 = vpop.f32.mrb[0].mxu0
      %v3681 = vadd.f32 0.0, %v3680
      %v3682 = vpop.f32.mrb[0].mxu0
      %v3683 = vpop.f32.mrb[0].mxu0
      %v3684 = vadd.f32 0.0, %v3683
      %v3685 = vpop.f32.mrb[0].mxu0
      %3686 = vdwg.mxu0
      %v3687 = vadd.f32 %v2935, %v3433
      %v3688 = vadd.f32 %v2938, %v3436
      %v3689 = vadd.f32 %v2943, %v3441
      %v3690 = vadd.f32 %v2946, %v3444
      %v3691 = vadd.f32 %v2951, %v3449
      %v3692 = vadd.f32 %v2954, %v3452
      %v3693 = vadd.f32 %v2959, %v3457
      %v3694 = vadd.f32 %v2962, %v3460
      %v3695 = vadd.f32 %v2967, %v3465
      %v3696 = vadd.f32 %v2970, %v3468
      %v3697 = vadd.f32 %v2975, %v3473
      %v3698 = vadd.f32 %v2978, %v3476
      %v3699 = vadd.f32 %v2983, %v3481
      %v3700 = vadd.f32 %v2986, %v3484
      %v3701 = vadd.f32 %v2991, %v3489
      %v3702 = vadd.f32 %v2994, %v3492
      %v3703 = vadd.f32 %v2999, %v3497
      %v3704 = vadd.f32 %v3002, %v3500
      %v3705 = vadd.f32 %v3007, %v3505
      %v3706 = vadd.f32 %v3010, %v3508
      %v3707 = vadd.f32 %v3015, %v3513
      %v3708 = vadd.f32 %v3018, %v3516
      %v3709 = vadd.f32 %v3023, %v3521
      %v3710 = vadd.f32 %v3026, %v3524
      %v3711 = vadd.f32 %v3031, %v3529
      %v3712 = vadd.f32 %v3034, %v3532
      %v3713 = vadd.f32 %v3039, %v3537
      %v3714 = vadd.f32 %v3042, %v3540
      %v3715 = vadd.f32 %v3047, %v3545
      %v3716 = vadd.f32 %v3050, %v3548
      %v3717 = vadd.f32 %v3055, %v3553
      %v3718 = vadd.f32 %v3058, %v3556
      %v3719 = vadd.f32 %v3063, %v3561
      %v3720 = vadd.f32 %v3066, %v3564
      %v3721 = vadd.f32 %v3071, %v3569
      %v3722 = vadd.f32 %v3074, %v3572
      %v3723 = vadd.f32 %v3079, %v3577
      %v3724 = vadd.f32 %v3082, %v3580
      %v3725 = vadd.f32 %v3087, %v3585
      %v3726 = vadd.f32 %v3090, %v3588
      %v3727 = vadd.f32 %v3095, %v3593
      %v3728 = vadd.f32 %v3098, %v3596
      %v3729 = vadd.f32 %v3103, %v3601
      %v3730 = vadd.f32 %v3106, %v3604
      %v3731 = vadd.f32 %v3111, %v3609
      %v3732 = vadd.f32 %v3114, %v3612
      %v3733 = vadd.f32 %v3119, %v3617
      %v3734 = vadd.f32 %v3122, %v3620
      %v3735 = vadd.f32 %v3127, %v3625
      %v3736 = vadd.f32 %v3130, %v3628
      %v3737 = vadd.f32 %v3135, %v3633
      %v3738 = vadd.f32 %v3138, %v3636
      %v3739 = vadd.f32 %v3143, %v3641
      %v3740 = vadd.f32 %v3146, %v3644
      %v3741 = vadd.f32 %v3151, %v3649
      %v3742 = vadd.f32 %v3154, %v3652
      %v3743 = vadd.f32 %v3159, %v3657
      %v3744 = vadd.f32 %v3162, %v3660
      %v3745 = vadd.f32 %v3167, %v3665
      %v3746 = vadd.f32 %v3170, %v3668
      %v3747 = vadd.f32 %v3175, %v3673
      %v3748 = vadd.f32 %v3178, %v3676
      %v3749 = vadd.f32 %v3183, %v3681
      %v3750 = vadd.f32 %v3186, %v3684
      %v3751 = vld [vmem:[%s4] sm:$0x1]
      %v3753 = vlaneseq
      %v3754 = vshrl.u32 %v3753, 7
      %v3755 = vsub.s32 0, %v3754
      %v3756 = vrot.slane %v3751, %v3755
      %v3758 = vadd.f32 %v3687, %v3756
      %v3759 = vadd.f32 %v3688, %v3756
      %v3760 = vadd.f32 %v3689, %v3756
      %v3761 = vadd.f32 %v3690, %v3756
      %v3762 = vadd.f32 %v3691, %v3756
      %v3763 = vadd.f32 %v3692, %v3756
      %v3764 = vadd.f32 %v3693, %v3756
      %v3765 = vadd.f32 %v3694, %v3756
      %v3766 = vadd.f32 %v3695, %v3756
      %v3767 = vadd.f32 %v3696, %v3756
      %v3768 = vadd.f32 %v3697, %v3756
      %v3769 = vadd.f32 %v3698, %v3756
      %v3770 = vadd.f32 %v3699, %v3756
      %v3771 = vadd.f32 %v3700, %v3756
      %v3772 = vadd.f32 %v3701, %v3756
      %v3773 = vadd.f32 %v3702, %v3756
      %v3774 = vadd.f32 %v3703, %v3756
      %v3775 = vadd.f32 %v3704, %v3756
      %v3776 = vadd.f32 %v3705, %v3756
      %v3777 = vadd.f32 %v3706, %v3756
      %v3778 = vadd.f32 %v3707, %v3756
      %v3779 = vadd.f32 %v3708, %v3756
      %v3780 = vadd.f32 %v3709, %v3756
      %v3781 = vadd.f32 %v3710, %v3756
      %v3782 = vadd.f32 %v3711, %v3756
      %v3783 = vadd.f32 %v3712, %v3756
      %v3784 = vadd.f32 %v3713, %v3756
      %v3785 = vadd.f32 %v3714, %v3756
      %v3786 = vadd.f32 %v3715, %v3756
      %v3787 = vadd.f32 %v3716, %v3756
      %v3788 = vadd.f32 %v3717, %v3756
      %v3789 = vadd.f32 %v3718, %v3756
      %v3790 = vadd.f32 %v3719, %v3756
      %v3791 = vadd.f32 %v3720, %v3756
      %v3792 = vadd.f32 %v3721, %v3756
      %v3793 = vadd.f32 %v3722, %v3756
      %v3794 = vadd.f32 %v3723, %v3756
      %v3795 = vadd.f32 %v3724, %v3756
      %v3796 = vadd.f32 %v3725, %v3756
      %v3797 = vadd.f32 %v3726, %v3756
      %v3798 = vadd.f32 %v3727, %v3756
      %v3799 = vadd.f32 %v3728, %v3756
      %v3800 = vadd.f32 %v3729, %v3756
      %v3801 = vadd.f32 %v3730, %v3756
      %v3802 = vadd.f32 %v3731, %v3756
      %v3803 = vadd.f32 %v3732, %v3756
      %v3804 = vadd.f32 %v3733, %v3756
      %v3805 = vadd.f32 %v3734, %v3756
      %v3806 = vadd.f32 %v3735, %v3756
      %v3807 = vadd.f32 %v3736, %v3756
      %v3808 = vadd.f32 %v3737, %v3756
      %v3809 = vadd.f32 %v3738, %v3756
      %v3810 = vadd.f32 %v3739, %v3756
      %v3811 = vadd.f32 %v3740, %v3756
      %v3812 = vadd.f32 %v3741, %v3756
      %v3813 = vadd.f32 %v3742, %v3756
      %v3814 = vadd.f32 %v3743, %v3756
      %v3815 = vadd.f32 %v3744, %v3756
      %v3816 = vadd.f32 %v3745, %v3756
      %v3817 = vadd.f32 %v3746, %v3756
      %v3818 = vadd.f32 %v3747, %v3756
      %v3819 = vadd.f32 %v3748, %v3756
      %v3820 = vadd.f32 %v3749, %v3756
      %v3821 = vadd.f32 %v3750, %v3756
      %v3822 = vmax.f32 %v3758, 0.0
      %v3823 = vmax.f32 %v3759, 0.0
      %v3824 = vmax.f32 %v3760, 0.0
      %v3825 = vmax.f32 %v3761, 0.0
      %v3826 = vmax.f32 %v3762, 0.0
      %v3827 = vmax.f32 %v3763, 0.0
      %v3828 = vmax.f32 %v3764, 0.0
      %v3829 = vmax.f32 %v3765, 0.0
      %v3830 = vmax.f32 %v3766, 0.0
      %v3831 = vmax.f32 %v3767, 0.0
      %v3832 = vmax.f32 %v3768, 0.0
      %v3833 = vmax.f32 %v3769, 0.0
      %v3834 = vmax.f32 %v3770, 0.0
      %v3835 = vmax.f32 %v3771, 0.0
      %v3836 = vmax.f32 %v3772, 0.0
      %v3837 = vmax.f32 %v3773, 0.0
      %v3838 = vmax.f32 %v3774, 0.0
      %v3839 = vmax.f32 %v3775, 0.0
      %v3840 = vmax.f32 %v3776, 0.0
      %v3841 = vmax.f32 %v3777, 0.0
      %v3842 = vmax.f32 %v3778, 0.0
      %v3843 = vmax.f32 %v3779, 0.0
      %v3844 = vmax.f32 %v3780, 0.0
      %v3845 = vmax.f32 %v3781, 0.0
      %v3846 = vmax.f32 %v3782, 0.0
      %v3847 = vmax.f32 %v3783, 0.0
      %v3848 = vmax.f32 %v3784, 0.0
      %v3849 = vmax.f32 %v3785, 0.0
      %v3850 = vmax.f32 %v3786, 0.0
      %v3851 = vmax.f32 %v3787, 0.0
      %v3852 = vmax.f32 %v3788, 0.0
      %v3853 = vmax.f32 %v3789, 0.0
      %v3854 = vmax.f32 %v3790, 0.0
      %v3855 = vmax.f32 %v3791, 0.0
      %v3856 = vmax.f32 %v3792, 0.0
      %v3857 = vmax.f32 %v3793, 0.0
      %v3858 = vmax.f32 %v3794, 0.0
      %v3859 = vmax.f32 %v3795, 0.0
      %v3860 = vmax.f32 %v3796, 0.0
      %v3861 = vmax.f32 %v3797, 0.0
      %v3862 = vmax.f32 %v3798, 0.0
      %v3863 = vmax.f32 %v3799, 0.0
      %v3864 = vmax.f32 %v3800, 0.0
      %v3865 = vmax.f32 %v3801, 0.0
      %v3866 = vmax.f32 %v3802, 0.0
      %v3867 = vmax.f32 %v3803, 0.0
      %v3868 = vmax.f32 %v3804, 0.0
      %v3869 = vmax.f32 %v3805, 0.0
      %v3870 = vmax.f32 %v3806, 0.0
      %v3871 = vmax.f32 %v3807, 0.0
      %v3872 = vmax.f32 %v3808, 0.0
      %v3873 = vmax.f32 %v3809, 0.0
      %v3874 = vmax.f32 %v3810, 0.0
      %v3875 = vmax.f32 %v3811, 0.0
      %v3876 = vmax.f32 %v3812, 0.0
      %v3877 = vmax.f32 %v3813, 0.0
      %v3878 = vmax.f32 %v3814, 0.0
      %v3879 = vmax.f32 %v3815, 0.0
      %v3880 = vmax.f32 %v3816, 0.0
      %v3881 = vmax.f32 %v3817, 0.0
      %v3882 = vmax.f32 %v3818, 0.0
      %v3883 = vmax.f32 %v3819, 0.0
      %v3884 = vmax.f32 %v3820, 0.0
      %v3885 = vmax.f32 %v3821, 0.0
      %vm3886 = vcmask 523264
      %3887 = vst.msk [vmem:[#allocation4] sm:$0xff] %vm3886, %v3822
      %3888 = vst.msk [vmem:[#allocation4 + $0x8] sm:$0xff] %vm3886, %v3823
      %3889 = vst.msk [vmem:[#allocation4 + $0x10] sm:$0xff] %vm3886, %v3824
      %3890 = vst.msk [vmem:[#allocation4 + $0x18] sm:$0xff] %vm3886, %v3825
      %3891 = vst.msk [vmem:[#allocation4 + $0x20] sm:$0xff] %vm3886, %v3826
      %3892 = vst.msk [vmem:[#allocation4 + $0x28] sm:$0xff] %vm3886, %v3827
      %3893 = vst.msk [vmem:[#allocation4 + $0x30] sm:$0xff] %vm3886, %v3828
      %3894 = vst.msk [vmem:[#allocation4 + $0x38] sm:$0xff] %vm3886, %v3829
      %3895 = vst.msk [vmem:[#allocation4 + $0x40] sm:$0xff] %vm3886, %v3830
      %3896 = vst.msk [vmem:[#allocation4 + $0x48] sm:$0xff] %vm3886, %v3831
      %3897 = vst.msk [vmem:[#allocation4 + $0x50] sm:$0xff] %vm3886, %v3832
      %3898 = vst.msk [vmem:[#allocation4 + $0x58] sm:$0xff] %vm3886, %v3833
      %3899 = vst.msk [vmem:[#allocation4 + $0x60] sm:$0xff] %vm3886, %v3834
      %3900 = vst.msk [vmem:[#allocation4 + $0x68] sm:$0xff] %vm3886, %v3835
      %3901 = vst.msk [vmem:[#allocation4 + $0x70] sm:$0xff] %vm3886, %v3836
      %3902 = vst.msk [vmem:[#allocation4 + $0x78] sm:$0xff] %vm3886, %v3837
      %3903 = vst.msk [vmem:[#allocation4 + $0x80] sm:$0xff] %vm3886, %v3838
      %3904 = vst.msk [vmem:[#allocation4 + $0x88] sm:$0xff] %vm3886, %v3839
      %3905 = vst.msk [vmem:[#allocation4 + $0x90] sm:$0xff] %vm3886, %v3840
      %3906 = vst.msk [vmem:[#allocation4 + $0x98] sm:$0xff] %vm3886, %v3841
      %3907 = vst.msk [vmem:[#allocation4 + $0xa0] sm:$0xff] %vm3886, %v3842
      %3908 = vst.msk [vmem:[#allocation4 + $0xa8] sm:$0xff] %vm3886, %v3843
      %3909 = vst.msk [vmem:[#allocation4 + $0xb0] sm:$0xff] %vm3886, %v3844
      %3910 = vst.msk [vmem:[#allocation4 + $0xb8] sm:$0xff] %vm3886, %v3845
      %3911 = vst.msk [vmem:[#allocation4 + $0xc0] sm:$0xff] %vm3886, %v3846
      %3912 = vst.msk [vmem:[#allocation4 + $0xc8] sm:$0xff] %vm3886, %v3847
      %3913 = vst.msk [vmem:[#allocation4 + $0xd0] sm:$0xff] %vm3886, %v3848
      %3914 = vst.msk [vmem:[#allocation4 + $0xd8] sm:$0xff] %vm3886, %v3849
      %3915 = vst.msk [vmem:[#allocation4 + $0xe0] sm:$0xff] %vm3886, %v3850
      %3916 = vst.msk [vmem:[#allocation4 + $0xe8] sm:$0xff] %vm3886, %v3851
      %3917 = vst.msk [vmem:[#allocation4 + $0xf0] sm:$0xff] %vm3886, %v3852
      %3918 = vst.msk [vmem:[#allocation4 + $0xf8] sm:$0xff] %vm3886, %v3853
      %3919 = vst.msk [vmem:[#allocation4 + $0x100] sm:$0xff] %vm3886, %v3854
      %3920 = vst.msk [vmem:[#allocation4 + $0x108] sm:$0xff] %vm3886, %v3855
      %3921 = vst.msk [vmem:[#allocation4 + $0x110] sm:$0xff] %vm3886, %v3856
      %3922 = vst.msk [vmem:[#allocation4 + $0x118] sm:$0xff] %vm3886, %v3857
      %3923 = vst.msk [vmem:[#allocation4 + $0x120] sm:$0xff] %vm3886, %v3858
      %3924 = vst.msk [vmem:[#allocation4 + $0x128] sm:$0xff] %vm3886, %v3859
      %3925 = vst.msk [vmem:[#allocation4 + $0x130] sm:$0xff] %vm3886, %v3860
      %3926 = vst.msk [vmem:[#allocation4 + $0x138] sm:$0xff] %vm3886, %v3861
      %3927 = vst.msk [vmem:[#allocation4 + $0x140] sm:$0xff] %vm3886, %v3862
      %3928 = vst.msk [vmem:[#allocation4 + $0x148] sm:$0xff] %vm3886, %v3863
      %3929 = vst.msk [vmem:[#allocation4 + $0x150] sm:$0xff] %vm3886, %v3864
      %3930 = vst.msk [vmem:[#allocation4 + $0x158] sm:$0xff] %vm3886, %v3865
      %3931 = vst.msk [vmem:[#allocation4 + $0x160] sm:$0xff] %vm3886, %v3866
      %3932 = vst.msk [vmem:[#allocation4 + $0x168] sm:$0xff] %vm3886, %v3867
      %3933 = vst.msk [vmem:[#allocation4 + $0x170] sm:$0xff] %vm3886, %v3868
      %3934 = vst.msk [vmem:[#allocation4 + $0x178] sm:$0xff] %vm3886, %v3869
      %3935 = vst.msk [vmem:[#allocation4 + $0x180] sm:$0xff] %vm3886, %v3870
      %3936 = vst.msk [vmem:[#allocation4 + $0x188] sm:$0xff] %vm3886, %v3871
      %3937 = vst.msk [vmem:[#allocation4 + $0x190] sm:$0xff] %vm3886, %v3872
      %3938 = vst.msk [vmem:[#allocation4 + $0x198] sm:$0xff] %vm3886, %v3873
      %3939 = vst.msk [vmem:[#allocation4 + $0x1a0] sm:$0xff] %vm3886, %v3874
      %3940 = vst.msk [vmem:[#allocation4 + $0x1a8] sm:$0xff] %vm3886, %v3875
      %3941 = vst.msk [vmem:[#allocation4 + $0x1b0] sm:$0xff] %vm3886, %v3876
      %3942 = vst.msk [vmem:[#allocation4 + $0x1b8] sm:$0xff] %vm3886, %v3877
      %3943 = vst.msk [vmem:[#allocation4 + $0x1c0] sm:$0xff] %vm3886, %v3878
      %3944 = vst.msk [vmem:[#allocation4 + $0x1c8] sm:$0xff] %vm3886, %v3879
      %3945 = vst.msk [vmem:[#allocation4 + $0x1d0] sm:$0xff] %vm3886, %v3880
      %3946 = vst.msk [vmem:[#allocation4 + $0x1d8] sm:$0xff] %vm3886, %v3881
      %3947 = vst.msk [vmem:[#allocation4 + $0x1e0] sm:$0xff] %vm3886, %v3882
      %3948 = vst.msk [vmem:[#allocation4 + $0x1e8] sm:$0xff] %vm3886, %v3883
      %3949 = vst.msk [vmem:[#allocation4 + $0x1f0] sm:$0xff] %vm3886, %v3884
      %3950 = vst.msk [vmem:[#allocation4 + $0x1f8] sm:$0xff] %vm3886, %v3885
      %v3951 = vld [vmem:[#allocation4] ss:$64 sm:$0x1]
      %v3952 = vld [vmem:[#allocation4] ss:$64 sm:$0x2]
      %v3953 = vor.u32 %v3951, %v3952
      %v3954 = vld [vmem:[#allocation4] ss:$64 sm:$0x4]
      %v3955 = vor.u32 %v3953, %v3954
      %v3956 = vld [vmem:[#allocation4] ss:$64 sm:$0x8]
      %v3957 = vor.u32 %v3955, %v3956
      %v3958 = vld [vmem:[#allocation4] ss:$64 sm:$0x10]
      %v3959 = vor.u32 %v3957, %v3958
      %v3960 = vld [vmem:[#allocation4] ss:$64 sm:$0x20]
      %v3961 = vor.u32 %v3959, %v3960
      %v3962 = vld [vmem:[#allocation4] ss:$64 sm:$0x40]
      %v3963 = vor.u32 %v3961, %v3962
      %v3964 = vld [vmem:[#allocation4] ss:$64 sm:$0x80]
      %v3965 = vor.u32 %v3963, %v3964
      %s3966 = scalar_lea.vmem [#allocation4], 1
      %v3967 = vld [vmem:[%s3966] ss:$64 sm:$0x1]
      %v3968 = vld [vmem:[%s3966] ss:$64 sm:$0x2]
      %v3969 = vor.u32 %v3967, %v3968
      %v3970 = vld [vmem:[%s3966] ss:$64 sm:$0x4]
      %v3971 = vor.u32 %v3969, %v3970
      %v3972 = vld [vmem:[%s3966] ss:$64 sm:$0x8]
      %v3973 = vor.u32 %v3971, %v3972
      %v3974 = vld [vmem:[%s3966] ss:$64 sm:$0x10]
      %v3975 = vor.u32 %v3973, %v3974
      %v3976 = vld [vmem:[%s3966] ss:$64 sm:$0x20]
      %v3977 = vor.u32 %v3975, %v3976
      %v3978 = vld [vmem:[%s3966] ss:$64 sm:$0x40]
      %v3979 = vor.u32 %v3977, %v3978
      %v3980 = vld [vmem:[%s3966] ss:$64 sm:$0x80]
      %v3981 = vor.u32 %v3979, %v3980
      %v3982 = vmax.f32 %v3965, %v3981
      %v3983 = vpack.c.bf16 %v3982, %v3982
      %vm3984 = vcmask 519168
      %3985 = vst.msk [vmem:[#allocation5] sm:$0xf] %vm3984, %v3983
      %s3986 = scalar_lea.vmem [#allocation4], 2
      %v3987 = vld [vmem:[%s3986] ss:$64 sm:$0x1]
      %v3988 = vld [vmem:[%s3986] ss:$64 sm:$0x2]
      %v3989 = vor.u32 %v3987, %v3988
      %v3990 = vld [vmem:[%s3986] ss:$64 sm:$0x4]
      %v3991 = vor.u32 %v3989, %v3990
      %v3992 = vld [vmem:[%s3986] ss:$64 sm:$0x8]
      %v3993 = vor.u32 %v3991, %v3992
      %v3994 = vld [vmem:[%s3986] ss:$64 sm:$0x10]
      %v3995 = vor.u32 %v3993, %v3994
      %v3996 = vld [vmem:[%s3986] ss:$64 sm:$0x20]
      %v3997 = vor.u32 %v3995, %v3996
      %v3998 = vld [vmem:[%s3986] ss:$64 sm:$0x40]
      %v3999 = vor.u32 %v3997, %v3998
      %v4000 = vld [vmem:[%s3986] ss:$64 sm:$0x80]
      %v4001 = vor.u32 %v3999, %v4000
      %s4002 = scalar_lea.vmem [#allocation4], 3
      %v4003 = vld [vmem:[%s4002] ss:$64 sm:$0x1]
      %v4004 = vld [vmem:[%s4002] ss:$64 sm:$0x2]
      %v4005 = vor.u32 %v4003, %v4004
      %v4006 = vld [vmem:[%s4002] ss:$64 sm:$0x4]
      %v4007 = vor.u32 %v4005, %v4006
      %v4008 = vld [vmem:[%s4002] ss:$64 sm:$0x8]
      %v4009 = vor.u32 %v4007, %v4008
      %v4010 = vld [vmem:[%s4002] ss:$64 sm:$0x10]
      %v4011 = vor.u32 %v4009, %v4010
      %v4012 = vld [vmem:[%s4002] ss:$64 sm:$0x20]
      %v4013 = vor.u32 %v4011, %v4012
      %v4014 = vld [vmem:[%s4002] ss:$64 sm:$0x40]
      %v4015 = vor.u32 %v4013, %v4014
      %v4016 = vld [vmem:[%s4002] ss:$64 sm:$0x80]
      %v4017 = vor.u32 %v4015, %v4016
      %v4018 = vmax.f32 %v4001, %v4017
      %v4019 = vpack.c.bf16 %v4018, %v4018
      %v4021 = vunpack.c.l.b16 %v4019
      %v4022 = vpack.c.b16 %v4021, %v4021
      %4023 = vrot.lane.b32.xlu0 %v4022, 64
      %v4024 = vpop.permute.xlu0 %4023
      %vm4026 = vcmask 1043968
      %4027 = vst.msk [vmem:[#allocation5] sm:$0xf] %vm4026, %v4024
      %s4028 = scalar_lea.vmem [#allocation4], 4
      %v4029 = vld [vmem:[%s4028] ss:$64 sm:$0x1]
      %v4030 = vld [vmem:[%s4028] ss:$64 sm:$0x2]
      %v4031 = vor.u32 %v4029, %v4030
      %v4032 = vld [vmem:[%s4028] ss:$64 sm:$0x4]
      %v4033 = vor.u32 %v4031, %v4032
      %v4034 = vld [vmem:[%s4028] ss:$64 sm:$0x8]
      %v4035 = vor.u32 %v4033, %v4034
      %v4036 = vld [vmem:[%s4028] ss:$64 sm:$0x10]
      %v4037 = vor.u32 %v4035, %v4036
      %v4038 = vld [vmem:[%s4028] ss:$64 sm:$0x20]
      %v4039 = vor.u32 %v4037, %v4038
      %v4040 = vld [vmem:[%s4028] ss:$64 sm:$0x40]
      %v4041 = vor.u32 %v4039, %v4040
      %v4042 = vld [vmem:[%s4028] ss:$64 sm:$0x80]
      %v4043 = vor.u32 %v4041, %v4042
      %s4044 = scalar_lea.vmem [#allocation4], 5
      %v4045 = vld [vmem:[%s4044] ss:$64 sm:$0x1]
      %v4046 = vld [vmem:[%s4044] ss:$64 sm:$0x2]
      %v4047 = vor.u32 %v4045, %v4046
      %v4048 = vld [vmem:[%s4044] ss:$64 sm:$0x4]
      %v4049 = vor.u32 %v4047, %v4048
      %v4050 = vld [vmem:[%s4044] ss:$64 sm:$0x8]
      %v4051 = vor.u32 %v4049, %v4050
      %v4052 = vld [vmem:[%s4044] ss:$64 sm:$0x10]
      %v4053 = vor.u32 %v4051, %v4052
      %v4054 = vld [vmem:[%s4044] ss:$64 sm:$0x20]
      %v4055 = vor.u32 %v4053, %v4054
      %v4056 = vld [vmem:[%s4044] ss:$64 sm:$0x40]
      %v4057 = vor.u32 %v4055, %v4056
      %v4058 = vld [vmem:[%s4044] ss:$64 sm:$0x80]
      %v4059 = vor.u32 %v4057, %v4058
      %v4060 = vmax.f32 %v4043, %v4059
      %v4061 = vpack.c.bf16 %v4060, %v4060
      %4062 = vst.msk [vmem:[#allocation5 + $0x4] sm:$0xf] %vm3984, %v4061
      %s4063 = scalar_lea.vmem [#allocation4], 6
      %v4064 = vld [vmem:[%s4063] ss:$64 sm:$0x1]
      %v4065 = vld [vmem:[%s4063] ss:$64 sm:$0x2]
      %v4066 = vor.u32 %v4064, %v4065
      %v4067 = vld [vmem:[%s4063] ss:$64 sm:$0x4]
      %v4068 = vor.u32 %v4066, %v4067
      %v4069 = vld [vmem:[%s4063] ss:$64 sm:$0x8]
      %v4070 = vor.u32 %v4068, %v4069
      %v4071 = vld [vmem:[%s4063] ss:$64 sm:$0x10]
      %v4072 = vor.u32 %v4070, %v4071
      %v4073 = vld [vmem:[%s4063] ss:$64 sm:$0x20]
      %v4074 = vor.u32 %v4072, %v4073
      %v4075 = vld [vmem:[%s4063] ss:$64 sm:$0x40]
      %v4076 = vor.u32 %v4074, %v4075
      %v4077 = vld [vmem:[%s4063] ss:$64 sm:$0x80]
      %v4078 = vor.u32 %v4076, %v4077
      %s4079 = scalar_lea.vmem [#allocation4], 7
      %v4080 = vld [vmem:[%s4079] ss:$64 sm:$0x1]
      %v4081 = vld [vmem:[%s4079] ss:$64 sm:$0x2]
      %v4082 = vor.u32 %v4080, %v4081
      %v4083 = vld [vmem:[%s4079] ss:$64 sm:$0x4]
      %v4084 = vor.u32 %v4082, %v4083
      %v4085 = vld [vmem:[%s4079] ss:$64 sm:$0x8]
      %v4086 = vor.u32 %v4084, %v4085
      %v4087 = vld [vmem:[%s4079] ss:$64 sm:$0x10]
      %v4088 = vor.u32 %v4086, %v4087
      %v4089 = vld [vmem:[%s4079] ss:$64 sm:$0x20]
      %v4090 = vor.u32 %v4088, %v4089
      %v4091 = vld [vmem:[%s4079] ss:$64 sm:$0x40]
      %v4092 = vor.u32 %v4090, %v4091
      %v4093 = vld [vmem:[%s4079] ss:$64 sm:$0x80]
      %v4094 = vor.u32 %v4092, %v4093
      %v4095 = vmax.f32 %v4078, %v4094
      %v4096 = vpack.c.bf16 %v4095, %v4095
      %v4098 = vunpack.c.l.b16 %v4096
      %v4099 = vpack.c.b16 %v4098, %v4098
      %4100 = vrot.lane.b32.xlu0 %v4099, 64
      %v4101 = vpop.permute.xlu0 %4100
      %4103 = vst.msk [vmem:[#allocation5 + $0x4] sm:$0xf] %vm4026, %v4101
      %s4104 = scalar_lea.vmem [#allocation4], 8
      %v4105 = vld [vmem:[%s4104] ss:$64 sm:$0x1]
      %v4106 = vld [vmem:[%s4104] ss:$64 sm:$0x2]
      %v4107 = vor.u32 %v4105, %v4106
      %v4108 = vld [vmem:[%s4104] ss:$64 sm:$0x4]
      %v4109 = vor.u32 %v4107, %v4108
      %v4110 = vld [vmem:[%s4104] ss:$64 sm:$0x8]
      %v4111 = vor.u32 %v4109, %v4110
      %v4112 = vld [vmem:[%s4104] ss:$64 sm:$0x10]
      %v4113 = vor.u32 %v4111, %v4112
      %v4114 = vld [vmem:[%s4104] ss:$64 sm:$0x20]
      %v4115 = vor.u32 %v4113, %v4114
      %v4116 = vld [vmem:[%s4104] ss:$64 sm:$0x40]
      %v4117 = vor.u32 %v4115, %v4116
      %v4118 = vld [vmem:[%s4104] ss:$64 sm:$0x80]
      %v4119 = vor.u32 %v4117, %v4118
      %s4120 = scalar_lea.vmem [#allocation4], 9
      %v4121 = vld [vmem:[%s4120] ss:$64 sm:$0x1]
      %v4122 = vld [vmem:[%s4120] ss:$64 sm:$0x2]
      %v4123 = vor.u32 %v4121, %v4122
      %v4124 = vld [vmem:[%s4120] ss:$64 sm:$0x4]
      %v4125 = vor.u32 %v4123, %v4124
      %v4126 = vld [vmem:[%s4120] ss:$64 sm:$0x8]
      %v4127 = vor.u32 %v4125, %v4126
      %v4128 = vld [vmem:[%s4120] ss:$64 sm:$0x10]
      %v4129 = vor.u32 %v4127, %v4128
      %v4130 = vld [vmem:[%s4120] ss:$64 sm:$0x20]
      %v4131 = vor.u32 %v4129, %v4130
      %v4132 = vld [vmem:[%s4120] ss:$64 sm:$0x40]
      %v4133 = vor.u32 %v4131, %v4132
      %v4134 = vld [vmem:[%s4120] ss:$64 sm:$0x80]
      %v4135 = vor.u32 %v4133, %v4134
      %v4136 = vmax.f32 %v4119, %v4135
      %v4137 = vpack.c.bf16 %v4136, %v4136
      %4138 = vst.msk [vmem:[#allocation5 + $0x8] sm:$0xf] %vm3984, %v4137
      %s4139 = scalar_lea.vmem [#allocation4], 10
      %v4140 = vld [vmem:[%s4139] ss:$64 sm:$0x1]
      %v4141 = vld [vmem:[%s4139] ss:$64 sm:$0x2]
      %v4142 = vor.u32 %v4140, %v4141
      %v4143 = vld [vmem:[%s4139] ss:$64 sm:$0x4]
      %v4144 = vor.u32 %v4142, %v4143
      %v4145 = vld [vmem:[%s4139] ss:$64 sm:$0x8]
      %v4146 = vor.u32 %v4144, %v4145
      %v4147 = vld [vmem:[%s4139] ss:$64 sm:$0x10]
      %v4148 = vor.u32 %v4146, %v4147
      %v4149 = vld [vmem:[%s4139] ss:$64 sm:$0x20]
      %v4150 = vor.u32 %v4148, %v4149
      %v4151 = vld [vmem:[%s4139] ss:$64 sm:$0x40]
      %v4152 = vor.u32 %v4150, %v4151
      %v4153 = vld [vmem:[%s4139] ss:$64 sm:$0x80]
      %v4154 = vor.u32 %v4152, %v4153
      %s4155 = scalar_lea.vmem [#allocation4], 11
      %v4156 = vld [vmem:[%s4155] ss:$64 sm:$0x1]
      %v4157 = vld [vmem:[%s4155] ss:$64 sm:$0x2]
      %v4158 = vor.u32 %v4156, %v4157
      %v4159 = vld [vmem:[%s4155] ss:$64 sm:$0x4]
      %v4160 = vor.u32 %v4158, %v4159
      %v4161 = vld [vmem:[%s4155] ss:$64 sm:$0x8]
      %v4162 = vor.u32 %v4160, %v4161
      %v4163 = vld [vmem:[%s4155] ss:$64 sm:$0x10]
      %v4164 = vor.u32 %v4162, %v4163
      %v4165 = vld [vmem:[%s4155] ss:$64 sm:$0x20]
      %v4166 = vor.u32 %v4164, %v4165
      %v4167 = vld [vmem:[%s4155] ss:$64 sm:$0x40]
      %v4168 = vor.u32 %v4166, %v4167
      %v4169 = vld [vmem:[%s4155] ss:$64 sm:$0x80]
      %v4170 = vor.u32 %v4168, %v4169
      %v4171 = vmax.f32 %v4154, %v4170
      %v4172 = vpack.c.bf16 %v4171, %v4171
      %v4174 = vunpack.c.l.b16 %v4172
      %v4175 = vpack.c.b16 %v4174, %v4174
      %4176 = vrot.lane.b32.xlu0 %v4175, 64
      %v4177 = vpop.permute.xlu0 %4176
      %4179 = vst.msk [vmem:[#allocation5 + $0x8] sm:$0xf] %vm4026, %v4177
      %s4180 = scalar_lea.vmem [#allocation4], 12
      %v4181 = vld [vmem:[%s4180] ss:$64 sm:$0x1]
      %v4182 = vld [vmem:[%s4180] ss:$64 sm:$0x2]
      %v4183 = vor.u32 %v4181, %v4182
      %v4184 = vld [vmem:[%s4180] ss:$64 sm:$0x4]
      %v4185 = vor.u32 %v4183, %v4184
      %v4186 = vld [vmem:[%s4180] ss:$64 sm:$0x8]
      %v4187 = vor.u32 %v4185, %v4186
      %v4188 = vld [vmem:[%s4180] ss:$64 sm:$0x10]
      %v4189 = vor.u32 %v4187, %v4188
      %v4190 = vld [vmem:[%s4180] ss:$64 sm:$0x20]
      %v4191 = vor.u32 %v4189, %v4190
      %v4192 = vld [vmem:[%s4180] ss:$64 sm:$0x40]
      %v4193 = vor.u32 %v4191, %v4192
      %v4194 = vld [vmem:[%s4180] ss:$64 sm:$0x80]
      %v4195 = vor.u32 %v4193, %v4194
      %s4196 = scalar_lea.vmem [#allocation4], 13
      %v4197 = vld [vmem:[%s4196] ss:$64 sm:$0x1]
      %v4198 = vld [vmem:[%s4196] ss:$64 sm:$0x2]
      %v4199 = vor.u32 %v4197, %v4198
      %v4200 = vld [vmem:[%s4196] ss:$64 sm:$0x4]
      %v4201 = vor.u32 %v4199, %v4200
      %v4202 = vld [vmem:[%s4196] ss:$64 sm:$0x8]
      %v4203 = vor.u32 %v4201, %v4202
      %v4204 = vld [vmem:[%s4196] ss:$64 sm:$0x10]
      %v4205 = vor.u32 %v4203, %v4204
      %v4206 = vld [vmem:[%s4196] ss:$64 sm:$0x20]
      %v4207 = vor.u32 %v4205, %v4206
      %v4208 = vld [vmem:[%s4196] ss:$64 sm:$0x40]
      %v4209 = vor.u32 %v4207, %v4208
      %v4210 = vld [vmem:[%s4196] ss:$64 sm:$0x80]
      %v4211 = vor.u32 %v4209, %v4210
      %v4212 = vmax.f32 %v4195, %v4211
      %v4213 = vpack.c.bf16 %v4212, %v4212
      %4214 = vst.msk [vmem:[#allocation5 + $0xc] sm:$0xf] %vm3984, %v4213
      %s4215 = scalar_lea.vmem [#allocation4], 14
      %v4216 = vld [vmem:[%s4215] ss:$64 sm:$0x1]
      %v4217 = vld [vmem:[%s4215] ss:$64 sm:$0x2]
      %v4218 = vor.u32 %v4216, %v4217
      %v4219 = vld [vmem:[%s4215] ss:$64 sm:$0x4]
      %v4220 = vor.u32 %v4218, %v4219
      %v4221 = vld [vmem:[%s4215] ss:$64 sm:$0x8]
      %v4222 = vor.u32 %v4220, %v4221
      %v4223 = vld [vmem:[%s4215] ss:$64 sm:$0x10]
      %v4224 = vor.u32 %v4222, %v4223
      %v4225 = vld [vmem:[%s4215] ss:$64 sm:$0x20]
      %v4226 = vor.u32 %v4224, %v4225
      %v4227 = vld [vmem:[%s4215] ss:$64 sm:$0x40]
      %v4228 = vor.u32 %v4226, %v4227
      %v4229 = vld [vmem:[%s4215] ss:$64 sm:$0x80]
      %v4230 = vor.u32 %v4228, %v4229
      %s4231 = scalar_lea.vmem [#allocation4], 15
      %v4232 = vld [vmem:[%s4231] ss:$64 sm:$0x1]
      %v4233 = vld [vmem:[%s4231] ss:$64 sm:$0x2]
      %v4234 = vor.u32 %v4232, %v4233
      %v4235 = vld [vmem:[%s4231] ss:$64 sm:$0x4]
      %v4236 = vor.u32 %v4234, %v4235
      %v4237 = vld [vmem:[%s4231] ss:$64 sm:$0x8]
      %v4238 = vor.u32 %v4236, %v4237
      %v4239 = vld [vmem:[%s4231] ss:$64 sm:$0x10]
      %v4240 = vor.u32 %v4238, %v4239
      %v4241 = vld [vmem:[%s4231] ss:$64 sm:$0x20]
      %v4242 = vor.u32 %v4240, %v4241
      %v4243 = vld [vmem:[%s4231] ss:$64 sm:$0x40]
      %v4244 = vor.u32 %v4242, %v4243
      %v4245 = vld [vmem:[%s4231] ss:$64 sm:$0x80]
      %v4246 = vor.u32 %v4244, %v4245
      %v4247 = vmax.f32 %v4230, %v4246
      %v4248 = vpack.c.bf16 %v4247, %v4247
      %v4250 = vunpack.c.l.b16 %v4248
      %v4251 = vpack.c.b16 %v4250, %v4250
      %4252 = vrot.lane.b32.xlu0 %v4251, 64
      %v4253 = vpop.permute.xlu0 %4252
      %4255 = vst.msk [vmem:[#allocation5 + $0xc] sm:$0xf] %vm4026, %v4253
      %s4256 = scalar_lea.vmem [#allocation4], 16
      %v4257 = vld [vmem:[%s4256] ss:$64 sm:$0x1]
      %v4258 = vld [vmem:[%s4256] ss:$64 sm:$0x2]
      %v4259 = vor.u32 %v4257, %v4258
      %v4260 = vld [vmem:[%s4256] ss:$64 sm:$0x4]
      %v4261 = vor.u32 %v4259, %v4260
      %v4262 = vld [vmem:[%s4256] ss:$64 sm:$0x8]
      %v4263 = vor.u32 %v4261, %v4262
      %v4264 = vld [vmem:[%s4256] ss:$64 sm:$0x10]
      %v4265 = vor.u32 %v4263, %v4264
      %v4266 = vld [vmem:[%s4256] ss:$64 sm:$0x20]
      %v4267 = vor.u32 %v4265, %v4266
      %v4268 = vld [vmem:[%s4256] ss:$64 sm:$0x40]
      %v4269 = vor.u32 %v4267, %v4268
      %v4270 = vld [vmem:[%s4256] ss:$64 sm:$0x80]
      %v4271 = vor.u32 %v4269, %v4270
      %s4272 = scalar_lea.vmem [#allocation4], 17
      %v4273 = vld [vmem:[%s4272] ss:$64 sm:$0x1]
      %v4274 = vld [vmem:[%s4272] ss:$64 sm:$0x2]
      %v4275 = vor.u32 %v4273, %v4274
      %v4276 = vld [vmem:[%s4272] ss:$64 sm:$0x4]
      %v4277 = vor.u32 %v4275, %v4276
      %v4278 = vld [vmem:[%s4272] ss:$64 sm:$0x8]
      %v4279 = vor.u32 %v4277, %v4278
      %v4280 = vld [vmem:[%s4272] ss:$64 sm:$0x10]
      %v4281 = vor.u32 %v4279, %v4280
      %v4282 = vld [vmem:[%s4272] ss:$64 sm:$0x20]
      %v4283 = vor.u32 %v4281, %v4282
      %v4284 = vld [vmem:[%s4272] ss:$64 sm:$0x40]
      %v4285 = vor.u32 %v4283, %v4284
      %v4286 = vld [vmem:[%s4272] ss:$64 sm:$0x80]
      %v4287 = vor.u32 %v4285, %v4286
      %v4288 = vmax.f32 %v4271, %v4287
      %v4289 = vpack.c.bf16 %v4288, %v4288
      %4290 = vst.msk [vmem:[#allocation5 + $0x10] sm:$0xf] %vm3984, %v4289
      %s4291 = scalar_lea.vmem [#allocation4], 18
      %v4292 = vld [vmem:[%s4291] ss:$64 sm:$0x1]
      %v4293 = vld [vmem:[%s4291] ss:$64 sm:$0x2]
      %v4294 = vor.u32 %v4292, %v4293
      %v4295 = vld [vmem:[%s4291] ss:$64 sm:$0x4]
      %v4296 = vor.u32 %v4294, %v4295
      %v4297 = vld [vmem:[%s4291] ss:$64 sm:$0x8]
      %v4298 = vor.u32 %v4296, %v4297
      %v4299 = vld [vmem:[%s4291] ss:$64 sm:$0x10]
      %v4300 = vor.u32 %v4298, %v4299
      %v4301 = vld [vmem:[%s4291] ss:$64 sm:$0x20]
      %v4302 = vor.u32 %v4300, %v4301
      %v4303 = vld [vmem:[%s4291] ss:$64 sm:$0x40]
      %v4304 = vor.u32 %v4302, %v4303
      %v4305 = vld [vmem:[%s4291] ss:$64 sm:$0x80]
      %v4306 = vor.u32 %v4304, %v4305
      %s4307 = scalar_lea.vmem [#allocation4], 19
      %v4308 = vld [vmem:[%s4307] ss:$64 sm:$0x1]
      %v4309 = vld [vmem:[%s4307] ss:$64 sm:$0x2]
      %v4310 = vor.u32 %v4308, %v4309
      %v4311 = vld [vmem:[%s4307] ss:$64 sm:$0x4]
      %v4312 = vor.u32 %v4310, %v4311
      %v4313 = vld [vmem:[%s4307] ss:$64 sm:$0x8]
      %v4314 = vor.u32 %v4312, %v4313
      %v4315 = vld [vmem:[%s4307] ss:$64 sm:$0x10]
      %v4316 = vor.u32 %v4314, %v4315
      %v4317 = vld [vmem:[%s4307] ss:$64 sm:$0x20]
      %v4318 = vor.u32 %v4316, %v4317
      %v4319 = vld [vmem:[%s4307] ss:$64 sm:$0x40]
      %v4320 = vor.u32 %v4318, %v4319
      %v4321 = vld [vmem:[%s4307] ss:$64 sm:$0x80]
      %v4322 = vor.u32 %v4320, %v4321
      %v4323 = vmax.f32 %v4306, %v4322
      %v4324 = vpack.c.bf16 %v4323, %v4323
      %v4326 = vunpack.c.l.b16 %v4324
      %v4327 = vpack.c.b16 %v4326, %v4326
      %4328 = vrot.lane.b32.xlu0 %v4327, 64
      %v4329 = vpop.permute.xlu0 %4328
      %4331 = vst.msk [vmem:[#allocation5 + $0x10] sm:$0xf] %vm4026, %v4329
      %s4332 = scalar_lea.vmem [#allocation4], 20
      %v4333 = vld [vmem:[%s4332] ss:$64 sm:$0x1]
      %v4334 = vld [vmem:[%s4332] ss:$64 sm:$0x2]
      %v4335 = vor.u32 %v4333, %v4334
      %v4336 = vld [vmem:[%s4332] ss:$64 sm:$0x4]
      %v4337 = vor.u32 %v4335, %v4336
      %v4338 = vld [vmem:[%s4332] ss:$64 sm:$0x8]
      %v4339 = vor.u32 %v4337, %v4338
      %v4340 = vld [vmem:[%s4332] ss:$64 sm:$0x10]
      %v4341 = vor.u32 %v4339, %v4340
      %v4342 = vld [vmem:[%s4332] ss:$64 sm:$0x20]
      %v4343 = vor.u32 %v4341, %v4342
      %v4344 = vld [vmem:[%s4332] ss:$64 sm:$0x40]
      %v4345 = vor.u32 %v4343, %v4344
      %v4346 = vld [vmem:[%s4332] ss:$64 sm:$0x80]
      %v4347 = vor.u32 %v4345, %v4346
      %s4348 = scalar_lea.vmem [#allocation4], 21
      %v4349 = vld [vmem:[%s4348] ss:$64 sm:$0x1]
      %v4350 = vld [vmem:[%s4348] ss:$64 sm:$0x2]
      %v4351 = vor.u32 %v4349, %v4350
      %v4352 = vld [vmem:[%s4348] ss:$64 sm:$0x4]
      %v4353 = vor.u32 %v4351, %v4352
      %v4354 = vld [vmem:[%s4348] ss:$64 sm:$0x8]
      %v4355 = vor.u32 %v4353, %v4354
      %v4356 = vld [vmem:[%s4348] ss:$64 sm:$0x10]
      %v4357 = vor.u32 %v4355, %v4356
      %v4358 = vld [vmem:[%s4348] ss:$64 sm:$0x20]
      %v4359 = vor.u32 %v4357, %v4358
      %v4360 = vld [vmem:[%s4348] ss:$64 sm:$0x40]
      %v4361 = vor.u32 %v4359, %v4360
      %v4362 = vld [vmem:[%s4348] ss:$64 sm:$0x80]
      %v4363 = vor.u32 %v4361, %v4362
      %v4364 = vmax.f32 %v4347, %v4363
      %v4365 = vpack.c.bf16 %v4364, %v4364
      %4366 = vst.msk [vmem:[#allocation5 + $0x14] sm:$0xf] %vm3984, %v4365
      %s4367 = scalar_lea.vmem [#allocation4], 22
      %v4368 = vld [vmem:[%s4367] ss:$64 sm:$0x1]
      %v4369 = vld [vmem:[%s4367] ss:$64 sm:$0x2]
      %v4370 = vor.u32 %v4368, %v4369
      %v4371 = vld [vmem:[%s4367] ss:$64 sm:$0x4]
      %v4372 = vor.u32 %v4370, %v4371
      %v4373 = vld [vmem:[%s4367] ss:$64 sm:$0x8]
      %v4374 = vor.u32 %v4372, %v4373
      %v4375 = vld [vmem:[%s4367] ss:$64 sm:$0x10]
      %v4376 = vor.u32 %v4374, %v4375
      %v4377 = vld [vmem:[%s4367] ss:$64 sm:$0x20]
      %v4378 = vor.u32 %v4376, %v4377
      %v4379 = vld [vmem:[%s4367] ss:$64 sm:$0x40]
      %v4380 = vor.u32 %v4378, %v4379
      %v4381 = vld [vmem:[%s4367] ss:$64 sm:$0x80]
      %v4382 = vor.u32 %v4380, %v4381
      %s4383 = scalar_lea.vmem [#allocation4], 23
      %v4384 = vld [vmem:[%s4383] ss:$64 sm:$0x1]
      %v4385 = vld [vmem:[%s4383] ss:$64 sm:$0x2]
      %v4386 = vor.u32 %v4384, %v4385
      %v4387 = vld [vmem:[%s4383] ss:$64 sm:$0x4]
      %v4388 = vor.u32 %v4386, %v4387
      %v4389 = vld [vmem:[%s4383] ss:$64 sm:$0x8]
      %v4390 = vor.u32 %v4388, %v4389
      %v4391 = vld [vmem:[%s4383] ss:$64 sm:$0x10]
      %v4392 = vor.u32 %v4390, %v4391
      %v4393 = vld [vmem:[%s4383] ss:$64 sm:$0x20]
      %v4394 = vor.u32 %v4392, %v4393
      %v4395 = vld [vmem:[%s4383] ss:$64 sm:$0x40]
      %v4396 = vor.u32 %v4394, %v4395
      %v4397 = vld [vmem:[%s4383] ss:$64 sm:$0x80]
      %v4398 = vor.u32 %v4396, %v4397
      %v4399 = vmax.f32 %v4382, %v4398
      %v4400 = vpack.c.bf16 %v4399, %v4399
      %v4402 = vunpack.c.l.b16 %v4400
      %v4403 = vpack.c.b16 %v4402, %v4402
      %4404 = vrot.lane.b32.xlu0 %v4403, 64
      %v4405 = vpop.permute.xlu0 %4404
      %4407 = vst.msk [vmem:[#allocation5 + $0x14] sm:$0xf] %vm4026, %v4405
      %s4408 = scalar_lea.vmem [#allocation4], 24
      %v4409 = vld [vmem:[%s4408] ss:$64 sm:$0x1]
      %v4410 = vld [vmem:[%s4408] ss:$64 sm:$0x2]
      %v4411 = vor.u32 %v4409, %v4410
      %v4412 = vld [vmem:[%s4408] ss:$64 sm:$0x4]
      %v4413 = vor.u32 %v4411, %v4412
      %v4414 = vld [vmem:[%s4408] ss:$64 sm:$0x8]
      %v4415 = vor.u32 %v4413, %v4414
      %v4416 = vld [vmem:[%s4408] ss:$64 sm:$0x10]
      %v4417 = vor.u32 %v4415, %v4416
      %v4418 = vld [vmem:[%s4408] ss:$64 sm:$0x20]
      %v4419 = vor.u32 %v4417, %v4418
      %v4420 = vld [vmem:[%s4408] ss:$64 sm:$0x40]
      %v4421 = vor.u32 %v4419, %v4420
      %v4422 = vld [vmem:[%s4408] ss:$64 sm:$0x80]
      %v4423 = vor.u32 %v4421, %v4422
      %s4424 = scalar_lea.vmem [#allocation4], 25
      %v4425 = vld [vmem:[%s4424] ss:$64 sm:$0x1]
      %v4426 = vld [vmem:[%s4424] ss:$64 sm:$0x2]
      %v4427 = vor.u32 %v4425, %v4426
      %v4428 = vld [vmem:[%s4424] ss:$64 sm:$0x4]
      %v4429 = vor.u32 %v4427, %v4428
      %v4430 = vld [vmem:[%s4424] ss:$64 sm:$0x8]
      %v4431 = vor.u32 %v4429, %v4430
      %v4432 = vld [vmem:[%s4424] ss:$64 sm:$0x10]
      %v4433 = vor.u32 %v4431, %v4432
      %v4434 = vld [vmem:[%s4424] ss:$64 sm:$0x20]
      %v4435 = vor.u32 %v4433, %v4434
      %v4436 = vld [vmem:[%s4424] ss:$64 sm:$0x40]
      %v4437 = vor.u32 %v4435, %v4436
      %v4438 = vld [vmem:[%s4424] ss:$64 sm:$0x80]
      %v4439 = vor.u32 %v4437, %v4438
      %v4440 = vmax.f32 %v4423, %v4439
      %v4441 = vpack.c.bf16 %v4440, %v4440
      %4442 = vst.msk [vmem:[#allocation5 + $0x18] sm:$0xf] %vm3984, %v4441
      %s4443 = scalar_lea.vmem [#allocation4], 26
      %v4444 = vld [vmem:[%s4443] ss:$64 sm:$0x1]
      %v4445 = vld [vmem:[%s4443] ss:$64 sm:$0x2]
      %v4446 = vor.u32 %v4444, %v4445
      %v4447 = vld [vmem:[%s4443] ss:$64 sm:$0x4]
      %v4448 = vor.u32 %v4446, %v4447
      %v4449 = vld [vmem:[%s4443] ss:$64 sm:$0x8]
      %v4450 = vor.u32 %v4448, %v4449
      %v4451 = vld [vmem:[%s4443] ss:$64 sm:$0x10]
      %v4452 = vor.u32 %v4450, %v4451
      %v4453 = vld [vmem:[%s4443] ss:$64 sm:$0x20]
      %v4454 = vor.u32 %v4452, %v4453
      %v4455 = vld [vmem:[%s4443] ss:$64 sm:$0x40]
      %v4456 = vor.u32 %v4454, %v4455
      %v4457 = vld [vmem:[%s4443] ss:$64 sm:$0x80]
      %v4458 = vor.u32 %v4456, %v4457
      %s4459 = scalar_lea.vmem [#allocation4], 27
      %v4460 = vld [vmem:[%s4459] ss:$64 sm:$0x1]
      %v4461 = vld [vmem:[%s4459] ss:$64 sm:$0x2]
      %v4462 = vor.u32 %v4460, %v4461
      %v4463 = vld [vmem:[%s4459] ss:$64 sm:$0x4]
      %v4464 = vor.u32 %v4462, %v4463
      %v4465 = vld [vmem:[%s4459] ss:$64 sm:$0x8]
      %v4466 = vor.u32 %v4464, %v4465
      %v4467 = vld [vmem:[%s4459] ss:$64 sm:$0x10]
      %v4468 = vor.u32 %v4466, %v4467
      %v4469 = vld [vmem:[%s4459] ss:$64 sm:$0x20]
      %v4470 = vor.u32 %v4468, %v4469
      %v4471 = vld [vmem:[%s4459] ss:$64 sm:$0x40]
      %v4472 = vor.u32 %v4470, %v4471
      %v4473 = vld [vmem:[%s4459] ss:$64 sm:$0x80]
      %v4474 = vor.u32 %v4472, %v4473
      %v4475 = vmax.f32 %v4458, %v4474
      %v4476 = vpack.c.bf16 %v4475, %v4475
      %v4478 = vunpack.c.l.b16 %v4476
      %v4479 = vpack.c.b16 %v4478, %v4478
      %4480 = vrot.lane.b32.xlu0 %v4479, 64
      %v4481 = vpop.permute.xlu0 %4480
      %4483 = vst.msk [vmem:[#allocation5 + $0x18] sm:$0xf] %vm4026, %v4481
      %s4484 = scalar_lea.vmem [#allocation4], 28
      %v4485 = vld [vmem:[%s4484] ss:$64 sm:$0x1]
      %v4486 = vld [vmem:[%s4484] ss:$64 sm:$0x2]
      %v4487 = vor.u32 %v4485, %v4486
      %v4488 = vld [vmem:[%s4484] ss:$64 sm:$0x4]
      %v4489 = vor.u32 %v4487, %v4488
      %v4490 = vld [vmem:[%s4484] ss:$64 sm:$0x8]
      %v4491 = vor.u32 %v4489, %v4490
      %v4492 = vld [vmem:[%s4484] ss:$64 sm:$0x10]
      %v4493 = vor.u32 %v4491, %v4492
      %v4494 = vld [vmem:[%s4484] ss:$64 sm:$0x20]
      %v4495 = vor.u32 %v4493, %v4494
      %v4496 = vld [vmem:[%s4484] ss:$64 sm:$0x40]
      %v4497 = vor.u32 %v4495, %v4496
      %v4498 = vld [vmem:[%s4484] ss:$64 sm:$0x80]
      %v4499 = vor.u32 %v4497, %v4498
      %s4500 = scalar_lea.vmem [#allocation4], 29
      %v4501 = vld [vmem:[%s4500] ss:$64 sm:$0x1]
      %v4502 = vld [vmem:[%s4500] ss:$64 sm:$0x2]
      %v4503 = vor.u32 %v4501, %v4502
      %v4504 = vld [vmem:[%s4500] ss:$64 sm:$0x4]
      %v4505 = vor.u32 %v4503, %v4504
      %v4506 = vld [vmem:[%s4500] ss:$64 sm:$0x8]
      %v4507 = vor.u32 %v4505, %v4506
      %v4508 = vld [vmem:[%s4500] ss:$64 sm:$0x10]
      %v4509 = vor.u32 %v4507, %v4508
      %v4510 = vld [vmem:[%s4500] ss:$64 sm:$0x20]
      %v4511 = vor.u32 %v4509, %v4510
      %v4512 = vld [vmem:[%s4500] ss:$64 sm:$0x40]
      %v4513 = vor.u32 %v4511, %v4512
      %v4514 = vld [vmem:[%s4500] ss:$64 sm:$0x80]
      %v4515 = vor.u32 %v4513, %v4514
      %v4516 = vmax.f32 %v4499, %v4515
      %v4517 = vpack.c.bf16 %v4516, %v4516
      %4518 = vst.msk [vmem:[#allocation5 + $0x1c] sm:$0xf] %vm3984, %v4517
      %s4519 = scalar_lea.vmem [#allocation4], 30
      %v4520 = vld [vmem:[%s4519] ss:$64 sm:$0x1]
      %v4521 = vld [vmem:[%s4519] ss:$64 sm:$0x2]
      %v4522 = vor.u32 %v4520, %v4521
      %v4523 = vld [vmem:[%s4519] ss:$64 sm:$0x4]
      %v4524 = vor.u32 %v4522, %v4523
      %v4525 = vld [vmem:[%s4519] ss:$64 sm:$0x8]
      %v4526 = vor.u32 %v4524, %v4525
      %v4527 = vld [vmem:[%s4519] ss:$64 sm:$0x10]
      %v4528 = vor.u32 %v4526, %v4527
      %v4529 = vld [vmem:[%s4519] ss:$64 sm:$0x20]
      %v4530 = vor.u32 %v4528, %v4529
      %v4531 = vld [vmem:[%s4519] ss:$64 sm:$0x40]
      %v4532 = vor.u32 %v4530, %v4531
      %v4533 = vld [vmem:[%s4519] ss:$64 sm:$0x80]
      %v4534 = vor.u32 %v4532, %v4533
      %s4535 = scalar_lea.vmem [#allocation4], 31
      %v4536 = vld [vmem:[%s4535] ss:$64 sm:$0x1]
      %v4537 = vld [vmem:[%s4535] ss:$64 sm:$0x2]
      %v4538 = vor.u32 %v4536, %v4537
      %v4539 = vld [vmem:[%s4535] ss:$64 sm:$0x4]
      %v4540 = vor.u32 %v4538, %v4539
      %v4541 = vld [vmem:[%s4535] ss:$64 sm:$0x8]
      %v4542 = vor.u32 %v4540, %v4541
      %v4543 = vld [vmem:[%s4535] ss:$64 sm:$0x10]
      %v4544 = vor.u32 %v4542, %v4543
      %v4545 = vld [vmem:[%s4535] ss:$64 sm:$0x20]
      %v4546 = vor.u32 %v4544, %v4545
      %v4547 = vld [vmem:[%s4535] ss:$64 sm:$0x40]
      %v4548 = vor.u32 %v4546, %v4547
      %v4549 = vld [vmem:[%s4535] ss:$64 sm:$0x80]
      %v4550 = vor.u32 %v4548, %v4549
      %v4551 = vmax.f32 %v4534, %v4550
      %v4552 = vpack.c.bf16 %v4551, %v4551
      %v4554 = vunpack.c.l.b16 %v4552
      %v4555 = vpack.c.b16 %v4554, %v4554
      %4556 = vrot.lane.b32.xlu0 %v4555, 64
      %v4557 = vpop.permute.xlu0 %4556
      %4559 = vst.msk [vmem:[#allocation5 + $0x1c] sm:$0xf] %vm4026, %v4557
      %s4560 = scalar_lea.vmem [#allocation4], 32
      %v4561 = vld [vmem:[%s4560] ss:$64 sm:$0x1]
      %v4562 = vld [vmem:[%s4560] ss:$64 sm:$0x2]
      %v4563 = vor.u32 %v4561, %v4562
      %v4564 = vld [vmem:[%s4560] ss:$64 sm:$0x4]
      %v4565 = vor.u32 %v4563, %v4564
      %v4566 = vld [vmem:[%s4560] ss:$64 sm:$0x8]
      %v4567 = vor.u32 %v4565, %v4566
      %v4568 = vld [vmem:[%s4560] ss:$64 sm:$0x10]
      %v4569 = vor.u32 %v4567, %v4568
      %v4570 = vld [vmem:[%s4560] ss:$64 sm:$0x20]
      %v4571 = vor.u32 %v4569, %v4570
      %v4572 = vld [vmem:[%s4560] ss:$64 sm:$0x40]
      %v4573 = vor.u32 %v4571, %v4572
      %v4574 = vld [vmem:[%s4560] ss:$64 sm:$0x80]
      %v4575 = vor.u32 %v4573, %v4574
      %s4576 = scalar_lea.vmem [#allocation4], 33
      %v4577 = vld [vmem:[%s4576] ss:$64 sm:$0x1]
      %v4578 = vld [vmem:[%s4576] ss:$64 sm:$0x2]
      %v4579 = vor.u32 %v4577, %v4578
      %v4580 = vld [vmem:[%s4576] ss:$64 sm:$0x4]
      %v4581 = vor.u32 %v4579, %v4580
      %v4582 = vld [vmem:[%s4576] ss:$64 sm:$0x8]
      %v4583 = vor.u32 %v4581, %v4582
      %v4584 = vld [vmem:[%s4576] ss:$64 sm:$0x10]
      %v4585 = vor.u32 %v4583, %v4584
      %v4586 = vld [vmem:[%s4576] ss:$64 sm:$0x20]
      %v4587 = vor.u32 %v4585, %v4586
      %v4588 = vld [vmem:[%s4576] ss:$64 sm:$0x40]
      %v4589 = vor.u32 %v4587, %v4588
      %v4590 = vld [vmem:[%s4576] ss:$64 sm:$0x80]
      %v4591 = vor.u32 %v4589, %v4590
      %v4592 = vmax.f32 %v4575, %v4591
      %v4593 = vpack.c.bf16 %v4592, %v4592
      %4594 = vst.msk [vmem:[#allocation5 + $0x20] sm:$0xf] %vm3984, %v4593
      %s4595 = scalar_lea.vmem [#allocation4], 34
      %v4596 = vld [vmem:[%s4595] ss:$64 sm:$0x1]
      %v4597 = vld [vmem:[%s4595] ss:$64 sm:$0x2]
      %v4598 = vor.u32 %v4596, %v4597
      %v4599 = vld [vmem:[%s4595] ss:$64 sm:$0x4]
      %v4600 = vor.u32 %v4598, %v4599
      %v4601 = vld [vmem:[%s4595] ss:$64 sm:$0x8]
      %v4602 = vor.u32 %v4600, %v4601
      %v4603 = vld [vmem:[%s4595] ss:$64 sm:$0x10]
      %v4604 = vor.u32 %v4602, %v4603
      %v4605 = vld [vmem:[%s4595] ss:$64 sm:$0x20]
      %v4606 = vor.u32 %v4604, %v4605
      %v4607 = vld [vmem:[%s4595] ss:$64 sm:$0x40]
      %v4608 = vor.u32 %v4606, %v4607
      %v4609 = vld [vmem:[%s4595] ss:$64 sm:$0x80]
      %v4610 = vor.u32 %v4608, %v4609
      %s4611 = scalar_lea.vmem [#allocation4], 35
      %v4612 = vld [vmem:[%s4611] ss:$64 sm:$0x1]
      %v4613 = vld [vmem:[%s4611] ss:$64 sm:$0x2]
      %v4614 = vor.u32 %v4612, %v4613
      %v4615 = vld [vmem:[%s4611] ss:$64 sm:$0x4]
      %v4616 = vor.u32 %v4614, %v4615
      %v4617 = vld [vmem:[%s4611] ss:$64 sm:$0x8]
      %v4618 = vor.u32 %v4616, %v4617
      %v4619 = vld [vmem:[%s4611] ss:$64 sm:$0x10]
      %v4620 = vor.u32 %v4618, %v4619
      %v4621 = vld [vmem:[%s4611] ss:$64 sm:$0x20]
      %v4622 = vor.u32 %v4620, %v4621
      %v4623 = vld [vmem:[%s4611] ss:$64 sm:$0x40]
      %v4624 = vor.u32 %v4622, %v4623
      %v4625 = vld [vmem:[%s4611] ss:$64 sm:$0x80]
      %v4626 = vor.u32 %v4624, %v4625
      %v4627 = vmax.f32 %v4610, %v4626
      %v4628 = vpack.c.bf16 %v4627, %v4627
      %v4630 = vunpack.c.l.b16 %v4628
      %v4631 = vpack.c.b16 %v4630, %v4630
      %4632 = vrot.lane.b32.xlu0 %v4631, 64
      %v4633 = vpop.permute.xlu0 %4632
      %4635 = vst.msk [vmem:[#allocation5 + $0x20] sm:$0xf] %vm4026, %v4633
      %s4636 = scalar_lea.vmem [#allocation4], 36
      %v4637 = vld [vmem:[%s4636] ss:$64 sm:$0x1]
      %v4638 = vld [vmem:[%s4636] ss:$64 sm:$0x2]
      %v4639 = vor.u32 %v4637, %v4638
      %v4640 = vld [vmem:[%s4636] ss:$64 sm:$0x4]
      %v4641 = vor.u32 %v4639, %v4640
      %v4642 = vld [vmem:[%s4636] ss:$64 sm:$0x8]
      %v4643 = vor.u32 %v4641, %v4642
      %v4644 = vld [vmem:[%s4636] ss:$64 sm:$0x10]
      %v4645 = vor.u32 %v4643, %v4644
      %v4646 = vld [vmem:[%s4636] ss:$64 sm:$0x20]
      %v4647 = vor.u32 %v4645, %v4646
      %v4648 = vld [vmem:[%s4636] ss:$64 sm:$0x40]
      %v4649 = vor.u32 %v4647, %v4648
      %v4650 = vld [vmem:[%s4636] ss:$64 sm:$0x80]
      %v4651 = vor.u32 %v4649, %v4650
      %s4652 = scalar_lea.vmem [#allocation4], 37
      %v4653 = vld [vmem:[%s4652] ss:$64 sm:$0x1]
      %v4654 = vld [vmem:[%s4652] ss:$64 sm:$0x2]
      %v4655 = vor.u32 %v4653, %v4654
      %v4656 = vld [vmem:[%s4652] ss:$64 sm:$0x4]
      %v4657 = vor.u32 %v4655, %v4656
      %v4658 = vld [vmem:[%s4652] ss:$64 sm:$0x8]
      %v4659 = vor.u32 %v4657, %v4658
      %v4660 = vld [vmem:[%s4652] ss:$64 sm:$0x10]
      %v4661 = vor.u32 %v4659, %v4660
      %v4662 = vld [vmem:[%s4652] ss:$64 sm:$0x20]
      %v4663 = vor.u32 %v4661, %v4662
      %v4664 = vld [vmem:[%s4652] ss:$64 sm:$0x40]
      %v4665 = vor.u32 %v4663, %v4664
      %v4666 = vld [vmem:[%s4652] ss:$64 sm:$0x80]
      %v4667 = vor.u32 %v4665, %v4666
      %v4668 = vmax.f32 %v4651, %v4667
      %v4669 = vpack.c.bf16 %v4668, %v4668
      %4670 = vst.msk [vmem:[#allocation5 + $0x24] sm:$0xf] %vm3984, %v4669
      %s4671 = scalar_lea.vmem [#allocation4], 38
      %v4672 = vld [vmem:[%s4671] ss:$64 sm:$0x1]
      %v4673 = vld [vmem:[%s4671] ss:$64 sm:$0x2]
      %v4674 = vor.u32 %v4672, %v4673
      %v4675 = vld [vmem:[%s4671] ss:$64 sm:$0x4]
      %v4676 = vor.u32 %v4674, %v4675
      %v4677 = vld [vmem:[%s4671] ss:$64 sm:$0x8]
      %v4678 = vor.u32 %v4676, %v4677
      %v4679 = vld [vmem:[%s4671] ss:$64 sm:$0x10]
      %v4680 = vor.u32 %v4678, %v4679
      %v4681 = vld [vmem:[%s4671] ss:$64 sm:$0x20]
      %v4682 = vor.u32 %v4680, %v4681
      %v4683 = vld [vmem:[%s4671] ss:$64 sm:$0x40]
      %v4684 = vor.u32 %v4682, %v4683
      %v4685 = vld [vmem:[%s4671] ss:$64 sm:$0x80]
      %v4686 = vor.u32 %v4684, %v4685
      %s4687 = scalar_lea.vmem [#allocation4], 39
      %v4688 = vld [vmem:[%s4687] ss:$64 sm:$0x1]
      %v4689 = vld [vmem:[%s4687] ss:$64 sm:$0x2]
      %v4690 = vor.u32 %v4688, %v4689
      %v4691 = vld [vmem:[%s4687] ss:$64 sm:$0x4]
      %v4692 = vor.u32 %v4690, %v4691
      %v4693 = vld [vmem:[%s4687] ss:$64 sm:$0x8]
      %v4694 = vor.u32 %v4692, %v4693
      %v4695 = vld [vmem:[%s4687] ss:$64 sm:$0x10]
      %v4696 = vor.u32 %v4694, %v4695
      %v4697 = vld [vmem:[%s4687] ss:$64 sm:$0x20]
      %v4698 = vor.u32 %v4696, %v4697
      %v4699 = vld [vmem:[%s4687] ss:$64 sm:$0x40]
      %v4700 = vor.u32 %v4698, %v4699
      %v4701 = vld [vmem:[%s4687] ss:$64 sm:$0x80]
      %v4702 = vor.u32 %v4700, %v4701
      %v4703 = vmax.f32 %v4686, %v4702
      %v4704 = vpack.c.bf16 %v4703, %v4703
      %v4706 = vunpack.c.l.b16 %v4704
      %v4707 = vpack.c.b16 %v4706, %v4706
      %4708 = vrot.lane.b32.xlu0 %v4707, 64
      %v4709 = vpop.permute.xlu0 %4708
      %4711 = vst.msk [vmem:[#allocation5 + $0x24] sm:$0xf] %vm4026, %v4709
      %s4712 = scalar_lea.vmem [#allocation4], 40
      %v4713 = vld [vmem:[%s4712] ss:$64 sm:$0x1]
      %v4714 = vld [vmem:[%s4712] ss:$64 sm:$0x2]
      %v4715 = vor.u32 %v4713, %v4714
      %v4716 = vld [vmem:[%s4712] ss:$64 sm:$0x4]
      %v4717 = vor.u32 %v4715, %v4716
      %v4718 = vld [vmem:[%s4712] ss:$64 sm:$0x8]
      %v4719 = vor.u32 %v4717, %v4718
      %v4720 = vld [vmem:[%s4712] ss:$64 sm:$0x10]
      %v4721 = vor.u32 %v4719, %v4720
      %v4722 = vld [vmem:[%s4712] ss:$64 sm:$0x20]
      %v4723 = vor.u32 %v4721, %v4722
      %v4724 = vld [vmem:[%s4712] ss:$64 sm:$0x40]
      %v4725 = vor.u32 %v4723, %v4724
      %v4726 = vld [vmem:[%s4712] ss:$64 sm:$0x80]
      %v4727 = vor.u32 %v4725, %v4726
      %s4728 = scalar_lea.vmem [#allocation4], 41
      %v4729 = vld [vmem:[%s4728] ss:$64 sm:$0x1]
      %v4730 = vld [vmem:[%s4728] ss:$64 sm:$0x2]
      %v4731 = vor.u32 %v4729, %v4730
      %v4732 = vld [vmem:[%s4728] ss:$64 sm:$0x4]
      %v4733 = vor.u32 %v4731, %v4732
      %v4734 = vld [vmem:[%s4728] ss:$64 sm:$0x8]
      %v4735 = vor.u32 %v4733, %v4734
      %v4736 = vld [vmem:[%s4728] ss:$64 sm:$0x10]
      %v4737 = vor.u32 %v4735, %v4736
      %v4738 = vld [vmem:[%s4728] ss:$64 sm:$0x20]
      %v4739 = vor.u32 %v4737, %v4738
      %v4740 = vld [vmem:[%s4728] ss:$64 sm:$0x40]
      %v4741 = vor.u32 %v4739, %v4740
      %v4742 = vld [vmem:[%s4728] ss:$64 sm:$0x80]
      %v4743 = vor.u32 %v4741, %v4742
      %v4744 = vmax.f32 %v4727, %v4743
      %v4745 = vpack.c.bf16 %v4744, %v4744
      %4746 = vst.msk [vmem:[#allocation5 + $0x28] sm:$0xf] %vm3984, %v4745
      %s4747 = scalar_lea.vmem [#allocation4], 42
      %v4748 = vld [vmem:[%s4747] ss:$64 sm:$0x1]
      %v4749 = vld [vmem:[%s4747] ss:$64 sm:$0x2]
      %v4750 = vor.u32 %v4748, %v4749
      %v4751 = vld [vmem:[%s4747] ss:$64 sm:$0x4]
      %v4752 = vor.u32 %v4750, %v4751
      %v4753 = vld [vmem:[%s4747] ss:$64 sm:$0x8]
      %v4754 = vor.u32 %v4752, %v4753
      %v4755 = vld [vmem:[%s4747] ss:$64 sm:$0x10]
      %v4756 = vor.u32 %v4754, %v4755
      %v4757 = vld [vmem:[%s4747] ss:$64 sm:$0x20]
      %v4758 = vor.u32 %v4756, %v4757
      %v4759 = vld [vmem:[%s4747] ss:$64 sm:$0x40]
      %v4760 = vor.u32 %v4758, %v4759
      %v4761 = vld [vmem:[%s4747] ss:$64 sm:$0x80]
      %v4762 = vor.u32 %v4760, %v4761
      %s4763 = scalar_lea.vmem [#allocation4], 43
      %v4764 = vld [vmem:[%s4763] ss:$64 sm:$0x1]
      %v4765 = vld [vmem:[%s4763] ss:$64 sm:$0x2]
      %v4766 = vor.u32 %v4764, %v4765
      %v4767 = vld [vmem:[%s4763] ss:$64 sm:$0x4]
      %v4768 = vor.u32 %v4766, %v4767
      %v4769 = vld [vmem:[%s4763] ss:$64 sm:$0x8]
      %v4770 = vor.u32 %v4768, %v4769
      %v4771 = vld [vmem:[%s4763] ss:$64 sm:$0x10]
      %v4772 = vor.u32 %v4770, %v4771
      %v4773 = vld [vmem:[%s4763] ss:$64 sm:$0x20]
      %v4774 = vor.u32 %v4772, %v4773
      %v4775 = vld [vmem:[%s4763] ss:$64 sm:$0x40]
      %v4776 = vor.u32 %v4774, %v4775
      %v4777 = vld [vmem:[%s4763] ss:$64 sm:$0x80]
      %v4778 = vor.u32 %v4776, %v4777
      %v4779 = vmax.f32 %v4762, %v4778
      %v4780 = vpack.c.bf16 %v4779, %v4779
      %v4782 = vunpack.c.l.b16 %v4780
      %v4783 = vpack.c.b16 %v4782, %v4782
      %4784 = vrot.lane.b32.xlu0 %v4783, 64
      %v4785 = vpop.permute.xlu0 %4784
      %4787 = vst.msk [vmem:[#allocation5 + $0x28] sm:$0xf] %vm4026, %v4785
      %s4788 = scalar_lea.vmem [#allocation4], 44
      %v4789 = vld [vmem:[%s4788] ss:$64 sm:$0x1]
      %v4790 = vld [vmem:[%s4788] ss:$64 sm:$0x2]
      %v4791 = vor.u32 %v4789, %v4790
      %v4792 = vld [vmem:[%s4788] ss:$64 sm:$0x4]
      %v4793 = vor.u32 %v4791, %v4792
      %v4794 = vld [vmem:[%s4788] ss:$64 sm:$0x8]
      %v4795 = vor.u32 %v4793, %v4794
      %v4796 = vld [vmem:[%s4788] ss:$64 sm:$0x10]
      %v4797 = vor.u32 %v4795, %v4796
      %v4798 = vld [vmem:[%s4788] ss:$64 sm:$0x20]
      %v4799 = vor.u32 %v4797, %v4798
      %v4800 = vld [vmem:[%s4788] ss:$64 sm:$0x40]
      %v4801 = vor.u32 %v4799, %v4800
      %v4802 = vld [vmem:[%s4788] ss:$64 sm:$0x80]
      %v4803 = vor.u32 %v4801, %v4802
      %s4804 = scalar_lea.vmem [#allocation4], 45
      %v4805 = vld [vmem:[%s4804] ss:$64 sm:$0x1]
      %v4806 = vld [vmem:[%s4804] ss:$64 sm:$0x2]
      %v4807 = vor.u32 %v4805, %v4806
      %v4808 = vld [vmem:[%s4804] ss:$64 sm:$0x4]
      %v4809 = vor.u32 %v4807, %v4808
      %v4810 = vld [vmem:[%s4804] ss:$64 sm:$0x8]
      %v4811 = vor.u32 %v4809, %v4810
      %v4812 = vld [vmem:[%s4804] ss:$64 sm:$0x10]
      %v4813 = vor.u32 %v4811, %v4812
      %v4814 = vld [vmem:[%s4804] ss:$64 sm:$0x20]
      %v4815 = vor.u32 %v4813, %v4814
      %v4816 = vld [vmem:[%s4804] ss:$64 sm:$0x40]
      %v4817 = vor.u32 %v4815, %v4816
      %v4818 = vld [vmem:[%s4804] ss:$64 sm:$0x80]
      %v4819 = vor.u32 %v4817, %v4818
      %v4820 = vmax.f32 %v4803, %v4819
      %v4821 = vpack.c.bf16 %v4820, %v4820
      %4822 = vst.msk [vmem:[#allocation5 + $0x2c] sm:$0xf] %vm3984, %v4821
      %s4823 = scalar_lea.vmem [#allocation4], 46
      %v4824 = vld [vmem:[%s4823] ss:$64 sm:$0x1]
      %v4825 = vld [vmem:[%s4823] ss:$64 sm:$0x2]
      %v4826 = vor.u32 %v4824, %v4825
      %v4827 = vld [vmem:[%s4823] ss:$64 sm:$0x4]
      %v4828 = vor.u32 %v4826, %v4827
      %v4829 = vld [vmem:[%s4823] ss:$64 sm:$0x8]
      %v4830 = vor.u32 %v4828, %v4829
      %v4831 = vld [vmem:[%s4823] ss:$64 sm:$0x10]
      %v4832 = vor.u32 %v4830, %v4831
      %v4833 = vld [vmem:[%s4823] ss:$64 sm:$0x20]
      %v4834 = vor.u32 %v4832, %v4833
      %v4835 = vld [vmem:[%s4823] ss:$64 sm:$0x40]
      %v4836 = vor.u32 %v4834, %v4835
      %v4837 = vld [vmem:[%s4823] ss:$64 sm:$0x80]
      %v4838 = vor.u32 %v4836, %v4837
      %s4839 = scalar_lea.vmem [#allocation4], 47
      %v4840 = vld [vmem:[%s4839] ss:$64 sm:$0x1]
      %v4841 = vld [vmem:[%s4839] ss:$64 sm:$0x2]
      %v4842 = vor.u32 %v4840, %v4841
      %v4843 = vld [vmem:[%s4839] ss:$64 sm:$0x4]
      %v4844 = vor.u32 %v4842, %v4843
      %v4845 = vld [vmem:[%s4839] ss:$64 sm:$0x8]
      %v4846 = vor.u32 %v4844, %v4845
      %v4847 = vld [vmem:[%s4839] ss:$64 sm:$0x10]
      %v4848 = vor.u32 %v4846, %v4847
      %v4849 = vld [vmem:[%s4839] ss:$64 sm:$0x20]
      %v4850 = vor.u32 %v4848, %v4849
      %v4851 = vld [vmem:[%s4839] ss:$64 sm:$0x40]
      %v4852 = vor.u32 %v4850, %v4851
      %v4853 = vld [vmem:[%s4839] ss:$64 sm:$0x80]
      %v4854 = vor.u32 %v4852, %v4853
      %v4855 = vmax.f32 %v4838, %v4854
      %v4856 = vpack.c.bf16 %v4855, %v4855
      %v4858 = vunpack.c.l.b16 %v4856
      %v4859 = vpack.c.b16 %v4858, %v4858
      %4860 = vrot.lane.b32.xlu0 %v4859, 64
      %v4861 = vpop.permute.xlu0 %4860
      %4863 = vst.msk [vmem:[#allocation5 + $0x2c] sm:$0xf] %vm4026, %v4861
      %s4864 = scalar_lea.vmem [#allocation4], 48
      %v4865 = vld [vmem:[%s4864] ss:$64 sm:$0x1]
      %v4866 = vld [vmem:[%s4864] ss:$64 sm:$0x2]
      %v4867 = vor.u32 %v4865, %v4866
      %v4868 = vld [vmem:[%s4864] ss:$64 sm:$0x4]
      %v4869 = vor.u32 %v4867, %v4868
      %v4870 = vld [vmem:[%s4864] ss:$64 sm:$0x8]
      %v4871 = vor.u32 %v4869, %v4870
      %v4872 = vld [vmem:[%s4864] ss:$64 sm:$0x10]
      %v4873 = vor.u32 %v4871, %v4872
      %v4874 = vld [vmem:[%s4864] ss:$64 sm:$0x20]
      %v4875 = vor.u32 %v4873, %v4874
      %v4876 = vld [vmem:[%s4864] ss:$64 sm:$0x40]
      %v4877 = vor.u32 %v4875, %v4876
      %v4878 = vld [vmem:[%s4864] ss:$64 sm:$0x80]
      %v4879 = vor.u32 %v4877, %v4878
      %s4880 = scalar_lea.vmem [#allocation4], 49
      %v4881 = vld [vmem:[%s4880] ss:$64 sm:$0x1]
      %v4882 = vld [vmem:[%s4880] ss:$64 sm:$0x2]
      %v4883 = vor.u32 %v4881, %v4882
      %v4884 = vld [vmem:[%s4880] ss:$64 sm:$0x4]
      %v4885 = vor.u32 %v4883, %v4884
      %v4886 = vld [vmem:[%s4880] ss:$64 sm:$0x8]
      %v4887 = vor.u32 %v4885, %v4886
      %v4888 = vld [vmem:[%s4880] ss:$64 sm:$0x10]
      %v4889 = vor.u32 %v4887, %v4888
      %v4890 = vld [vmem:[%s4880] ss:$64 sm:$0x20]
      %v4891 = vor.u32 %v4889, %v4890
      %v4892 = vld [vmem:[%s4880] ss:$64 sm:$0x40]
      %v4893 = vor.u32 %v4891, %v4892
      %v4894 = vld [vmem:[%s4880] ss:$64 sm:$0x80]
      %v4895 = vor.u32 %v4893, %v4894
      %v4896 = vmax.f32 %v4879, %v4895
      %v4897 = vpack.c.bf16 %v4896, %v4896
      %4898 = vst.msk [vmem:[#allocation5 + $0x30] sm:$0xf] %vm3984, %v4897
      %s4899 = scalar_lea.vmem [#allocation4], 50
      %v4900 = vld [vmem:[%s4899] ss:$64 sm:$0x1]
      %v4901 = vld [vmem:[%s4899] ss:$64 sm:$0x2]
      %v4902 = vor.u32 %v4900, %v4901
      %v4903 = vld [vmem:[%s4899] ss:$64 sm:$0x4]
      %v4904 = vor.u32 %v4902, %v4903
      %v4905 = vld [vmem:[%s4899] ss:$64 sm:$0x8]
      %v4906 = vor.u32 %v4904, %v4905
      %v4907 = vld [vmem:[%s4899] ss:$64 sm:$0x10]
      %v4908 = vor.u32 %v4906, %v4907
      %v4909 = vld [vmem:[%s4899] ss:$64 sm:$0x20]
      %v4910 = vor.u32 %v4908, %v4909
      %v4911 = vld [vmem:[%s4899] ss:$64 sm:$0x40]
      %v4912 = vor.u32 %v4910, %v4911
      %v4913 = vld [vmem:[%s4899] ss:$64 sm:$0x80]
      %v4914 = vor.u32 %v4912, %v4913
      %s4915 = scalar_lea.vmem [#allocation4], 51
      %v4916 = vld [vmem:[%s4915] ss:$64 sm:$0x1]
      %v4917 = vld [vmem:[%s4915] ss:$64 sm:$0x2]
      %v4918 = vor.u32 %v4916, %v4917
      %v4919 = vld [vmem:[%s4915] ss:$64 sm:$0x4]
      %v4920 = vor.u32 %v4918, %v4919
      %v4921 = vld [vmem:[%s4915] ss:$64 sm:$0x8]
      %v4922 = vor.u32 %v4920, %v4921
      %v4923 = vld [vmem:[%s4915] ss:$64 sm:$0x10]
      %v4924 = vor.u32 %v4922, %v4923
      %v4925 = vld [vmem:[%s4915] ss:$64 sm:$0x20]
      %v4926 = vor.u32 %v4924, %v4925
      %v4927 = vld [vmem:[%s4915] ss:$64 sm:$0x40]
      %v4928 = vor.u32 %v4926, %v4927
      %v4929 = vld [vmem:[%s4915] ss:$64 sm:$0x80]
      %v4930 = vor.u32 %v4928, %v4929
      %v4931 = vmax.f32 %v4914, %v4930
      %v4932 = vpack.c.bf16 %v4931, %v4931
      %v4934 = vunpack.c.l.b16 %v4932
      %v4935 = vpack.c.b16 %v4934, %v4934
      %4936 = vrot.lane.b32.xlu0 %v4935, 64
      %v4937 = vpop.permute.xlu0 %4936
      %4939 = vst.msk [vmem:[#allocation5 + $0x30] sm:$0xf] %vm4026, %v4937
      %s4940 = scalar_lea.vmem [#allocation4], 52
      %v4941 = vld [vmem:[%s4940] ss:$64 sm:$0x1]
      %v4942 = vld [vmem:[%s4940] ss:$64 sm:$0x2]
      %v4943 = vor.u32 %v4941, %v4942
      %v4944 = vld [vmem:[%s4940] ss:$64 sm:$0x4]
      %v4945 = vor.u32 %v4943, %v4944
      %v4946 = vld [vmem:[%s4940] ss:$64 sm:$0x8]
      %v4947 = vor.u32 %v4945, %v4946
      %v4948 = vld [vmem:[%s4940] ss:$64 sm:$0x10]
      %v4949 = vor.u32 %v4947, %v4948
      %v4950 = vld [vmem:[%s4940] ss:$64 sm:$0x20]
      %v4951 = vor.u32 %v4949, %v4950
      %v4952 = vld [vmem:[%s4940] ss:$64 sm:$0x40]
      %v4953 = vor.u32 %v4951, %v4952
      %v4954 = vld [vmem:[%s4940] ss:$64 sm:$0x80]
      %v4955 = vor.u32 %v4953, %v4954
      %s4956 = scalar_lea.vmem [#allocation4], 53
      %v4957 = vld [vmem:[%s4956] ss:$64 sm:$0x1]
      %v4958 = vld [vmem:[%s4956] ss:$64 sm:$0x2]
      %v4959 = vor.u32 %v4957, %v4958
      %v4960 = vld [vmem:[%s4956] ss:$64 sm:$0x4]
      %v4961 = vor.u32 %v4959, %v4960
      %v4962 = vld [vmem:[%s4956] ss:$64 sm:$0x8]
      %v4963 = vor.u32 %v4961, %v4962
      %v4964 = vld [vmem:[%s4956] ss:$64 sm:$0x10]
      %v4965 = vor.u32 %v4963, %v4964
      %v4966 = vld [vmem:[%s4956] ss:$64 sm:$0x20]
      %v4967 = vor.u32 %v4965, %v4966
      %v4968 = vld [vmem:[%s4956] ss:$64 sm:$0x40]
      %v4969 = vor.u32 %v4967, %v4968
      %v4970 = vld [vmem:[%s4956] ss:$64 sm:$0x80]
      %v4971 = vor.u32 %v4969, %v4970
      %v4972 = vmax.f32 %v4955, %v4971
      %v4973 = vpack.c.bf16 %v4972, %v4972
      %4974 = vst.msk [vmem:[#allocation5 + $0x34] sm:$0xf] %vm3984, %v4973
      %s4975 = scalar_lea.vmem [#allocation4], 54
      %v4976 = vld [vmem:[%s4975] ss:$64 sm:$0x1]
      %v4977 = vld [vmem:[%s4975] ss:$64 sm:$0x2]
      %v4978 = vor.u32 %v4976, %v4977
      %v4979 = vld [vmem:[%s4975] ss:$64 sm:$0x4]
      %v4980 = vor.u32 %v4978, %v4979
      %v4981 = vld [vmem:[%s4975] ss:$64 sm:$0x8]
      %v4982 = vor.u32 %v4980, %v4981
      %v4983 = vld [vmem:[%s4975] ss:$64 sm:$0x10]
      %v4984 = vor.u32 %v4982, %v4983
      %v4985 = vld [vmem:[%s4975] ss:$64 sm:$0x20]
      %v4986 = vor.u32 %v4984, %v4985
      %v4987 = vld [vmem:[%s4975] ss:$64 sm:$0x40]
      %v4988 = vor.u32 %v4986, %v4987
      %v4989 = vld [vmem:[%s4975] ss:$64 sm:$0x80]
      %v4990 = vor.u32 %v4988, %v4989
      %s4991 = scalar_lea.vmem [#allocation4], 55
      %v4992 = vld [vmem:[%s4991] ss:$64 sm:$0x1]
      %v4993 = vld [vmem:[%s4991] ss:$64 sm:$0x2]
      %v4994 = vor.u32 %v4992, %v4993
      %v4995 = vld [vmem:[%s4991] ss:$64 sm:$0x4]
      %v4996 = vor.u32 %v4994, %v4995
      %v4997 = vld [vmem:[%s4991] ss:$64 sm:$0x8]
      %v4998 = vor.u32 %v4996, %v4997
      %v4999 = vld [vmem:[%s4991] ss:$64 sm:$0x10]
      %v5000 = vor.u32 %v4998, %v4999
      %v5001 = vld [vmem:[%s4991] ss:$64 sm:$0x20]
      %v5002 = vor.u32 %v5000, %v5001
      %v5003 = vld [vmem:[%s4991] ss:$64 sm:$0x40]
      %v5004 = vor.u32 %v5002, %v5003
      %v5005 = vld [vmem:[%s4991] ss:$64 sm:$0x80]
      %v5006 = vor.u32 %v5004, %v5005
      %v5007 = vmax.f32 %v4990, %v5006
      %v5008 = vpack.c.bf16 %v5007, %v5007
      %v5010 = vunpack.c.l.b16 %v5008
      %v5011 = vpack.c.b16 %v5010, %v5010
      %5012 = vrot.lane.b32.xlu0 %v5011, 64
      %v5013 = vpop.permute.xlu0 %5012
      %5015 = vst.msk [vmem:[#allocation5 + $0x34] sm:$0xf] %vm4026, %v5013
      %s5016 = scalar_lea.vmem [#allocation4], 56
      %v5017 = vld [vmem:[%s5016] ss:$64 sm:$0x1]
      %v5018 = vld [vmem:[%s5016] ss:$64 sm:$0x2]
      %v5019 = vor.u32 %v5017, %v5018
      %v5020 = vld [vmem:[%s5016] ss:$64 sm:$0x4]
      %v5021 = vor.u32 %v5019, %v5020
      %v5022 = vld [vmem:[%s5016] ss:$64 sm:$0x8]
      %v5023 = vor.u32 %v5021, %v5022
      %v5024 = vld [vmem:[%s5016] ss:$64 sm:$0x10]
      %v5025 = vor.u32 %v5023, %v5024
      %v5026 = vld [vmem:[%s5016] ss:$64 sm:$0x20]
      %v5027 = vor.u32 %v5025, %v5026
      %v5028 = vld [vmem:[%s5016] ss:$64 sm:$0x40]
      %v5029 = vor.u32 %v5027, %v5028
      %v5030 = vld [vmem:[%s5016] ss:$64 sm:$0x80]
      %v5031 = vor.u32 %v5029, %v5030
      %s5032 = scalar_lea.vmem [#allocation4], 57
      %v5033 = vld [vmem:[%s5032] ss:$64 sm:$0x1]
      %v5034 = vld [vmem:[%s5032] ss:$64 sm:$0x2]
      %v5035 = vor.u32 %v5033, %v5034
      %v5036 = vld [vmem:[%s5032] ss:$64 sm:$0x4]
      %v5037 = vor.u32 %v5035, %v5036
      %v5038 = vld [vmem:[%s5032] ss:$64 sm:$0x8]
      %v5039 = vor.u32 %v5037, %v5038
      %v5040 = vld [vmem:[%s5032] ss:$64 sm:$0x10]
      %v5041 = vor.u32 %v5039, %v5040
      %v5042 = vld [vmem:[%s5032] ss:$64 sm:$0x20]
      %v5043 = vor.u32 %v5041, %v5042
      %v5044 = vld [vmem:[%s5032] ss:$64 sm:$0x40]
      %v5045 = vor.u32 %v5043, %v5044
      %v5046 = vld [vmem:[%s5032] ss:$64 sm:$0x80]
      %v5047 = vor.u32 %v5045, %v5046
      %v5048 = vmax.f32 %v5031, %v5047
      %v5049 = vpack.c.bf16 %v5048, %v5048
      %5050 = vst.msk [vmem:[#allocation5 + $0x38] sm:$0xf] %vm3984, %v5049
      %s5051 = scalar_lea.vmem [#allocation4], 58
      %v5052 = vld [vmem:[%s5051] ss:$64 sm:$0x1]
      %v5053 = vld [vmem:[%s5051] ss:$64 sm:$0x2]
      %v5054 = vor.u32 %v5052, %v5053
      %v5055 = vld [vmem:[%s5051] ss:$64 sm:$0x4]
      %v5056 = vor.u32 %v5054, %v5055
      %v5057 = vld [vmem:[%s5051] ss:$64 sm:$0x8]
      %v5058 = vor.u32 %v5056, %v5057
      %v5059 = vld [vmem:[%s5051] ss:$64 sm:$0x10]
      %v5060 = vor.u32 %v5058, %v5059
      %v5061 = vld [vmem:[%s5051] ss:$64 sm:$0x20]
      %v5062 = vor.u32 %v5060, %v5061
      %v5063 = vld [vmem:[%s5051] ss:$64 sm:$0x40]
      %v5064 = vor.u32 %v5062, %v5063
      %v5065 = vld [vmem:[%s5051] ss:$64 sm:$0x80]
      %v5066 = vor.u32 %v5064, %v5065
      %s5067 = scalar_lea.vmem [#allocation4], 59
      %v5068 = vld [vmem:[%s5067] ss:$64 sm:$0x1]
      %v5069 = vld [vmem:[%s5067] ss:$64 sm:$0x2]
      %v5070 = vor.u32 %v5068, %v5069
      %v5071 = vld [vmem:[%s5067] ss:$64 sm:$0x4]
      %v5072 = vor.u32 %v5070, %v5071
      %v5073 = vld [vmem:[%s5067] ss:$64 sm:$0x8]
      %v5074 = vor.u32 %v5072, %v5073
      %v5075 = vld [vmem:[%s5067] ss:$64 sm:$0x10]
      %v5076 = vor.u32 %v5074, %v5075
      %v5077 = vld [vmem:[%s5067] ss:$64 sm:$0x20]
      %v5078 = vor.u32 %v5076, %v5077
      %v5079 = vld [vmem:[%s5067] ss:$64 sm:$0x40]
      %v5080 = vor.u32 %v5078, %v5079
      %v5081 = vld [vmem:[%s5067] ss:$64 sm:$0x80]
      %v5082 = vor.u32 %v5080, %v5081
      %v5083 = vmax.f32 %v5066, %v5082
      %v5084 = vpack.c.bf16 %v5083, %v5083
      %v5086 = vunpack.c.l.b16 %v5084
      %v5087 = vpack.c.b16 %v5086, %v5086
      %5088 = vrot.lane.b32.xlu0 %v5087, 64
      %v5089 = vpop.permute.xlu0 %5088
      %5091 = vst.msk [vmem:[#allocation5 + $0x38] sm:$0xf] %vm4026, %v5089
      %v5092 = vld [vmem:[#allocation5] sm:$0xff]
      %v5093 = vld [vmem:[#allocation5 + $0x8] sm:$0xff]
      %v5094 = vld [vmem:[#allocation5 + $0x10] sm:$0xff]
      %v5095 = vld [vmem:[#allocation5 + $0x18] sm:$0xff]
      %v5096 = vld [vmem:[#allocation5 + $0x20] sm:$0xff]
      %v5097 = vld [vmem:[#allocation5 + $0x28] sm:$0xff]
      %v5098 = vld [vmem:[#allocation5 + $0x30] sm:$0xff]
      %v5099 = vld [vmem:[#allocation5 + $0x38] sm:$0xf]
      %v5100 = vld [vmem:[%s5] sm:$0xf]
      %v5101 = vld [vmem:[%s5 + $0x4] sm:$0xf]
      %v5102 = vld [vmem:[%s5 + $0x8] sm:$0xf]
      %v5103 = vld [vmem:[%s5 + $0xc] sm:$0xf]
      %v5104 = vld [vmem:[%s5 + $0x10] sm:$0xf]
      %v5105 = vld [vmem:[%s5 + $0x14] sm:$0xf]
      %v5106 = vld [vmem:[%s5 + $0x18] sm:$0xf]
      %v5107 = vld [vmem:[%s5 + $0x1c] sm:$0xf]
      %v5108 = vld [vmem:[%s5 + $0x20] sm:$0xf]
      %v5109 = vld [vmem:[%s5 + $0x24] sm:$0xf]
      %v5110 = vld [vmem:[%s5 + $0x28] sm:$0xf]
      %v5111 = vld [vmem:[%s5 + $0x2c] sm:$0xf]
      %v5112 = vld [vmem:[%s5 + $0x30] sm:$0xf]
      %v5113 = vld [vmem:[%s5 + $0x34] sm:$0xf]
      %v5114 = vld [vmem:[%s5 + $0x38] sm:$0xf]
      %v5115 = vld [vmem:[%s5 + $0x3c] sm:$0xf]
      %v5116 = vld [vmem:[%s5 + $0x40] sm:$0xf]
      %v5117 = vld [vmem:[%s5 + $0x44] sm:$0xf]
      %v5118 = vld [vmem:[%s5 + $0x48] sm:$0xf]
      %v5119 = vld [vmem:[%s5 + $0x4c] sm:$0xf]
      %v5120 = vld [vmem:[%s5 + $0x50] sm:$0xf]
      %v5121 = vld [vmem:[%s5 + $0x54] sm:$0xf]
      %v5122 = vld [vmem:[%s5 + $0x58] sm:$0xf]
      %v5123 = vld [vmem:[%s5 + $0x5c] sm:$0xf]
      %v5124 = vld [vmem:[%s5 + $0x60] sm:$0xf]
      %v5125 = vld [vmem:[%s5 + $0x64] sm:$0xf]
      %v5126 = vld [vmem:[%s5 + $0x68] sm:$0xf]
      %v5127 = vld [vmem:[%s5 + $0x6c] sm:$0xf]
      %v5128 = vld [vmem:[%s5 + $0x70] sm:$0xf]
      %v5129 = vld [vmem:[%s5 + $0x74] sm:$0xf]
      %v5130 = vld [vmem:[%s5 + $0x78] sm:$0xf]
      %v5131 = vld [vmem:[%s5 + $0x7c] sm:$0xf]
      %v5132 = vld [vmem:[%s5 + $0x80] sm:$0xf]
      %v5133 = vld [vmem:[%s5 + $0x84] sm:$0xf]
      %v5134 = vld [vmem:[%s5 + $0x88] sm:$0xf]
      %v5135 = vld [vmem:[%s5 + $0x8c] sm:$0xf]
      %v5136 = vld [vmem:[%s5 + $0x90] sm:$0xf]
      %v5137 = vld [vmem:[%s5 + $0x94] sm:$0xf]
      %v5138 = vld [vmem:[%s5 + $0x98] sm:$0xf]
      %v5139 = vld [vmem:[%s5 + $0x9c] sm:$0xf]
      %v5140 = vld [vmem:[%s5 + $0xa0] sm:$0xf]
      %v5141 = vld [vmem:[%s5 + $0xa4] sm:$0xf]
      %v5142 = vld [vmem:[%s5 + $0xa8] sm:$0xf]
      %v5143 = vld [vmem:[%s5 + $0xac] sm:$0xf]
      %v5144 = vld [vmem:[%s5 + $0xb0] sm:$0xf]
      %v5145 = vld [vmem:[%s5 + $0xb4] sm:$0xf]
      %v5146 = vld [vmem:[%s5 + $0xb8] sm:$0xf]
      %v5147 = vld [vmem:[%s5 + $0xbc] sm:$0xf]
      %v5148 = vld [vmem:[%s5 + $0xc0] sm:$0xf]
      %v5149 = vld [vmem:[%s5 + $0xc4] sm:$0xf]
      %v5150 = vld [vmem:[%s5 + $0xc8] sm:$0xf]
      %v5151 = vld [vmem:[%s5 + $0xcc] sm:$0xf]
      %v5152 = vld [vmem:[%s5 + $0xd0] sm:$0xf]
      %v5153 = vld [vmem:[%s5 + $0xd4] sm:$0xf]
      %v5154 = vld [vmem:[%s5 + $0xd8] sm:$0xf]
      %v5155 = vld [vmem:[%s5 + $0xdc] sm:$0xf]
      %v5156 = vld [vmem:[%s5 + $0xe0] sm:$0xf]
      %v5157 = vld [vmem:[%s5 + $0xe4] sm:$0xf]
      %v5158 = vld [vmem:[%s5 + $0xe8] sm:$0xf]
      %v5159 = vld [vmem:[%s5 + $0xec] sm:$0xf]
      %v5160 = vld [vmem:[%s5 + $0xf0] sm:$0xf]
      %v5161 = vld [vmem:[%s5 + $0xf4] sm:$0xf]
      %v5162 = vld [vmem:[%s5 + $0xf8] sm:$0xf]
      %v5163 = vld [vmem:[%s5 + $0xfc] sm:$0xf]
      %v5164 = vld [vmem:[%s5 + $0x100] sm:$0xf]
      %v5165 = vld [vmem:[%s5 + $0x104] sm:$0xf]
      %v5166 = vld [vmem:[%s5 + $0x108] sm:$0xf]
      %v5167 = vld [vmem:[%s5 + $0x10c] sm:$0xf]
      %v5168 = vld [vmem:[%s5 + $0x110] sm:$0xf]
      %v5169 = vld [vmem:[%s5 + $0x114] sm:$0xf]
      %v5170 = vld [vmem:[%s5 + $0x118] sm:$0xf]
      %v5171 = vld [vmem:[%s5 + $0x11c] sm:$0xf]
      %v5172 = vld [vmem:[%s5 + $0x120] sm:$0xf]
      %v5173 = vld [vmem:[%s5 + $0x124] sm:$0xf]
      %v5174 = vld [vmem:[%s5 + $0x128] sm:$0xf]
      %v5175 = vld [vmem:[%s5 + $0x12c] sm:$0xf]
      %v5176 = vld [vmem:[%s5 + $0x130] sm:$0xf]
      %v5177 = vld [vmem:[%s5 + $0x134] sm:$0xf]
      %v5178 = vld [vmem:[%s5 + $0x138] sm:$0xf]
      %v5179 = vld [vmem:[%s5 + $0x13c] sm:$0xf]
      %v5180 = vld [vmem:[%s5 + $0x140] sm:$0xf]
      %v5181 = vld [vmem:[%s5 + $0x144] sm:$0xf]
      %v5182 = vld [vmem:[%s5 + $0x148] sm:$0xf]
      %v5183 = vld [vmem:[%s5 + $0x14c] sm:$0xf]
      %v5184 = vld [vmem:[%s5 + $0x150] sm:$0xf]
      %v5185 = vld [vmem:[%s5 + $0x154] sm:$0xf]
      %v5186 = vld [vmem:[%s5 + $0x158] sm:$0xf]
      %v5187 = vld [vmem:[%s5 + $0x15c] sm:$0xf]
      %v5188 = vld [vmem:[%s5 + $0x160] sm:$0xf]
      %v5189 = vld [vmem:[%s5 + $0x164] sm:$0xf]
      %v5190 = vld [vmem:[%s5 + $0x168] sm:$0xf]
      %v5191 = vld [vmem:[%s5 + $0x16c] sm:$0xf]
      %v5192 = vld [vmem:[%s5 + $0x170] sm:$0xf]
      %v5193 = vld [vmem:[%s5 + $0x174] sm:$0xf]
      %v5194 = vld [vmem:[%s5 + $0x178] sm:$0xf]
      %v5195 = vld [vmem:[%s5 + $0x17c] sm:$0xf]
      %v5196 = vld [vmem:[%s5 + $0x180] sm:$0xf]
      %v5197 = vld [vmem:[%s5 + $0x184] sm:$0xf]
      %v5198 = vld [vmem:[%s5 + $0x188] sm:$0xf]
      %v5199 = vld [vmem:[%s5 + $0x18c] sm:$0xf]
      %v5200 = vld [vmem:[%s5 + $0x190] sm:$0xf]
      %v5201 = vld [vmem:[%s5 + $0x194] sm:$0xf]
      %v5202 = vld [vmem:[%s5 + $0x198] sm:$0xf]
      %v5203 = vld [vmem:[%s5 + $0x19c] sm:$0xf]
      %v5204 = vld [vmem:[%s5 + $0x1a0] sm:$0xf]
      %v5205 = vld [vmem:[%s5 + $0x1a4] sm:$0xf]
      %v5206 = vld [vmem:[%s5 + $0x1a8] sm:$0xf]
      %v5207 = vld [vmem:[%s5 + $0x1ac] sm:$0xf]
      %v5208 = vld [vmem:[%s5 + $0x1b0] sm:$0xf]
      %v5209 = vld [vmem:[%s5 + $0x1b4] sm:$0xf]
      %v5210 = vld [vmem:[%s5 + $0x1b8] sm:$0xf]
      %v5211 = vld [vmem:[%s5 + $0x1bc] sm:$0xf]
      %v5212 = vld [vmem:[%s5 + $0x1c0] sm:$0xf]
      %v5213 = vld [vmem:[%s5 + $0x1c4] sm:$0xf]
      %v5214 = vld [vmem:[%s5 + $0x1c8] sm:$0xf]
      %v5215 = vld [vmem:[%s5 + $0x1cc] sm:$0xf]
      %v5216 = vld [vmem:[%s5 + $0x1d0] sm:$0xf]
      %v5217 = vld [vmem:[%s5 + $0x1d4] sm:$0xf]
      %v5218 = vld [vmem:[%s5 + $0x1d8] sm:$0xf]
      %v5219 = vld [vmem:[%s5 + $0x1dc] sm:$0xf]
      %v5220 = vld [vmem:[%s5 + $0x1e0] sm:$0xf]
      %v5221 = vld [vmem:[%s5 + $0x1e4] sm:$0xf]
      %v5222 = vld [vmem:[%s5 + $0x1e8] sm:$0xf]
      %v5223 = vld [vmem:[%s5 + $0x1ec] sm:$0xf]
      %v5224 = vld [vmem:[%s5 + $0x1f0] sm:$0xf]
      %v5225 = vld [vmem:[%s5 + $0x1f4] sm:$0xf]
      %v5226 = vld [vmem:[%s5 + $0x1f8] sm:$0xf]
      %v5227 = vld [vmem:[%s5 + $0x1fc] sm:$0xf]
      %v5228 = vld [vmem:[%s5 + $0x200] sm:$0xf]
      %v5229 = vld [vmem:[%s5 + $0x204] sm:$0xf]
      %v5230 = vld [vmem:[%s5 + $0x208] sm:$0xf]
      %v5231 = vld [vmem:[%s5 + $0x20c] sm:$0xf]
      %v5232 = vld [vmem:[%s5 + $0x210] sm:$0xf]
      %v5233 = vld [vmem:[%s5 + $0x214] sm:$0xf]
      %v5234 = vld [vmem:[%s5 + $0x218] sm:$0xf]
      %v5235 = vld [vmem:[%s5 + $0x21c] sm:$0xf]
      %v5236 = vld [vmem:[%s5 + $0x220] sm:$0xf]
      %v5237 = vld [vmem:[%s5 + $0x224] sm:$0xf]
      %v5238 = vld [vmem:[%s5 + $0x228] sm:$0xf]
      %v5239 = vld [vmem:[%s5 + $0x22c] sm:$0xf]
      %v5240 = vld [vmem:[%s5 + $0x230] sm:$0xf]
      %v5241 = vld [vmem:[%s5 + $0x234] sm:$0xf]
      %v5242 = vld [vmem:[%s5 + $0x238] sm:$0xf]
      %v5243 = vld [vmem:[%s5 + $0x23c] sm:$0xf]
      %v5244 = vld [vmem:[%s5 + $0x240] sm:$0xf]
      %v5245 = vld [vmem:[%s5 + $0x244] sm:$0xf]
      %v5246 = vld [vmem:[%s5 + $0x248] sm:$0xf]
      %v5247 = vld [vmem:[%s5 + $0x24c] sm:$0xf]
      %v5248 = vld [vmem:[%s5 + $0x250] sm:$0xf]
      %v5249 = vld [vmem:[%s5 + $0x254] sm:$0xf]
      %v5250 = vld [vmem:[%s5 + $0x258] sm:$0xf]
      %v5251 = vld [vmem:[%s5 + $0x25c] sm:$0xf]
      %v5252 = vld [vmem:[%s5 + $0x260] sm:$0xf]
      %v5253 = vld [vmem:[%s5 + $0x264] sm:$0xf]
      %v5254 = vld [vmem:[%s5 + $0x268] sm:$0xf]
      %v5255 = vld [vmem:[%s5 + $0x26c] sm:$0xf]
      %v5256 = vld [vmem:[%s5 + $0x270] sm:$0xf]
      %v5257 = vld [vmem:[%s5 + $0x274] sm:$0xf]
      %v5258 = vld [vmem:[%s5 + $0x278] sm:$0xf]
      %v5259 = vld [vmem:[%s5 + $0x27c] sm:$0xf]
      %v5260 = vld [vmem:[%s5 + $0x280] sm:$0xf]
      %v5261 = vld [vmem:[%s5 + $0x284] sm:$0xf]
      %v5262 = vld [vmem:[%s5 + $0x288] sm:$0xf]
      %v5263 = vld [vmem:[%s5 + $0x28c] sm:$0xf]
      %v5264 = vld [vmem:[%s5 + $0x290] sm:$0xf]
      %v5265 = vld [vmem:[%s5 + $0x294] sm:$0xf]
      %v5266 = vld [vmem:[%s5 + $0x298] sm:$0xf]
      %v5267 = vld [vmem:[%s5 + $0x29c] sm:$0xf]
      %v5268 = vld [vmem:[%s5 + $0x2a0] sm:$0xf]
      %v5269 = vld [vmem:[%s5 + $0x2a4] sm:$0xf]
      %v5270 = vld [vmem:[%s5 + $0x2a8] sm:$0xf]
      %v5271 = vld [vmem:[%s5 + $0x2ac] sm:$0xf]
      %v5272 = vld [vmem:[%s5 + $0x2b0] sm:$0xf]
      %v5273 = vld [vmem:[%s5 + $0x2b4] sm:$0xf]
      %v5274 = vld [vmem:[%s5 + $0x2b8] sm:$0xf]
      %v5275 = vld [vmem:[%s5 + $0x2bc] sm:$0xf]
      %v5276 = vld [vmem:[%s5 + $0x2c0] sm:$0xf]
      %v5277 = vld [vmem:[%s5 + $0x2c4] sm:$0xf]
      %v5278 = vld [vmem:[%s5 + $0x2c8] sm:$0xf]
      %v5279 = vld [vmem:[%s5 + $0x2cc] sm:$0xf]
      %v5280 = vld [vmem:[%s5 + $0x2d0] sm:$0xf]
      %v5281 = vld [vmem:[%s5 + $0x2d4] sm:$0xf]
      %v5282 = vld [vmem:[%s5 + $0x2d8] sm:$0xf]
      %v5283 = vld [vmem:[%s5 + $0x2dc] sm:$0xf]
      %v5284 = vld [vmem:[%s5 + $0x2e0] sm:$0xf]
      %v5285 = vld [vmem:[%s5 + $0x2e4] sm:$0xf]
      %v5286 = vld [vmem:[%s5 + $0x2e8] sm:$0xf]
      %v5287 = vld [vmem:[%s5 + $0x2ec] sm:$0xf]
      %v5288 = vld [vmem:[%s5 + $0x2f0] sm:$0xf]
      %v5289 = vld [vmem:[%s5 + $0x2f4] sm:$0xf]
      %v5290 = vld [vmem:[%s5 + $0x2f8] sm:$0xf]
      %v5291 = vld [vmem:[%s5 + $0x2fc] sm:$0xf]
      %v5292 = vld [vmem:[%s5 + $0x300] sm:$0xf]
      %v5293 = vld [vmem:[%s5 + $0x304] sm:$0xf]
      %v5294 = vld [vmem:[%s5 + $0x308] sm:$0xf]
      %v5295 = vld [vmem:[%s5 + $0x30c] sm:$0xf]
      %v5296 = vld [vmem:[%s5 + $0x310] sm:$0xf]
      %v5297 = vld [vmem:[%s5 + $0x314] sm:$0xf]
      %v5298 = vld [vmem:[%s5 + $0x318] sm:$0xf]
      %v5299 = vld [vmem:[%s5 + $0x31c] sm:$0xf]
      %v5300 = vld [vmem:[%s5 + $0x320] sm:$0xf]
      %v5301 = vld [vmem:[%s5 + $0x324] sm:$0xf]
      %v5302 = vld [vmem:[%s5 + $0x328] sm:$0xf]
      %v5303 = vld [vmem:[%s5 + $0x32c] sm:$0xf]
      %v5304 = vld [vmem:[%s5 + $0x330] sm:$0xf]
      %v5305 = vld [vmem:[%s5 + $0x334] sm:$0xf]
      %v5306 = vld [vmem:[%s5 + $0x338] sm:$0xf]
      %v5307 = vld [vmem:[%s5 + $0x33c] sm:$0xf]
      %v5308 = vld [vmem:[%s5 + $0x340] sm:$0xf]
      %v5309 = vld [vmem:[%s5 + $0x344] sm:$0xf]
      %v5310 = vld [vmem:[%s5 + $0x348] sm:$0xf]
      %v5311 = vld [vmem:[%s5 + $0x34c] sm:$0xf]
      %v5312 = vld [vmem:[%s5 + $0x350] sm:$0xf]
      %v5313 = vld [vmem:[%s5 + $0x354] sm:$0xf]
      %v5314 = vld [vmem:[%s5 + $0x358] sm:$0xf]
      %v5315 = vld [vmem:[%s5 + $0x35c] sm:$0xf]
      %v5316 = vld [vmem:[%s5 + $0x360] sm:$0xf]
      %v5317 = vld [vmem:[%s5 + $0x364] sm:$0xf]
      %v5318 = vld [vmem:[%s5 + $0x368] sm:$0xf]
      %v5319 = vld [vmem:[%s5 + $0x36c] sm:$0xf]
      %v5320 = vld [vmem:[%s5 + $0x370] sm:$0xf]
      %v5321 = vld [vmem:[%s5 + $0x374] sm:$0xf]
      %v5322 = vld [vmem:[%s5 + $0x378] sm:$0xf]
      %v5323 = vld [vmem:[%s5 + $0x37c] sm:$0xf]
      %v5324 = vld [vmem:[%s5 + $0x380] sm:$0xf]
      %v5325 = vld [vmem:[%s5 + $0x384] sm:$0xf]
      %v5326 = vld [vmem:[%s5 + $0x388] sm:$0xf]
      %v5327 = vld [vmem:[%s5 + $0x38c] sm:$0xf]
      %v5328 = vld [vmem:[%s5 + $0x390] sm:$0xf]
      %v5329 = vld [vmem:[%s5 + $0x394] sm:$0xf]
      %v5330 = vld [vmem:[%s5 + $0x398] sm:$0xf]
      %v5331 = vld [vmem:[%s5 + $0x39c] sm:$0xf]
      %v5332 = vld [vmem:[%s5 + $0x3a0] sm:$0xf]
      %v5333 = vld [vmem:[%s5 + $0x3a4] sm:$0xf]
      %v5334 = vld [vmem:[%s5 + $0x3a8] sm:$0xf]
      %v5335 = vld [vmem:[%s5 + $0x3ac] sm:$0xf]
      %v5336 = vld [vmem:[%s5 + $0x3b0] sm:$0xf]
      %v5337 = vld [vmem:[%s5 + $0x3b4] sm:$0xf]
      %v5338 = vld [vmem:[%s5 + $0x3b8] sm:$0xf]
      %v5339 = vld [vmem:[%s5 + $0x3bc] sm:$0xf]
      %v5340 = vld [vmem:[%s6] sm:$0x1]
      %v5342 = vlaneseq
      %v5343 = vshrl.u32 %v5342, 7
      %v5344 = vsub.s32 0, %v5343
      %v5345 = vrot.slane %v5340, %v5344
      %v5355 = vunpack.c.l.b16 %v5092
      %v5356 = vunpack.c.h.b16 %v5092
      %v5357 = vunpack.c.l.b16 %v5093
      %v5358 = vunpack.c.h.b16 %v5093
      %v5359 = vunpack.c.l.b16 %v5094
      %v5360 = vunpack.c.h.b16 %v5094
      %v5361 = vunpack.c.l.b16 %v5095
      %v5362 = vunpack.c.h.b16 %v5095
      %v5363 = vunpack.c.l.b16 %v5096
      %v5364 = vunpack.c.h.b16 %v5096
      %v5365 = vunpack.c.l.b16 %v5097
      %v5366 = vunpack.c.h.b16 %v5097
      %v5367 = vunpack.c.l.b16 %v5098
      %v5368 = vunpack.c.h.b16 %v5098
      %v5369 = vunpack.c.l.b16 %v5099
      %v5370 = vpack.c.b16 %v5355, %v5355
      %v5371 = vpack.c.b16 %v5356, %v5356
      %v5372 = vpack.c.b16 %v5357, %v5357
      %v5373 = vpack.c.b16 %v5358, %v5358
      %v5374 = vpack.c.b16 %v5359, %v5359
      %v5375 = vpack.c.b16 %v5360, %v5360
      %v5376 = vpack.c.b16 %v5361, %v5361
      %v5377 = vpack.c.b16 %v5362, %v5362
      %v5378 = vpack.c.b16 %v5363, %v5363
      %v5379 = vpack.c.b16 %v5364, %v5364
      %v5380 = vpack.c.b16 %v5365, %v5365
      %v5381 = vpack.c.b16 %v5366, %v5366
      %v5382 = vpack.c.b16 %v5367, %v5367
      %v5383 = vpack.c.b16 %v5368, %v5368
      %v5384 = vpack.c.b16 %v5369, %v5369
      %v5640 = vunpack.c.l.b16 %v5100
      %v5641 = vunpack.c.l.b16 %v5101
      %v5642 = vunpack.c.l.b16 %v5102
      %v5643 = vunpack.c.l.b16 %v5103
      %v5644 = vunpack.c.l.b16 %v5104
      %v5645 = vunpack.c.l.b16 %v5105
      %v5646 = vunpack.c.l.b16 %v5106
      %v5647 = vunpack.c.l.b16 %v5107
      %v5648 = vunpack.c.l.b16 %v5108
      %v5649 = vunpack.c.l.b16 %v5109
      %v5650 = vunpack.c.l.b16 %v5110
      %v5651 = vunpack.c.l.b16 %v5111
      %v5652 = vunpack.c.l.b16 %v5112
      %v5653 = vunpack.c.l.b16 %v5113
      %v5654 = vunpack.c.l.b16 %v5114
      %v5655 = vunpack.c.l.b16 %v5115
      %v5656 = vunpack.c.l.b16 %v5116
      %v5657 = vunpack.c.l.b16 %v5117
      %v5658 = vunpack.c.l.b16 %v5118
      %v5659 = vunpack.c.l.b16 %v5119
      %v5660 = vunpack.c.l.b16 %v5120
      %v5661 = vunpack.c.l.b16 %v5121
      %v5662 = vunpack.c.l.b16 %v5122
      %v5663 = vunpack.c.l.b16 %v5123
      %v5664 = vunpack.c.l.b16 %v5124
      %v5665 = vunpack.c.l.b16 %v5125
      %v5666 = vunpack.c.l.b16 %v5126
      %v5667 = vunpack.c.l.b16 %v5127
      %v5668 = vunpack.c.l.b16 %v5128
      %v5669 = vunpack.c.l.b16 %v5129
      %v5670 = vunpack.c.l.b16 %v5130
      %v5671 = vunpack.c.l.b16 %v5131
      %v5672 = vunpack.c.l.b16 %v5132
      %v5673 = vunpack.c.l.b16 %v5133
      %v5674 = vunpack.c.l.b16 %v5134
      %v5675 = vunpack.c.l.b16 %v5135
      %v5676 = vunpack.c.l.b16 %v5136
      %v5677 = vunpack.c.l.b16 %v5137
      %v5678 = vunpack.c.l.b16 %v5138
      %v5679 = vunpack.c.l.b16 %v5139
      %v5680 = vunpack.c.l.b16 %v5140
      %v5681 = vunpack.c.l.b16 %v5141
      %v5682 = vunpack.c.l.b16 %v5142
      %v5683 = vunpack.c.l.b16 %v5143
      %v5684 = vunpack.c.l.b16 %v5144
      %v5685 = vunpack.c.l.b16 %v5145
      %v5686 = vunpack.c.l.b16 %v5146
      %v5687 = vunpack.c.l.b16 %v5147
      %v5688 = vunpack.c.l.b16 %v5148
      %v5689 = vunpack.c.l.b16 %v5149
      %v5690 = vunpack.c.l.b16 %v5150
      %v5691 = vunpack.c.l.b16 %v5151
      %v5692 = vunpack.c.l.b16 %v5152
      %v5693 = vunpack.c.l.b16 %v5153
      %v5694 = vunpack.c.l.b16 %v5154
      %v5695 = vunpack.c.l.b16 %v5155
      %v5696 = vunpack.c.l.b16 %v5156
      %v5697 = vunpack.c.l.b16 %v5157
      %v5698 = vunpack.c.l.b16 %v5158
      %v5699 = vunpack.c.l.b16 %v5159
      %v5700 = vunpack.c.l.b16 %v5160
      %v5701 = vunpack.c.l.b16 %v5161
      %v5702 = vunpack.c.l.b16 %v5162
      %v5703 = vunpack.c.l.b16 %v5163
      %v5704 = vunpack.c.l.b16 %v5164
      %v5705 = vunpack.c.l.b16 %v5165
      %v5706 = vunpack.c.l.b16 %v5166
      %v5707 = vunpack.c.l.b16 %v5167
      %v5708 = vunpack.c.l.b16 %v5168
      %v5709 = vunpack.c.l.b16 %v5169
      %v5710 = vunpack.c.l.b16 %v5170
      %v5711 = vunpack.c.l.b16 %v5171
      %v5712 = vunpack.c.l.b16 %v5172
      %v5713 = vunpack.c.l.b16 %v5173
      %v5714 = vunpack.c.l.b16 %v5174
      %v5715 = vunpack.c.l.b16 %v5175
      %v5716 = vunpack.c.l.b16 %v5176
      %v5717 = vunpack.c.l.b16 %v5177
      %v5718 = vunpack.c.l.b16 %v5178
      %v5719 = vunpack.c.l.b16 %v5179
      %v5720 = vunpack.c.l.b16 %v5180
      %v5721 = vunpack.c.l.b16 %v5181
      %v5722 = vunpack.c.l.b16 %v5182
      %v5723 = vunpack.c.l.b16 %v5183
      %v5724 = vunpack.c.l.b16 %v5184
      %v5725 = vunpack.c.l.b16 %v5185
      %v5726 = vunpack.c.l.b16 %v5186
      %v5727 = vunpack.c.l.b16 %v5187
      %v5728 = vunpack.c.l.b16 %v5188
      %v5729 = vunpack.c.l.b16 %v5189
      %v5730 = vunpack.c.l.b16 %v5190
      %v5731 = vunpack.c.l.b16 %v5191
      %v5732 = vunpack.c.l.b16 %v5192
      %v5733 = vunpack.c.l.b16 %v5193
      %v5734 = vunpack.c.l.b16 %v5194
      %v5735 = vunpack.c.l.b16 %v5195
      %v5736 = vunpack.c.l.b16 %v5196
      %v5737 = vunpack.c.l.b16 %v5197
      %v5738 = vunpack.c.l.b16 %v5198
      %v5739 = vunpack.c.l.b16 %v5199
      %v5740 = vunpack.c.l.b16 %v5200
      %v5741 = vunpack.c.l.b16 %v5201
      %v5742 = vunpack.c.l.b16 %v5202
      %v5743 = vunpack.c.l.b16 %v5203
      %v5744 = vunpack.c.l.b16 %v5204
      %v5745 = vunpack.c.l.b16 %v5205
      %v5746 = vunpack.c.l.b16 %v5206
      %v5747 = vunpack.c.l.b16 %v5207
      %v5748 = vunpack.c.l.b16 %v5208
      %v5749 = vunpack.c.l.b16 %v5209
      %v5750 = vunpack.c.l.b16 %v5210
      %v5751 = vunpack.c.l.b16 %v5211
      %v5752 = vunpack.c.l.b16 %v5212
      %v5753 = vunpack.c.l.b16 %v5213
      %v5754 = vunpack.c.l.b16 %v5214
      %v5755 = vunpack.c.l.b16 %v5215
      %v5756 = vunpack.c.l.b16 %v5216
      %v5757 = vunpack.c.l.b16 %v5217
      %v5758 = vunpack.c.l.b16 %v5218
      %v5759 = vunpack.c.l.b16 %v5219
      %v5760 = vunpack.c.l.b16 %v5220
      %v5761 = vunpack.c.l.b16 %v5221
      %v5762 = vunpack.c.l.b16 %v5222
      %v5763 = vunpack.c.l.b16 %v5223
      %v5764 = vunpack.c.l.b16 %v5224
      %v5765 = vunpack.c.l.b16 %v5225
      %v5766 = vunpack.c.l.b16 %v5226
      %v5767 = vunpack.c.l.b16 %v5227
      %v5768 = vunpack.c.l.b16 %v5228
      %v5769 = vunpack.c.l.b16 %v5229
      %v5770 = vunpack.c.l.b16 %v5230
      %v5771 = vunpack.c.l.b16 %v5231
      %v5772 = vunpack.c.l.b16 %v5232
      %v5773 = vunpack.c.l.b16 %v5233
      %v5774 = vunpack.c.l.b16 %v5234
      %v5775 = vunpack.c.l.b16 %v5235
      %v5776 = vunpack.c.l.b16 %v5236
      %v5777 = vunpack.c.l.b16 %v5237
      %v5778 = vunpack.c.l.b16 %v5238
      %v5779 = vunpack.c.l.b16 %v5239
      %v5780 = vunpack.c.l.b16 %v5240
      %v5781 = vunpack.c.l.b16 %v5241
      %v5782 = vunpack.c.l.b16 %v5242
      %v5783 = vunpack.c.l.b16 %v5243
      %v5784 = vunpack.c.l.b16 %v5244
      %v5785 = vunpack.c.l.b16 %v5245
      %v5786 = vunpack.c.l.b16 %v5246
      %v5787 = vunpack.c.l.b16 %v5247
      %v5788 = vunpack.c.l.b16 %v5248
      %v5789 = vunpack.c.l.b16 %v5249
      %v5790 = vunpack.c.l.b16 %v5250
      %v5791 = vunpack.c.l.b16 %v5251
      %v5792 = vunpack.c.l.b16 %v5252
      %v5793 = vunpack.c.l.b16 %v5253
      %v5794 = vunpack.c.l.b16 %v5254
      %v5795 = vunpack.c.l.b16 %v5255
      %v5796 = vunpack.c.l.b16 %v5256
      %v5797 = vunpack.c.l.b16 %v5257
      %v5798 = vunpack.c.l.b16 %v5258
      %v5799 = vunpack.c.l.b16 %v5259
      %v5800 = vunpack.c.l.b16 %v5260
      %v5801 = vunpack.c.l.b16 %v5261
      %v5802 = vunpack.c.l.b16 %v5262
      %v5803 = vunpack.c.l.b16 %v5263
      %v5804 = vunpack.c.l.b16 %v5264
      %v5805 = vunpack.c.l.b16 %v5265
      %v5806 = vunpack.c.l.b16 %v5266
      %v5807 = vunpack.c.l.b16 %v5267
      %v5808 = vunpack.c.l.b16 %v5268
      %v5809 = vunpack.c.l.b16 %v5269
      %v5810 = vunpack.c.l.b16 %v5270
      %v5811 = vunpack.c.l.b16 %v5271
      %v5812 = vunpack.c.l.b16 %v5272
      %v5813 = vunpack.c.l.b16 %v5273
      %v5814 = vunpack.c.l.b16 %v5274
      %v5815 = vunpack.c.l.b16 %v5275
      %v5816 = vunpack.c.l.b16 %v5276
      %v5817 = vunpack.c.l.b16 %v5277
      %v5818 = vunpack.c.l.b16 %v5278
      %v5819 = vunpack.c.l.b16 %v5279
      %v5820 = vunpack.c.l.b16 %v5280
      %v5821 = vunpack.c.l.b16 %v5281
      %v5822 = vunpack.c.l.b16 %v5282
      %v5823 = vunpack.c.l.b16 %v5283
      %v5824 = vunpack.c.l.b16 %v5284
      %v5825 = vunpack.c.l.b16 %v5285
      %v5826 = vunpack.c.l.b16 %v5286
      %v5827 = vunpack.c.l.b16 %v5287
      %v5828 = vunpack.c.l.b16 %v5288
      %v5829 = vunpack.c.l.b16 %v5289
      %v5830 = vunpack.c.l.b16 %v5290
      %v5831 = vunpack.c.l.b16 %v5291
      %v5832 = vunpack.c.l.b16 %v5292
      %v5833 = vunpack.c.l.b16 %v5293
      %v5834 = vunpack.c.l.b16 %v5294
      %v5835 = vunpack.c.l.b16 %v5295
      %v5836 = vunpack.c.l.b16 %v5296
      %v5837 = vunpack.c.l.b16 %v5297
      %v5838 = vunpack.c.l.b16 %v5298
      %v5839 = vunpack.c.l.b16 %v5299
      %v5840 = vunpack.c.l.b16 %v5300
      %v5841 = vunpack.c.l.b16 %v5301
      %v5842 = vunpack.c.l.b16 %v5302
      %v5843 = vunpack.c.l.b16 %v5303
      %v5844 = vunpack.c.l.b16 %v5304
      %v5845 = vunpack.c.l.b16 %v5305
      %v5846 = vunpack.c.l.b16 %v5306
      %v5847 = vunpack.c.l.b16 %v5307
      %v5848 = vunpack.c.l.b16 %v5308
      %v5849 = vunpack.c.l.b16 %v5309
      %v5850 = vunpack.c.l.b16 %v5310
      %v5851 = vunpack.c.l.b16 %v5311
      %v5852 = vunpack.c.l.b16 %v5312
      %v5853 = vunpack.c.l.b16 %v5313
      %v5854 = vunpack.c.l.b16 %v5314
      %v5855 = vunpack.c.l.b16 %v5315
      %v5856 = vunpack.c.l.b16 %v5316
      %v5857 = vunpack.c.l.b16 %v5317
      %v5858 = vunpack.c.l.b16 %v5318
      %v5859 = vunpack.c.l.b16 %v5319
      %v5860 = vunpack.c.l.b16 %v5320
      %v5861 = vunpack.c.l.b16 %v5321
      %v5862 = vunpack.c.l.b16 %v5322
      %v5863 = vunpack.c.l.b16 %v5323
      %v5864 = vunpack.c.l.b16 %v5324
      %v5865 = vunpack.c.l.b16 %v5325
      %v5866 = vunpack.c.l.b16 %v5326
      %v5867 = vunpack.c.l.b16 %v5327
      %v5868 = vunpack.c.l.b16 %v5328
      %v5869 = vunpack.c.l.b16 %v5329
      %v5870 = vunpack.c.l.b16 %v5330
      %v5871 = vunpack.c.l.b16 %v5331
      %v5872 = vunpack.c.l.b16 %v5332
      %v5873 = vunpack.c.l.b16 %v5333
      %v5874 = vunpack.c.l.b16 %v5334
      %v5875 = vunpack.c.l.b16 %v5335
      %v5876 = vunpack.c.l.b16 %v5336
      %v5877 = vunpack.c.l.b16 %v5337
      %v5878 = vunpack.c.l.b16 %v5338
      %v5879 = vunpack.c.l.b16 %v5339
      %v5880 = vpack.c.b16 %v5641, %v5640
      %v5881 = vpack.c.b16 %v5643, %v5642
      %v5882 = vpack.c.b16 %v5645, %v5644
      %v5883 = vpack.c.b16 %v5647, %v5646
      %v5884 = vpack.c.b16 %v5649, %v5648
      %v5885 = vpack.c.b16 %v5651, %v5650
      %v5886 = vpack.c.b16 %v5653, %v5652
      %v5887 = vpack.c.b16 %v5655, %v5654
      %v5888 = vpack.c.b16 %v5657, %v5656
      %v5889 = vpack.c.b16 %v5659, %v5658
      %v5890 = vpack.c.b16 %v5661, %v5660
      %v5891 = vpack.c.b16 %v5663, %v5662
      %v5892 = vpack.c.b16 %v5665, %v5664
      %v5893 = vpack.c.b16 %v5667, %v5666
      %v5894 = vpack.c.b16 %v5669, %v5668
      %v5895 = vpack.c.b16 %v5671, %v5670
      %v5896 = vpack.c.b16 %v5673, %v5672
      %v5897 = vpack.c.b16 %v5675, %v5674
      %v5898 = vpack.c.b16 %v5677, %v5676
      %v5899 = vpack.c.b16 %v5679, %v5678
      %v5900 = vpack.c.b16 %v5681, %v5680
      %v5901 = vpack.c.b16 %v5683, %v5682
      %v5902 = vpack.c.b16 %v5685, %v5684
      %v5903 = vpack.c.b16 %v5687, %v5686
      %v5904 = vpack.c.b16 %v5689, %v5688
      %v5905 = vpack.c.b16 %v5691, %v5690
      %v5906 = vpack.c.b16 %v5693, %v5692
      %v5907 = vpack.c.b16 %v5695, %v5694
      %v5908 = vpack.c.b16 %v5697, %v5696
      %v5909 = vpack.c.b16 %v5699, %v5698
      %v5910 = vpack.c.b16 %v5701, %v5700
      %v5911 = vpack.c.b16 %v5703, %v5702
      %v5912 = vpack.c.b16 %v5705, %v5704
      %v5913 = vpack.c.b16 %v5707, %v5706
      %v5914 = vpack.c.b16 %v5709, %v5708
      %v5915 = vpack.c.b16 %v5711, %v5710
      %v5916 = vpack.c.b16 %v5713, %v5712
      %v5917 = vpack.c.b16 %v5715, %v5714
      %v5918 = vpack.c.b16 %v5717, %v5716
      %v5919 = vpack.c.b16 %v5719, %v5718
      %v5920 = vpack.c.b16 %v5721, %v5720
      %v5921 = vpack.c.b16 %v5723, %v5722
      %v5922 = vpack.c.b16 %v5725, %v5724
      %v5923 = vpack.c.b16 %v5727, %v5726
      %v5924 = vpack.c.b16 %v5729, %v5728
      %v5925 = vpack.c.b16 %v5731, %v5730
      %v5926 = vpack.c.b16 %v5733, %v5732
      %v5927 = vpack.c.b16 %v5735, %v5734
      %v5928 = vpack.c.b16 %v5737, %v5736
      %v5929 = vpack.c.b16 %v5739, %v5738
      %v5930 = vpack.c.b16 %v5741, %v5740
      %v5931 = vpack.c.b16 %v5743, %v5742
      %v5932 = vpack.c.b16 %v5745, %v5744
      %v5933 = vpack.c.b16 %v5747, %v5746
      %v5934 = vpack.c.b16 %v5749, %v5748
      %v5935 = vpack.c.b16 %v5751, %v5750
      %v5936 = vpack.c.b16 %v5753, %v5752
      %v5937 = vpack.c.b16 %v5755, %v5754
      %v5938 = vpack.c.b16 %v5757, %v5756
      %v5939 = vpack.c.b16 %v5759, %v5758
      %v5940 = vpack.c.b16 %v5761, %v5760
      %v5941 = vpack.c.b16 %v5763, %v5762
      %v5942 = vpack.c.b16 %v5765, %v5764
      %v5943 = vpack.c.b16 %v5767, %v5766
      %v5944 = vpack.c.b16 %v5769, %v5768
      %v5945 = vpack.c.b16 %v5771, %v5770
      %v5946 = vpack.c.b16 %v5773, %v5772
      %v5947 = vpack.c.b16 %v5775, %v5774
      %v5948 = vpack.c.b16 %v5777, %v5776
      %v5949 = vpack.c.b16 %v5779, %v5778
      %v5950 = vpack.c.b16 %v5781, %v5780
      %v5951 = vpack.c.b16 %v5783, %v5782
      %v5952 = vpack.c.b16 %v5785, %v5784
      %v5953 = vpack.c.b16 %v5787, %v5786
      %v5954 = vpack.c.b16 %v5789, %v5788
      %v5955 = vpack.c.b16 %v5791, %v5790
      %v5956 = vpack.c.b16 %v5793, %v5792
      %v5957 = vpack.c.b16 %v5795, %v5794
      %v5958 = vpack.c.b16 %v5797, %v5796
      %v5959 = vpack.c.b16 %v5799, %v5798
      %v5960 = vpack.c.b16 %v5801, %v5800
      %v5961 = vpack.c.b16 %v5803, %v5802
      %v5962 = vpack.c.b16 %v5805, %v5804
      %v5963 = vpack.c.b16 %v5807, %v5806
      %v5964 = vpack.c.b16 %v5809, %v5808
      %v5965 = vpack.c.b16 %v5811, %v5810
      %v5966 = vpack.c.b16 %v5813, %v5812
      %v5967 = vpack.c.b16 %v5815, %v5814
      %v5968 = vpack.c.b16 %v5817, %v5816
      %v5969 = vpack.c.b16 %v5819, %v5818
      %v5970 = vpack.c.b16 %v5821, %v5820
      %v5971 = vpack.c.b16 %v5823, %v5822
      %v5972 = vpack.c.b16 %v5825, %v5824
      %v5973 = vpack.c.b16 %v5827, %v5826
      %v5974 = vpack.c.b16 %v5829, %v5828
      %v5975 = vpack.c.b16 %v5831, %v5830
      %v5976 = vpack.c.b16 %v5833, %v5832
      %v5977 = vpack.c.b16 %v5835, %v5834
      %v5978 = vpack.c.b16 %v5837, %v5836
      %v5979 = vpack.c.b16 %v5839, %v5838
      %v5980 = vpack.c.b16 %v5841, %v5840
      %v5981 = vpack.c.b16 %v5843, %v5842
      %v5982 = vpack.c.b16 %v5845, %v5844
      %v5983 = vpack.c.b16 %v5847, %v5846
      %v5984 = vpack.c.b16 %v5849, %v5848
      %v5985 = vpack.c.b16 %v5851, %v5850
      %v5986 = vpack.c.b16 %v5853, %v5852
      %v5987 = vpack.c.b16 %v5855, %v5854
      %v5988 = vpack.c.b16 %v5857, %v5856
      %v5989 = vpack.c.b16 %v5859, %v5858
      %v5990 = vpack.c.b16 %v5861, %v5860
      %v5991 = vpack.c.b16 %v5863, %v5862
      %v5992 = vpack.c.b16 %v5865, %v5864
      %v5993 = vpack.c.b16 %v5867, %v5866
      %v5994 = vpack.c.b16 %v5869, %v5868
      %v5995 = vpack.c.b16 %v5871, %v5870
      %v5996 = vpack.c.b16 %v5873, %v5872
      %v5997 = vpack.c.b16 %v5875, %v5874
      %v5998 = vpack.c.b16 %v5877, %v5876
      %v5999 = vpack.c.b16 %v5879, %v5878
      %6120 = vmatprep.subr.bf16.mxu0 0
      %6121 = vmatpush1.bf16.msra.mxu0 %v5880
      %6122 = vmatprep.subr.bf16.mxu0 0
      %6123 = vmatpush1.bf16.msra.mxu0 %v5881
      %6124 = vmatprep.subr.bf16.mxu0 0
      %6125 = vmatpush1.bf16.msra.mxu0 %v5882
      %6126 = vmatprep.subr.bf16.mxu0 0
      %6127 = vmatpush1.bf16.msra.mxu0 %v5883
      %6128 = vmatprep.subr.bf16.mxu0 0
      %6129 = vmatpush1.bf16.msra.mxu0 %v5884
      %6130 = vmatprep.subr.bf16.mxu0 0
      %6131 = vmatpush1.bf16.msra.mxu0 %v5885
      %6132 = vmatprep.subr.bf16.mxu0 0
      %6133 = vmatpush1.bf16.msra.mxu0 %v5886
      %6134 = vmatprep.subr.bf16.mxu0 0
      %6135 = vmatpush1.bf16.msra.mxu0 %v5887
      %6136 = vmatprep.subr.bf16.mxu0 0
      %6137 = vmatpush1.bf16.msra.mxu0 %v5888
      %6138 = vmatprep.subr.bf16.mxu0 0
      %6139 = vmatpush1.bf16.msra.mxu0 %v5889
      %6140 = vmatprep.subr.bf16.mxu0 0
      %6141 = vmatpush1.bf16.msra.mxu0 %v5890
      %6142 = vmatprep.subr.bf16.mxu0 0
      %6143 = vmatpush1.bf16.msra.mxu0 %v5891
      %6144 = vmatprep.subr.bf16.mxu0 0
      %6145 = vmatpush1.bf16.msra.mxu0 %v5892
      %6146 = vmatprep.subr.bf16.mxu0 0
      %6147 = vmatpush1.bf16.msra.mxu0 %v5893
      %6148 = vmatprep.subr.bf16.mxu0 0
      %6149 = vmatpush1.bf16.msra.mxu0 %v5894
      %6150 = vmatprep.subr.bf16.mxu0 0
      %6151 = vmatpush1.bf16.msra.mxu0 %v5895
      %6152 = vmatprep.mubr.bf16.mxu0 %v5371
      %6153 = vmatmul.mubr.bf16.gmra.mrb[0].mxu0 %v5370
      %v6154 = vpop.f32.mrb[0].mxu0
      %v6155 = vadd.f32 %v5345, %v6154
      %v6156 = vpop.f32.mrb[0].mxu0
      %v6157 = vpop.f32.mrb[0].mxu0
      %v6158 = vpop.f32.mrb[0].mxu0
      %6159 = vdwg.mxu0
      %6160 = vmatprep.subr.bf16.mxu0 0
      %6161 = vmatpush1.bf16.msra.mxu0 %v5896
      %6162 = vmatprep.subr.bf16.mxu0 0
      %6163 = vmatpush1.bf16.msra.mxu0 %v5897
      %6164 = vmatprep.subr.bf16.mxu0 0
      %6165 = vmatpush1.bf16.msra.mxu0 %v5898
      %6166 = vmatprep.subr.bf16.mxu0 0
      %6167 = vmatpush1.bf16.msra.mxu0 %v5899
      %6168 = vmatprep.subr.bf16.mxu0 0
      %6169 = vmatpush1.bf16.msra.mxu0 %v5900
      %6170 = vmatprep.subr.bf16.mxu0 0
      %6171 = vmatpush1.bf16.msra.mxu0 %v5901
      %6172 = vmatprep.subr.bf16.mxu0 0
      %6173 = vmatpush1.bf16.msra.mxu0 %v5902
      %6174 = vmatprep.subr.bf16.mxu0 0
      %6175 = vmatpush1.bf16.msra.mxu0 %v5903
      %6176 = vmatprep.subr.bf16.mxu0 0
      %6177 = vmatpush1.bf16.msra.mxu0 %v5904
      %6178 = vmatprep.subr.bf16.mxu0 0
      %6179 = vmatpush1.bf16.msra.mxu0 %v5905
      %6180 = vmatprep.subr.bf16.mxu0 0
      %6181 = vmatpush1.bf16.msra.mxu0 %v5906
      %6182 = vmatprep.subr.bf16.mxu0 0
      %6183 = vmatpush1.bf16.msra.mxu0 %v5907
      %6184 = vmatprep.subr.bf16.mxu0 0
      %6185 = vmatpush1.bf16.msra.mxu0 %v5908
      %6186 = vmatprep.subr.bf16.mxu0 0
      %6187 = vmatpush1.bf16.msra.mxu0 %v5909
      %6188 = vmatprep.subr.bf16.mxu0 0
      %6189 = vmatpush1.bf16.msra.mxu0 %v5910
      %6190 = vmatprep.subr.bf16.mxu0 0
      %6191 = vmatpush1.bf16.msra.mxu0 %v5911
      %6192 = vmatprep.mubr.bf16.mxu0 %v5373
      %6193 = vmatmul.mubr.bf16.gmra.mrb[0].mxu0 %v5372
      %v6194 = vpop.f32.mrb[0].mxu0
      %v6195 = vadd.f32 %v6155, %v6194
      %v6196 = vpop.f32.mrb[0].mxu0
      %v6197 = vpop.f32.mrb[0].mxu0
      %v6198 = vpop.f32.mrb[0].mxu0
      %6199 = vdwg.mxu0
      %6200 = vmatprep.subr.bf16.mxu0 0
      %6201 = vmatpush1.bf16.msra.mxu0 %v5912
      %6202 = vmatprep.subr.bf16.mxu0 0
      %6203 = vmatpush1.bf16.msra.mxu0 %v5913
      %6204 = vmatprep.subr.bf16.mxu0 0
      %6205 = vmatpush1.bf16.msra.mxu0 %v5914
      %6206 = vmatprep.subr.bf16.mxu0 0
      %6207 = vmatpush1.bf16.msra.mxu0 %v5915
      %6208 = vmatprep.subr.bf16.mxu0 0
      %6209 = vmatpush1.bf16.msra.mxu0 %v5916
      %6210 = vmatprep.subr.bf16.mxu0 0
      %6211 = vmatpush1.bf16.msra.mxu0 %v5917
      %6212 = vmatprep.subr.bf16.mxu0 0
      %6213 = vmatpush1.bf16.msra.mxu0 %v5918
      %6214 = vmatprep.subr.bf16.mxu0 0
      %6215 = vmatpush1.bf16.msra.mxu0 %v5919
      %6216 = vmatprep.subr.bf16.mxu0 0
      %6217 = vmatpush1.bf16.msra.mxu0 %v5920
      %6218 = vmatprep.subr.bf16.mxu0 0
      %6219 = vmatpush1.bf16.msra.mxu0 %v5921
      %6220 = vmatprep.subr.bf16.mxu0 0
      %6221 = vmatpush1.bf16.msra.mxu0 %v5922
      %6222 = vmatprep.subr.bf16.mxu0 0
      %6223 = vmatpush1.bf16.msra.mxu0 %v5923
      %6224 = vmatprep.subr.bf16.mxu0 0
      %6225 = vmatpush1.bf16.msra.mxu0 %v5924
      %6226 = vmatprep.subr.bf16.mxu0 0
      %6227 = vmatpush1.bf16.msra.mxu0 %v5925
      %6228 = vmatprep.subr.bf16.mxu0 0
      %6229 = vmatpush1.bf16.msra.mxu0 %v5926
      %6230 = vmatprep.subr.bf16.mxu0 0
      %6231 = vmatpush1.bf16.msra.mxu0 %v5927
      %6232 = vmatprep.mubr.bf16.mxu0 %v5375
      %6233 = vmatmul.mubr.bf16.gmra.mrb[0].mxu0 %v5374
      %v6234 = vpop.f32.mrb[0].mxu0
      %v6235 = vadd.f32 %v6195, %v6234
      %v6236 = vpop.f32.mrb[0].mxu0
      %v6237 = vpop.f32.mrb[0].mxu0
      %v6238 = vpop.f32.mrb[0].mxu0
      %6239 = vdwg.mxu0
      %6240 = vmatprep.subr.bf16.mxu0 0
      %6241 = vmatpush1.bf16.msra.mxu0 %v5928
      %6242 = vmatprep.subr.bf16.mxu0 0
      %6243 = vmatpush1.bf16.msra.mxu0 %v5929
      %6244 = vmatprep.subr.bf16.mxu0 0
      %6245 = vmatpush1.bf16.msra.mxu0 %v5930
      %6246 = vmatprep.subr.bf16.mxu0 0
      %6247 = vmatpush1.bf16.msra.mxu0 %v5931
      %6248 = vmatprep.subr.bf16.mxu0 0
      %6249 = vmatpush1.bf16.msra.mxu0 %v5932
      %6250 = vmatprep.subr.bf16.mxu0 0
      %6251 = vmatpush1.bf16.msra.mxu0 %v5933
      %6252 = vmatprep.subr.bf16.mxu0 0
      %6253 = vmatpush1.bf16.msra.mxu0 %v5934
      %6254 = vmatprep.subr.bf16.mxu0 0
      %6255 = vmatpush1.bf16.msra.mxu0 %v5935
      %6256 = vmatprep.subr.bf16.mxu0 0
      %6257 = vmatpush1.bf16.msra.mxu0 %v5936
      %6258 = vmatprep.subr.bf16.mxu0 0
      %6259 = vmatpush1.bf16.msra.mxu0 %v5937
      %6260 = vmatprep.subr.bf16.mxu0 0
      %6261 = vmatpush1.bf16.msra.mxu0 %v5938
      %6262 = vmatprep.subr.bf16.mxu0 0
      %6263 = vmatpush1.bf16.msra.mxu0 %v5939
      %6264 = vmatprep.subr.bf16.mxu0 0
      %6265 = vmatpush1.bf16.msra.mxu0 %v5940
      %6266 = vmatprep.subr.bf16.mxu0 0
      %6267 = vmatpush1.bf16.msra.mxu0 %v5941
      %6268 = vmatprep.subr.bf16.mxu0 0
      %6269 = vmatpush1.bf16.msra.mxu0 %v5942
      %6270 = vmatprep.subr.bf16.mxu0 0
      %6271 = vmatpush1.bf16.msra.mxu0 %v5943
      %6272 = vmatprep.mubr.bf16.mxu0 %v5377
      %6273 = vmatmul.mubr.bf16.gmra.mrb[0].mxu0 %v5376
      %v6274 = vpop.f32.mrb[0].mxu0
      %v6275 = vadd.f32 %v6235, %v6274
      %v6276 = vpop.f32.mrb[0].mxu0
      %v6277 = vpop.f32.mrb[0].mxu0
      %v6278 = vpop.f32.mrb[0].mxu0
      %6279 = vdwg.mxu0
      %6280 = vmatprep.subr.bf16.mxu0 0
      %6281 = vmatpush1.bf16.msra.mxu0 %v5944
      %6282 = vmatprep.subr.bf16.mxu0 0
      %6283 = vmatpush1.bf16.msra.mxu0 %v5945
      %6284 = vmatprep.subr.bf16.mxu0 0
      %6285 = vmatpush1.bf16.msra.mxu0 %v5946
      %6286 = vmatprep.subr.bf16.mxu0 0
      %6287 = vmatpush1.bf16.msra.mxu0 %v5947
      %6288 = vmatprep.subr.bf16.mxu0 0
      %6289 = vmatpush1.bf16.msra.mxu0 %v5948
      %6290 = vmatprep.subr.bf16.mxu0 0
      %6291 = vmatpush1.bf16.msra.mxu0 %v5949
      %6292 = vmatprep.subr.bf16.mxu0 0
      %6293 = vmatpush1.bf16.msra.mxu0 %v5950
      %6294 = vmatprep.subr.bf16.mxu0 0
      %6295 = vmatpush1.bf16.msra.mxu0 %v5951
      %6296 = vmatprep.subr.bf16.mxu0 0
      %6297 = vmatpush1.bf16.msra.mxu0 %v5952
      %6298 = vmatprep.subr.bf16.mxu0 0
      %6299 = vmatpush1.bf16.msra.mxu0 %v5953
      %6300 = vmatprep.subr.bf16.mxu0 0
      %6301 = vmatpush1.bf16.msra.mxu0 %v5954
      %6302 = vmatprep.subr.bf16.mxu0 0
      %6303 = vmatpush1.bf16.msra.mxu0 %v5955
      %6304 = vmatprep.subr.bf16.mxu0 0
      %6305 = vmatpush1.bf16.msra.mxu0 %v5956
      %6306 = vmatprep.subr.bf16.mxu0 0
      %6307 = vmatpush1.bf16.msra.mxu0 %v5957
      %6308 = vmatprep.subr.bf16.mxu0 0
      %6309 = vmatpush1.bf16.msra.mxu0 %v5958
      %6310 = vmatprep.subr.bf16.mxu0 0
      %6311 = vmatpush1.bf16.msra.mxu0 %v5959
      %6312 = vmatprep.mubr.bf16.mxu0 %v5379
      %6313 = vmatmul.mubr.bf16.gmra.mrb[0].mxu0 %v5378
      %v6314 = vpop.f32.mrb[0].mxu0
      %v6315 = vadd.f32 %v6275, %v6314
      %v6316 = vpop.f32.mrb[0].mxu0
      %v6317 = vpop.f32.mrb[0].mxu0
      %v6318 = vpop.f32.mrb[0].mxu0
      %6319 = vdwg.mxu0
      %6320 = vmatprep.subr.bf16.mxu0 0
      %6321 = vmatpush1.bf16.msra.mxu0 %v5960
      %6322 = vmatprep.subr.bf16.mxu0 0
      %6323 = vmatpush1.bf16.msra.mxu0 %v5961
      %6324 = vmatprep.subr.bf16.mxu0 0
      %6325 = vmatpush1.bf16.msra.mxu0 %v5962
      %6326 = vmatprep.subr.bf16.mxu0 0
      %6327 = vmatpush1.bf16.msra.mxu0 %v5963
      %6328 = vmatprep.subr.bf16.mxu0 0
      %6329 = vmatpush1.bf16.msra.mxu0 %v5964
      %6330 = vmatprep.subr.bf16.mxu0 0
      %6331 = vmatpush1.bf16.msra.mxu0 %v5965
      %6332 = vmatprep.subr.bf16.mxu0 0
      %6333 = vmatpush1.bf16.msra.mxu0 %v5966
      %6334 = vmatprep.subr.bf16.mxu0 0
      %6335 = vmatpush1.bf16.msra.mxu0 %v5967
      %6336 = vmatprep.subr.bf16.mxu0 0
      %6337 = vmatpush1.bf16.msra.mxu0 %v5968
      %6338 = vmatprep.subr.bf16.mxu0 0
      %6339 = vmatpush1.bf16.msra.mxu0 %v5969
      %6340 = vmatprep.subr.bf16.mxu0 0
      %6341 = vmatpush1.bf16.msra.mxu0 %v5970
      %6342 = vmatprep.subr.bf16.mxu0 0
      %6343 = vmatpush1.bf16.msra.mxu0 %v5971
      %6344 = vmatprep.subr.bf16.mxu0 0
      %6345 = vmatpush1.bf16.msra.mxu0 %v5972
      %6346 = vmatprep.subr.bf16.mxu0 0
      %6347 = vmatpush1.bf16.msra.mxu0 %v5973
      %6348 = vmatprep.subr.bf16.mxu0 0
      %6349 = vmatpush1.bf16.msra.mxu0 %v5974
      %6350 = vmatprep.subr.bf16.mxu0 0
      %6351 = vmatpush1.bf16.msra.mxu0 %v5975
      %6352 = vmatprep.mubr.bf16.mxu0 %v5381
      %6353 = vmatmul.mubr.bf16.gmra.mrb[0].mxu0 %v5380
      %v6354 = vpop.f32.mrb[0].mxu0
      %v6355 = vadd.f32 %v6315, %v6354
      %v6356 = vpop.f32.mrb[0].mxu0
      %v6357 = vpop.f32.mrb[0].mxu0
      %v6358 = vpop.f32.mrb[0].mxu0
      %6359 = vdwg.mxu0
      %6360 = vmatprep.subr.bf16.mxu0 0
      %6361 = vmatpush1.bf16.msra.mxu0 %v5976
      %6362 = vmatprep.subr.bf16.mxu0 0
      %6363 = vmatpush1.bf16.msra.mxu0 %v5977
      %6364 = vmatprep.subr.bf16.mxu0 0
      %6365 = vmatpush1.bf16.msra.mxu0 %v5978
      %6366 = vmatprep.subr.bf16.mxu0 0
      %6367 = vmatpush1.bf16.msra.mxu0 %v5979
      %6368 = vmatprep.subr.bf16.mxu0 0
      %6369 = vmatpush1.bf16.msra.mxu0 %v5980
      %6370 = vmatprep.subr.bf16.mxu0 0
      %6371 = vmatpush1.bf16.msra.mxu0 %v5981
      %6372 = vmatprep.subr.bf16.mxu0 0
      %6373 = vmatpush1.bf16.msra.mxu0 %v5982
      %6374 = vmatprep.subr.bf16.mxu0 0
      %6375 = vmatpush1.bf16.msra.mxu0 %v5983
      %6376 = vmatprep.subr.bf16.mxu0 0
      %6377 = vmatpush1.bf16.msra.mxu0 %v5984
      %6378 = vmatprep.subr.bf16.mxu0 0
      %6379 = vmatpush1.bf16.msra.mxu0 %v5985
      %6380 = vmatprep.subr.bf16.mxu0 0
      %6381 = vmatpush1.bf16.msra.mxu0 %v5986
      %6382 = vmatprep.subr.bf16.mxu0 0
      %6383 = vmatpush1.bf16.msra.mxu0 %v5987
      %6384 = vmatprep.subr.bf16.mxu0 0
      %6385 = vmatpush1.bf16.msra.mxu0 %v5988
      %6386 = vmatprep.subr.bf16.mxu0 0
      %6387 = vmatpush1.bf16.msra.mxu0 %v5989
      %6388 = vmatprep.subr.bf16.mxu0 0
      %6389 = vmatpush1.bf16.msra.mxu0 %v5990
      %6390 = vmatprep.subr.bf16.mxu0 0
      %6391 = vmatpush1.bf16.msra.mxu0 %v5991
      %6392 = vmatprep.mubr.bf16.mxu0 %v5383
      %6393 = vmatmul.mubr.bf16.gmra.mrb[0].mxu0 %v5382
      %v6394 = vpop.f32.mrb[0].mxu0
      %v6395 = vadd.f32 %v6355, %v6394
      %v6396 = vpop.f32.mrb[0].mxu0
      %v6397 = vpop.f32.mrb[0].mxu0
      %v6398 = vpop.f32.mrb[0].mxu0
      %6399 = vdwg.mxu0
      %6400 = vmatprep.subr.bf16.mxu0 0
      %6401 = vmatpush1.bf16.msra.mxu0 %v5992
      %6402 = vmatprep.subr.bf16.mxu0 0
      %6403 = vmatpush1.bf16.msra.mxu0 %v5993
      %6404 = vmatprep.subr.bf16.mxu0 0
      %6405 = vmatpush1.bf16.msra.mxu0 %v5994
      %6406 = vmatprep.subr.bf16.mxu0 0
      %6407 = vmatpush1.bf16.msra.mxu0 %v5995
      %6408 = vmatprep.subr.bf16.mxu0 0
      %6409 = vmatpush1.bf16.msra.mxu0 %v5996
      %6410 = vmatprep.subr.bf16.mxu0 0
      %6411 = vmatpush1.bf16.msra.mxu0 %v5997
      %6412 = vmatprep.subr.bf16.mxu0 0
      %6413 = vmatpush1.bf16.msra.mxu0 %v5998
      %6414 = vmatprep.subr.bf16.mxu0 0
      %6415 = vmatpush1.bf16.msra.mxu0 %v5999
      %6416 = vmatprep.subr.bf16.mxu0 0
      %6417 = vmatpush1.bf16.msra.mxu0 0
      %6418 = vmatprep.subr.bf16.mxu0 0
      %6419 = vmatpush1.bf16.msra.mxu0 0
      %6420 = vmatprep.subr.bf16.mxu0 0
      %6421 = vmatpush1.bf16.msra.mxu0 0
      %6422 = vmatprep.subr.bf16.mxu0 0
      %6423 = vmatpush1.bf16.msra.mxu0 0
      %6424 = vmatprep.subr.bf16.mxu0 0
      %6425 = vmatpush1.bf16.msra.mxu0 0
      %6426 = vmatprep.subr.bf16.mxu0 0
      %6427 = vmatpush1.bf16.msra.mxu0 0
      %6428 = vmatprep.subr.bf16.mxu0 0
      %6429 = vmatpush1.bf16.msra.mxu0 0
      %6430 = vmatprep.subr.bf16.mxu0 0
      %6431 = vmatpush1.bf16.msra.mxu0 0
      %6432 = vmatprep.mubr.bf16.mxu0 0
      %6433 = vmatmul.mubr.bf16.gmra.mrb[0].mxu0 %v5384
      %v6434 = vpop.f32.mrb[0].mxu0
      %v6435 = vadd.f32 %v6395, %v6434
      %v6436 = vpop.f32.mrb[0].mxu0
      %v6437 = vpop.f32.mrb[0].mxu0
      %v6438 = vpop.f32.mrb[0].mxu0
      %6439 = vdwg.mxu0
      %v6440 = vmax.f32 %v6435, 0.0
      %v6441 = vld [vmem:[%s7] sm:$0x1]
      %v6443 = vlaneseq
      %v6444 = vshrl.u32 %v6443, 7
      %v6445 = vsub.s32 0, %v6444
      %v6446 = vrot.slane %v6441, %v6445
      %v6448 = vmul.f32 %v6440, %v6446
      %6449 = vadd.xlane.f32.xlu0 %v6448
      %v6450 = vpop.xlane.xlu0 %6449
      %v6451 = vld [vmem:[#allocation6] sm:$0x1]
      %v6453 = vlaneseq
      %v6454 = vshrl.u32 %v6453, 7
      %v6455 = vsub.s32 0, %v6454
      %v6456 = vrot.slane %v6451, %v6455
      %v6458 = vadd.f32 %v6450, %v6456
      %vm6459 = vcmask 7168
      %6460 = vst.msk [vmem:[%s334] sm:$0xff] %vm6459, %v6458
      %p6461 = scmp.lt.s32.totalorder %s22, 1
      %s6462 = scalar_select %p6461, %s22, 1
      %s6463 = smul.addr %s6462, 8
      %s6464 = scalar_lea.vmem %s9, %s6463
      // Predicated region
      $region57: #{tpu_custom_call.1} parent=55 // pred_check
        %p6465 = pneg %p234
      $region58: #{tpu_custom_call.1} parent=55 // pred_check_branch
        %6467 = sbr.rel (%p6465) target = $region60
      $region59: #{tpu_custom_call.1} parent=55 // pred_region
        _
      $region60: #{tpu_custom_call.1} parent=55 // pred_fallthru
        _
    $region56: #{tpu_custom_call.1} parent=5 // pred_fallthru
      _
    %p6468 = scmp.le.s32.totalorder 2, %s17
    // Predicated region
    $region61: #{tpu_custom_call.1} parent=5 // pred_check
      %p6469 = pneg %p6468
    $region62: #{tpu_custom_call.1} parent=5 // pred_check_branch
      %6471 = sbr.rel (%p6469) target = $region64
    $region63: #{tpu_custom_call.1} parent=5 // pred_region
      %s6472 = ssub.s32 %s17, 2
      // Predicated region
      $region65: #{tpu_custom_call.1} parent=63 // pred_check
        %p6473 = pneg %p240
      $region66: #{tpu_custom_call.1} parent=63 // pred_check_branch
        %6475 = sbr.rel (%p6473) target = $region68
      $region67: #{tpu_custom_call.1} parent=63 // pred_region
        %p6476 = scmp.lt.s32.totalorder %s23, 1
        %s6477 = scalar_select %p6476, %s23, 1
        %s6478 = smul.addr %s6477, 8
        %s6479 = scalar_lea.vmem %s9, %s6478
      $region68: #{tpu_custom_call.1} parent=63 // pred_fallthru
        _
    $region64: #{tpu_custom_call.1} parent=5 // pred_fallthru
      _
  $region6: #{tpu_custom_call.1} parent=0 // loop_footer
    %s21 = sadd.s32 1, %s17
  $region7: #{tpu_custom_call.1} parent=0 // loop_footer_branch
    %16 = sbr.rel target = $region3
  $region8: #{tpu_custom_call.1} parent=0 // loop_exit
    _

</llo_original>
